<compile_context>
chip_gen: v7x
topology: tpu7x:2x2x1
jax: 0.10.0
libtpu: 0.0.40
codegen_flags: <defaults>
</compile_context>

<pallas_src>
import functools
import math

import jax
import jax.numpy as jnp
from jax.experimental import pallas as pl
from jax.experimental.pallas import tpu as pltpu

LN_EPS = 1e-12                           # HF ViTConfig default layer_norm_eps
IMAGENET_MEAN = (0.485, 0.456, 0.406)    # facebook/dino-vitb16 processor stats
IMAGENET_STD = (0.229, 0.224, 0.225)


# ----------------------------- in-kernel helpers -----------------------------

def _layernorm(x, gamma, beta, eps):
  mu = jnp.mean(x, axis=-1, keepdims=True)
  var = jnp.mean((x - mu) ** 2, axis=-1, keepdims=True)
  return (x - mu) * jax.lax.rsqrt(var + eps) * gamma + beta


def _gelu_exact(x):
  # HF ViT uses exact (erf) GELU; kept exact for parity with the reference.
  return 0.5 * x * (1.0 + jax.lax.erf(x * (1.0 / math.sqrt(2.0))))


# --------------------------------- kernels -----------------------------------

def _patch_embed_kernel(p_ref, w_ref, b_ref, o_ref):
  # p: (RT, C*P*P) bf16   w: (C*P*P, H) bf16 (preprocessing folded)   b: (1, H) f32
  o_ref[...] = (
      jnp.dot(p_ref[...], w_ref[...], preferred_element_type=jnp.float32)
      + b_ref[...]
  ).astype(o_ref.dtype)


def _encoder_stack_kernel(
    tok_ref,                       # (bt, N, H) f32 patch tokens (per batch tile)
    cls_ref, pos_ref,              # (1, 1, H), (1, S, H) f32
    ln1g_ref, ln1b_ref,            # (1, H) f32
    wqkv_ref, bqkv_ref,            # (H, 3H) bf16 (Q cols pre-scaled), (1, 3H) f32
    wo_ref, bo_ref,                # (H, H) bf16, (1, H) f32
    ln2g_ref, ln2b_ref,            # (1, H) f32
    w1_ref, b1_ref,                # (H, M) bf16, (1, M) f32
    w2_ref, b2_ref,                # (M, H) bf16, (1, H) f32
    fg_ref, fb_ref,                # (1, H) f32 final encoder LayerNorm
    o_ref,                         # (bt, S, H) f32, resident over the layer axis
    ctx_ref,                       # (bt*S, H) f32 VMEM scratch for attention ctx
    *, num_heads, eps):
  l = pl.program_id(1)             # layer index (inner, "arbitrary")
  last_l = pl.num_programs(1) - 1
  BT, S, H = o_ref.shape
  dh = H // num_heads
  rows = BT * S
  bf16 = jnp.bfloat16

  # Build the initial token sequence (CLS ++ patches) + position embedding once,
  # while the resident activation block is being initialized.
  @pl.when(l == 0)
  def _():
    cls_tok = jnp.broadcast_to(cls_ref[...], (BT, 1, H))
    o_ref[...] = jnp.concatenate([cls_tok, tok_ref[...]], axis=1) + pos_ref[...]

  x2 = o_ref[...].reshape(rows, H)                         # (rows, H) f32

  # ---------------- self attention (pre-LN) ----------------
  xn = _layernorm(x2, ln1g_ref[...], ln1b_ref[...], eps)
  qkv = jnp.dot(xn.astype(bf16), wqkv_ref[...],
                preferred_element_type=jnp.float32) + bqkv_ref[...]   # (rows, 3H)

  # Per-head attention from dh-wide lane slices; ctx written straight into the
  # (rows, H) scratch (no axis-0 concats, no final lane concat).
  for h in range(num_heads):
    lo = h * dh
    qh = qkv[:, lo:lo + dh].reshape(BT, S, dh).astype(bf16)
    kh = qkv[:, H + lo:H + lo + dh].reshape(BT, S, dh).astype(bf16)
    vh = qkv[:, 2 * H + lo:2 * H + lo + dh].reshape(BT, S, dh).astype(bf16)
    s = jnp.einsum('bqd,bkd->bqk', qh, kh,
                   preferred_element_type=jnp.float32)     # scale folded into Q
    m = jnp.max(s, axis=-1, keepdims=True)
    p = jnp.exp(s - m)
    p = p * pl.reciprocal(jnp.sum(p, axis=-1, keepdims=True), approx=True)
    ctx_h = jnp.einsum('bqk,bkd->bqd', p.astype(bf16), vh,
                       preferred_element_type=jnp.float32)  # (BT, S, dh)
    ctx_ref[:, lo:lo + dh] = ctx_h.reshape(rows, dh)

  attn = jnp.dot(ctx_ref[...].astype(bf16), wo_ref[...],
                 preferred_element_type=jnp.float32) + bo_ref[...]
  x2 = x2 + attn                    # residual (f32)

  # ---------------- MLP (pre-LN) ----------------
  xn2 = _layernorm(x2, ln2g_ref[...], ln2b_ref[...], eps)
  h1 = jnp.dot(xn2.astype(bf16), w1_ref[...],
               preferred_element_type=jnp.float32) + b1_ref[...]
  h1 = _gelu_exact(h1)
  mlp = jnp.dot(h1.astype(bf16), w2_ref[...],
                preferred_element_type=jnp.float32) + b2_ref[...]
  x2 = x2 + mlp                     # residual (f32)

  # Write back the resident activations; fold the final encoder LayerNorm into
  # the last layer so the tokens leave VMEM exactly once per batch tile.
  @pl.when(l < last_l)
  def _():
    o_ref[...] = x2.reshape(BT, S, H)

  @pl.when(l == last_l)
  def _():
    o_ref[...] = _layernorm(x2, fg_ref[...], fb_ref[...], eps).reshape(BT, S, H)


# --------------------------------- wrapper -----------------------------------

def _pick_row_tile(n, target=512):
  """Largest divisor of n that is <= target and a multiple of 16 (or n itself)."""
  for t in range(min(n, target), 0, -1):
    if n % t == 0 and (t % 16 == 0 or t == n):
      return t
  return n


def _extract_patches(image, patch):
  """NCHW image -> (B*nH*nW, C*P*P), flattened like Conv2d(kernel=P, stride=P).

  Cast to bf16 here: the convert fuses into the XLA transpose copy and halves
  the patch-embed kernel's dominant HBM read.
  """
  B, C, Hi, Wi = image.shape
  nH, nW = Hi // patch, Wi // patch
  p = image.reshape(B, C, nH, patch, nW, patch)
  p = p.transpose(0, 2, 4, 1, 3, 5).reshape(B * nH * nW, C * patch * patch)
  return p.astype(jnp.bfloat16), nH * nW


def _vmem_limit_bytes():
  """Physical VMEM minus ~16 MiB Mosaic scratch headroom (48 MiB v7x, 112 MiB v5e/v6e)."""
  cap = None
  try:
    cap = int(pltpu.get_tpu_info().vmem_capacity_bytes)
  except Exception:
    cap = None
  if not cap:
    try:
      kind = jax.devices()[0].device_kind.lower()
    except Exception:
      kind = ""
    cap = 64 * 1024 * 1024 if "v7" in kind else 128 * 1024 * 1024
  return max(cap - 16 * 1024 * 1024, 32 * 1024 * 1024)


def _default_batch_tile(batch):
  """Single-TC chips: one tile (weights stream once). v7x: >=2 tiles so the
  'parallel' batch axis shards across both TensorCores."""
  try:
    kind = jax.devices()[0].device_kind.lower()
  except Exception:
    kind = ""
  if "v7" in kind and batch % 2 == 0:
    return batch // 2
  return batch


def init_params(key, *, channels, patch, hidden, heads, mlp_dim, layers, n_patches):
  del heads
  ks = list(jax.random.split(key, 8 + layers * 10))
  nk = iter(ks)
  p = {
      'patch_w': 0.02 * jax.random.normal(next(nk), (hidden, channels, patch, patch), jnp.float32),
      'patch_b': jnp.zeros((hidden,), jnp.float32),
      'cls': 0.02 * jax.random.normal(next(nk), (1, 1, hidden), jnp.float32),
      'pos': 0.02 * jax.random.normal(next(nk), (1, n_patches + 1, hidden), jnp.float32),
      'final_ln_g': jnp.ones((hidden,), jnp.float32),
      'final_ln_b': jnp.zeros((hidden,), jnp.float32),
      'layers': [],
  }
  for _ in range(layers):
    layer = {
        'ln1_g': jnp.ones((hidden,), jnp.float32),
        'ln1_b': jnp.zeros((hidden,), jnp.float32),
        'wq': 0.02 * jax.random.normal(next(nk), (hidden, hidden), jnp.float32),
        'bq': jnp.zeros((hidden,), jnp.float32),
        'wk': 0.02 * jax.random.normal(next(nk), (hidden, hidden), jnp.float32),
        'bk': jnp.zeros((hidden,), jnp.float32),
        'wv': 0.02 * jax.random.normal(next(nk), (hidden, hidden), jnp.float32),
        'bv': jnp.zeros((hidden,), jnp.float32),
        'wo': 0.02 * jax.random.normal(next(nk), (hidden, hidden), jnp.float32),
        'bo': jnp.zeros((hidden,), jnp.float32),
        'ln2_g': jnp.ones((hidden,), jnp.float32),
        'ln2_b': jnp.zeros((hidden,), jnp.float32),
        'w1': 0.02 * jax.random.normal(next(nk), (hidden, mlp_dim), jnp.float32),
        'b1': jnp.zeros((mlp_dim,), jnp.float32),
        'w2': 0.02 * jax.random.normal(next(nk), (mlp_dim, hidden), jnp.float32),
        'b2': jnp.zeros((hidden,), jnp.float32),
    }
    p['layers'].append(layer)
  return p


def dino_forward(image, params, *, patch, heads, batch_tile=None):
  """image: (B, C, Hi, Wi) float32 in [-1, 1] (NCHW). Returns (B, N+1, H) f32."""
  B, C, Hi, Wi = image.shape
  hidden = params['patch_w'].shape[0]
  mlp_dim = params['layers'][0]['w1'].shape[1]
  L = len(params['layers'])
  dh = hidden // heads
  bt = batch_tile if batch_tile is not None else _default_batch_tile(B)
  assert B % bt == 0
  assert C == len(IMAGENET_MEAN)

  # ---- preprocessing folded into the patch-embedding (conv-as-matmul) ----
  # x' = (x*0.5 + 0.5 - mean)/std is a per-channel affine:  W' = a_c*W,
  # bias' = bias + b.W  (done in f32, then the weight is cast to bf16).
  # TODO(synk): processor do_resize bilinear resize and interpolate_pos_encoding
  # bicubic resize are identity here (input size matches the position table).
  mean = jnp.asarray(IMAGENET_MEAN, jnp.float32)
  std = jnp.asarray(IMAGENET_STD, jnp.float32)
  cpp = C * patch * patch
  a_vec = jnp.repeat(0.5 / std, patch * patch)                 # (C*P*P,)
  b_vec = jnp.repeat((0.5 - mean) / std, patch * patch)        # (C*P*P,)
  w = params['patch_w'].reshape(hidden, cpp).T                 # (C*P*P, H) f32
  w_fold = (w * a_vec[:, None]).astype(jnp.bfloat16)
  b_fold = (params['patch_b'] + b_vec @ w).reshape(1, hidden)  # f32

  patches, N = _extract_patches(image, patch)                  # (B*N, cpp) bf16
  rows_total = B * N
  RT = _pick_row_tile(rows_total, target=512)
  tok = pl.pallas_call(
      _patch_embed_kernel,
      out_shape=jax.ShapeDtypeStruct((rows_total, hidden), jnp.float32),
      grid=(rows_total // RT,),
      in_specs=[
          pl.BlockSpec((RT, cpp), lambda i: (i, 0)),
          pl.BlockSpec((cpp, hidden), lambda i: (0, 0)),
          pl.BlockSpec((1, hidden), lambda i: (0, 0)),
      ],
      out_specs=pl.BlockSpec((RT, hidden), lambda i: (i, 0)),
      compiler_params=pltpu.CompilerParams(
          dimension_semantics=("parallel",)),
  )(patches, w_fold, b_fold)
  tok = tok.reshape(B, N, hidden)
  S = N + 1

  # ---- all encoder layers + cls/pos init + final LayerNorm in ONE pallas_call ----
  lys = params['layers']
  scale = 1.0 / math.sqrt(dh)
  st = lambda name: jnp.stack([lp[name] for lp in lys], axis=0)
  ln1g = st('ln1_g').reshape(L, 1, hidden)
  ln1b = st('ln1_b').reshape(L, 1, hidden)
  # Attention scale folded into the Q columns (weight AND bias).
  wqkv = jnp.stack(
      [jnp.concatenate([lp['wq'] * scale, lp['wk'], lp['wv']], axis=1) for lp in lys],
      axis=0).astype(jnp.bfloat16)                                     # (L, H, 3H)
  bqkv = jnp.stack(
      [jnp.concatenate([lp['bq'] * scale, lp['bk'], lp['bv']], axis=0) for lp in lys],
      axis=0).reshape(L, 1, 3 * hidden)                                # f32
  wo = st('wo').astype(jnp.bfloat16)                                   # (L, H, H)
  bo = st('bo').reshape(L, 1, hidden)
  ln2g = st('ln2_g').reshape(L, 1, hidden)
  ln2b = st('ln2_b').reshape(L, 1, hidden)
  w1 = st('w1').astype(jnp.bfloat16)                                   # (L, H, M)
  b1 = st('b1').reshape(L, 1, mlp_dim)
  w2 = st('w2').astype(jnp.bfloat16)                                   # (L, M, H)
  b2 = st('b2').reshape(L, 1, hidden)
  fg = params['final_ln_g'].reshape(1, hidden)
  fb = params['final_ln_b'].reshape(1, hidden)
  cls = params['cls']                                                  # (1, 1, H)
  pos = params['pos']                                                  # (1, S, H)

  bmap3 = lambda b, l: (b, 0, 0)     # per-batch-tile resident blocks
  wmap = lambda b, l: (l, 0, 0)      # per-layer stacked weights (prefetch l+1)
  cmap3 = lambda b, l: (0, 0, 0)     # cls / pos (small, resident)
  cmap2 = lambda b, l: (0, 0)        # final LN params

  kernel = functools.partial(_encoder_stack_kernel, num_heads=heads, eps=LN_EPS)
  # Grid: batch tile OUTER ("parallel", v7x megacore shards it since each tile
  # owns its own output block), layer INNER ("arbitrary", activations resident).
  out = pl.pallas_call(
      kernel,
      out_shape=jax.ShapeDtypeStruct((B, S, hidden), jnp.float32),
      grid=(B // bt, L),
      in_specs=[
          pl.BlockSpec((bt, N, hidden), bmap3),                                # tok
          pl.BlockSpec((1, 1, hidden), cmap3),                                 # cls
          pl.BlockSpec((1, S, hidden), cmap3),                                 # pos
          pl.BlockSpec((None, 1, hidden), wmap), pl.BlockSpec((None, 1, hidden), wmap),
          pl.BlockSpec((None, hidden, 3 * hidden), wmap), pl.BlockSpec((None, 1, 3 * hidden), wmap),
          pl.BlockSpec((None, hidden, hidden), wmap), pl.BlockSpec((None, 1, hidden), wmap),
          pl.BlockSpec((None, 1, hidden), wmap), pl.BlockSpec((None, 1, hidden), wmap),
          pl.BlockSpec((None, hidden, mlp_dim), wmap), pl.BlockSpec((None, 1, mlp_dim), wmap),
          pl.BlockSpec((None, mlp_dim, hidden), wmap), pl.BlockSpec((None, 1, hidden), wmap),
          pl.BlockSpec((1, hidden), cmap2), pl.BlockSpec((1, hidden), cmap2),
      ],
      out_specs=pl.BlockSpec((bt, S, hidden), bmap3),
      scratch_shapes=[pltpu.VMEM((bt * S, hidden), jnp.float32)],
      compiler_params=pltpu.CompilerParams(
          dimension_semantics=("parallel", "arbitrary"),
          vmem_limit_bytes=_vmem_limit_bytes()),
  )(tok, cls, pos, ln1g, ln1b, wqkv, bqkv, wo, bo, ln2g, ln2b, w1, b1, w2, b2, fg, fb)
  return out


# ---------------------------- pure-JAX reference ------------------------------

def _reference_forward(image, params, *, patch, heads):
  B, C, Hi, Wi = image.shape
  hidden = params['patch_w'].shape[0]
  mean = jnp.asarray(IMAGENET_MEAN, jnp.float32).reshape(1, C, 1, 1)
  std = jnp.asarray(IMAGENET_STD, jnp.float32).reshape(1, C, 1, 1)
  x = (image * 0.5 + 0.5 - mean) / std
  nH, nW = Hi // patch, Wi // patch
  p = x.reshape(B, C, nH, patch, nW, patch)
  patches = p.transpose(0, 2, 4, 1, 3, 5).reshape(B * nH * nW, C * patch * patch)
  N = nH * nW
  w = params['patch_w'].reshape(hidden, -1).T
  tok = (patches @ w + params['patch_b']).reshape(B, N, hidden)
  cls = jnp.broadcast_to(params['cls'], (B, 1, hidden))
  x = jnp.concatenate([cls, tok], axis=1) + params['pos']
  S = N + 1
  dh = hidden // heads

  def ln(v, g, b):
    mu = v.mean(-1, keepdims=True)
    var = ((v - mu) ** 2).mean(-1, keepdims=True)
    return (v - mu) / jnp.sqrt(var + LN_EPS) * g + b

  for lp in params['layers']:
    xn = ln(x, lp['ln1_g'], lp['ln1_b'])
    q = (xn @ lp['wq'] + lp['bq']).reshape(B, S, heads, dh).transpose(0, 2, 1, 3)
    k = (xn @ lp['wk'] + lp['bk']).reshape(B, S, heads, dh).transpose(0, 2, 1, 3)
    v = (xn @ lp['wv'] + lp['bv']).reshape(B, S, heads, dh).transpose(0, 2, 1, 3)
    att = jax.nn.softmax(q @ k.transpose(0, 1, 3, 2) / math.sqrt(dh), axis=-1)
    ctx = (att @ v).transpose(0, 2, 1, 3).reshape(B, S, hidden)
    x = x + ctx @ lp['wo'] + lp['bo']
    xn2 = ln(x, lp['ln2_g'], lp['ln2_b'])
    h1 = xn2 @ lp['w1'] + lp['b1']
    h1 = 0.5 * h1 * (1.0 + jax.lax.erf(h1 / math.sqrt(2.0)))
    x = x + h1 @ lp['w2'] + lp['b2']
  return ln(x, params['final_ln_g'], params['final_ln_b'])


# ----------------------------------- main -------------------------------------

if __name__ == "__main__":
  # Small toy shapes for the runnable check.
  # NOTE: tune/benchmark with real ViT-B/16 shapes (H=768, S=197, heads=12,
  # M=3072, L=12) — toy lane dims (<128) do not reflect real bottlenecks.
  B, C, IMG, PATCH = 2, 3, 32, 8
  HIDDEN, HEADS, MLP_DIM, LAYERS = 64, 4, 128, 3
  N_PATCHES = (IMG // PATCH) ** 2

  key = jax.random.PRNGKey(0)
  k_img, k_par = jax.random.split(key)
  image = jax.random.uniform(k_img, (B, C, IMG, IMG), jnp.float32,
                             minval=-1.0, maxval=1.0)
  params = init_params(k_par, channels=C, patch=PATCH, hidden=HIDDEN,
                       heads=HEADS, mlp_dim=MLP_DIM, layers=LAYERS,
                       n_patches=N_PATCHES)

  fwd = jax.jit(functools.partial(dino_forward, patch=PATCH, heads=HEADS))
  out = jax.block_until_ready(fwd(image, params))
  assert out.shape == (B, N_PATCHES + 1, HIDDEN), out.shape
  assert bool(jnp.all(jnp.isfinite(out)))

  # Loose tolerance: kernel runs bf16 matmul operands (f32 accumulation) and an
  # approx-reciprocal softmax denominator; reference is full f32.
  ref = _reference_forward(image, params, patch=PATCH, heads=HEADS)
  max_err = float(jnp.max(jnp.abs(out - ref)))
  assert max_err < 1e-1, f"max abs err vs reference: {max_err}"

  print("KERNEL_OK")
</pallas_src>

<mosaic_0001>
module attributes {stable_mosaic.version = 11 : i64} {
  func.func @_patch_embed_kernel(%arg0: i32, %arg1: memref<32x192xbf16, #tpu.memory_space<vmem>>, %arg2: memref<192x64xbf16, #tpu.memory_space<vmem>>, %arg3: memref<1x64xf32, #tpu.memory_space<vmem>>, %arg4: memref<32x64xf32, #tpu.memory_space<vmem>>) attributes {dimension_semantics = [#tpu.dimension_semantics<parallel>], iteration_bounds = array<i64: 1>, scalar_prefetch = 0 : i64, scratch_operands = 0 : i64, tpu.core_type = #tpu.core_type<tc>, window_params = [{transform_indices = @transform_0, window_bounds = array<i64: 32, 192>}, {pipeline_mode = #tpu.pipeline_mode<synchronous>, transform_indices = @transform_1, window_bounds = array<i64: 192, 64>}, {pipeline_mode = #tpu.pipeline_mode<synchronous>, transform_indices = @transform_2, window_bounds = array<i64: 1, 64>}, {transform_indices = @transform_3, window_bounds = array<i64: 32, 64>}]} {
    %c0 = arith.constant 0 : index
    %c0_0 = arith.constant 0 : index
    %0 = vector.load %arg1[%c0, %c0_0] : memref<32x192xbf16, #tpu.memory_space<vmem>>, vector<32x192xbf16>
    %c0_1 = arith.constant 0 : index
    %c0_2 = arith.constant 0 : index
    %1 = vector.load %arg2[%c0_1, %c0_2] : memref<192x64xbf16, #tpu.memory_space<vmem>>, vector<192x64xbf16>
    %cst = arith.constant dense<0.000000e+00> : vector<32x64xf32>
    %2 = tpu.matmul %0, %1, %cst {dimension_numbers = #tpu.dot_dimension_numbers<[1], [0], [0], [1], [0, 0, 1, 1], [], []>} : vector<32x192xbf16>, vector<192x64xbf16>, vector<32x64xf32> -> vector<32x64xf32>
    %c0_3 = arith.constant 0 : index
    %c0_4 = arith.constant 0 : index
    %3 = vector.load %arg3[%c0_3, %c0_4] : memref<1x64xf32, #tpu.memory_space<vmem>>, vector<1x64xf32>
    %4 = vector.broadcast %3 : vector<1x64xf32> to vector<32x64xf32>
    %5 = arith.addf %2, %4 : vector<32x64xf32>
    %c0_5 = arith.constant 0 : index
    %c0_6 = arith.constant 0 : index
    %6 = vector.load %arg4[%c0_5, %c0_6] : memref<32x64xf32, #tpu.memory_space<vmem>>, vector<32x64xf32>
    tpu.vector_store %arg4[%c0_5, %c0_6], %5 {strides = array<i32>} : memref<32x64xf32, #tpu.memory_space<vmem>>, vector<32x64xf32>,
    return
  }
  func.func @transform_0(%arg0: i32) -> (i32, i32) {
    %c0_i32 = arith.constant 0 : i32
    %c0_i32_0 = arith.constant 0 : i32
    return %arg0, %c0_i32 : i32, i32
  }
  func.func @transform_1(%arg0: i32) -> (i32, i32) {
    %c0_i32 = arith.constant 0 : i32
    %c0_i32_0 = arith.constant 0 : i32
    %c0_i32_1 = arith.constant 0 : i32
    return %c0_i32, %c0_i32_0 : i32, i32
  }
  func.func @transform_2(%arg0: i32) -> (i32, i32) {
    %c0_i32 = arith.constant 0 : i32
    %c0_i32_0 = arith.constant 0 : i32
    %c0_i32_1 = arith.constant 0 : i32
    return %c0_i32, %c0_i32_0 : i32, i32
  }
  func.func @transform_3(%arg0: i32) -> (i32, i32) {
    %c0_i32 = arith.constant 0 : i32
    %c0_i32_0 = arith.constant 0 : i32
    return %arg0, %c0_i32 : i32, i32
  }
}

module attributes {stable_mosaic.version = 11 : i64} {
  func.func @_encoder_stack_kernel(%arg0: i32, %arg1: i32, %arg2: memref<2x16x64xf32, #tpu.memory_space<vmem>>, %arg3: memref<1x1x64xf32, #tpu.memory_space<vmem>>, %arg4: memref<1x17x64xf32, #tpu.memory_space<vmem>>, %arg5: memref<1x1x64xf32, #tpu.memory_space<vmem>>, %arg6: memref<1x1x64xf32, #tpu.memory_space<vmem>>, %arg7: memref<1x64x192xbf16, #tpu.memory_space<vmem>>, %arg8: memref<1x1x192xf32, #tpu.memory_space<vmem>>, %arg9: memref<1x64x64xbf16, #tpu.memory_space<vmem>>, %arg10: memref<1x1x64xf32, #tpu.memory_space<vmem>>, %arg11: memref<1x1x64xf32, #tpu.memory_space<vmem>>, %arg12: memref<1x1x64xf32, #tpu.memory_space<vmem>>, %arg13: memref<1x64x128xbf16, #tpu.memory_space<vmem>>, %arg14: memref<1x1x128xf32, #tpu.memory_space<vmem>>, %arg15: memref<1x128x64xbf16, #tpu.memory_space<vmem>>, %arg16: memref<1x1x64xf32, #tpu.memory_space<vmem>>, %arg17: memref<1x64xf32, #tpu.memory_space<vmem>>, %arg18: memref<1x64xf32, #tpu.memory_space<vmem>>, %arg19: memref<2x17x64xf32, #tpu.memory_space<vmem>>, %arg20: memref<34x64xf32, #tpu.memory_space<vmem>>) attributes {dimension_semantics = [#tpu.dimension_semantics<parallel>, #tpu.dimension_semantics<arbitrary>], iteration_bounds = array<i64: 1, 3>, scalar_prefetch = 0 : i64, scratch_operands = 1 : i64, tpu.core_type = #tpu.core_type<tc>, window_params = [{transform_indices = @transform_0, window_bounds = array<i64: 2, 16, 64>}, {pipeline_mode = #tpu.pipeline_mode<synchronous>, transform_indices = @transform_1, window_bounds = array<i64: 1, 1, 64>}, {pipeline_mode = #tpu.pipeline_mode<synchronous>, transform_indices = @transform_2, window_bounds = array<i64: 1, 17, 64>}, {transform_indices = @transform_3, window_bounds = array<i64: 1, 1, 64>}, {transform_indices = @transform_4, window_bounds = array<i64: 1, 1, 64>}, {transform_indices = @transform_5, window_bounds = array<i64: 1, 64, 192>}, {transform_indices = @transform_6, window_bounds = array<i64: 1, 1, 192>}, {transform_indices = @transform_7, window_bounds = array<i64: 1, 64, 64>}, {transform_indices = @transform_8, window_bounds = array<i64: 1, 1, 64>}, {transform_indices = @transform_9, window_bounds = array<i64: 1, 1, 64>}, {transform_indices = @transform_10, window_bounds = array<i64: 1, 1, 64>}, {transform_indices = @transform_11, window_bounds = array<i64: 1, 64, 128>}, {transform_indices = @transform_12, window_bounds = array<i64: 1, 1, 128>}, {transform_indices = @transform_13, window_bounds = array<i64: 1, 128, 64>}, {transform_indices = @transform_14, window_bounds = array<i64: 1, 1, 64>}, {pipeline_mode = #tpu.pipeline_mode<synchronous>, transform_indices = @transform_15, window_bounds = array<i64: 1, 64>}, {pipeline_mode = #tpu.pipeline_mode<synchronous>, transform_indices = @transform_16, window_bounds = array<i64: 1, 64>}, {transform_indices = @transform_17, window_bounds = array<i64: 2, 17, 64>}]} {
    %c0_i32 = arith.constant 0 : i32
    %0 = arith.cmpi eq, %arg1, %c0_i32 : i32
    %1 = arith.extui %0 : i1 to i32
    %c0_i32_0 = arith.constant 0 : i32
    %2 = arith.cmpi ne, %1, %c0_i32_0 : i32
    scf.if %2 {
      %c0_81 = arith.constant 0 : index
      %c0_82 = arith.constant 0 : index
      %c0_83 = arith.constant 0 : index
      %202 = vector.load %arg3[%c0_81, %c0_82, %c0_83] : memref<1x1x64xf32, #tpu.memory_space<vmem>>, vector<1x1x64xf32>
      %203 = vector.shape_cast %202 : vector<1x1x64xf32> to vector<1x1x64xf32>
      %204 = vector.broadcast %203 : vector<1x1x64xf32> to vector<2x1x64xf32>
      %c0_84 = arith.constant 0 : index
      %c0_85 = arith.constant 0 : index
      %c0_86 = arith.constant 0 : index
      %205 = vector.load %arg2[%c0_84, %c0_85, %c0_86] : memref<2x16x64xf32, #tpu.memory_space<vmem>>, vector<2x16x64xf32>
      %206 = tpu.concatenate %204, %205 in 1 : vector<2x1x64xf32>, vector<2x16x64xf32> -> vector<2x17x64xf32>
      %c0_87 = arith.constant 0 : index
      %c0_88 = arith.constant 0 : index
      %c0_89 = arith.constant 0 : index
      %207 = vector.load %arg4[%c0_87, %c0_88, %c0_89] : memref<1x17x64xf32, #tpu.memory_space<vmem>>, vector<1x17x64xf32>
      %208 = vector.broadcast %207 : vector<1x17x64xf32> to vector<2x17x64xf32>
      %209 = arith.addf %206, %208 : vector<2x17x64xf32>
      %c0_90 = arith.constant 0 : index
      %c0_91 = arith.constant 0 : index
      %c0_92 = arith.constant 0 : index
      %210 = vector.load %arg19[%c0_90, %c0_91, %c0_92] : memref<2x17x64xf32, #tpu.memory_space<vmem>>, vector<2x17x64xf32>
      tpu.vector_store %arg19[%c0_90, %c0_91, %c0_92], %209 {strides = array<i32>} : memref<2x17x64xf32, #tpu.memory_space<vmem>>, vector<2x17x64xf32>,
    } else {
    }
    %c0 = arith.constant 0 : index
    %c0_1 = arith.constant 0 : index
    %c0_2 = arith.constant 0 : index
    %3 = vector.load %arg19[%c0, %c0_1, %c0_2] : memref<2x17x64xf32, #tpu.memory_space<vmem>>, vector<2x17x64xf32>
    %4 = vector.shape_cast %3 : vector<2x17x64xf32> to vector<34x64xf32>
    %c0_3 = arith.constant 0 : index
    %c0_4 = arith.constant 0 : index
    %c0_5 = arith.constant 0 : index
    %5 = vector.load %arg5[%c0_3, %c0_4, %c0_5] : memref<1x1x64xf32, #tpu.memory_space<vmem>>, vector<1x1x64xf32>
    %6 = vector.shape_cast %5 : vector<1x1x64xf32> to vector<1x64xf32>
    %c0_6 = arith.constant 0 : index
    %c0_7 = arith.constant 0 : index
    %c0_8 = arith.constant 0 : index
    %7 = vector.load %arg6[%c0_6, %c0_7, %c0_8] : memref<1x1x64xf32, #tpu.memory_space<vmem>>, vector<1x1x64xf32>
    %8 = vector.shape_cast %7 : vector<1x1x64xf32> to vector<1x64xf32>
    %cst = arith.constant dense<0.000000e+00> : vector<34xf32>
    %9 = vector.multi_reduction <add>, %4, %cst [1] : vector<34x64xf32> to vector<34xf32>
    %10 = vector.shape_cast %9 : vector<34xf32> to vector<34x1xf32>
    %cst_9 = arith.constant 6.400000e+01 : f32
    %11 = vector.broadcast %cst_9 : f32 to vector<34x1xf32>
    %12 = arith.divf %10, %11 : vector<34x1xf32>
    %13 = vector.broadcast %12 : vector<34x1xf32> to vector<34x64xf32>
    %14 = arith.subf %4, %13 : vector<34x64xf32>
    %15 = arith.mulf %14, %14 : vector<34x64xf32>
    %cst_10 = arith.constant dense<0.000000e+00> : vector<34xf32>
    %16 = vector.multi_reduction <add>, %15, %cst_10 [1] : vector<34x64xf32> to vector<34xf32>
    %17 = vector.shape_cast %16 : vector<34xf32> to vector<34x1xf32>
    %cst_11 = arith.constant 6.400000e+01 : f32
    %18 = vector.broadcast %cst_11 : f32 to vector<34x1xf32>
    %19 = arith.divf %17, %18 : vector<34x1xf32>
    %20 = vector.broadcast %12 : vector<34x1xf32> to vector<34x64xf32>
    %21 = arith.subf %4, %20 : vector<34x64xf32>
    %cst_12 = arith.constant 9.99999996E-13 : f32
    %22 = vector.broadcast %cst_12 : f32 to vector<34x1xf32>
    %23 = arith.addf %19, %22 : vector<34x1xf32>
    %24 = math.rsqrt %23 : vector<34x1xf32>
    %25 = vector.broadcast %24 : vector<34x1xf32> to vector<34x64xf32>
    %26 = arith.mulf %21, %25 : vector<34x64xf32>
    %27 = vector.broadcast %6 : vector<1x64xf32> to vector<34x64xf32>
    %28 = arith.mulf %26, %27 : vector<34x64xf32>
    %29 = vector.broadcast %8 : vector<1x64xf32> to vector<34x64xf32>
    %30 = arith.addf %28, %29 : vector<34x64xf32>
    %31 = arith.truncf %30 : vector<34x64xf32> to vector<34x64xbf16>
    %c0_13 = arith.constant 0 : index
    %c0_14 = arith.constant 0 : index
    %c0_15 = arith.constant 0 : index
    %32 = vector.load %arg7[%c0_13, %c0_14, %c0_15] : memref<1x64x192xbf16, #tpu.memory_space<vmem>>, vector<1x64x192xbf16>
    %33 = vector.shape_cast %32 : vector<1x64x192xbf16> to vector<64x192xbf16>
    %cst_16 = arith.constant dense<0.000000e+00> : vector<34x192xf32>
    %34 = tpu.matmul %31, %33, %cst_16 {dimension_numbers = #tpu.dot_dimension_numbers<[1], [0], [0], [1], [0, 0, 1, 1], [], []>} : vector<34x64xbf16>, vector<64x192xbf16>, vector<34x192xf32> -> vector<34x192xf32>
    %c0_17 = arith.constant 0 : index
    %c0_18 = arith.constant 0 : index
    %c0_19 = arith.constant 0 : index
    %35 = vector.load %arg8[%c0_17, %c0_18, %c0_19] : memref<1x1x192xf32, #tpu.memory_space<vmem>>, vector<1x1x192xf32>
    %36 = vector.shape_cast %35 : vector<1x1x192xf32> to vector<1x192xf32>
    %37 = vector.broadcast %36 : vector<1x192xf32> to vector<34x192xf32>
    %38 = arith.addf %34, %37 : vector<34x192xf32>
    %39 = vector.extract_strided_slice %38 {offsets = [0, 0], sizes = [34, 16], strides = [1, 1]} : vector<34x192xf32> to vector<34x16xf32>
    %40 = vector.shape_cast %39 : vector<34x16xf32> to vector<2x17x16xf32>
    %41 = arith.truncf %40 : vector<2x17x16xf32> to vector<2x17x16xbf16>
    %42 = vector.extract_strided_slice %38 {offsets = [0, 64], sizes = [34, 16], strides = [1, 1]} : vector<34x192xf32> to vector<34x16xf32>
    %43 = vector.shape_cast %42 : vector<34x16xf32> to vector<2x17x16xf32>
    %44 = arith.truncf %43 : vector<2x17x16xf32> to vector<2x17x16xbf16>
    %45 = vector.extract_strided_slice %38 {offsets = [0, 128], sizes = [34, 16], strides = [1, 1]} : vector<34x192xf32> to vector<34x16xf32>
    %46 = vector.shape_cast %45 : vector<34x16xf32> to vector<2x17x16xf32>
    %47 = arith.truncf %46 : vector<2x17x16xf32> to vector<2x17x16xbf16>
    "tpu.trace_start"() <{level = 10 : i32, message = "bqd,bkd->bqk"}> : () -> ()
    %cst_20 = arith.constant dense<0.000000e+00> : vector<2x17x17xf32>
    %48 = tpu.matmul %41, %44, %cst_20 {dimension_numbers = #tpu.dot_dimension_numbers<[2], [2], [1], [1], [0, 0, 0, 1, 1, 1], [0], [0]>} : vector<2x17x16xbf16>, vector<2x17x16xbf16>, vector<2x17x17xf32> -> vector<2x17x17xf32>
    "tpu.trace_stop"() : () -> ()
    %cst_21 = arith.constant dense<0xFF800000> : vector<2x17xf32>
    %49 = vector.multi_reduction <maximumf>, %48, %cst_21 [2] : vector<2x17x17xf32> to vector<2x17xf32>
    %50 = vector.shape_cast %49 : vector<2x17xf32> to vector<2x17x1xf32>
    %51 = vector.broadcast %50 : vector<2x17x1xf32> to vector<2x17x17xf32>
    %52 = arith.subf %48, %51 : vector<2x17x17xf32>
    %53 = math.exp %52 : vector<2x17x17xf32>
    %cst_22 = arith.constant dense<0.000000e+00> : vector<2x17xf32>
    %54 = vector.multi_reduction <add>, %53, %cst_22 [2] : vector<2x17x17xf32> to vector<2x17xf32>
    %55 = vector.shape_cast %54 : vector<2x17xf32> to vector<2x17x1xf32>
    %56 = tpu.reciprocal %55 {approx = true} : vector<2x17x1xf32> -> vector<2x17x1xf32>
    %57 = vector.broadcast %56 : vector<2x17x1xf32> to vector<2x17x17xf32>
    %58 = arith.mulf %53, %57 : vector<2x17x17xf32>
    %59 = arith.truncf %58 : vector<2x17x17xf32> to vector<2x17x17xbf16>
    "tpu.trace_start"() <{level = 10 : i32, message = "bqk,bkd->bqd"}> : () -> ()
    %cst_23 = arith.constant dense<0.000000e+00> : vector<2x17x16xf32>
    %60 = tpu.matmul %59, %47, %cst_23 {dimension_numbers = #tpu.dot_dimension_numbers<[2], [1], [1], [2], [0, 0, 0, 1, 1, 2], [0], [0]>} : vector<2x17x17xbf16>, vector<2x17x16xbf16>, vector<2x17x16xf32> -> vector<2x17x16xf32>
    "tpu.trace_stop"() : () -> ()
    %61 = vector.shape_cast %60 : vector<2x17x16xf32> to vector<34x16xf32>
    %c0_24 = arith.constant 0 : index
    %c0_25 = arith.constant 0 : index
    %62 = vector.load %arg20[%c0_24, %c0_25] : memref<34x64xf32, #tpu.memory_space<vmem>>, vector<34x16xf32>
    tpu.vector_store %arg20[%c0_24, %c0_25], %61 {strides = array<i32>} : memref<34x64xf32, #tpu.memory_space<vmem>>, vector<34x16xf32>,
    %63 = vector.extract_strided_slice %38 {offsets = [0, 16], sizes = [34, 16], strides = [1, 1]} : vector<34x192xf32> to vector<34x16xf32>
    %64 = vector.shape_cast %63 : vector<34x16xf32> to vector<2x17x16xf32>
    %65 = arith.truncf %64 : vector<2x17x16xf32> to vector<2x17x16xbf16>
    %66 = vector.extract_strided_slice %38 {offsets = [0, 80], sizes = [34, 16], strides = [1, 1]} : vector<34x192xf32> to vector<34x16xf32>
    %67 = vector.shape_cast %66 : vector<34x16xf32> to vector<2x17x16xf32>
    %68 = arith.truncf %67 : vector<2x17x16xf32> to vector<2x17x16xbf16>
    %69 = vector.extract_strided_slice %38 {offsets = [0, 144], sizes = [34, 16], strides = [1, 1]} : vector<34x192xf32> to vector<34x16xf32>
    %70 = vector.shape_cast %69 : vector<34x16xf32> to vector<2x17x16xf32>
    %71 = arith.truncf %70 : vector<2x17x16xf32> to vector<2x17x16xbf16>
    "tpu.trace_start"() <{level = 10 : i32, message = "bqd,bkd->bqk"}> : () -> ()
    %cst_26 = arith.constant dense<0.000000e+00> : vector<2x17x17xf32>
    %72 = tpu.matmul %65, %68, %cst_26 {dimension_numbers = #tpu.dot_dimension_numbers<[2], [2], [1], [1], [0, 0, 0, 1, 1, 1], [0], [0]>} : vector<2x17x16xbf16>, vector<2x17x16xbf16>, vector<2x17x17xf32> -> vector<2x17x17xf32>
    "tpu.trace_stop"() : () -> ()
    %cst_27 = arith.constant dense<0xFF800000> : vector<2x17xf32>
    %73 = vector.multi_reduction <maximumf>, %72, %cst_27 [2] : vector<2x17x17xf32> to vector<2x17xf32>
    %74 = vector.shape_cast %73 : vector<2x17xf32> to vector<2x17x1xf32>
    %75 = vector.broadcast %74 : vector<2x17x1xf32> to vector<2x17x17xf32>
    %76 = arith.subf %72, %75 : vector<2x17x17xf32>
    %77 = math.exp %76 : vector<2x17x17xf32>
    %cst_28 = arith.constant dense<0.000000e+00> : vector<2x17xf32>
    %78 = vector.multi_reduction <add>, %77, %cst_28 [2] : vector<2x17x17xf32> to vector<2x17xf32>
    %79 = vector.shape_cast %78 : vector<2x17xf32> to vector<2x17x1xf32>
    %80 = tpu.reciprocal %79 {approx = true} : vector<2x17x1xf32> -> vector<2x17x1xf32>
    %81 = vector.broadcast %80 : vector<2x17x1xf32> to vector<2x17x17xf32>
    %82 = arith.mulf %77, %81 : vector<2x17x17xf32>
    %83 = arith.truncf %82 : vector<2x17x17xf32> to vector<2x17x17xbf16>
    "tpu.trace_start"() <{level = 10 : i32, message = "bqk,bkd->bqd"}> : () -> ()
    %cst_29 = arith.constant dense<0.000000e+00> : vector<2x17x16xf32>
    %84 = tpu.matmul %83, %71, %cst_29 {dimension_numbers = #tpu.dot_dimension_numbers<[2], [1], [1], [2], [0, 0, 0, 1, 1, 2], [0], [0]>} : vector<2x17x17xbf16>, vector<2x17x16xbf16>, vector<2x17x16xf32> -> vector<2x17x16xf32>
    "tpu.trace_stop"() : () -> ()
    %85 = vector.shape_cast %84 : vector<2x17x16xf32> to vector<34x16xf32>
    %c0_30 = arith.constant 0 : index
    %c16 = arith.constant 16 : index
    %86 = vector.load %arg20[%c0_30, %c16] : memref<34x64xf32, #tpu.memory_space<vmem>>, vector<34x16xf32>
    tpu.vector_store %arg20[%c0_30, %c16], %85 {strides = array<i32>} : memref<34x64xf32, #tpu.memory_space<vmem>>, vector<34x16xf32>,
    %87 = vector.extract_strided_slice %38 {offsets = [0, 32], sizes = [34, 16], strides = [1, 1]} : vector<34x192xf32> to vector<34x16xf32>
    %88 = vector.shape_cast %87 : vector<34x16xf32> to vector<2x17x16xf32>
    %89 = arith.truncf %88 : vector<2x17x16xf32> to vector<2x17x16xbf16>
    %90 = vector.extract_strided_slice %38 {offsets = [0, 96], sizes = [34, 16], strides = [1, 1]} : vector<34x192xf32> to vector<34x16xf32>
    %91 = vector.shape_cast %90 : vector<34x16xf32> to vector<2x17x16xf32>
    %92 = arith.truncf %91 : vector<2x17x16xf32> to vector<2x17x16xbf16>
    %93 = vector.extract_strided_slice %38 {offsets = [0, 160], sizes = [34, 16], strides = [1, 1]} : vector<34x192xf32> to vector<34x16xf32>
    %94 = vector.shape_cast %93 : vector<34x16xf32> to vector<2x17x16xf32>
    %95 = arith.truncf %94 : vector<2x17x16xf32> to vector<2x17x16xbf16>
    "tpu.trace_start"() <{level = 10 : i32, message = "bqd,bkd->bqk"}> : () -> ()
    %cst_31 = arith.constant dense<0.000000e+00> : vector<2x17x17xf32>
    %96 = tpu.matmul %89, %92, %cst_31 {dimension_numbers = #tpu.dot_dimension_numbers<[2], [2], [1], [1], [0, 0, 0, 1, 1, 1], [0], [0]>} : vector<2x17x16xbf16>, vector<2x17x16xbf16>, vector<2x17x17xf32> -> vector<2x17x17xf32>
    "tpu.trace_stop"() : () -> ()
    %cst_32 = arith.constant dense<0xFF800000> : vector<2x17xf32>
    %97 = vector.multi_reduction <maximumf>, %96, %cst_32 [2] : vector<2x17x17xf32> to vector<2x17xf32>
    %98 = vector.shape_cast %97 : vector<2x17xf32> to vector<2x17x1xf32>
    %99 = vector.broadcast %98 : vector<2x17x1xf32> to vector<2x17x17xf32>
    %100 = arith.subf %96, %99 : vector<2x17x17xf32>
    %101 = math.exp %100 : vector<2x17x17xf32>
    %cst_33 = arith.constant dense<0.000000e+00> : vector<2x17xf32>
    %102 = vector.multi_reduction <add>, %101, %cst_33 [2] : vector<2x17x17xf32> to vector<2x17xf32>
    %103 = vector.shape_cast %102 : vector<2x17xf32> to vector<2x17x1xf32>
    %104 = tpu.reciprocal %103 {approx = true} : vector<2x17x1xf32> -> vector<2x17x1xf32>
    %105 = vector.broadcast %104 : vector<2x17x1xf32> to vector<2x17x17xf32>
    %106 = arith.mulf %101, %105 : vector<2x17x17xf32>
    %107 = arith.truncf %106 : vector<2x17x17xf32> to vector<2x17x17xbf16>
    "tpu.trace_start"() <{level = 10 : i32, message = "bqk,bkd->bqd"}> : () -> ()
    %cst_34 = arith.constant dense<0.000000e+00> : vector<2x17x16xf32>
    %108 = tpu.matmul %107, %95, %cst_34 {dimension_numbers = #tpu.dot_dimension_numbers<[2], [1], [1], [2], [0, 0, 0, 1, 1, 2], [0], [0]>} : vector<2x17x17xbf16>, vector<2x17x16xbf16>, vector<2x17x16xf32> -> vector<2x17x16xf32>
    "tpu.trace_stop"() : () -> ()
    %109 = vector.shape_cast %108 : vector<2x17x16xf32> to vector<34x16xf32>
    %c0_35 = arith.constant 0 : index
    %c32 = arith.constant 32 : index
    %110 = vector.load %arg20[%c0_35, %c32] : memref<34x64xf32, #tpu.memory_space<vmem>>, vector<34x16xf32>
    tpu.vector_store %arg20[%c0_35, %c32], %109 {strides = array<i32>} : memref<34x64xf32, #tpu.memory_space<vmem>>, vector<34x16xf32>,
    %111 = vector.extract_strided_slice %38 {offsets = [0, 48], sizes = [34, 16], strides = [1, 1]} : vector<34x192xf32> to vector<34x16xf32>
    %112 = vector.shape_cast %111 : vector<34x16xf32> to vector<2x17x16xf32>
    %113 = arith.truncf %112 : vector<2x17x16xf32> to vector<2x17x16xbf16>
    %114 = vector.extract_strided_slice %38 {offsets = [0, 112], sizes = [34, 16], strides = [1, 1]} : vector<34x192xf32> to vector<34x16xf32>
    %115 = vector.shape_cast %114 : vector<34x16xf32> to vector<2x17x16xf32>
    %116 = arith.truncf %115 : vector<2x17x16xf32> to vector<2x17x16xbf16>
    %117 = vector.extract_strided_slice %38 {offsets = [0, 176], sizes = [34, 16], strides = [1, 1]} : vector<34x192xf32> to vector<34x16xf32>
    %118 = vector.shape_cast %117 : vector<34x16xf32> to vector<2x17x16xf32>
    %119 = arith.truncf %118 : vector<2x17x16xf32> to vector<2x17x16xbf16>
    "tpu.trace_start"() <{level = 10 : i32, message = "bqd,bkd->bqk"}> : () -> ()
    %cst_36 = arith.constant dense<0.000000e+00> : vector<2x17x17xf32>
    %120 = tpu.matmul %113, %116, %cst_36 {dimension_numbers = #tpu.dot_dimension_numbers<[2], [2], [1], [1], [0, 0, 0, 1, 1, 1], [0], [0]>} : vector<2x17x16xbf16>, vector<2x17x16xbf16>, vector<2x17x17xf32> -> vector<2x17x17xf32>
    "tpu.trace_stop"() : () -> ()
    %cst_37 = arith.constant dense<0xFF800000> : vector<2x17xf32>
    %121 = vector.multi_reduction <maximumf>, %120, %cst_37 [2] : vector<2x17x17xf32> to vector<2x17xf32>
    %122 = vector.shape_cast %121 : vector<2x17xf32> to vector<2x17x1xf32>
    %123 = vector.broadcast %122 : vector<2x17x1xf32> to vector<2x17x17xf32>
    %124 = arith.subf %120, %123 : vector<2x17x17xf32>
    %125 = math.exp %124 : vector<2x17x17xf32>
    %cst_38 = arith.constant dense<0.000000e+00> : vector<2x17xf32>
    %126 = vector.multi_reduction <add>, %125, %cst_38 [2] : vector<2x17x17xf32> to vector<2x17xf32>
    %127 = vector.shape_cast %126 : vector<2x17xf32> to vector<2x17x1xf32>
    %128 = tpu.reciprocal %127 {approx = true} : vector<2x17x1xf32> -> vector<2x17x1xf32>
    %129 = vector.broadcast %128 : vector<2x17x1xf32> to vector<2x17x17xf32>
    %130 = arith.mulf %125, %129 : vector<2x17x17xf32>
    %131 = arith.truncf %130 : vector<2x17x17xf32> to vector<2x17x17xbf16>
    "tpu.trace_start"() <{level = 10 : i32, message = "bqk,bkd->bqd"}> : () -> ()
    %cst_39 = arith.constant dense<0.000000e+00> : vector<2x17x16xf32>
    %132 = tpu.matmul %131, %119, %cst_39 {dimension_numbers = #tpu.dot_dimension_numbers<[2], [1], [1], [2], [0, 0, 0, 1, 1, 2], [0], [0]>} : vector<2x17x17xbf16>, vector<2x17x16xbf16>, vector<2x17x16xf32> -> vector<2x17x16xf32>
    "tpu.trace_stop"() : () -> ()
    %133 = vector.shape_cast %132 : vector<2x17x16xf32> to vector<34x16xf32>
    %c0_40 = arith.constant 0 : index
    %c48 = arith.constant 48 : index
    %134 = vector.load %arg20[%c0_40, %c48] : memref<34x64xf32, #tpu.memory_space<vmem>>, vector<34x16xf32>
    tpu.vector_store %arg20[%c0_40, %c48], %133 {strides = array<i32>} : memref<34x64xf32, #tpu.memory_space<vmem>>, vector<34x16xf32>,
    %c0_41 = arith.constant 0 : index
    %c0_42 = arith.constant 0 : index
    %135 = vector.load %arg20[%c0_41, %c0_42] : memref<34x64xf32, #tpu.memory_space<vmem>>, vector<34x64xf32>
    %136 = arith.truncf %135 : vector<34x64xf32> to vector<34x64xbf16>
    %c0_43 = arith.constant 0 : index
    %c0_44 = arith.constant 0 : index
    %c0_45 = arith.constant 0 : index
    %137 = vector.load %arg9[%c0_43, %c0_44, %c0_45] : memref<1x64x64xbf16, #tpu.memory_space<vmem>>, vector<1x64x64xbf16>
    %138 = vector.shape_cast %137 : vector<1x64x64xbf16> to vector<64x64xbf16>
    %cst_46 = arith.constant dense<0.000000e+00> : vector<34x64xf32>
    %139 = tpu.matmul %136, %138, %cst_46 {dimension_numbers = #tpu.dot_dimension_numbers<[1], [0], [0], [1], [0, 0, 1, 1], [], []>} : vector<34x64xbf16>, vector<64x64xbf16>, vector<34x64xf32> -> vector<34x64xf32>
    %c0_47 = arith.constant 0 : index
    %c0_48 = arith.constant 0 : index
    %c0_49 = arith.constant 0 : index
    %140 = vector.load %arg10[%c0_47, %c0_48, %c0_49] : memref<1x1x64xf32, #tpu.memory_space<vmem>>, vector<1x1x64xf32>
    %141 = vector.shape_cast %140 : vector<1x1x64xf32> to vector<1x64xf32>
    %142 = vector.broadcast %141 : vector<1x64xf32> to vector<34x64xf32>
    %143 = arith.addf %139, %142 : vector<34x64xf32>
    %144 = arith.addf %4, %143 : vector<34x64xf32>
    %c0_50 = arith.constant 0 : index
    %c0_51 = arith.constant 0 : index
    %c0_52 = arith.constant 0 : index
    %145 = vector.load %arg11[%c0_50, %c0_51, %c0_52] : memref<1x1x64xf32, #tpu.memory_space<vmem>>, vector<1x1x64xf32>
    %146 = vector.shape_cast %145 : vector<1x1x64xf32> to vector<1x64xf32>
    %c0_53 = arith.constant 0 : index
    %c0_54 = arith.constant 0 : index
    %c0_55 = arith.constant 0 : index
    %147 = vector.load %arg12[%c0_53, %c0_54, %c0_55] : memref<1x1x64xf32, #tpu.memory_space<vmem>>, vector<1x1x64xf32>
    %148 = vector.shape_cast %147 : vector<1x1x64xf32> to vector<1x64xf32>
    %cst_56 = arith.constant dense<0.000000e+00> : vector<34xf32>
    %149 = vector.multi_reduction <add>, %144, %cst_56 [1] : vector<34x64xf32> to vector<34xf32>
    %150 = vector.shape_cast %149 : vector<34xf32> to vector<34x1xf32>
    %cst_57 = arith.constant 6.400000e+01 : f32
    %151 = vector.broadcast %cst_57 : f32 to vector<34x1xf32>
    %152 = arith.divf %150, %151 : vector<34x1xf32>
    %153 = vector.broadcast %152 : vector<34x1xf32> to vector<34x64xf32>
    %154 = arith.subf %144, %153 : vector<34x64xf32>
    %155 = arith.mulf %154, %154 : vector<34x64xf32>
    %cst_58 = arith.constant dense<0.000000e+00> : vector<34xf32>
    %156 = vector.multi_reduction <add>, %155, %cst_58 [1] : vector<34x64xf32> to vector<34xf32>
    %157 = vector.shape_cast %156 : vector<34xf32> to vector<34x1xf32>
    %cst_59 = arith.constant 6.400000e+01 : f32
    %158 = vector.broadcast %cst_59 : f32 to vector<34x1xf32>
    %159 = arith.divf %157, %158 : vector<34x1xf32>
    %160 = vector.broadcast %152 : vector<34x1xf32> to vector<34x64xf32>
    %161 = arith.subf %144, %160 : vector<34x64xf32>
    %cst_60 = arith.constant 9.99999996E-13 : f32
    %162 = vector.broadcast %cst_60 : f32 to vector<34x1xf32>
    %163 = arith.addf %159, %162 : vector<34x1xf32>
    %164 = math.rsqrt %163 : vector<34x1xf32>
    %165 = vector.broadcast %164 : vector<34x1xf32> to vector<34x64xf32>
    %166 = arith.mulf %161, %165 : vector<34x64xf32>
    %167 = vector.broadcast %146 : vector<1x64xf32> to vector<34x64xf32>
    %168 = arith.mulf %166, %167 : vector<34x64xf32>
    %169 = vector.broadcast %148 : vector<1x64xf32> to vector<34x64xf32>
    %170 = arith.addf %168, %169 : vector<34x64xf32>
    %171 = arith.truncf %170 : vector<34x64xf32> to vector<34x64xbf16>
    %c0_61 = arith.constant 0 : index
    %c0_62 = arith.constant 0 : index
    %c0_63 = arith.constant 0 : index
    %172 = vector.load %arg13[%c0_61, %c0_62, %c0_63] : memref<1x64x128xbf16, #tpu.memory_space<vmem>>, vector<1x64x128xbf16>
    %173 = vector.shape_cast %172 : vector<1x64x128xbf16> to vector<64x128xbf16>
    %cst_64 = arith.constant dense<0.000000e+00> : vector<34x128xf32>
    %174 = tpu.matmul %171, %173, %cst_64 {dimension_numbers = #tpu.dot_dimension_numbers<[1], [0], [0], [1], [0, 0, 1, 1], [], []>} : vector<34x64xbf16>, vector<64x128xbf16>, vector<34x128xf32> -> vector<34x128xf32>
    %c0_65 = arith.constant 0 : index
    %c0_66 = arith.constant 0 : index
    %c0_67 = arith.constant 0 : index
    %175 = vector.load %arg14[%c0_65, %c0_66, %c0_67] : memref<1x1x128xf32, #tpu.memory_space<vmem>>, vector<1x1x128xf32>
    %176 = vector.shape_cast %175 : vector<1x1x128xf32> to vector<1x128xf32>
    %177 = vector.broadcast %176 : vector<1x128xf32> to vector<34x128xf32>
    %178 = arith.addf %174, %177 : vector<34x128xf32>
    %cst_68 = arith.constant 5.000000e-01 : f32
    %179 = vector.broadcast %cst_68 : f32 to vector<34x128xf32>
    %180 = arith.mulf %179, %178 : vector<34x128xf32>
    %cst_69 = arith.constant 0.707106769 : f32
    %181 = vector.broadcast %cst_69 : f32 to vector<34x128xf32>
    %182 = arith.mulf %178, %181 : vector<34x128xf32>
    %183 = math.erf %182 : vector<34x128xf32>
    %cst_70 = arith.constant 1.000000e+00 : f32
    %184 = vector.broadcast %cst_70 : f32 to vector<34x128xf32>
    %185 = arith.addf %184, %183 : vector<34x128xf32>
    %186 = arith.mulf %180, %185 : vector<34x128xf32>
    %187 = arith.truncf %186 : vector<34x128xf32> to vector<34x128xbf16>
    %c0_71 = arith.constant 0 : index
    %c0_72 = arith.constant 0 : index
    %c0_73 = arith.constant 0 : index
    %188 = vector.load %arg15[%c0_71, %c0_72, %c0_73] : memref<1x128x64xbf16, #tpu.memory_space<vmem>>, vector<1x128x64xbf16>
    %189 = vector.shape_cast %188 : vector<1x128x64xbf16> to vector<128x64xbf16>
    %cst_74 = arith.constant dense<0.000000e+00> : vector<34x64xf32>
    %190 = tpu.matmul %187, %189, %cst_74 {dimension_numbers = #tpu.dot_dimension_numbers<[1], [0], [0], [1], [0, 0, 1, 1], [], []>} : vector<34x128xbf16>, vector<128x64xbf16>, vector<34x64xf32> -> vector<34x64xf32>
    %c0_75 = arith.constant 0 : index
    %c0_76 = arith.constant 0 : index
    %c0_77 = arith.constant 0 : index
    %191 = vector.load %arg16[%c0_75, %c0_76, %c0_77] : memref<1x1x64xf32, #tpu.memory_space<vmem>>, vector<1x1x64xf32>
    %192 = vector.shape_cast %191 : vector<1x1x64xf32> to vector<1x64xf32>
    %193 = vector.broadcast %192 : vector<1x64xf32> to vector<34x64xf32>
    %194 = arith.addf %190, %193 : vector<34x64xf32>
    %195 = arith.addf %144, %194 : vector<34x64xf32>
    %c2_i32 = arith.constant 2 : i32
    %196 = arith.cmpi slt, %arg1, %c2_i32 : i32
    %197 = arith.extui %196 : i1 to i32
    %c0_i32_78 = arith.constant 0 : i32
    %198 = arith.cmpi ne, %197, %c0_i32_78 : i32
    scf.if %198 {
      %202 = vector.shape_cast %195 : vector<34x64xf32> to vector<2x17x64xf32>
      %c0_81 = arith.constant 0 : index
      %c0_82 = arith.constant 0 : index
      %c0_83 = arith.constant 0 : index
      %203 = vector.load %arg19[%c0_81, %c0_82, %c0_83] : memref<2x17x64xf32, #tpu.memory_space<vmem>>, vector<2x17x64xf32>
      tpu.vector_store %arg19[%c0_81, %c0_82, %c0_83], %202 {strides = array<i32>} : memref<2x17x64xf32, #tpu.memory_space<vmem>>, vector<2x17x64xf32>,
    } else {
    }
    %c2_i32_79 = arith.constant 2 : i32
    %199 = arith.cmpi eq, %arg1, %c2_i32_79 : i32
    %200 = arith.extui %199 : i1 to i32
    %c0_i32_80 = arith.constant 0 : i32
    %201 = arith.cmpi ne, %200, %c0_i32_80 : i32
    scf.if %201 {
      %c0_81 = arith.constant 0 : index
      %c0_82 = arith.constant 0 : index
      %202 = vector.load %arg17[%c0_81, %c0_82] : memref<1x64xf32, #tpu.memory_space<vmem>>, vector<1x64xf32>
      %c0_83 = arith.constant 0 : index
      %c0_84 = arith.constant 0 : index
      %203 = vector.load %arg18[%c0_83, %c0_84] : memref<1x64xf32, #tpu.memory_space<vmem>>, vector<1x64xf32>
      %cst_85 = arith.constant dense<0.000000e+00> : vector<34xf32>
      %204 = vector.multi_reduction <add>, %195, %cst_85 [1] : vector<34x64xf32> to vector<34xf32>
      %205 = vector.shape_cast %204 : vector<34xf32> to vector<34x1xf32>
      %cst_86 = arith.constant 6.400000e+01 : f32
      %206 = vector.broadcast %cst_86 : f32 to vector<34x1xf32>
      %207 = arith.divf %205, %206 : vector<34x1xf32>
      %208 = vector.broadcast %207 : vector<34x1xf32> to vector<34x64xf32>
      %209 = arith.subf %195, %208 : vector<34x64xf32>
      %210 = arith.mulf %209, %209 : vector<34x64xf32>
      %cst_87 = arith.constant dense<0.000000e+00> : vector<34xf32>
      %211 = vector.multi_reduction <add>, %210, %cst_87 [1] : vector<34x64xf32> to vector<34xf32>
      %212 = vector.shape_cast %211 : vector<34xf32> to vector<34x1xf32>
      %cst_88 = arith.constant 6.400000e+01 : f32
      %213 = vector.broadcast %cst_88 : f32 to vector<34x1xf32>
      %214 = arith.divf %212, %213 : vector<34x1xf32>
      %215 = vector.broadcast %207 : vector<34x1xf32> to vector<34x64xf32>
      %216 = arith.subf %195, %215 : vector<34x64xf32>
      %cst_89 = arith.constant 9.99999996E-13 : f32
      %217 = vector.broadcast %cst_89 : f32 to vector<34x1xf32>
      %218 = arith.addf %214, %217 : vector<34x1xf32>
      %219 = math.rsqrt %218 : vector<34x1xf32>
      %220 = vector.broadcast %219 : vector<34x1xf32> to vector<34x64xf32>
      %221 = arith.mulf %216, %220 : vector<34x64xf32>
      %222 = vector.broadcast %202 : vector<1x64xf32> to vector<34x64xf32>
      %223 = arith.mulf %221, %222 : vector<34x64xf32>
      %224 = vector.broadcast %203 : vector<1x64xf32> to vector<34x64xf32>
      %225 = arith.addf %223, %224 : vector<34x64xf32>
      %226 = vector.shape_cast %225 : vector<34x64xf32> to vector<2x17x64xf32>
      %c0_90 = arith.constant 0 : index
      %c0_91 = arith.constant 0 : index
      %c0_92 = arith.constant 0 : index
      %227 = vector.load %arg19[%c0_90, %c0_91, %c0_92] : memref<2x17x64xf32, #tpu.memory_space<vmem>>, vector<2x17x64xf32>
      tpu.vector_store %arg19[%c0_90, %c0_91, %c0_92], %226 {strides = array<i32>} : memref<2x17x64xf32, #tpu.memory_space<vmem>>, vector<2x17x64xf32>,
    } else {
    }
    return
  }
  func.func @transform_0(%arg0: i32, %arg1: i32) -> (i32, i32, i32) {
    %c0_i32 = arith.constant 0 : i32
    %c0_i32_0 = arith.constant 0 : i32
    %c0_i32_1 = arith.constant 0 : i32
    return %arg0, %c0_i32, %c0_i32_0 : i32, i32, i32
  }
  func.func @transform_1(%arg0: i32, %arg1: i32) -> (i32, i32, i32) {
    %c0_i32 = arith.constant 0 : i32
    %c0_i32_0 = arith.constant 0 : i32
    %c0_i32_1 = arith.constant 0 : i32
    %c0_i32_2 = arith.constant 0 : i32
    return %c0_i32, %c0_i32_0, %c0_i32_1 : i32, i32, i32
  }
  func.func @transform_2(%arg0: i32, %arg1: i32) -> (i32, i32, i32) {
    %c0_i32 = arith.constant 0 : i32
    %c0_i32_0 = arith.constant 0 : i32
    %c0_i32_1 = arith.constant 0 : i32
    %c0_i32_2 = arith.constant 0 : i32
    return %c0_i32, %c0_i32_0, %c0_i32_1 : i32, i32, i32
  }
  func.func @transform_3(%arg0: i32, %arg1: i32) -> (i32, i32, i32) {
    %c0_i32 = arith.constant 0 : i32
    %c0_i32_0 = arith.constant 0 : i32
    %c0_i32_1 = arith.constant 0 : i32
    return %arg1, %c0_i32, %c0_i32_0 : i32, i32, i32
  }
  func.func @transform_4(%arg0: i32, %arg1: i32) -> (i32, i32, i32) {
    %c0_i32 = arith.constant 0 : i32
    %c0_i32_0 = arith.constant 0 : i32
    %c0_i32_1 = arith.constant 0 : i32
    return %arg1, %c0_i32, %c0_i32_0 : i32, i32, i32
  }
  func.func @transform_5(%arg0: i32, %arg1: i32) -> (i32, i32, i32) {
    %c0_i32 = arith.constant 0 : i32
    %c0_i32_0 = arith.constant 0 : i32
    %c0_i32_1 = arith.constant 0 : i32
    return %arg1, %c0_i32, %c0_i32_0 : i32, i32, i32
  }
  func.func @transform_6(%arg0: i32, %arg1: i32) -> (i32, i32, i32) {
    %c0_i32 = arith.constant 0 : i32
    %c0_i32_0 = arith.constant 0 : i32
    %c0_i32_1 = arith.constant 0 : i32
    return %arg1, %c0_i32, %c0_i32_0 : i32, i32, i32
  }
  func.func @transform_7(%arg0: i32, %arg1: i32) -> (i32, i32, i32) {
    %c0_i32 = arith.constant 0 : i32
    %c0_i32_0 = arith.constant 0 : i32
    %c0_i32_1 = arith.constant 0 : i32
    return %arg1, %c0_i32, %c0_i32_0 : i32, i32, i32
  }
  func.func @transform_8(%arg0: i32, %arg1: i32) -> (i32, i32, i32) {
    %c0_i32 = arith.constant 0 : i32
    %c0_i32_0 = arith.constant 0 : i32
    %c0_i32_1 = arith.constant 0 : i32
    return %arg1, %c0_i32, %c0_i32_0 : i32, i32, i32
  }
  func.func @transform_9(%arg0: i32, %arg1: i32) -> (i32, i32, i32) {
    %c0_i32 = arith.constant 0 : i32
    %c0_i32_0 = arith.constant 0 : i32
    %c0_i32_1 = arith.constant 0 : i32
    return %arg1, %c0_i32, %c0_i32_0 : i32, i32, i32
  }
  func.func @transform_10(%arg0: i32, %arg1: i32) -> (i32, i32, i32) {
    %c0_i32 = arith.constant 0 : i32
    %c0_i32_0 = arith.constant 0 : i32
    %c0_i32_1 = arith.constant 0 : i32
    return %arg1, %c0_i32, %c0_i32_0 : i32, i32, i32
  }
  func.func @transform_11(%arg0: i32, %arg1: i32) -> (i32, i32, i32) {
    %c0_i32 = arith.constant 0 : i32
    %c0_i32_0 = arith.constant 0 : i32
    %c0_i32_1 = arith.constant 0 : i32
    return %arg1, %c0_i32, %c0_i32_0 : i32, i32, i32
  }
  func.func @transform_12(%arg0: i32, %arg1: i32) -> (i32, i32, i32) {
    %c0_i32 = arith.constant 0 : i32
    %c0_i32_0 = arith.constant 0 : i32
    %c0_i32_1 = arith.constant 0 : i32
    return %arg1, %c0_i32, %c0_i32_0 : i32, i32, i32
  }
  func.func @transform_13(%arg0: i32, %arg1: i32) -> (i32, i32, i32) {
    %c0_i32 = arith.constant 0 : i32
    %c0_i32_0 = arith.constant 0 : i32
    %c0_i32_1 = arith.constant 0 : i32
    return %arg1, %c0_i32, %c0_i32_0 : i32, i32, i32
  }
  func.func @transform_14(%arg0: i32, %arg1: i32) -> (i32, i32, i32) {
    %c0_i32 = arith.constant 0 : i32
    %c0_i32_0 = arith.constant 0 : i32
    %c0_i32_1 = arith.constant 0 : i32
    return %arg1, %c0_i32, %c0_i32_0 : i32, i32, i32
  }
  func.func @transform_15(%arg0: i32, %arg1: i32) -> (i32, i32) {
    %c0_i32 = arith.constant 0 : i32
    %c0_i32_0 = arith.constant 0 : i32
    %c0_i32_1 = arith.constant 0 : i32
    return %c0_i32, %c0_i32_0 : i32, i32
  }
  func.func @transform_16(%arg0: i32, %arg1: i32) -> (i32, i32) {
    %c0_i32 = arith.constant 0 : i32
    %c0_i32_0 = arith.constant 0 : i32
    %c0_i32_1 = arith.constant 0 : i32
    return %c0_i32, %c0_i32_0 : i32, i32
  }
  func.func @transform_17(%arg0: i32, %arg1: i32) -> (i32, i32, i32) {
    %c0_i32 = arith.constant 0 : i32
    %c0_i32_0 = arith.constant 0 : i32
    %c0_i32_1 = arith.constant 0 : i32
    return %arg0, %c0_i32, %c0_i32_0 : i32, i32, i32
  }
}

</mosaic_0001>

<llo_original>
// kernel: mul.11
$region0: #{mul.11}
  %s0 = inlined_call_operand.vmem [shape: f32[3,64], index: 0, kind: input, shape index: {}]
  %s1 = inlined_call_operand.vmem [shape: f32[192], index: 1, kind: output, shape index: {}]
  $region1: #{mul.11} parent=0
    #allocation0 [shape = 'u8[4096]{0}', space=vmem, size = 0x1000, scoped, tag = 'scoped mem for output reshape']
    #allocation1 [shape = 'u8[4096]{0}', space=vmem, size = 0x1000, scoped, tag = 'scoped mem for input reshape']
    %s3 = sshllo.u32 0, 4
    %v4 = vld [vmem:[%s0] sm:%s3]
    %5 = vst [vmem:[#allocation1] sm:%s3] %v4
    %s6 = smov 3
    %v7 = vld [vmem:[#allocation1] ss:$2 sm:%s6]
    %vm8 = vcmask 523264
    %9 = vst.msk [vmem:[#allocation0] sm:$0x3] %vm8, %v7
    %s10 = scalar_lea.vmem [#allocation1], 1
    %v11 = vld [vmem:[%s10] sm:$0x1]
    %12 = vrot.lane.b32.xlu0 %v11, 64
    %v13 = vpop.permute.xlu0 %12
    %vm14 = vcmask 1048064
    %15 = vst.msk [vmem:[#allocation0] sm:$0x1] %vm14, %v13
    %s17 = sshllo.u32 0, 2
    %v19 = vld [vmem:[#allocation0] sm:%s17]
    %s20 = sshllo.u32 0, 2
    %21 = vst [vmem:[%s1] sm:%s20] %v19

// kernel: dino_forward.2
$region0: #{dino_forward.2}
  #allocation0 [shape = 'u32[]', space=smem, size = 0x4, offset = 0x4, fixed_abs, tag = 'smem constant byte address 0x4 - core index']
  #allocation1 [shape = 'u32[144,128]{1,0:T(1,128)}', space=vmem, size = 0x12000, scoped, tag = 'internal scratch']
  %s0 = inlined_call_operand.vmem [shape: bf16[32,192], index: 0, kind: input, shape index: {}]
  %s1 = inlined_call_operand.vmem [shape: bf16[192,64], index: 1, kind: input, shape index: {}]
  %s2 = inlined_call_operand.vmem [shape: f32[1,64], index: 2, kind: input, shape index: {}]
  %s3 = inlined_call_operand.hbm [shape: f32[32,64], index: 3, kind: output, shape index: {}]
  %s4 = sld [smem:[#allocation0]]
  $region22: #{dino_forward.2} parent=0
    _
  %s6 = ssub.s32 1, %s4
  %s7 = scalar_select 0, %s6, %s4
  $region1: #{dino_forward.2} parent=0
    #allocation2 [shape = 'u8[16384]{0}', space=vmem, size = 0x4000, scoped, tag = 'output window, operand 0, single buffered']
    #allocation3 [shape = 's32[1]{0}', space=sflag, size = 0x4, scoped, tag = 'scoped memory for dino_forward.2']
    %8 = vsyncpa [#allocation3], 0
    // Predicated region
    $region2: #{dino_forward.2} parent=1 // pred_check
      _
    $region3: #{dino_forward.2} parent=1 // pred_check_branch
      %10 = sbr.rel (0) target = $region5
    $region4: #{dino_forward.2} parent=1 // pred_region
      _
    $region5: #{dino_forward.2} parent=1 // pred_fallthru
      _
    // Predicated region
    $region6: #{dino_forward.2} parent=1 // pred_check
      _
    $region7: #{dino_forward.2} parent=1 // pred_check_branch
      %12 = sbr.rel (0) target = $region9
    $region8: #{dino_forward.2} parent=1 // pred_region
      _
    $region9: #{dino_forward.2} parent=1 // pred_fallthru
      _
    // Predicated region
    $region10: #{dino_forward.2} parent=1 // pred_check
      _
    $region11: #{dino_forward.2} parent=1 // pred_check_branch
      %14 = sbr.rel (0) target = $region13
    $region12: #{dino_forward.2} parent=1 // pred_region
      _
    $region13: #{dino_forward.2} parent=1 // pred_fallthru
      _
    %v16 = vld [vmem:[%s0] sm:$0xff]
    %v17 = vld [vmem:[%s0 + $0x8] sm:$0xff]
    %v18 = vld [vmem:[%s0 + $0x10] sm:$0xff]
    %v19 = vld [vmem:[%s0 + $0x18] sm:$0xff]
    %v20 = vld [vmem:[%s1] sm:$0xf]
    %v21 = vld [vmem:[%s1 + $0x4] sm:$0xf]
    %v22 = vld [vmem:[%s1 + $0x8] sm:$0xf]
    %v23 = vld [vmem:[%s1 + $0xc] sm:$0xf]
    %v24 = vld [vmem:[%s1 + $0x10] sm:$0xf]
    %v25 = vld [vmem:[%s1 + $0x14] sm:$0xf]
    %v26 = vld [vmem:[%s1 + $0x18] sm:$0xf]
    %v27 = vld [vmem:[%s1 + $0x1c] sm:$0xf]
    %v28 = vld [vmem:[%s1 + $0x20] sm:$0xf]
    %v29 = vld [vmem:[%s1 + $0x24] sm:$0xf]
    %v30 = vld [vmem:[%s1 + $0x28] sm:$0xf]
    %v31 = vld [vmem:[%s1 + $0x2c] sm:$0xf]
    %v32 = vld [vmem:[%s1 + $0x30] sm:$0xf]
    %v33 = vld [vmem:[%s1 + $0x34] sm:$0xf]
    %v34 = vld [vmem:[%s1 + $0x38] sm:$0xf]
    %v35 = vld [vmem:[%s1 + $0x3c] sm:$0xf]
    %v36 = vld [vmem:[%s1 + $0x40] sm:$0xf]
    %v37 = vld [vmem:[%s1 + $0x44] sm:$0xf]
    %v38 = vld [vmem:[%s1 + $0x48] sm:$0xf]
    %v39 = vld [vmem:[%s1 + $0x4c] sm:$0xf]
    %v40 = vld [vmem:[%s1 + $0x50] sm:$0xf]
    %v41 = vld [vmem:[%s1 + $0x54] sm:$0xf]
    %v42 = vld [vmem:[%s1 + $0x58] sm:$0xf]
    %v43 = vld [vmem:[%s1 + $0x5c] sm:$0xf]
    %v44 = vld [vmem:[%s2] sm:$0x1]
    %v46 = vlaneseq
    %v47 = vshrl.u32 %v46, 7
    %v48 = vsub.s32 0, %v47
    %v49 = vrot.slane %v44, %v48
    %v55 = vunpack.c.l.b16 %v16
    %v56 = vunpack.c.h.b16 %v16
    %v57 = vunpack.c.l.b16 %v17
    %v58 = vunpack.c.h.b16 %v17
    %v59 = vunpack.c.l.b16 %v18
    %v60 = vunpack.c.h.b16 %v18
    %v61 = vunpack.c.l.b16 %v19
    %v62 = vunpack.c.h.b16 %v19
    %v63 = vpack.c.b16 %v57, %v55
    %v64 = vpack.c.b16 %v58, %v56
    %v65 = vpack.c.b16 %v61, %v59
    %v66 = vpack.c.b16 %v62, %v60
    %v93 = vunpack.c.l.b16 %v20
    %v94 = vunpack.c.l.b16 %v21
    %v95 = vunpack.c.l.b16 %v22
    %v96 = vunpack.c.l.b16 %v23
    %v97 = vunpack.c.l.b16 %v24
    %v98 = vunpack.c.l.b16 %v25
    %v99 = vunpack.c.l.b16 %v26
    %v100 = vunpack.c.l.b16 %v27
    %v101 = vunpack.c.l.b16 %v28
    %v102 = vunpack.c.l.b16 %v29
    %v103 = vunpack.c.l.b16 %v30
    %v104 = vunpack.c.l.b16 %v31
    %v105 = vunpack.c.l.b16 %v32
    %v106 = vunpack.c.l.b16 %v33
    %v107 = vunpack.c.l.b16 %v34
    %v108 = vunpack.c.l.b16 %v35
    %v109 = vunpack.c.l.b16 %v36
    %v110 = vunpack.c.l.b16 %v37
    %v111 = vunpack.c.l.b16 %v38
    %v112 = vunpack.c.l.b16 %v39
    %v113 = vunpack.c.l.b16 %v40
    %v114 = vunpack.c.l.b16 %v41
    %v115 = vunpack.c.l.b16 %v42
    %v116 = vunpack.c.l.b16 %v43
    %v117 = vpack.c.b16 %v94, %v93
    %v118 = vpack.c.b16 %v96, %v95
    %v119 = vpack.c.b16 %v98, %v97
    %v120 = vpack.c.b16 %v100, %v99
    %v121 = vpack.c.b16 %v102, %v101
    %v122 = vpack.c.b16 %v104, %v103
    %v123 = vpack.c.b16 %v106, %v105
    %v124 = vpack.c.b16 %v108, %v107
    %v125 = vpack.c.b16 %v110, %v109
    %v126 = vpack.c.b16 %v112, %v111
    %v127 = vpack.c.b16 %v114, %v113
    %v128 = vpack.c.b16 %v116, %v115
    %vm141 = vcmask 523264
    %v143 = vsel %vm141, %v64, 0
    %v146 = vsel %vm141, %v66, 0
    %148 = vmatprep.subr.bf16.mxu0 0
    %149 = vmatpush1.bf16.msra.mxu0 %v117
    %150 = vmatprep.subr.bf16.mxu0 0
    %151 = vmatpush1.bf16.msra.mxu0 %v118
    %152 = vmatprep.subr.bf16.mxu0 0
    %153 = vmatpush1.bf16.msra.mxu0 %v119
    %154 = vmatprep.subr.bf16.mxu0 0
    %155 = vmatpush1.bf16.msra.mxu0 %v120
    %156 = vmatprep.subr.bf16.mxu0 0
    %157 = vmatpush1.bf16.msra.mxu0 %v121
    %158 = vmatprep.subr.bf16.mxu0 0
    %159 = vmatpush1.bf16.msra.mxu0 %v122
    %160 = vmatprep.subr.bf16.mxu0 0
    %161 = vmatpush1.bf16.msra.mxu0 %v123
    %162 = vmatprep.subr.bf16.mxu0 0
    %163 = vmatpush1.bf16.msra.mxu0 %v124
    %164 = vmatprep.subr.bf16.mxu0 0
    %165 = vmatpush1.bf16.msra.mxu0 %v125
    %166 = vmatprep.subr.bf16.mxu0 0
    %167 = vmatpush1.bf16.msra.mxu0 %v126
    %168 = vmatprep.subr.bf16.mxu0 0
    %169 = vmatpush1.bf16.msra.mxu0 %v127
    %170 = vmatprep.subr.bf16.mxu0 0
    %171 = vmatpush1.bf16.msra.mxu0 %v128
    %172 = vmatprep.subr.bf16.mxu0 0
    %173 = vmatpush1.bf16.msra.mxu0 0
    %174 = vmatprep.subr.bf16.mxu0 0
    %175 = vmatpush1.bf16.msra.mxu0 0
    %176 = vmatprep.subr.bf16.mxu0 0
    %177 = vmatpush1.bf16.msra.mxu0 0
    %178 = vmatprep.subr.bf16.mxu0 0
    %179 = vmatpush1.bf16.msra.mxu0 0
    %180 = vmatprep.mubr.bf16.mxu0 %v143
    %181 = vmatmul.mubr.bf16.gmra.mrb[0].mxu0 %v63
    %v182 = vpop.f32.mrb[0].mxu0
    %v183 = vadd.f32 %v49, %v182
    %v184 = vpop.f32.mrb[0].mxu0
    %v185 = vpop.f32.mrb[0].mxu0
    %v186 = vadd.f32 %v49, %v185
    %v187 = vpop.f32.mrb[0].mxu0
    %188 = vmatprep.mubr.bf16.mxu0 %v146
    %189 = vmatmul.mubr.bf16.gmra.mrb[0].mxu0 %v65
    %v190 = vpop.f32.mrb[0].mxu0
    %v191 = vadd.f32 %v49, %v190
    %v192 = vpop.f32.mrb[0].mxu0
    %v193 = vpop.f32.mrb[0].mxu0
    %v194 = vadd.f32 %v49, %v193
    %v195 = vpop.f32.mrb[0].mxu0
    %196 = vdwg.mxu0
    %197 = vst.msk [vmem:[#allocation2] sm:$0xff] %vm141, %v183
    %198 = vst.msk [vmem:[#allocation2 + $0x8] sm:$0xff] %vm141, %v186
    %199 = vst.msk [vmem:[#allocation2 + $0x10] sm:$0xff] %vm141, %v191
    %200 = vst.msk [vmem:[#allocation2 + $0x18] sm:$0xff] %vm141, %v194
    // Predicated region
    $region14: #{dino_forward.2} parent=1 // pred_check
      _
    $region15: #{dino_forward.2} parent=1 // pred_check_branch
      %202 = sbr.rel (0) target = $region17
    $region16: #{dino_forward.2} parent=1 // pred_region
      %s204 = ssub.s32 512, 512
      %205 = vsyncadd [#allocation3], %s204
      %s206 = sshll.u32 [#allocation2], 4
      %s207 = int_to_ptr.vmem [resolvable:$true] %s206
      %212 = dma.vmem_to_hbm [thread:$0]  %s207, 512, %s3, [#allocation3], 128, 128, 8
    $region17: #{dino_forward.2} parent=1 // pred_fallthru
      _
    // Predicated region
    $region18: #{dino_forward.2} parent=1 // pred_check
      _
    $region19: #{dino_forward.2} parent=1 // pred_check_branch
      %214 = sbr.rel (0) target = $region21
    $region20: #{dino_forward.2} parent=1 // pred_region
      %215 = dma.done [#allocation3], 512
    $region21: #{dino_forward.2} parent=1 // pred_fallthru
      _
    %216 = vsyncpa [#allocation3], 1

// kernel: dino_forward.3
$region0: #{dino_forward.3}
  #allocation0 [shape = 'u32[]', space=smem, size = 0x4, offset = 0x4, fixed_abs, tag = 'smem constant byte address 0x4 - core index']
  #allocation1 [shape = 'u32[144,128]{1,0:T(1,128)}', space=vmem, size = 0x12000, scoped, tag = 'internal scratch']
  #allocation2 [shape = 'f32[34,64]{1,0:T(8,128)}', space=vmem, size = 0x5000, scoped, tag = 'scratch operand']
  %s0 = inlined_call_operand.hbm [shape: f32[2,16,64], index: 0, kind: input, shape index: {}]
  %s1 = inlined_call_operand.hbm [shape: f32[1,1,64], index: 1, kind: input, shape index: {}]
  %s2 = inlined_call_operand.hbm [shape: f32[1,17,64], index: 2, kind: input, shape index: {}]
  %s3 = inlined_call_operand.hbm [shape: f32[3,1,64], index: 3, kind: input, shape index: {}]
  %s4 = inlined_call_operand.hbm [shape: f32[3,1,64], index: 4, kind: input, shape index: {}]
  %s5 = inlined_call_operand.hbm [shape: bf16[3,64,192], index: 5, kind: input, shape index: {}]
  %s6 = inlined_call_operand.hbm [shape: f32[3,1,192], index: 6, kind: input, shape index: {}]
  %s7 = inlined_call_operand.hbm [shape: bf16[3,64,64], index: 7, kind: input, shape index: {}]
  %s8 = inlined_call_operand.hbm [shape: f32[3,1,64], index: 8, kind: input, shape index: {}]
  %s9 = inlined_call_operand.hbm [shape: f32[3,1,64], index: 9, kind: input, shape index: {}]
  %s10 = inlined_call_operand.hbm [shape: f32[3,1,64], index: 10, kind: input, shape index: {}]
  %s11 = inlined_call_operand.hbm [shape: bf16[3,64,128], index: 11, kind: input, shape index: {}]
  %s12 = inlined_call_operand.hbm [shape: f32[3,1,128], index: 12, kind: input, shape index: {}]
  %s13 = inlined_call_operand.hbm [shape: bf16[3,128,64], index: 13, kind: input, shape index: {}]
  %s14 = inlined_call_operand.hbm [shape: f32[3,1,64], index: 14, kind: input, shape index: {}]
  %s15 = inlined_call_operand.hbm [shape: f32[1,64], index: 15, kind: input, shape index: {}]
  %s16 = inlined_call_operand.hbm [shape: f32[1,64], index: 16, kind: input, shape index: {}]
  %s17 = inlined_call_operand.hbm [shape: f32[2,17,64], index: 17, kind: output, shape index: {}]
  %s18 = sld [smem:[#allocation0]]
  $region181: #{dino_forward.3} parent=0
    _
  %s20 = ssub.s32 1, %s18
  %s21 = scalar_select 0, %s20, %s18
  $region1: #{dino_forward.3} parent=0
    #allocation3 [shape = 'u8[16384]{0}', space=vmem, size = 0x4000, scoped, tag = 'input window, operand 0, single buffered']
    #allocation4 [shape = 's32[2]{0}', space=sflag, size = 0x8, scoped, tag = 'scoped memory for dino_forward.3']
    #allocation5 [shape = 's32[2]{0}', space=sflag, size = 0x8, scoped, tag = 'scoped memory for dino_forward.3']
    #allocation6 [shape = 'u8[512]{0}', space=vmem, size = 0x400, scoped, tag = 'input window, operand 1, single buffered']
    #allocation7 [shape = 's32[1]{0}', space=sflag, size = 0x4, scoped, tag = 'scoped memory for dino_forward.3']
    #allocation8 [shape = 'u8[12288]{0}', space=vmem, size = 0x3000, scoped, tag = 'input window, operand 2, single buffered']
    #allocation9 [shape = 'u8[1024]{0}', space=vmem, size = 0x400, scoped, tag = 'input window, operand 3']
    #allocation10 [shape = 's32[2]{0}', space=sflag, size = 0x8, scoped, tag = 'scoped memory for dino_forward.3']
    #allocation11 [shape = 'u8[1024]{0}', space=vmem, size = 0x400, scoped, tag = 'input window, operand 4']
    #allocation12 [shape = 'u8[65536]{0}', space=vmem, size = 0x10000, scoped, tag = 'input window, operand 5']
    #allocation13 [shape = 's32[2]{0}', space=sflag, size = 0x8, scoped, tag = 'scoped memory for dino_forward.3']
    #allocation14 [shape = 'u8[2048]{0}', space=vmem, size = 0x800, scoped, tag = 'input window, operand 6']
    #allocation15 [shape = 'u8[32768]{0}', space=vmem, size = 0x8000, scoped, tag = 'input window, operand 7']
    #allocation16 [shape = 's32[2]{0}', space=sflag, size = 0x8, scoped, tag = 'scoped memory for dino_forward.3']
    #allocation17 [shape = 'u8[1024]{0}', space=vmem, size = 0x400, scoped, tag = 'input window, operand 8']
    #allocation18 [shape = 'u8[1024]{0}', space=vmem, size = 0x400, scoped, tag = 'input window, operand 9']
    #allocation19 [shape = 's32[2]{0}', space=sflag, size = 0x8, scoped, tag = 'scoped memory for dino_forward.3']
    #allocation20 [shape = 'u8[1024]{0}', space=vmem, size = 0x400, scoped, tag = 'input window, operand 10']
    #allocation21 [shape = 'u8[32768]{0}', space=vmem, size = 0x8000, scoped, tag = 'input window, operand 11']
    #allocation22 [shape = 's32[2]{0}', space=sflag, size = 0x8, scoped, tag = 'scoped memory for dino_forward.3']
    #allocation23 [shape = 'u8[1024]{0}', space=vmem, size = 0x400, scoped, tag = 'input window, operand 12']
    #allocation24 [shape = 'u8[65536]{0}', space=vmem, size = 0x10000, scoped, tag = 'input window, operand 13']
    #allocation25 [shape = 's32[2]{0}', space=sflag, size = 0x8, scoped, tag = 'scoped memory for dino_forward.3']
    #allocation26 [shape = 'u8[1024]{0}', space=vmem, size = 0x400, scoped, tag = 'input window, operand 14']
    #allocation27 [shape = 'u8[512]{0}', space=vmem, size = 0x400, scoped, tag = 'input window, operand 15, single buffered']
    #allocation28 [shape = 's32[1]{0}', space=sflag, size = 0x4, scoped, tag = 'scoped memory for dino_forward.3']
    #allocation29 [shape = 'u8[512]{0}', space=vmem, size = 0x400, scoped, tag = 'input window, operand 16, single buffered']
    #allocation30 [shape = 'u8[24576]{0}', space=vmem, size = 0x6000, scoped, tag = 'output window, operand 0, single buffered']
    %22 = vsyncpa [#allocation4], 0
    %23 = vsyncpa [#allocation7], 0
    %24 = vsyncpa [#allocation10], 0
    %s25 = scalar_lea.sflag [#allocation10], 1
    %26 = vsyncpa %s25, 0
    %27 = vsyncpa [#allocation13], 0
    %s28 = scalar_lea.sflag [#allocation13], 1
    %29 = vsyncpa %s28, 0
    %30 = vsyncpa [#allocation16], 0
    %s31 = scalar_lea.sflag [#allocation16], 1
    %32 = vsyncpa %s31, 0
    %33 = vsyncpa [#allocation19], 0
    %s34 = scalar_lea.sflag [#allocation19], 1
    %35 = vsyncpa %s34, 0
    %36 = vsyncpa [#allocation22], 0
    %s37 = scalar_lea.sflag [#allocation22], 1
    %38 = vsyncpa %s37, 0
    %39 = vsyncpa [#allocation25], 0
    %s40 = scalar_lea.sflag [#allocation25], 1
    %41 = vsyncpa %s40, 0
    %42 = vsyncpa [#allocation28], 0
    %43 = vsyncpa [#allocation5], 0
    loop: start=0, step=1, limit=5
    $region2: #{dino_forward.3} parent=1 // loop_pre_header
      _
    $region3: #{dino_forward.3} parent=1 // loop_header
      %s45 = sphi 0, %s49
      %p46 = scmp.ge.s32.totalorder %s45, 5
      %s52 = sphi 0, %s64
      %s53 = sphi 0, %s60
      %s54 = sphi 0, %s52
      %s55 = sphi 0, %s53
      %s56 = sphi 0, %s54
      %s57 = sphi 0, %s55
      %s67 = sphi 0, %s69
      %s70 = sphi 0, %s67
      %s71 = sphi 0, %s70
      %s87 = sphi 0, %s71
      %s91 = sphi 0, %s91
      %s93 = sphi 0, %s91
      %s94 = sphi 0, %s93
      %s108 = sphi 0, %s94
      %s112 = sphi 0, %s112
      %s114 = sphi 0, %s112
      %s115 = sphi 0, %s114
      %s129 = sphi 0, %s115
      %s135 = sphi 0, %s137
      %s138 = sphi 0, %s135
      %s139 = sphi 0, %s138
      %s155 = sphi 0, %s139
      %s161 = sphi 0, %s163
      %s164 = sphi 0, %s161
      %s165 = sphi 0, %s164
      %s181 = sphi 0, %s165
      %s187 = sphi 0, %s189
      %s190 = sphi 0, %s187
      %s191 = sphi 0, %s190
      %s207 = sphi 0, %s191
      %s213 = sphi 0, %s215
      %s216 = sphi 0, %s213
      %s217 = sphi 0, %s216
      %s233 = sphi 0, %s217
      %s239 = sphi 0, %s241
      %s242 = sphi 0, %s239
      %s243 = sphi 0, %s242
      %s259 = sphi 0, %s243
      %s265 = sphi 0, %s267
      %s268 = sphi 0, %s265
      %s269 = sphi 0, %s268
      %s285 = sphi 0, %s269
      %s291 = sphi 0, %s293
      %s294 = sphi 0, %s291
      %s295 = sphi 0, %s294
      %s311 = sphi 0, %s295
      %s317 = sphi 0, %s319
      %s320 = sphi 0, %s317
      %s321 = sphi 0, %s320
      %s337 = sphi 0, %s321
      %s343 = sphi 0, %s345
      %s346 = sphi 0, %s343
      %s347 = sphi 0, %s346
      %s363 = sphi 0, %s347
      %s369 = sphi 0, %s371
      %s372 = sphi 0, %s369
      %s373 = sphi 0, %s372
      %s389 = sphi 0, %s373
      %s395 = sphi 0, %s397
      %s398 = sphi 0, %s395
      %s399 = sphi 0, %s398
      %s415 = sphi 0, %s399
      %s421 = sphi 0, %s423
      %s424 = sphi 0, %s421
      %s425 = sphi 0, %s424
      %s441 = sphi 0, %s425
      %s445 = sphi 0, %s445
      %s447 = sphi 0, %s445
      %s448 = sphi 0, %s447
      %s462 = sphi 0, %s448
      %s466 = sphi 0, %s466
      %s468 = sphi 0, %s466
      %s469 = sphi 0, %s468
      %s483 = sphi 0, %s469
      %s489 = sphi 0, %s491
      %s492 = sphi 0, %s489
      %s493 = sphi 0, %s492
      %s509 = sphi 0, %s493
    $region4: #{dino_forward.3} parent=1 // loop_header_branch
      %48 = sbr.rel (%p46) target = $region8
    $region5: #{dino_forward.3} parent=1 // loop_body
      %s50 = ssub.s32 %s45, 1
      %s51 = ssub.s32 %s45, 2
      %s58 = sadd.s32 1, %s53
      %p59 = scmp.ge.s32.totalorder %s58, 3
      %s60 = scalar_select %p59, 0, %s58
      %s61 = sadd.s32 1, %s52
      %s62 = scalar_select %p59, %s61, %s52
      %p63 = scmp.ge.s32.totalorder %s62, 1
      %s64 = scalar_select %p63, 0, %s62
      %s65 = ssub.s32 %s52, %s64
      %p66 = scmp.eq.s32.totalorder %s65, 0
      %s68 = sadd.s32 %s67, 1
      %s69 = scalar_select %p66, %s67, %s68
      %p72 = pneg %p66
      %p73 = scmp.eq.s32.totalorder %s45, 2
      %p74 = por %p72, %p73
      %p75 = scmp.ne.s32.totalorder %s67, %s70
      %p76 = scmp.eq.s32.totalorder %s45, 0
      %p77 = por %p75, %p76
      %p78 = scmp.ne.s32.totalorder %s67, %s70
      %p79 = scmp.eq.s32.totalorder %s50, 2
      %p80 = por %p78, %p79
      %p81 = scmp.ne.s32.totalorder %s70, %s71
      %p82 = scmp.eq.s32.totalorder %s50, 0
      %p83 = por %p81, %p82
      %p84 = scmp.ne.s32.totalorder %s70, %s71
      %p85 = scmp.eq.s32.totalorder %s51, 2
      %p86 = por %p84, %p85
      %p88 = scmp.ne.s32.totalorder %s71, %s87
      %p89 = scmp.eq.s32.totalorder %s51, 0
      %p90 = por %p88, %p89
      %s92 = sadd.s32 %s91, 1
      %p95 = scmp.eq.s32.totalorder %s45, 2
      %p96 = scmp.ne.s32.totalorder %s91, %s93
      %p97 = scmp.eq.s32.totalorder %s45, 0
      %p98 = por %p96, %p97
      %p99 = scmp.ne.s32.totalorder %s91, %s93
      %p100 = scmp.eq.s32.totalorder %s50, 2
      %p101 = por %p99, %p100
      %p102 = scmp.ne.s32.totalorder %s93, %s94
      %p103 = scmp.eq.s32.totalorder %s50, 0
      %p104 = por %p102, %p103
      %p105 = scmp.ne.s32.totalorder %s93, %s94
      %p106 = scmp.eq.s32.totalorder %s51, 2
      %p107 = por %p105, %p106
      %p109 = scmp.ne.s32.totalorder %s94, %s108
      %p110 = scmp.eq.s32.totalorder %s51, 0
      %p111 = por %p109, %p110
      %s113 = sadd.s32 %s112, 1
      %p116 = scmp.eq.s32.totalorder %s45, 2
      %p117 = scmp.ne.s32.totalorder %s112, %s114
      %p118 = scmp.eq.s32.totalorder %s45, 0
      %p119 = por %p117, %p118
      %p120 = scmp.ne.s32.totalorder %s112, %s114
      %p121 = scmp.eq.s32.totalorder %s50, 2
      %p122 = por %p120, %p121
      %p123 = scmp.ne.s32.totalorder %s114, %s115
      %p124 = scmp.eq.s32.totalorder %s50, 0
      %p125 = por %p123, %p124
      %p126 = scmp.ne.s32.totalorder %s114, %s115
      %p127 = scmp.eq.s32.totalorder %s51, 2
      %p128 = por %p126, %p127
      %p130 = scmp.ne.s32.totalorder %s115, %s129
      %p131 = scmp.eq.s32.totalorder %s51, 0
      %p132 = por %p130, %p131
      %s133 = ssub.s32 %s53, %s60
      %p134 = scmp.eq.s32.totalorder %s133, 0
      %s136 = sadd.s32 %s135, 1
      %s137 = scalar_select %p134, %s135, %s136
      %p140 = pneg %p134
      %p141 = scmp.eq.s32.totalorder %s45, 2
      %p142 = por %p140, %p141
      %p143 = scmp.ne.s32.totalorder %s135, %s138
      %p144 = scmp.eq.s32.totalorder %s45, 0
      %p145 = por %p143, %p144
      %p146 = scmp.ne.s32.totalorder %s135, %s138
      %p147 = scmp.eq.s32.totalorder %s50, 2
      %p148 = por %p146, %p147
      %p149 = scmp.ne.s32.totalorder %s138, %s139
      %p150 = scmp.eq.s32.totalorder %s50, 0
      %p151 = por %p149, %p150
      %p152 = scmp.ne.s32.totalorder %s138, %s139
      %p153 = scmp.eq.s32.totalorder %s51, 2
      %p154 = por %p152, %p153
      %p156 = scmp.ne.s32.totalorder %s139, %s155
      %p157 = scmp.eq.s32.totalorder %s51, 0
      %p158 = por %p156, %p157
      %s159 = ssub.s32 %s53, %s60
      %p160 = scmp.eq.s32.totalorder %s159, 0
      %s162 = sadd.s32 %s161, 1
      %s163 = scalar_select %p160, %s161, %s162
      %p166 = pneg %p160
      %p167 = scmp.eq.s32.totalorder %s45, 2
      %p168 = por %p166, %p167
      %p169 = scmp.ne.s32.totalorder %s161, %s164
      %p170 = scmp.eq.s32.totalorder %s45, 0
      %p171 = por %p169, %p170
      %p172 = scmp.ne.s32.totalorder %s161, %s164
      %p173 = scmp.eq.s32.totalorder %s50, 2
      %p174 = por %p172, %p173
      %p175 = scmp.ne.s32.totalorder %s164, %s165
      %p176 = scmp.eq.s32.totalorder %s50, 0
      %p177 = por %p175, %p176
      %p178 = scmp.ne.s32.totalorder %s164, %s165
      %p179 = scmp.eq.s32.totalorder %s51, 2
      %p180 = por %p178, %p179
      %p182 = scmp.ne.s32.totalorder %s165, %s181
      %p183 = scmp.eq.s32.totalorder %s51, 0
      %p184 = por %p182, %p183
      %s185 = ssub.s32 %s53, %s60
      %p186 = scmp.eq.s32.totalorder %s185, 0
      %s188 = sadd.s32 %s187, 1
      %s189 = scalar_select %p186, %s187, %s188
      %p192 = pneg %p186
      %p193 = scmp.eq.s32.totalorder %s45, 2
      %p194 = por %p192, %p193
      %p195 = scmp.ne.s32.totalorder %s187, %s190
      %p196 = scmp.eq.s32.totalorder %s45, 0
      %p197 = por %p195, %p196
      %p198 = scmp.ne.s32.totalorder %s187, %s190
      %p199 = scmp.eq.s32.totalorder %s50, 2
      %p200 = por %p198, %p199
      %p201 = scmp.ne.s32.totalorder %s190, %s191
      %p202 = scmp.eq.s32.totalorder %s50, 0
      %p203 = por %p201, %p202
      %p204 = scmp.ne.s32.totalorder %s190, %s191
      %p205 = scmp.eq.s32.totalorder %s51, 2
      %p206 = por %p204, %p205
      %p208 = scmp.ne.s32.totalorder %s191, %s207
      %p209 = scmp.eq.s32.totalorder %s51, 0
      %p210 = por %p208, %p209
      %s211 = ssub.s32 %s53, %s60
      %p212 = scmp.eq.s32.totalorder %s211, 0
      %s214 = sadd.s32 %s213, 1
      %s215 = scalar_select %p212, %s213, %s214
      %p218 = pneg %p212
      %p219 = scmp.eq.s32.totalorder %s45, 2
      %p220 = por %p218, %p219
      %p221 = scmp.ne.s32.totalorder %s213, %s216
      %p222 = scmp.eq.s32.totalorder %s45, 0
      %p223 = por %p221, %p222
      %p224 = scmp.ne.s32.totalorder %s213, %s216
      %p225 = scmp.eq.s32.totalorder %s50, 2
      %p226 = por %p224, %p225
      %p227 = scmp.ne.s32.totalorder %s216, %s217
      %p228 = scmp.eq.s32.totalorder %s50, 0
      %p229 = por %p227, %p228
      %p230 = scmp.ne.s32.totalorder %s216, %s217
      %p231 = scmp.eq.s32.totalorder %s51, 2
      %p232 = por %p230, %p231
      %p234 = scmp.ne.s32.totalorder %s217, %s233
      %p235 = scmp.eq.s32.totalorder %s51, 0
      %p236 = por %p234, %p235
      %s237 = ssub.s32 %s53, %s60
      %p238 = scmp.eq.s32.totalorder %s237, 0
      %s240 = sadd.s32 %s239, 1
      %s241 = scalar_select %p238, %s239, %s240
      %p244 = pneg %p238
      %p245 = scmp.eq.s32.totalorder %s45, 2
      %p246 = por %p244, %p245
      %p247 = scmp.ne.s32.totalorder %s239, %s242
      %p248 = scmp.eq.s32.totalorder %s45, 0
      %p249 = por %p247, %p248
      %p250 = scmp.ne.s32.totalorder %s239, %s242
      %p251 = scmp.eq.s32.totalorder %s50, 2
      %p252 = por %p250, %p251
      %p253 = scmp.ne.s32.totalorder %s242, %s243
      %p254 = scmp.eq.s32.totalorder %s50, 0
      %p255 = por %p253, %p254
      %p256 = scmp.ne.s32.totalorder %s242, %s243
      %p257 = scmp.eq.s32.totalorder %s51, 2
      %p258 = por %p256, %p257
      %p260 = scmp.ne.s32.totalorder %s243, %s259
      %p261 = scmp.eq.s32.totalorder %s51, 0
      %p262 = por %p260, %p261
      %s263 = ssub.s32 %s53, %s60
      %p264 = scmp.eq.s32.totalorder %s263, 0
      %s266 = sadd.s32 %s265, 1
      %s267 = scalar_select %p264, %s265, %s266
      %p270 = pneg %p264
      %p271 = scmp.eq.s32.totalorder %s45, 2
      %p272 = por %p270, %p271
      %p273 = scmp.ne.s32.totalorder %s265, %s268
      %p274 = scmp.eq.s32.totalorder %s45, 0
      %p275 = por %p273, %p274
      %p276 = scmp.ne.s32.totalorder %s265, %s268
      %p277 = scmp.eq.s32.totalorder %s50, 2
      %p278 = por %p276, %p277
      %p279 = scmp.ne.s32.totalorder %s268, %s269
      %p280 = scmp.eq.s32.totalorder %s50, 0
      %p281 = por %p279, %p280
      %p282 = scmp.ne.s32.totalorder %s268, %s269
      %p283 = scmp.eq.s32.totalorder %s51, 2
      %p284 = por %p282, %p283
      %p286 = scmp.ne.s32.totalorder %s269, %s285
      %p287 = scmp.eq.s32.totalorder %s51, 0
      %p288 = por %p286, %p287
      %s289 = ssub.s32 %s53, %s60
      %p290 = scmp.eq.s32.totalorder %s289, 0
      %s292 = sadd.s32 %s291, 1
      %s293 = scalar_select %p290, %s291, %s292
      %p296 = pneg %p290
      %p297 = scmp.eq.s32.totalorder %s45, 2
      %p298 = por %p296, %p297
      %p299 = scmp.ne.s32.totalorder %s291, %s294
      %p300 = scmp.eq.s32.totalorder %s45, 0
      %p301 = por %p299, %p300
      %p302 = scmp.ne.s32.totalorder %s291, %s294
      %p303 = scmp.eq.s32.totalorder %s50, 2
      %p304 = por %p302, %p303
      %p305 = scmp.ne.s32.totalorder %s294, %s295
      %p306 = scmp.eq.s32.totalorder %s50, 0
      %p307 = por %p305, %p306
      %p308 = scmp.ne.s32.totalorder %s294, %s295
      %p309 = scmp.eq.s32.totalorder %s51, 2
      %p310 = por %p308, %p309
      %p312 = scmp.ne.s32.totalorder %s295, %s311
      %p313 = scmp.eq.s32.totalorder %s51, 0
      %p314 = por %p312, %p313
      %s315 = ssub.s32 %s53, %s60
      %p316 = scmp.eq.s32.totalorder %s315, 0
      %s318 = sadd.s32 %s317, 1
      %s319 = scalar_select %p316, %s317, %s318
      %p322 = pneg %p316
      %p323 = scmp.eq.s32.totalorder %s45, 2
      %p324 = por %p322, %p323
      %p325 = scmp.ne.s32.totalorder %s317, %s320
      %p326 = scmp.eq.s32.totalorder %s45, 0
      %p327 = por %p325, %p326
      %p328 = scmp.ne.s32.totalorder %s317, %s320
      %p329 = scmp.eq.s32.totalorder %s50, 2
      %p330 = por %p328, %p329
      %p331 = scmp.ne.s32.totalorder %s320, %s321
      %p332 = scmp.eq.s32.totalorder %s50, 0
      %p333 = por %p331, %p332
      %p334 = scmp.ne.s32.totalorder %s320, %s321
      %p335 = scmp.eq.s32.totalorder %s51, 2
      %p336 = por %p334, %p335
      %p338 = scmp.ne.s32.totalorder %s321, %s337
      %p339 = scmp.eq.s32.totalorder %s51, 0
      %p340 = por %p338, %p339
      %s341 = ssub.s32 %s53, %s60
      %p342 = scmp.eq.s32.totalorder %s341, 0
      %s344 = sadd.s32 %s343, 1
      %s345 = scalar_select %p342, %s343, %s344
      %p348 = pneg %p342
      %p349 = scmp.eq.s32.totalorder %s45, 2
      %p350 = por %p348, %p349
      %p351 = scmp.ne.s32.totalorder %s343, %s346
      %p352 = scmp.eq.s32.totalorder %s45, 0
      %p353 = por %p351, %p352
      %p354 = scmp.ne.s32.totalorder %s343, %s346
      %p355 = scmp.eq.s32.totalorder %s50, 2
      %p356 = por %p354, %p355
      %p357 = scmp.ne.s32.totalorder %s346, %s347
      %p358 = scmp.eq.s32.totalorder %s50, 0
      %p359 = por %p357, %p358
      %p360 = scmp.ne.s32.totalorder %s346, %s347
      %p361 = scmp.eq.s32.totalorder %s51, 2
      %p362 = por %p360, %p361
      %p364 = scmp.ne.s32.totalorder %s347, %s363
      %p365 = scmp.eq.s32.totalorder %s51, 0
      %p366 = por %p364, %p365
      %s367 = ssub.s32 %s53, %s60
      %p368 = scmp.eq.s32.totalorder %s367, 0
      %s370 = sadd.s32 %s369, 1
      %s371 = scalar_select %p368, %s369, %s370
      %p374 = pneg %p368
      %p375 = scmp.eq.s32.totalorder %s45, 2
      %p376 = por %p374, %p375
      %p377 = scmp.ne.s32.totalorder %s369, %s372
      %p378 = scmp.eq.s32.totalorder %s45, 0
      %p379 = por %p377, %p378
      %p380 = scmp.ne.s32.totalorder %s369, %s372
      %p381 = scmp.eq.s32.totalorder %s50, 2
      %p382 = por %p380, %p381
      %p383 = scmp.ne.s32.totalorder %s372, %s373
      %p384 = scmp.eq.s32.totalorder %s50, 0
      %p385 = por %p383, %p384
      %p386 = scmp.ne.s32.totalorder %s372, %s373
      %p387 = scmp.eq.s32.totalorder %s51, 2
      %p388 = por %p386, %p387
      %p390 = scmp.ne.s32.totalorder %s373, %s389
      %p391 = scmp.eq.s32.totalorder %s51, 0
      %p392 = por %p390, %p391
      %s393 = ssub.s32 %s53, %s60
      %p394 = scmp.eq.s32.totalorder %s393, 0
      %s396 = sadd.s32 %s395, 1
      %s397 = scalar_select %p394, %s395, %s396
      %p400 = pneg %p394
      %p401 = scmp.eq.s32.totalorder %s45, 2
      %p402 = por %p400, %p401
      %p403 = scmp.ne.s32.totalorder %s395, %s398
      %p404 = scmp.eq.s32.totalorder %s45, 0
      %p405 = por %p403, %p404
      %p406 = scmp.ne.s32.totalorder %s395, %s398
      %p407 = scmp.eq.s32.totalorder %s50, 2
      %p408 = por %p406, %p407
      %p409 = scmp.ne.s32.totalorder %s398, %s399
      %p410 = scmp.eq.s32.totalorder %s50, 0
      %p411 = por %p409, %p410
      %p412 = scmp.ne.s32.totalorder %s398, %s399
      %p413 = scmp.eq.s32.totalorder %s51, 2
      %p414 = por %p412, %p413
      %p416 = scmp.ne.s32.totalorder %s399, %s415
      %p417 = scmp.eq.s32.totalorder %s51, 0
      %p418 = por %p416, %p417
      %s419 = ssub.s32 %s53, %s60
      %p420 = scmp.eq.s32.totalorder %s419, 0
      %s422 = sadd.s32 %s421, 1
      %s423 = scalar_select %p420, %s421, %s422
      %p426 = pneg %p420
      %p427 = scmp.eq.s32.totalorder %s45, 2
      %p428 = por %p426, %p427
      %p429 = scmp.ne.s32.totalorder %s421, %s424
      %p430 = scmp.eq.s32.totalorder %s45, 0
      %p431 = por %p429, %p430
      %p432 = scmp.ne.s32.totalorder %s421, %s424
      %p433 = scmp.eq.s32.totalorder %s50, 2
      %p434 = por %p432, %p433
      %p435 = scmp.ne.s32.totalorder %s424, %s425
      %p436 = scmp.eq.s32.totalorder %s50, 0
      %p437 = por %p435, %p436
      %p438 = scmp.ne.s32.totalorder %s424, %s425
      %p439 = scmp.eq.s32.totalorder %s51, 2
      %p440 = por %p438, %p439
      %p442 = scmp.ne.s32.totalorder %s425, %s441
      %p443 = scmp.eq.s32.totalorder %s51, 0
      %p444 = por %p442, %p443
      %s446 = sadd.s32 %s445, 1
      %p449 = scmp.eq.s32.totalorder %s45, 2
      %p450 = scmp.ne.s32.totalorder %s445, %s447
      %p451 = scmp.eq.s32.totalorder %s45, 0
      %p452 = por %p450, %p451
      %p453 = scmp.ne.s32.totalorder %s445, %s447
      %p454 = scmp.eq.s32.totalorder %s50, 2
      %p455 = por %p453, %p454
      %p456 = scmp.ne.s32.totalorder %s447, %s448
      %p457 = scmp.eq.s32.totalorder %s50, 0
      %p458 = por %p456, %p457
      %p459 = scmp.ne.s32.totalorder %s447, %s448
      %p460 = scmp.eq.s32.totalorder %s51, 2
      %p461 = por %p459, %p460
      %p463 = scmp.ne.s32.totalorder %s448, %s462
      %p464 = scmp.eq.s32.totalorder %s51, 0
      %p465 = por %p463, %p464
      %s467 = sadd.s32 %s466, 1
      %p470 = scmp.eq.s32.totalorder %s45, 2
      %p471 = scmp.ne.s32.totalorder %s466, %s468
      %p472 = scmp.eq.s32.totalorder %s45, 0
      %p473 = por %p471, %p472
      %p474 = scmp.ne.s32.totalorder %s466, %s468
      %p475 = scmp.eq.s32.totalorder %s50, 2
      %p476 = por %p474, %p475
      %p477 = scmp.ne.s32.totalorder %s468, %s469
      %p478 = scmp.eq.s32.totalorder %s50, 0
      %p479 = por %p477, %p478
      %p480 = scmp.ne.s32.totalorder %s468, %s469
      %p481 = scmp.eq.s32.totalorder %s51, 2
      %p482 = por %p480, %p481
      %p484 = scmp.ne.s32.totalorder %s469, %s483
      %p485 = scmp.eq.s32.totalorder %s51, 0
      %p486 = por %p484, %p485
      %s487 = ssub.s32 %s52, %s64
      %p488 = scmp.eq.s32.totalorder %s487, 0
      %s490 = sadd.s32 %s489, 1
      %s491 = scalar_select %p488, %s489, %s490
      %p494 = pneg %p488
      %p495 = scmp.eq.s32.totalorder %s45, 2
      %p496 = por %p494, %p495
      %p497 = scmp.ne.s32.totalorder %s489, %s492
      %p498 = scmp.eq.s32.totalorder %s45, 0
      %p499 = por %p497, %p498
      %p500 = scmp.ne.s32.totalorder %s489, %s492
      %p501 = scmp.eq.s32.totalorder %s50, 2
      %p502 = por %p500, %p501
      %p503 = scmp.ne.s32.totalorder %s492, %s493
      %p504 = scmp.eq.s32.totalorder %s50, 0
      %p505 = por %p503, %p504
      %p506 = scmp.ne.s32.totalorder %s492, %s493
      %p507 = scmp.eq.s32.totalorder %s51, 2
      %p508 = por %p506, %p507
      %p510 = scmp.ne.s32.totalorder %s493, %s509
      %p511 = scmp.eq.s32.totalorder %s51, 0
      %p512 = por %p510, %p511
      %p513 = scmp.le.s32.totalorder 1, %s45
      %p514 = scmp.lt.s32.totalorder %s45, 4
      %p515 = pnand %p513, %p514
      %p516 = pneg %p515
      // Predicated region
      $region9: #{dino_forward.3} parent=5 // pred_check
        _
      $region10: #{dino_forward.3} parent=5 // pred_check_branch
        %518 = sbr.rel (%p515) target = $region12
      $region11: #{dino_forward.3} parent=5 // pred_region
        %s519 = ssub.s32 %s45, 1
        // Predicated region
        $region13: #{dino_forward.3} parent=11 // pred_check
          %p520 = pneg %p83
        $region14: #{dino_forward.3} parent=11 // pred_check_branch
          %522 = sbr.rel (%p520) target = $region16
        $region15: #{dino_forward.3} parent=11 // pred_region
          %s523 = smul.u32 2, %s54
          %s525 = ssub.s32 512, 512
          %526 = vsyncadd [#allocation4], %s525
          %s527 = smul.addr %s523, 2
          %s528 = smul.addr %s527, 128
          %s529 = scalar_lea.hbm %s0, %s528
          %s530 = sshll.u32 [#allocation3], 4
          %s531 = int_to_ptr.vmem [resolvable:$true] %s530
          %536 = dma.hbm_to_vmem [thread:$0]  %s529, 512, %s531, [#allocation4], 128, 128, 8
        $region16: #{dino_forward.3} parent=11 // pred_fallthru
          _
        // Predicated region
        $region17: #{dino_forward.3} parent=11 // pred_check
          %p537 = pneg %p104
        $region18: #{dino_forward.3} parent=11 // pred_check_branch
          %539 = sbr.rel (%p537) target = $region20
        $region19: #{dino_forward.3} parent=11 // pred_region
          %s541 = ssub.s32 16, 16
          %542 = vsyncadd [#allocation7], %s541
          %s544 = sshll.u32 [#allocation6], 4
          %s545 = int_to_ptr.vmem [resolvable:$true] %s544
          %547 = dma.hbm_to_vmem [thread:$0]  %s1, 16, %s545, [#allocation7]
        $region20: #{dino_forward.3} parent=11 // pred_fallthru
          _
        // Predicated region
        $region21: #{dino_forward.3} parent=11 // pred_check
          %p548 = pneg %p125
        $region22: #{dino_forward.3} parent=11 // pred_check_branch
          %550 = sbr.rel (%p548) target = $region24
        $region23: #{dino_forward.3} parent=11 // pred_region
          %s552 = ssub.s32 384, 384
          %553 = vsyncadd [#allocation7], %s552
          %s554 = sshll.u32 [#allocation8], 4
          %s555 = int_to_ptr.vmem [resolvable:$true] %s554
          %560 = dma.hbm_to_vmem [thread:$0]  %s2, 384, %s555, [#allocation7], 128, 128, 8
        $region24: #{dino_forward.3} parent=11 // pred_fallthru
          _
        // Predicated region
        $region25: #{dino_forward.3} parent=11 // pred_check
          %p561 = pneg %p458
        $region26: #{dino_forward.3} parent=11 // pred_check_branch
          %563 = sbr.rel (%p561) target = $region28
        $region27: #{dino_forward.3} parent=11 // pred_region
          %s565 = ssub.s32 16, 16
          %566 = vsyncadd [#allocation28], %s565
          %s568 = sshll.u32 [#allocation27], 4
          %s569 = int_to_ptr.vmem [resolvable:$true] %s568
          %571 = dma.hbm_to_vmem [thread:$0]  %s15, 16, %s569, [#allocation28]
        $region28: #{dino_forward.3} parent=11 // pred_fallthru
          _
        // Predicated region
        $region29: #{dino_forward.3} parent=11 // pred_check
          %p572 = pneg %p479
        $region30: #{dino_forward.3} parent=11 // pred_check_branch
          %574 = sbr.rel (%p572) target = $region32
        $region31: #{dino_forward.3} parent=11 // pred_region
          %s576 = ssub.s32 16, 16
          %577 = vsyncadd [#allocation28], %s576
          %s579 = sshll.u32 [#allocation29], 4
          %s580 = int_to_ptr.vmem [resolvable:$true] %s579
          %582 = dma.hbm_to_vmem [thread:$0]  %s16, 16, %s580, [#allocation28]
        $region32: #{dino_forward.3} parent=11 // pred_fallthru
          _
      $region12: #{dino_forward.3} parent=5 // pred_fallthru
        _
      %p583 = scmp.lt.s32.totalorder %s45, 3
      // Predicated region
      $region33: #{dino_forward.3} parent=5 // pred_check
        %p584 = pneg %p583
      $region34: #{dino_forward.3} parent=5 // pred_check_branch
        %586 = sbr.rel (%p584) target = $region36
      $region35: #{dino_forward.3} parent=5 // pred_region
        // Predicated region
        $region37: #{dino_forward.3} parent=35 // pred_check
          %p587 = pneg %p145
        $region38: #{dino_forward.3} parent=35 // pred_check_branch
          %589 = sbr.rel (%p587) target = $region40
        $region39: #{dino_forward.3} parent=35 // pred_region
          %s590 = sand.u32 %s45, 1
          %s591 = scalar_lea.sflag [#allocation10], %s590
          %s592 = sand.u32 %s135, 1
          %s593 = scalar_lea.vmem [#allocation9], %s592
          %s595 = ssub.s32 16, 16
          %596 = vsyncadd %s591, %s595
          %s597 = smul.addr %s53, 16
          %s598 = scalar_lea.hbm %s3, %s597
          %s600 = sshll.u32 %s593, 4
          %s601 = int_to_ptr.vmem [resolvable:$true] %s600
          %603 = dma.hbm_to_vmem [thread:$0]  %s598, 16, %s601, %s591
        $region40: #{dino_forward.3} parent=35 // pred_fallthru
          _
        // Predicated region
        $region41: #{dino_forward.3} parent=35 // pred_check
          %p604 = pneg %p171
        $region42: #{dino_forward.3} parent=35 // pred_check_branch
          %606 = sbr.rel (%p604) target = $region44
        $region43: #{dino_forward.3} parent=35 // pred_region
          %s607 = sand.u32 %s45, 1
          %s608 = scalar_lea.sflag [#allocation10], %s607
          %s609 = sand.u32 %s161, 1
          %s610 = scalar_lea.vmem [#allocation11], %s609
          %s612 = ssub.s32 16, 16
          %613 = vsyncadd %s608, %s612
          %s614 = smul.addr %s53, 16
          %s615 = scalar_lea.hbm %s4, %s614
          %s617 = sshll.u32 %s610, 4
          %s618 = int_to_ptr.vmem [resolvable:$true] %s617
          %620 = dma.hbm_to_vmem [thread:$0]  %s615, 16, %s618, %s608
        $region44: #{dino_forward.3} parent=35 // pred_fallthru
          _
        // Predicated region
        $region45: #{dino_forward.3} parent=35 // pred_check
          %p621 = pneg %p197
        $region46: #{dino_forward.3} parent=35 // pred_check_branch
          %623 = sbr.rel (%p621) target = $region48
        $region47: #{dino_forward.3} parent=35 // pred_region
          %s624 = sand.u32 %s45, 1
          %s625 = scalar_lea.sflag [#allocation13], %s624
          %s626 = sand.u32 %s187, 1
          %s627 = smul.addr %s626, 64
          %s628 = scalar_lea.vmem [#allocation12], %s627
          %s630 = ssub.s32 1024, 1024
          %631 = vsyncadd %s625, %s630
          %s632 = smul.addr %s53, 16
          %s633 = smul.addr %s632, 64
          %s634 = scalar_lea.hbm %s5, %s633
          %s635 = sshll.u32 %s628, 4
          %s636 = int_to_ptr.vmem [resolvable:$true] %s635
          %641 = dma.hbm_to_vmem [thread:$0]  %s634, 1024, %s636, %s625, 128, 128, 8
        $region48: #{dino_forward.3} parent=35 // pred_fallthru
          _
        // Predicated region
        $region49: #{dino_forward.3} parent=35 // pred_check
          %p642 = pneg %p223
        $region50: #{dino_forward.3} parent=35 // pred_check_branch
          %644 = sbr.rel (%p642) target = $region52
        $region51: #{dino_forward.3} parent=35 // pred_region
          %s645 = sand.u32 %s45, 1
          %s646 = scalar_lea.sflag [#allocation13], %s645
          %s647 = sand.u32 %s213, 1
          %s648 = smul.addr %s647, 2
          %s649 = scalar_lea.vmem [#allocation14], %s648
          %s651 = ssub.s32 32, 32
          %652 = vsyncadd %s646, %s651
          %s653 = smul.addr %s53, 2
          %s654 = smul.addr %s653, 16
          %s655 = scalar_lea.hbm %s6, %s654
          %s657 = sshll.u32 %s649, 4
          %s658 = int_to_ptr.vmem [resolvable:$true] %s657
          %660 = dma.hbm_to_vmem [thread:$0]  %s655, 32, %s658, %s646
        $region52: #{dino_forward.3} parent=35 // pred_fallthru
          _
        // Predicated region
        $region53: #{dino_forward.3} parent=35 // pred_check
          %p661 = pneg %p249
        $region54: #{dino_forward.3} parent=35 // pred_check_branch
          %663 = sbr.rel (%p661) target = $region56
        $region55: #{dino_forward.3} parent=35 // pred_region
          %s664 = sand.u32 %s45, 1
          %s665 = scalar_lea.sflag [#allocation16], %s664
          %s666 = sand.u32 %s239, 1
          %s667 = smul.addr %s666, 32
          %s668 = scalar_lea.vmem [#allocation15], %s667
          %s670 = ssub.s32 512, 512
          %671 = vsyncadd %s665, %s670
          %s672 = smul.addr %s53, 8
          %s673 = smul.addr %s672, 64
          %s674 = scalar_lea.hbm %s7, %s673
          %s675 = sshll.u32 %s668, 4
          %s676 = int_to_ptr.vmem [resolvable:$true] %s675
          %681 = dma.hbm_to_vmem [thread:$0]  %s674, 512, %s676, %s665, 64, 64, 4
        $region56: #{dino_forward.3} parent=35 // pred_fallthru
          _
        // Predicated region
        $region57: #{dino_forward.3} parent=35 // pred_check
          %p682 = pneg %p275
        $region58: #{dino_forward.3} parent=35 // pred_check_branch
          %684 = sbr.rel (%p682) target = $region60
        $region59: #{dino_forward.3} parent=35 // pred_region
          %s685 = sand.u32 %s45, 1
          %s686 = scalar_lea.sflag [#allocation16], %s685
          %s687 = sand.u32 %s265, 1
          %s688 = scalar_lea.vmem [#allocation17], %s687
          %s690 = ssub.s32 16, 16
          %691 = vsyncadd %s686, %s690
          %s692 = smul.addr %s53, 16
          %s693 = scalar_lea.hbm %s8, %s692
          %s695 = sshll.u32 %s688, 4
          %s696 = int_to_ptr.vmem [resolvable:$true] %s695
          %698 = dma.hbm_to_vmem [thread:$0]  %s693, 16, %s696, %s686
        $region60: #{dino_forward.3} parent=35 // pred_fallthru
          _
        // Predicated region
        $region61: #{dino_forward.3} parent=35 // pred_check
          %p699 = pneg %p301
        $region62: #{dino_forward.3} parent=35 // pred_check_branch
          %701 = sbr.rel (%p699) target = $region64
        $region63: #{dino_forward.3} parent=35 // pred_region
          %s702 = sand.u32 %s45, 1
          %s703 = scalar_lea.sflag [#allocation19], %s702
          %s704 = sand.u32 %s291, 1
          %s705 = scalar_lea.vmem [#allocation18], %s704
          %s707 = ssub.s32 16, 16
          %708 = vsyncadd %s703, %s707
          %s709 = smul.addr %s53, 16
          %s710 = scalar_lea.hbm %s9, %s709
          %s712 = sshll.u32 %s705, 4
          %s713 = int_to_ptr.vmem [resolvable:$true] %s712
          %715 = dma.hbm_to_vmem [thread:$0]  %s710, 16, %s713, %s703
        $region64: #{dino_forward.3} parent=35 // pred_fallthru
          _
        // Predicated region
        $region65: #{dino_forward.3} parent=35 // pred_check
          %p716 = pneg %p327
        $region66: #{dino_forward.3} parent=35 // pred_check_branch
          %718 = sbr.rel (%p716) target = $region68
        $region67: #{dino_forward.3} parent=35 // pred_region
          %s719 = sand.u32 %s45, 1
          %s720 = scalar_lea.sflag [#allocation19], %s719
          %s721 = sand.u32 %s317, 1
          %s722 = scalar_lea.vmem [#allocation20], %s721
          %s724 = ssub.s32 16, 16
          %725 = vsyncadd %s720, %s724
          %s726 = smul.addr %s53, 16
          %s727 = scalar_lea.hbm %s10, %s726
          %s729 = sshll.u32 %s722, 4
          %s730 = int_to_ptr.vmem [resolvable:$true] %s729
          %732 = dma.hbm_to_vmem [thread:$0]  %s727, 16, %s730, %s720
        $region68: #{dino_forward.3} parent=35 // pred_fallthru
          _
        // Predicated region
        $region69: #{dino_forward.3} parent=35 // pred_check
          %p733 = pneg %p353
        $region70: #{dino_forward.3} parent=35 // pred_check_branch
          %735 = sbr.rel (%p733) target = $region72
        $region71: #{dino_forward.3} parent=35 // pred_region
          %s736 = sand.u32 %s45, 1
          %s737 = scalar_lea.sflag [#allocation22], %s736
          %s738 = sand.u32 %s343, 1
          %s739 = smul.addr %s738, 32
          %s740 = scalar_lea.vmem [#allocation21], %s739
          %s742 = ssub.s32 512, 512
          %743 = vsyncadd %s737, %s742
          %s744 = smul.addr %s53, 8
          %s745 = smul.addr %s744, 64
          %s746 = scalar_lea.hbm %s11, %s745
          %s747 = sshll.u32 %s740, 4
          %s748 = int_to_ptr.vmem [resolvable:$true] %s747
          %753 = dma.hbm_to_vmem [thread:$0]  %s746, 512, %s748, %s737, 64, 64, 4
        $region72: #{dino_forward.3} parent=35 // pred_fallthru
          _
        // Predicated region
        $region73: #{dino_forward.3} parent=35 // pred_check
          %p754 = pneg %p379
        $region74: #{dino_forward.3} parent=35 // pred_check_branch
          %756 = sbr.rel (%p754) target = $region76
        $region75: #{dino_forward.3} parent=35 // pred_region
          %s757 = sand.u32 %s45, 1
          %s758 = scalar_lea.sflag [#allocation22], %s757
          %s759 = sand.u32 %s369, 1
          %s760 = scalar_lea.vmem [#allocation23], %s759
          %s762 = ssub.s32 16, 16
          %763 = vsyncadd %s758, %s762
          %s764 = smul.addr %s53, 16
          %s765 = scalar_lea.hbm %s12, %s764
          %s767 = sshll.u32 %s760, 4
          %s768 = int_to_ptr.vmem [resolvable:$true] %s767
          %770 = dma.hbm_to_vmem [thread:$0]  %s765, 16, %s768, %s758
        $region76: #{dino_forward.3} parent=35 // pred_fallthru
          _
        // Predicated region
        $region77: #{dino_forward.3} parent=35 // pred_check
          %p771 = pneg %p405
        $region78: #{dino_forward.3} parent=35 // pred_check_branch
          %773 = sbr.rel (%p771) target = $region80
        $region79: #{dino_forward.3} parent=35 // pred_region
          %s774 = sand.u32 %s45, 1
          %s775 = scalar_lea.sflag [#allocation25], %s774
          %s776 = sand.u32 %s395, 1
          %s777 = smul.addr %s776, 64
          %s778 = scalar_lea.vmem [#allocation24], %s777
          %s780 = ssub.s32 1024, 1024
          %781 = vsyncadd %s775, %s780
          %s782 = smul.addr %s53, 16
          %s783 = smul.addr %s782, 64
          %s784 = scalar_lea.hbm %s13, %s783
          %s785 = sshll.u32 %s778, 4
          %s786 = int_to_ptr.vmem [resolvable:$true] %s785
          %791 = dma.hbm_to_vmem [thread:$0]  %s784, 1024, %s786, %s775, 64, 64, 4
        $region80: #{dino_forward.3} parent=35 // pred_fallthru
          _
        // Predicated region
        $region81: #{dino_forward.3} parent=35 // pred_check
          %p792 = pneg %p431
        $region82: #{dino_forward.3} parent=35 // pred_check_branch
          %794 = sbr.rel (%p792) target = $region84
        $region83: #{dino_forward.3} parent=35 // pred_region
          %s795 = sand.u32 %s45, 1
          %s796 = scalar_lea.sflag [#allocation25], %s795
          %s797 = sand.u32 %s421, 1
          %s798 = scalar_lea.vmem [#allocation26], %s797
          %s800 = ssub.s32 16, 16
          %801 = vsyncadd %s796, %s800
          %s802 = smul.addr %s53, 16
          %s803 = scalar_lea.hbm %s14, %s802
          %s805 = sshll.u32 %s798, 4
          %s806 = int_to_ptr.vmem [resolvable:$true] %s805
          %808 = dma.hbm_to_vmem [thread:$0]  %s803, 16, %s806, %s796
        $region84: #{dino_forward.3} parent=35 // pred_fallthru
          _
      $region36: #{dino_forward.3} parent=5 // pred_fallthru
        _
      %p809 = scmp.le.s32.totalorder 1, %s45
      %p810 = scmp.lt.s32.totalorder %s45, 4
      %p811 = pnand %p809, %p810
      %p812 = pneg %p811
      // Predicated region
      $region85: #{dino_forward.3} parent=5 // pred_check
        _
      $region86: #{dino_forward.3} parent=5 // pred_check_branch
        %814 = sbr.rel (%p811) target = $region88
      $region87: #{dino_forward.3} parent=5 // pred_region
        %s815 = ssub.s32 %s45, 1
        // Predicated region
        $region89: #{dino_forward.3} parent=87 // pred_check
          %p816 = pneg %p83
        $region90: #{dino_forward.3} parent=87 // pred_check_branch
          %818 = sbr.rel (%p816) target = $region92
        $region91: #{dino_forward.3} parent=87 // pred_region
          %819 = dma.done [#allocation4], 512
        $region92: #{dino_forward.3} parent=87 // pred_fallthru
          _
        // Predicated region
        $region93: #{dino_forward.3} parent=87 // pred_check
          %p820 = pneg %p104
        $region94: #{dino_forward.3} parent=87 // pred_check_branch
          %822 = sbr.rel (%p820) target = $region96
        $region95: #{dino_forward.3} parent=87 // pred_region
          %823 = dma.done [#allocation7], 16
        $region96: #{dino_forward.3} parent=87 // pred_fallthru
          _
        // Predicated region
        $region97: #{dino_forward.3} parent=87 // pred_check
          %p824 = pneg %p125
        $region98: #{dino_forward.3} parent=87 // pred_check_branch
          %826 = sbr.rel (%p824) target = $region100
        $region99: #{dino_forward.3} parent=87 // pred_region
          %827 = dma.done [#allocation7], 384
        $region100: #{dino_forward.3} parent=87 // pred_fallthru
          _
        %s828 = sand.u32 %s50, 1
        %s829 = scalar_lea.sflag [#allocation10], %s828
        %s830 = sand.u32 %s138, 1
        %s831 = scalar_lea.vmem [#allocation9], %s830
        // Predicated region
        $region101: #{dino_forward.3} parent=87 // pred_check
          %p832 = pneg %p151
        $region102: #{dino_forward.3} parent=87 // pred_check_branch
          %834 = sbr.rel (%p832) target = $region104
        $region103: #{dino_forward.3} parent=87 // pred_region
          %835 = dma.done %s829, 16
        $region104: #{dino_forward.3} parent=87 // pred_fallthru
          _
        %s836 = sand.u32 %s50, 1
        %s837 = scalar_lea.sflag [#allocation10], %s836
        %s838 = sand.u32 %s164, 1
        %s839 = scalar_lea.vmem [#allocation11], %s838
        // Predicated region
        $region105: #{dino_forward.3} parent=87 // pred_check
          %p840 = pneg %p177
        $region106: #{dino_forward.3} parent=87 // pred_check_branch
          %842 = sbr.rel (%p840) target = $region108
        $region107: #{dino_forward.3} parent=87 // pred_region
          %843 = dma.done %s837, 16
        $region108: #{dino_forward.3} parent=87 // pred_fallthru
          _
        %s844 = sand.u32 %s50, 1
        %s845 = scalar_lea.sflag [#allocation13], %s844
        %s846 = sand.u32 %s190, 1
        %s847 = smul.addr %s846, 64
        %s848 = scalar_lea.vmem [#allocation12], %s847
        // Predicated region
        $region109: #{dino_forward.3} parent=87 // pred_check
          %p849 = pneg %p203
        $region110: #{dino_forward.3} parent=87 // pred_check_branch
          %851 = sbr.rel (%p849) target = $region112
        $region111: #{dino_forward.3} parent=87 // pred_region
          %852 = dma.done %s845, 1024
        $region112: #{dino_forward.3} parent=87 // pred_fallthru
          _
        %s853 = sand.u32 %s50, 1
        %s854 = scalar_lea.sflag [#allocation13], %s853
        %s855 = sand.u32 %s216, 1
        %s856 = smul.addr %s855, 2
        %s857 = scalar_lea.vmem [#allocation14], %s856
        // Predicated region
        $region113: #{dino_forward.3} parent=87 // pred_check
          %p858 = pneg %p229
        $region114: #{dino_forward.3} parent=87 // pred_check_branch
          %860 = sbr.rel (%p858) target = $region116
        $region115: #{dino_forward.3} parent=87 // pred_region
          %861 = dma.done %s854, 32
        $region116: #{dino_forward.3} parent=87 // pred_fallthru
          _
        %s862 = sand.u32 %s50, 1
        %s863 = scalar_lea.sflag [#allocation16], %s862
        %s864 = sand.u32 %s242, 1
        %s865 = smul.addr %s864, 32
        %s866 = scalar_lea.vmem [#allocation15], %s865
        // Predicated region
        $region117: #{dino_forward.3} parent=87 // pred_check
          %p867 = pneg %p255
        $region118: #{dino_forward.3} parent=87 // pred_check_branch
          %869 = sbr.rel (%p867) target = $region120
        $region119: #{dino_forward.3} parent=87 // pred_region
          %870 = dma.done %s863, 512
        $region120: #{dino_forward.3} parent=87 // pred_fallthru
          _
        %s871 = sand.u32 %s50, 1
        %s872 = scalar_lea.sflag [#allocation16], %s871
        %s873 = sand.u32 %s268, 1
        %s874 = scalar_lea.vmem [#allocation17], %s873
        // Predicated region
        $region121: #{dino_forward.3} parent=87 // pred_check
          %p875 = pneg %p281
        $region122: #{dino_forward.3} parent=87 // pred_check_branch
          %877 = sbr.rel (%p875) target = $region124
        $region123: #{dino_forward.3} parent=87 // pred_region
          %878 = dma.done %s872, 16
        $region124: #{dino_forward.3} parent=87 // pred_fallthru
          _
        %s879 = sand.u32 %s50, 1
        %s880 = scalar_lea.sflag [#allocation19], %s879
        %s881 = sand.u32 %s294, 1
        %s882 = scalar_lea.vmem [#allocation18], %s881
        // Predicated region
        $region125: #{dino_forward.3} parent=87 // pred_check
          %p883 = pneg %p307
        $region126: #{dino_forward.3} parent=87 // pred_check_branch
          %885 = sbr.rel (%p883) target = $region128
        $region127: #{dino_forward.3} parent=87 // pred_region
          %886 = dma.done %s880, 16
        $region128: #{dino_forward.3} parent=87 // pred_fallthru
          _
        %s887 = sand.u32 %s50, 1
        %s888 = scalar_lea.sflag [#allocation19], %s887
        %s889 = sand.u32 %s320, 1
        %s890 = scalar_lea.vmem [#allocation20], %s889
        // Predicated region
        $region129: #{dino_forward.3} parent=87 // pred_check
          %p891 = pneg %p333
        $region130: #{dino_forward.3} parent=87 // pred_check_branch
          %893 = sbr.rel (%p891) target = $region132
        $region131: #{dino_forward.3} parent=87 // pred_region
          %894 = dma.done %s888, 16
        $region132: #{dino_forward.3} parent=87 // pred_fallthru
          _
        %s895 = sand.u32 %s50, 1
        %s896 = scalar_lea.sflag [#allocation22], %s895
        %s897 = sand.u32 %s346, 1
        %s898 = smul.addr %s897, 32
        %s899 = scalar_lea.vmem [#allocation21], %s898
        // Predicated region
        $region133: #{dino_forward.3} parent=87 // pred_check
          %p900 = pneg %p359
        $region134: #{dino_forward.3} parent=87 // pred_check_branch
          %902 = sbr.rel (%p900) target = $region136
        $region135: #{dino_forward.3} parent=87 // pred_region
          %903 = dma.done %s896, 512
        $region136: #{dino_forward.3} parent=87 // pred_fallthru
          _
        %s904 = sand.u32 %s50, 1
        %s905 = scalar_lea.sflag [#allocation22], %s904
        %s906 = sand.u32 %s372, 1
        %s907 = scalar_lea.vmem [#allocation23], %s906
        // Predicated region
        $region137: #{dino_forward.3} parent=87 // pred_check
          %p908 = pneg %p385
        $region138: #{dino_forward.3} parent=87 // pred_check_branch
          %910 = sbr.rel (%p908) target = $region140
        $region139: #{dino_forward.3} parent=87 // pred_region
          %911 = dma.done %s905, 16
        $region140: #{dino_forward.3} parent=87 // pred_fallthru
          _
        %s912 = sand.u32 %s50, 1
        %s913 = scalar_lea.sflag [#allocation25], %s912
        %s914 = sand.u32 %s398, 1
        %s915 = smul.addr %s914, 64
        %s916 = scalar_lea.vmem [#allocation24], %s915
        // Predicated region
        $region141: #{dino_forward.3} parent=87 // pred_check
          %p917 = pneg %p411
        $region142: #{dino_forward.3} parent=87 // pred_check_branch
          %919 = sbr.rel (%p917) target = $region144
        $region143: #{dino_forward.3} parent=87 // pred_region
          %920 = dma.done %s913, 1024
        $region144: #{dino_forward.3} parent=87 // pred_fallthru
          _
        %s921 = sand.u32 %s50, 1
        %s922 = scalar_lea.sflag [#allocation25], %s921
        %s923 = sand.u32 %s424, 1
        %s924 = scalar_lea.vmem [#allocation26], %s923
        // Predicated region
        $region145: #{dino_forward.3} parent=87 // pred_check
          %p925 = pneg %p437
        $region146: #{dino_forward.3} parent=87 // pred_check_branch
          %927 = sbr.rel (%p925) target = $region148
        $region147: #{dino_forward.3} parent=87 // pred_region
          %928 = dma.done %s922, 16
        $region148: #{dino_forward.3} parent=87 // pred_fallthru
          _
        // Predicated region
        $region149: #{dino_forward.3} parent=87 // pred_check
          %p929 = pneg %p458
        $region150: #{dino_forward.3} parent=87 // pred_check_branch
          %931 = sbr.rel (%p929) target = $region152
        $region151: #{dino_forward.3} parent=87 // pred_region
          %932 = dma.done [#allocation28], 16
        $region152: #{dino_forward.3} parent=87 // pred_fallthru
          _
        // Predicated region
        $region153: #{dino_forward.3} parent=87 // pred_check
          %p933 = pneg %p479
        $region154: #{dino_forward.3} parent=87 // pred_check_branch
          %935 = sbr.rel (%p933) target = $region156
        $region155: #{dino_forward.3} parent=87 // pred_region
          %936 = dma.done [#allocation28], 16
        $region156: #{dino_forward.3} parent=87 // pred_fallthru
          _
        %p937 = pneg %p83
        %p938 = pneg %p80
        %p939 = pneg %p104
        %p940 = pneg %p101
        %p941 = pneg %p125
        %p942 = pneg %p122
        %s943 = sand.u32 %s50, 1
        %s944 = scalar_lea.sflag [#allocation10], %s943
        %s945 = sand.u32 %s138, 1
        %s946 = scalar_lea.vmem [#allocation9], %s945
        %p947 = pneg %p151
        %p948 = pneg %p148
        %s949 = sand.u32 %s50, 1
        %s950 = scalar_lea.sflag [#allocation10], %s949
        %s951 = sand.u32 %s164, 1
        %s952 = scalar_lea.vmem [#allocation11], %s951
        %p953 = pneg %p177
        %p954 = pneg %p174
        %s955 = sand.u32 %s50, 1
        %s956 = scalar_lea.sflag [#allocation13], %s955
        %s957 = sand.u32 %s190, 1
        %s958 = smul.addr %s957, 64
        %s959 = scalar_lea.vmem [#allocation12], %s958
        %p960 = pneg %p203
        %p961 = pneg %p200
        %s962 = sand.u32 %s50, 1
        %s963 = scalar_lea.sflag [#allocation13], %s962
        %s964 = sand.u32 %s216, 1
        %s965 = smul.addr %s964, 2
        %s966 = scalar_lea.vmem [#allocation14], %s965
        %p967 = pneg %p229
        %p968 = pneg %p226
        %s969 = sand.u32 %s50, 1
        %s970 = scalar_lea.sflag [#allocation16], %s969
        %s971 = sand.u32 %s242, 1
        %s972 = smul.addr %s971, 32
        %s973 = scalar_lea.vmem [#allocation15], %s972
        %p974 = pneg %p255
        %p975 = pneg %p252
        %s976 = sand.u32 %s50, 1
        %s977 = scalar_lea.sflag [#allocation16], %s976
        %s978 = sand.u32 %s268, 1
        %s979 = scalar_lea.vmem [#allocation17], %s978
        %p980 = pneg %p281
        %p981 = pneg %p278
        %s982 = sand.u32 %s50, 1
        %s983 = scalar_lea.sflag [#allocation19], %s982
        %s984 = sand.u32 %s294, 1
        %s985 = scalar_lea.vmem [#allocation18], %s984
        %p986 = pneg %p307
        %p987 = pneg %p304
        %s988 = sand.u32 %s50, 1
        %s989 = scalar_lea.sflag [#allocation19], %s988
        %s990 = sand.u32 %s320, 1
        %s991 = scalar_lea.vmem [#allocation20], %s990
        %p992 = pneg %p333
        %p993 = pneg %p330
        %s994 = sand.u32 %s50, 1
        %s995 = scalar_lea.sflag [#allocation22], %s994
        %s996 = sand.u32 %s346, 1
        %s997 = smul.addr %s996, 32
        %s998 = scalar_lea.vmem [#allocation21], %s997
        %p999 = pneg %p359
        %p1000 = pneg %p356
        %s1001 = sand.u32 %s50, 1
        %s1002 = scalar_lea.sflag [#allocation22], %s1001
        %s1003 = sand.u32 %s372, 1
        %s1004 = scalar_lea.vmem [#allocation23], %s1003
        %p1005 = pneg %p385
        %p1006 = pneg %p382
        %s1007 = sand.u32 %s50, 1
        %s1008 = scalar_lea.sflag [#allocation25], %s1007
        %s1009 = sand.u32 %s398, 1
        %s1010 = smul.addr %s1009, 64
        %s1011 = scalar_lea.vmem [#allocation24], %s1010
        %p1012 = pneg %p411
        %p1013 = pneg %p408
        %s1014 = sand.u32 %s50, 1
        %s1015 = scalar_lea.sflag [#allocation25], %s1014
        %s1016 = sand.u32 %s424, 1
        %s1017 = scalar_lea.vmem [#allocation26], %s1016
        %p1018 = pneg %p437
        %p1019 = pneg %p434
        %p1020 = pneg %p458
        %p1021 = pneg %p455
        %p1022 = pneg %p479
        %p1023 = pneg %p476
        %p1024 = pneg %p505
        %p1025 = pneg %p502
        %s1026 = smul.u32 2, %s54
        %s1027 = smul.u32 2, %s54
        %p1029 = scmp.eq.s32.totalorder %s55, 0
        // Predicated region
        $region157: #{dino_forward.3} parent=87 // pred_check
          %p1030 = pneg %p1029
        $region158: #{dino_forward.3} parent=87 // pred_check_branch
          %1032 = sbr.rel (%p1030) target = $region160
        $region159: #{dino_forward.3} parent=87 // pred_region
          %v1033 = vld [vmem:[#allocation6] sm:$0x1]
          %v1034 = vld [vmem:[#allocation3] sm:$0xff]
          %v1035 = vld [vmem:[#allocation3 + $0x8] sm:$0xff]
          %v1036 = vld [vmem:[#allocation3 + $0x10] sm:$0xff]
          %v1037 = vld [vmem:[#allocation3 + $0x18] sm:$0xff]
          %vm1042 = vcmask 1040384
          %v1043 = vrot.slane %v1034, 7
          %v1044 = vrot.slane %v1035, 7
          %v1045 = vsel %vm1042, %v1043, %v1044
          %v1046 = vrot.slane %v1036, 7
          %v1047 = vrot.slane %v1037, 7
          %v1048 = vsel %vm1042, %v1046, %v1047
          %v1055 = vsel %vm1042, %v1033, %v1043
          %v1056 = vsel %vm1042, %v1033, %v1046
          %v1057 = vld [vmem:[#allocation8] sm:$0xff]
          %v1058 = vld [vmem:[#allocation8 + $0x8] sm:$0xff]
          %v1059 = vld [vmem:[#allocation8 + $0x10] sm:$0x1]
          %v1060 = vadd.f32 %v1055, %v1057
          %v1061 = vadd.f32 %v1045, %v1058
          %v1062 = vadd.f32 %v1044, %v1059
          %v1063 = vadd.f32 %v1056, %v1057
          %v1064 = vadd.f32 %v1048, %v1058
          %v1065 = vadd.f32 %v1047, %v1059
          %vm1066 = vcmask 523264
          %1067 = vst.msk [vmem:[#allocation30] sm:$0xff] %vm1066, %v1060
          %1068 = vst.msk [vmem:[#allocation30 + $0x8] sm:$0xff] %vm1066, %v1061
          %vm1069 = vcmask 516096
          %1070 = vst.msk [vmem:[#allocation30 + $0x10] sm:$0x1] %vm1069, %v1062
          %1071 = vst.msk [vmem:[#allocation30 + $0x18] sm:$0xff] %vm1066, %v1063
          %1072 = vst.msk [vmem:[#allocation30 + $0x20] sm:$0xff] %vm1066, %v1064
          %1073 = vst.msk [vmem:[#allocation30 + $0x28] sm:$0x1] %vm1069, %v1065
        $region160: #{dino_forward.3} parent=87 // pred_fallthru
          _
        %v1074 = vld [vmem:[#allocation30] sm:$0xff]
        %v1075 = vld [vmem:[#allocation30 + $0x8] sm:$0xff]
        %v1076 = vld [vmem:[#allocation30 + $0x10] sm:$0x1]
        %v1077 = vld [vmem:[#allocation30 + $0x18] sm:$0xff]
        %v1078 = vld [vmem:[#allocation30 + $0x20] sm:$0xff]
        %v1079 = vld [vmem:[#allocation30 + $0x28] sm:$0x1]
        %v1086 = vcombine.high %v1074, %v1074
        %v1088 = vunpack.c.l.s4 1966171168
        %v1089 = vunpack.c.0.s8 %v1088
        %v1090 = vlaneseq
        %v1091 = vshrl.u32 %v1090, 7
        %v1092 = vsub.s32 %v1089, %v1091
        %v1093 = vrot.slane %v1074, %v1092
        %v1095 = vunpack.c.l.s4 1966171168
        %v1096 = vunpack.c.0.s8 %v1095
        %v1097 = vlaneseq
        %v1098 = vshrl.u32 %v1097, 7
        %v1099 = vsub.s32 %v1096, %v1098
        %v1100 = vrot.slane %v1086, %v1099
        %v1101 = vcombine.high %v1093, %v1093
        %v1102 = vcombine.high %v1100, %v1100
        %v1104 = vunpack.c.l.s4 1966171168
        %v1105 = vunpack.c.0.s8 %v1104
        %v1106 = vlaneseq
        %v1107 = vshrl.u32 %v1106, 7
        %v1108 = vsub.s32 %v1105, %v1107
        %v1109 = vrot.slane %v1093, %v1108
        %v1111 = vunpack.c.l.s4 1966171168
        %v1112 = vunpack.c.0.s8 %v1111
        %v1113 = vlaneseq
        %v1114 = vshrl.u32 %v1113, 7
        %v1115 = vsub.s32 %v1112, %v1114
        %v1116 = vrot.slane %v1100, %v1115
        %v1118 = vunpack.c.l.s4 1966171168
        %v1119 = vunpack.c.0.s8 %v1118
        %v1120 = vlaneseq
        %v1121 = vshrl.u32 %v1120, 7
        %v1122 = vsub.s32 %v1119, %v1121
        %v1123 = vrot.slane %v1101, %v1122
        %v1125 = vunpack.c.l.s4 1966171168
        %v1126 = vunpack.c.0.s8 %v1125
        %v1127 = vlaneseq
        %v1128 = vshrl.u32 %v1127, 7
        %v1129 = vsub.s32 %v1126, %v1128
        %v1130 = vrot.slane %v1102, %v1129
        %v1131 = vcombine.high %v1109, %v1109
        %v1132 = vcombine.high %v1116, %v1116
        %v1133 = vcombine.high %v1123, %v1123
        %v1134 = vcombine.high %v1130, %v1130
        %v1135 = vcombine.high %v1075, %v1075
        %v1137 = vunpack.c.l.s4 1966171168
        %v1138 = vunpack.c.0.s8 %v1137
        %v1139 = vlaneseq
        %v1140 = vshrl.u32 %v1139, 7
        %v1141 = vsub.s32 %v1138, %v1140
        %v1142 = vrot.slane %v1075, %v1141
        %v1144 = vunpack.c.l.s4 1966171168
        %v1145 = vunpack.c.0.s8 %v1144
        %v1146 = vlaneseq
        %v1147 = vshrl.u32 %v1146, 7
        %v1148 = vsub.s32 %v1145, %v1147
        %v1149 = vrot.slane %v1135, %v1148
        %v1150 = vcombine.high %v1142, %v1142
        %v1151 = vcombine.high %v1149, %v1149
        %v1153 = vunpack.c.l.s4 1966171168
        %v1154 = vunpack.c.0.s8 %v1153
        %v1155 = vlaneseq
        %v1156 = vshrl.u32 %v1155, 7
        %v1157 = vsub.s32 %v1154, %v1156
        %v1158 = vrot.slane %v1142, %v1157
        %v1160 = vunpack.c.l.s4 1966171168
        %v1161 = vunpack.c.0.s8 %v1160
        %v1162 = vlaneseq
        %v1163 = vshrl.u32 %v1162, 7
        %v1164 = vsub.s32 %v1161, %v1163
        %v1165 = vrot.slane %v1149, %v1164
        %v1167 = vunpack.c.l.s4 1966171168
        %v1168 = vunpack.c.0.s8 %v1167
        %v1169 = vlaneseq
        %v1170 = vshrl.u32 %v1169, 7
        %v1171 = vsub.s32 %v1168, %v1170
        %v1172 = vrot.slane %v1150, %v1171
        %v1174 = vunpack.c.l.s4 1966171168
        %v1175 = vunpack.c.0.s8 %v1174
        %v1176 = vlaneseq
        %v1177 = vshrl.u32 %v1176, 7
        %v1178 = vsub.s32 %v1175, %v1177
        %v1179 = vrot.slane %v1151, %v1178
        %v1180 = vcombine.high %v1158, %v1158
        %v1181 = vcombine.high %v1165, %v1165
        %v1182 = vcombine.high %v1172, %v1172
        %v1183 = vcombine.high %v1179, %v1179
        %v1185 = vunpack.c.l.s4 1966171168
        %v1186 = vunpack.c.0.s8 %v1185
        %v1187 = vlaneseq
        %v1188 = vshrl.u32 %v1187, 7
        %v1189 = vsub.s32 %v1186, %v1188
        %v1190 = vrot.slane %v1076, %v1189
        %v1192 = vunpack.c.l.s4 1966171168
        %v1193 = vunpack.c.0.s8 %v1192
        %v1194 = vlaneseq
        %v1195 = vshrl.u32 %v1194, 7
        %v1196 = vsub.s32 %v1193, %v1195
        %v1197 = vrot.slane %v1190, %v1196
        %v1198 = vcombine.high %v1077, %v1077
        %v1200 = vunpack.c.l.s4 1966171168
        %v1201 = vunpack.c.0.s8 %v1200
        %v1202 = vlaneseq
        %v1203 = vshrl.u32 %v1202, 7
        %v1204 = vsub.s32 %v1201, %v1203
        %v1205 = vrot.slane %v1077, %v1204
        %v1207 = vunpack.c.l.s4 1966171168
        %v1208 = vunpack.c.0.s8 %v1207
        %v1209 = vlaneseq
        %v1210 = vshrl.u32 %v1209, 7
        %v1211 = vsub.s32 %v1208, %v1210
        %v1212 = vrot.slane %v1198, %v1211
        %v1213 = vcombine.high %v1205, %v1205
        %v1214 = vcombine.high %v1212, %v1212
        %v1216 = vunpack.c.l.s4 1966171168
        %v1217 = vunpack.c.0.s8 %v1216
        %v1218 = vlaneseq
        %v1219 = vshrl.u32 %v1218, 7
        %v1220 = vsub.s32 %v1217, %v1219
        %v1221 = vrot.slane %v1205, %v1220
        %v1223 = vunpack.c.l.s4 1966171168
        %v1224 = vunpack.c.0.s8 %v1223
        %v1225 = vlaneseq
        %v1226 = vshrl.u32 %v1225, 7
        %v1227 = vsub.s32 %v1224, %v1226
        %v1228 = vrot.slane %v1212, %v1227
        %v1230 = vunpack.c.l.s4 1966171168
        %v1231 = vunpack.c.0.s8 %v1230
        %v1232 = vlaneseq
        %v1233 = vshrl.u32 %v1232, 7
        %v1234 = vsub.s32 %v1231, %v1233
        %v1235 = vrot.slane %v1213, %v1234
        %v1237 = vunpack.c.l.s4 1966171168
        %v1238 = vunpack.c.0.s8 %v1237
        %v1239 = vlaneseq
        %v1240 = vshrl.u32 %v1239, 7
        %v1241 = vsub.s32 %v1238, %v1240
        %v1242 = vrot.slane %v1214, %v1241
        %v1243 = vcombine.high %v1221, %v1221
        %v1244 = vcombine.high %v1228, %v1228
        %v1245 = vcombine.high %v1235, %v1235
        %v1246 = vcombine.high %v1242, %v1242
        %v1247 = vcombine.high %v1078, %v1078
        %v1249 = vunpack.c.l.s4 1966171168
        %v1250 = vunpack.c.0.s8 %v1249
        %v1251 = vlaneseq
        %v1252 = vshrl.u32 %v1251, 7
        %v1253 = vsub.s32 %v1250, %v1252
        %v1254 = vrot.slane %v1078, %v1253
        %v1256 = vunpack.c.l.s4 1966171168
        %v1257 = vunpack.c.0.s8 %v1256
        %v1258 = vlaneseq
        %v1259 = vshrl.u32 %v1258, 7
        %v1260 = vsub.s32 %v1257, %v1259
        %v1261 = vrot.slane %v1247, %v1260
        %v1262 = vcombine.high %v1254, %v1254
        %v1263 = vcombine.high %v1261, %v1261
        %v1265 = vunpack.c.l.s4 1966171168
        %v1266 = vunpack.c.0.s8 %v1265
        %v1267 = vlaneseq
        %v1268 = vshrl.u32 %v1267, 7
        %v1269 = vsub.s32 %v1266, %v1268
        %v1270 = vrot.slane %v1254, %v1269
        %v1272 = vunpack.c.l.s4 1966171168
        %v1273 = vunpack.c.0.s8 %v1272
        %v1274 = vlaneseq
        %v1275 = vshrl.u32 %v1274, 7
        %v1276 = vsub.s32 %v1273, %v1275
        %v1277 = vrot.slane %v1261, %v1276
        %v1279 = vunpack.c.l.s4 1966171168
        %v1280 = vunpack.c.0.s8 %v1279
        %v1281 = vlaneseq
        %v1282 = vshrl.u32 %v1281, 7
        %v1283 = vsub.s32 %v1280, %v1282
        %v1284 = vrot.slane %v1262, %v1283
        %v1286 = vunpack.c.l.s4 1966171168
        %v1287 = vunpack.c.0.s8 %v1286
        %v1288 = vlaneseq
        %v1289 = vshrl.u32 %v1288, 7
        %v1290 = vsub.s32 %v1287, %v1289
        %v1291 = vrot.slane %v1263, %v1290
        %v1292 = vcombine.high %v1270, %v1270
        %v1293 = vcombine.high %v1277, %v1277
        %v1294 = vcombine.high %v1284, %v1284
        %v1295 = vcombine.high %v1291, %v1291
        %v1297 = vunpack.c.l.s4 1966171168
        %v1298 = vunpack.c.0.s8 %v1297
        %v1299 = vlaneseq
        %v1300 = vshrl.u32 %v1299, 7
        %v1301 = vsub.s32 %v1298, %v1300
        %v1302 = vrot.slane %v1079, %v1301
        %v1304 = vunpack.c.l.s4 1966171168
        %v1305 = vunpack.c.0.s8 %v1304
        %v1306 = vlaneseq
        %v1307 = vshrl.u32 %v1306, 7
        %v1308 = vsub.s32 %v1305, %v1307
        %v1309 = vrot.slane %v1302, %v1308
        %v1344 = vld [vmem:[%s831] sm:$0x1]
        %v1345 = vld [vmem:[%s839] sm:$0x1]
        %v1346 = vcombine.low %v1109, %v1123
        %v1347 = vcombine.low %v1131, %v1133
        %v1348 = vcombine.low %v1116, %v1130
        %v1349 = vcombine.low %v1132, %v1134
        %v1351 = vunpack.c.l.s4 1966171168
        %v1352 = vunpack.c.0.s8 %v1351
        %v1353 = vlaneseq
        %v1354 = vshrl.u32 %v1353, 7
        %v1355 = vsub.s32 %v1352, %v1354
        %v1356 = vrot.slane %v1346, %v1355
        %v1358 = vunpack.c.l.s4 1966171168
        %v1359 = vunpack.c.0.s8 %v1358
        %v1360 = vlaneseq
        %v1361 = vshrl.u32 %v1360, 7
        %v1362 = vsub.s32 %v1359, %v1361
        %v1363 = vrot.slane %v1347, %v1362
        %v1365 = vunpack.c.l.s4 1966171168
        %v1366 = vunpack.c.0.s8 %v1365
        %v1367 = vlaneseq
        %v1368 = vshrl.u32 %v1367, 7
        %v1369 = vsub.s32 %v1366, %v1368
        %v1370 = vrot.slane %v1348, %v1369
        %v1372 = vunpack.c.l.s4 1966171168
        %v1373 = vunpack.c.0.s8 %v1372
        %v1374 = vlaneseq
        %v1375 = vshrl.u32 %v1374, 7
        %v1376 = vsub.s32 %v1373, %v1375
        %v1377 = vrot.slane %v1349, %v1376
        %v1378 = vcombine.low %v1356, %v1363
        %v1379 = vcombine.low %v1370, %v1377
        %v1381 = vunpack.c.l.s4 1966171168
        %v1382 = vunpack.c.0.s8 %v1381
        %v1383 = vlaneseq
        %v1384 = vshrl.u32 %v1383, 7
        %v1385 = vsub.s32 %v1382, %v1384
        %v1386 = vrot.slane %v1378, %v1385
        %v1388 = vunpack.c.l.s4 1966171168
        %v1389 = vunpack.c.0.s8 %v1388
        %v1390 = vlaneseq
        %v1391 = vshrl.u32 %v1390, 7
        %v1392 = vsub.s32 %v1389, %v1391
        %v1393 = vrot.slane %v1379, %v1392
        %v1394 = vcombine.low %v1386, %v1393
        %v1395 = vcombine.low %v1158, %v1172
        %v1396 = vcombine.low %v1180, %v1182
        %v1397 = vcombine.low %v1165, %v1179
        %v1398 = vcombine.low %v1181, %v1183
        %v1400 = vunpack.c.l.s4 1966171168
        %v1401 = vunpack.c.0.s8 %v1400
        %v1402 = vlaneseq
        %v1403 = vshrl.u32 %v1402, 7
        %v1404 = vsub.s32 %v1401, %v1403
        %v1405 = vrot.slane %v1395, %v1404
        %v1407 = vunpack.c.l.s4 1966171168
        %v1408 = vunpack.c.0.s8 %v1407
        %v1409 = vlaneseq
        %v1410 = vshrl.u32 %v1409, 7
        %v1411 = vsub.s32 %v1408, %v1410
        %v1412 = vrot.slane %v1396, %v1411
        %v1414 = vunpack.c.l.s4 1966171168
        %v1415 = vunpack.c.0.s8 %v1414
        %v1416 = vlaneseq
        %v1417 = vshrl.u32 %v1416, 7
        %v1418 = vsub.s32 %v1415, %v1417
        %v1419 = vrot.slane %v1397, %v1418
        %v1421 = vunpack.c.l.s4 1966171168
        %v1422 = vunpack.c.0.s8 %v1421
        %v1423 = vlaneseq
        %v1424 = vshrl.u32 %v1423, 7
        %v1425 = vsub.s32 %v1422, %v1424
        %v1426 = vrot.slane %v1398, %v1425
        %v1427 = vcombine.low %v1405, %v1412
        %v1428 = vcombine.low %v1419, %v1426
        %v1430 = vunpack.c.l.s4 1966171168
        %v1431 = vunpack.c.0.s8 %v1430
        %v1432 = vlaneseq
        %v1433 = vshrl.u32 %v1432, 7
        %v1434 = vsub.s32 %v1431, %v1433
        %v1435 = vrot.slane %v1427, %v1434
        %v1437 = vunpack.c.l.s4 1966171168
        %v1438 = vunpack.c.0.s8 %v1437
        %v1439 = vlaneseq
        %v1440 = vshrl.u32 %v1439, 7
        %v1441 = vsub.s32 %v1438, %v1440
        %v1442 = vrot.slane %v1428, %v1441
        %v1443 = vcombine.low %v1435, %v1442
        %v1444 = vcombine.low %v1197, %v1221
        %v1445 = vcombine.low %v1235, %v1243
        %v1446 = vcombine.low %v1245, %v1228
        %v1447 = vcombine.low %v1242, %v1244
        %v1449 = vunpack.c.l.s4 1966171168
        %v1450 = vunpack.c.0.s8 %v1449
        %v1451 = vlaneseq
        %v1452 = vshrl.u32 %v1451, 7
        %v1453 = vsub.s32 %v1450, %v1452
        %v1454 = vrot.slane %v1444, %v1453
        %v1456 = vunpack.c.l.s4 1966171168
        %v1457 = vunpack.c.0.s8 %v1456
        %v1458 = vlaneseq
        %v1459 = vshrl.u32 %v1458, 7
        %v1460 = vsub.s32 %v1457, %v1459
        %v1461 = vrot.slane %v1445, %v1460
        %v1463 = vunpack.c.l.s4 1966171168
        %v1464 = vunpack.c.0.s8 %v1463
        %v1465 = vlaneseq
        %v1466 = vshrl.u32 %v1465, 7
        %v1467 = vsub.s32 %v1464, %v1466
        %v1468 = vrot.slane %v1446, %v1467
        %v1470 = vunpack.c.l.s4 1966171168
        %v1471 = vunpack.c.0.s8 %v1470
        %v1472 = vlaneseq
        %v1473 = vshrl.u32 %v1472, 7
        %v1474 = vsub.s32 %v1471, %v1473
        %v1475 = vrot.slane %v1447, %v1474
        %v1476 = vcombine.low %v1454, %v1461
        %v1477 = vcombine.low %v1468, %v1475
        %v1479 = vunpack.c.l.s4 1966171168
        %v1480 = vunpack.c.0.s8 %v1479
        %v1481 = vlaneseq
        %v1482 = vshrl.u32 %v1481, 7
        %v1483 = vsub.s32 %v1480, %v1482
        %v1484 = vrot.slane %v1476, %v1483
        %v1486 = vunpack.c.l.s4 1966171168
        %v1487 = vunpack.c.0.s8 %v1486
        %v1488 = vlaneseq
        %v1489 = vshrl.u32 %v1488, 7
        %v1490 = vsub.s32 %v1487, %v1489
        %v1491 = vrot.slane %v1477, %v1490
        %v1492 = vcombine.low %v1484, %v1491
        %v1493 = vcombine.low %v1246, %v1270
        %v1494 = vcombine.low %v1284, %v1292
        %v1495 = vcombine.low %v1294, %v1277
        %v1496 = vcombine.low %v1291, %v1293
        %v1498 = vunpack.c.l.s4 1966171168
        %v1499 = vunpack.c.0.s8 %v1498
        %v1500 = vlaneseq
        %v1501 = vshrl.u32 %v1500, 7
        %v1502 = vsub.s32 %v1499, %v1501
        %v1503 = vrot.slane %v1493, %v1502
        %v1505 = vunpack.c.l.s4 1966171168
        %v1506 = vunpack.c.0.s8 %v1505
        %v1507 = vlaneseq
        %v1508 = vshrl.u32 %v1507, 7
        %v1509 = vsub.s32 %v1506, %v1508
        %v1510 = vrot.slane %v1494, %v1509
        %v1512 = vunpack.c.l.s4 1966171168
        %v1513 = vunpack.c.0.s8 %v1512
        %v1514 = vlaneseq
        %v1515 = vshrl.u32 %v1514, 7
        %v1516 = vsub.s32 %v1513, %v1515
        %v1517 = vrot.slane %v1495, %v1516
        %v1519 = vunpack.c.l.s4 1966171168
        %v1520 = vunpack.c.0.s8 %v1519
        %v1521 = vlaneseq
        %v1522 = vshrl.u32 %v1521, 7
        %v1523 = vsub.s32 %v1520, %v1522
        %v1524 = vrot.slane %v1496, %v1523
        %v1525 = vcombine.low %v1503, %v1510
        %v1526 = vcombine.low %v1517, %v1524
        %v1528 = vunpack.c.l.s4 1966171168
        %v1529 = vunpack.c.0.s8 %v1528
        %v1530 = vlaneseq
        %v1531 = vshrl.u32 %v1530, 7
        %v1532 = vsub.s32 %v1529, %v1531
        %v1533 = vrot.slane %v1525, %v1532
        %v1535 = vunpack.c.l.s4 1966171168
        %v1536 = vunpack.c.0.s8 %v1535
        %v1537 = vlaneseq
        %v1538 = vshrl.u32 %v1537, 7
        %v1539 = vsub.s32 %v1536, %v1538
        %v1540 = vrot.slane %v1526, %v1539
        %v1541 = vcombine.low %v1533, %v1540
        %v1542 = vcombine.low %v1295, %v1309
        %v1544 = vunpack.c.l.s4 1966171168
        %v1545 = vunpack.c.0.s8 %v1544
        %v1546 = vlaneseq
        %v1547 = vshrl.u32 %v1546, 7
        %v1548 = vsub.s32 %v1545, %v1547
        %v1549 = vrot.slane %v1542, %v1548
        %v1551 = vunpack.c.l.s4 1966171168
        %v1552 = vunpack.c.0.s8 %v1551
        %v1553 = vlaneseq
        %v1554 = vshrl.u32 %v1553, 7
        %v1555 = vsub.s32 %v1552, %v1554
        %v1556 = vrot.slane %v1549, %v1555
        %vm1562 = vcmask 523264
        %v1563 = vsel %vm1562, %v1394, 0.0
        %1564 = vadd.xlane.f32.xlu0 %v1563
        %v1565 = vpop.xlane.xlu0 %1564
        %v1566 = vsel %vm1562, %v1443, 0.0
        %1567 = vadd.xlane.f32.xlu0 %v1566
        %v1568 = vpop.xlane.xlu0 %1567
        %v1569 = vsel %vm1562, %v1492, 0.0
        %1570 = vadd.xlane.f32.xlu0 %v1569
        %v1571 = vpop.xlane.xlu0 %1570
        %v1572 = vsel %vm1562, %v1541, 0.0
        %1573 = vadd.xlane.f32.xlu0 %v1572
        %v1574 = vpop.xlane.xlu0 %1573
        %vm1575 = vcmask 517120
        %v1576 = vsel %vm1575, %v1556, 0.0
        %1577 = vadd.xlane.f32.xlu0 %v1576
        %v1578 = vpop.xlane.xlu0 %1577
        %v1579 = vrcp.pop 64.0
        %v1580 = vmul.f32 %v1565, %v1579
        %v1581 = vmul.f32 %v1568, %v1579
        %v1582 = vmul.f32 %v1571, %v1579
        %v1583 = vmul.f32 %v1574, %v1579
        %v1584 = vmul.f32 %v1578, %v1579
        %v1590 = vlaneseq
        %v1591 = vshrl.u32 %v1590, 7
        %v1592 = vsub.s32 0, %v1591
        %v1593 = vrot.slane %v1580, %v1592
        %v1594 = vlaneseq
        %v1595 = vshrl.u32 %v1594, 7
        %v1596 = vsub.s32 1, %v1595
        %v1597 = vrot.slane %v1580, %v1596
        %v1598 = vlaneseq
        %v1599 = vshrl.u32 %v1598, 7
        %v1600 = vsub.s32 2, %v1599
        %v1601 = vrot.slane %v1580, %v1600
        %v1602 = vlaneseq
        %v1603 = vshrl.u32 %v1602, 7
        %v1604 = vsub.s32 3, %v1603
        %v1605 = vrot.slane %v1580, %v1604
        %v1606 = vlaneseq
        %v1607 = vshrl.u32 %v1606, 7
        %v1608 = vsub.s32 4, %v1607
        %v1609 = vrot.slane %v1580, %v1608
        %v1610 = vlaneseq
        %v1611 = vshrl.u32 %v1610, 7
        %v1612 = vsub.s32 5, %v1611
        %v1613 = vrot.slane %v1580, %v1612
        %v1614 = vlaneseq
        %v1615 = vshrl.u32 %v1614, 7
        %v1616 = vsub.s32 6, %v1615
        %v1617 = vrot.slane %v1580, %v1616
        %v1618 = vlaneseq
        %v1619 = vshrl.u32 %v1618, 7
        %v1620 = vsub.s32 7, %v1619
        %v1621 = vrot.slane %v1580, %v1620
        %v1622 = vlaneseq
        %v1623 = vshrl.u32 %v1622, 7
        %v1624 = vsub.s32 0, %v1623
        %v1625 = vrot.slane %v1581, %v1624
        %v1626 = vlaneseq
        %v1627 = vshrl.u32 %v1626, 7
        %v1628 = vsub.s32 1, %v1627
        %v1629 = vrot.slane %v1581, %v1628
        %v1630 = vlaneseq
        %v1631 = vshrl.u32 %v1630, 7
        %v1632 = vsub.s32 2, %v1631
        %v1633 = vrot.slane %v1581, %v1632
        %v1634 = vlaneseq
        %v1635 = vshrl.u32 %v1634, 7
        %v1636 = vsub.s32 3, %v1635
        %v1637 = vrot.slane %v1581, %v1636
        %v1638 = vlaneseq
        %v1639 = vshrl.u32 %v1638, 7
        %v1640 = vsub.s32 4, %v1639
        %v1641 = vrot.slane %v1581, %v1640
        %v1642 = vlaneseq
        %v1643 = vshrl.u32 %v1642, 7
        %v1644 = vsub.s32 5, %v1643
        %v1645 = vrot.slane %v1581, %v1644
        %v1646 = vlaneseq
        %v1647 = vshrl.u32 %v1646, 7
        %v1648 = vsub.s32 6, %v1647
        %v1649 = vrot.slane %v1581, %v1648
        %v1650 = vlaneseq
        %v1651 = vshrl.u32 %v1650, 7
        %v1652 = vsub.s32 7, %v1651
        %v1653 = vrot.slane %v1581, %v1652
        %v1654 = vlaneseq
        %v1655 = vshrl.u32 %v1654, 7
        %v1656 = vsub.s32 0, %v1655
        %v1657 = vrot.slane %v1582, %v1656
        %v1658 = vlaneseq
        %v1659 = vshrl.u32 %v1658, 7
        %v1660 = vsub.s32 1, %v1659
        %v1661 = vrot.slane %v1582, %v1660
        %v1662 = vlaneseq
        %v1663 = vshrl.u32 %v1662, 7
        %v1664 = vsub.s32 2, %v1663
        %v1665 = vrot.slane %v1582, %v1664
        %v1666 = vlaneseq
        %v1667 = vshrl.u32 %v1666, 7
        %v1668 = vsub.s32 3, %v1667
        %v1669 = vrot.slane %v1582, %v1668
        %v1670 = vlaneseq
        %v1671 = vshrl.u32 %v1670, 7
        %v1672 = vsub.s32 4, %v1671
        %v1673 = vrot.slane %v1582, %v1672
        %v1674 = vlaneseq
        %v1675 = vshrl.u32 %v1674, 7
        %v1676 = vsub.s32 5, %v1675
        %v1677 = vrot.slane %v1582, %v1676
        %v1678 = vlaneseq
        %v1679 = vshrl.u32 %v1678, 7
        %v1680 = vsub.s32 6, %v1679
        %v1681 = vrot.slane %v1582, %v1680
        %v1682 = vlaneseq
        %v1683 = vshrl.u32 %v1682, 7
        %v1684 = vsub.s32 7, %v1683
        %v1685 = vrot.slane %v1582, %v1684
        %v1686 = vlaneseq
        %v1687 = vshrl.u32 %v1686, 7
        %v1688 = vsub.s32 0, %v1687
        %v1689 = vrot.slane %v1583, %v1688
        %v1690 = vlaneseq
        %v1691 = vshrl.u32 %v1690, 7
        %v1692 = vsub.s32 1, %v1691
        %v1693 = vrot.slane %v1583, %v1692
        %v1694 = vlaneseq
        %v1695 = vshrl.u32 %v1694, 7
        %v1696 = vsub.s32 2, %v1695
        %v1697 = vrot.slane %v1583, %v1696
        %v1698 = vlaneseq
        %v1699 = vshrl.u32 %v1698, 7
        %v1700 = vsub.s32 3, %v1699
        %v1701 = vrot.slane %v1583, %v1700
        %v1702 = vlaneseq
        %v1703 = vshrl.u32 %v1702, 7
        %v1704 = vsub.s32 4, %v1703
        %v1705 = vrot.slane %v1583, %v1704
        %v1706 = vlaneseq
        %v1707 = vshrl.u32 %v1706, 7
        %v1708 = vsub.s32 5, %v1707
        %v1709 = vrot.slane %v1583, %v1708
        %v1710 = vlaneseq
        %v1711 = vshrl.u32 %v1710, 7
        %v1712 = vsub.s32 6, %v1711
        %v1713 = vrot.slane %v1583, %v1712
        %v1714 = vlaneseq
        %v1715 = vshrl.u32 %v1714, 7
        %v1716 = vsub.s32 7, %v1715
        %v1717 = vrot.slane %v1583, %v1716
        %v1718 = vlaneseq
        %v1719 = vshrl.u32 %v1718, 7
        %v1720 = vsub.s32 0, %v1719
        %v1721 = vrot.slane %v1584, %v1720
        %v1722 = vlaneseq
        %v1723 = vshrl.u32 %v1722, 7
        %v1724 = vsub.s32 1, %v1723
        %v1725 = vrot.slane %v1584, %v1724
        %v1760 = vsub.f32 %v1109, %v1593
        %v1761 = vsub.f32 %v1123, %v1597
        %v1762 = vsub.f32 %v1131, %v1601
        %v1763 = vsub.f32 %v1133, %v1605
        %v1764 = vsub.f32 %v1116, %v1609
        %v1765 = vsub.f32 %v1130, %v1613
        %v1766 = vsub.f32 %v1132, %v1617
        %v1767 = vsub.f32 %v1134, %v1621
        %v1768 = vsub.f32 %v1158, %v1625
        %v1769 = vsub.f32 %v1172, %v1629
        %v1770 = vsub.f32 %v1180, %v1633
        %v1771 = vsub.f32 %v1182, %v1637
        %v1772 = vsub.f32 %v1165, %v1641
        %v1773 = vsub.f32 %v1179, %v1645
        %v1774 = vsub.f32 %v1181, %v1649
        %v1775 = vsub.f32 %v1183, %v1653
        %v1776 = vsub.f32 %v1197, %v1657
        %v1777 = vsub.f32 %v1221, %v1661
        %v1778 = vsub.f32 %v1235, %v1665
        %v1779 = vsub.f32 %v1243, %v1669
        %v1780 = vsub.f32 %v1245, %v1673
        %v1781 = vsub.f32 %v1228, %v1677
        %v1782 = vsub.f32 %v1242, %v1681
        %v1783 = vsub.f32 %v1244, %v1685
        %v1784 = vsub.f32 %v1246, %v1689
        %v1785 = vsub.f32 %v1270, %v1693
        %v1786 = vsub.f32 %v1284, %v1697
        %v1787 = vsub.f32 %v1292, %v1701
        %v1788 = vsub.f32 %v1294, %v1705
        %v1789 = vsub.f32 %v1277, %v1709
        %v1790 = vsub.f32 %v1291, %v1713
        %v1791 = vsub.f32 %v1293, %v1717
        %v1792 = vsub.f32 %v1295, %v1721
        %v1793 = vsub.f32 %v1309, %v1725
        %v1794 = vmul.f32 %v1760, %v1760
        %v1795 = vmul.f32 %v1761, %v1761
        %v1796 = vmul.f32 %v1762, %v1762
        %v1797 = vmul.f32 %v1763, %v1763
        %v1798 = vmul.f32 %v1764, %v1764
        %v1799 = vmul.f32 %v1765, %v1765
        %v1800 = vmul.f32 %v1766, %v1766
        %v1801 = vmul.f32 %v1767, %v1767
        %v1802 = vmul.f32 %v1768, %v1768
        %v1803 = vmul.f32 %v1769, %v1769
        %v1804 = vmul.f32 %v1770, %v1770
        %v1805 = vmul.f32 %v1771, %v1771
        %v1806 = vmul.f32 %v1772, %v1772
        %v1807 = vmul.f32 %v1773, %v1773
        %v1808 = vmul.f32 %v1774, %v1774
        %v1809 = vmul.f32 %v1775, %v1775
        %v1810 = vmul.f32 %v1776, %v1776
        %v1811 = vmul.f32 %v1777, %v1777
        %v1812 = vmul.f32 %v1778, %v1778
        %v1813 = vmul.f32 %v1779, %v1779
        %v1814 = vmul.f32 %v1780, %v1780
        %v1815 = vmul.f32 %v1781, %v1781
        %v1816 = vmul.f32 %v1782, %v1782
        %v1817 = vmul.f32 %v1783, %v1783
        %v1818 = vmul.f32 %v1784, %v1784
        %v1819 = vmul.f32 %v1785, %v1785
        %v1820 = vmul.f32 %v1786, %v1786
        %v1821 = vmul.f32 %v1787, %v1787
        %v1822 = vmul.f32 %v1788, %v1788
        %v1823 = vmul.f32 %v1789, %v1789
        %v1824 = vmul.f32 %v1790, %v1790
        %v1825 = vmul.f32 %v1791, %v1791
        %v1826 = vmul.f32 %v1792, %v1792
        %v1827 = vmul.f32 %v1793, %v1793
        %v1862 = vcombine.low %v1794, %v1795
        %v1863 = vcombine.low %v1796, %v1797
        %v1864 = vcombine.low %v1798, %v1799
        %v1865 = vcombine.low %v1800, %v1801
        %v1867 = vunpack.c.l.s4 1966171168
        %v1868 = vunpack.c.0.s8 %v1867
        %v1869 = vlaneseq
        %v1870 = vshrl.u32 %v1869, 7
        %v1871 = vsub.s32 %v1868, %v1870
        %v1872 = vrot.slane %v1862, %v1871
        %v1874 = vunpack.c.l.s4 1966171168
        %v1875 = vunpack.c.0.s8 %v1874
        %v1876 = vlaneseq
        %v1877 = vshrl.u32 %v1876, 7
        %v1878 = vsub.s32 %v1875, %v1877
        %v1879 = vrot.slane %v1863, %v1878
        %v1881 = vunpack.c.l.s4 1966171168
        %v1882 = vunpack.c.0.s8 %v1881
        %v1883 = vlaneseq
        %v1884 = vshrl.u32 %v1883, 7
        %v1885 = vsub.s32 %v1882, %v1884
        %v1886 = vrot.slane %v1864, %v1885
        %v1888 = vunpack.c.l.s4 1966171168
        %v1889 = vunpack.c.0.s8 %v1888
        %v1890 = vlaneseq
        %v1891 = vshrl.u32 %v1890, 7
        %v1892 = vsub.s32 %v1889, %v1891
        %v1893 = vrot.slane %v1865, %v1892
        %v1894 = vcombine.low %v1872, %v1879
        %v1895 = vcombine.low %v1886, %v1893
        %v1897 = vunpack.c.l.s4 1966171168
        %v1898 = vunpack.c.0.s8 %v1897
        %v1899 = vlaneseq
        %v1900 = vshrl.u32 %v1899, 7
        %v1901 = vsub.s32 %v1898, %v1900
        %v1902 = vrot.slane %v1894, %v1901
        %v1904 = vunpack.c.l.s4 1966171168
        %v1905 = vunpack.c.0.s8 %v1904
        %v1906 = vlaneseq
        %v1907 = vshrl.u32 %v1906, 7
        %v1908 = vsub.s32 %v1905, %v1907
        %v1909 = vrot.slane %v1895, %v1908
        %v1910 = vcombine.low %v1902, %v1909
        %v1911 = vcombine.low %v1802, %v1803
        %v1912 = vcombine.low %v1804, %v1805
        %v1913 = vcombine.low %v1806, %v1807
        %v1914 = vcombine.low %v1808, %v1809
        %v1916 = vunpack.c.l.s4 1966171168
        %v1917 = vunpack.c.0.s8 %v1916
        %v1918 = vlaneseq
        %v1919 = vshrl.u32 %v1918, 7
        %v1920 = vsub.s32 %v1917, %v1919
        %v1921 = vrot.slane %v1911, %v1920
        %v1923 = vunpack.c.l.s4 1966171168
        %v1924 = vunpack.c.0.s8 %v1923
        %v1925 = vlaneseq
        %v1926 = vshrl.u32 %v1925, 7
        %v1927 = vsub.s32 %v1924, %v1926
        %v1928 = vrot.slane %v1912, %v1927
        %v1930 = vunpack.c.l.s4 1966171168
        %v1931 = vunpack.c.0.s8 %v1930
        %v1932 = vlaneseq
        %v1933 = vshrl.u32 %v1932, 7
        %v1934 = vsub.s32 %v1931, %v1933
        %v1935 = vrot.slane %v1913, %v1934
        %v1937 = vunpack.c.l.s4 1966171168
        %v1938 = vunpack.c.0.s8 %v1937
        %v1939 = vlaneseq
        %v1940 = vshrl.u32 %v1939, 7
        %v1941 = vsub.s32 %v1938, %v1940
        %v1942 = vrot.slane %v1914, %v1941
        %v1943 = vcombine.low %v1921, %v1928
        %v1944 = vcombine.low %v1935, %v1942
        %v1946 = vunpack.c.l.s4 1966171168
        %v1947 = vunpack.c.0.s8 %v1946
        %v1948 = vlaneseq
        %v1949 = vshrl.u32 %v1948, 7
        %v1950 = vsub.s32 %v1947, %v1949
        %v1951 = vrot.slane %v1943, %v1950
        %v1953 = vunpack.c.l.s4 1966171168
        %v1954 = vunpack.c.0.s8 %v1953
        %v1955 = vlaneseq
        %v1956 = vshrl.u32 %v1955, 7
        %v1957 = vsub.s32 %v1954, %v1956
        %v1958 = vrot.slane %v1944, %v1957
        %v1959 = vcombine.low %v1951, %v1958
        %v1960 = vcombine.low %v1810, %v1811
        %v1961 = vcombine.low %v1812, %v1813
        %v1962 = vcombine.low %v1814, %v1815
        %v1963 = vcombine.low %v1816, %v1817
        %v1965 = vunpack.c.l.s4 1966171168
        %v1966 = vunpack.c.0.s8 %v1965
        %v1967 = vlaneseq
        %v1968 = vshrl.u32 %v1967, 7
        %v1969 = vsub.s32 %v1966, %v1968
        %v1970 = vrot.slane %v1960, %v1969
        %v1972 = vunpack.c.l.s4 1966171168
        %v1973 = vunpack.c.0.s8 %v1972
        %v1974 = vlaneseq
        %v1975 = vshrl.u32 %v1974, 7
        %v1976 = vsub.s32 %v1973, %v1975
        %v1977 = vrot.slane %v1961, %v1976
        %v1979 = vunpack.c.l.s4 1966171168
        %v1980 = vunpack.c.0.s8 %v1979
        %v1981 = vlaneseq
        %v1982 = vshrl.u32 %v1981, 7
        %v1983 = vsub.s32 %v1980, %v1982
        %v1984 = vrot.slane %v1962, %v1983
        %v1986 = vunpack.c.l.s4 1966171168
        %v1987 = vunpack.c.0.s8 %v1986
        %v1988 = vlaneseq
        %v1989 = vshrl.u32 %v1988, 7
        %v1990 = vsub.s32 %v1987, %v1989
        %v1991 = vrot.slane %v1963, %v1990
        %v1992 = vcombine.low %v1970, %v1977
        %v1993 = vcombine.low %v1984, %v1991
        %v1995 = vunpack.c.l.s4 1966171168
        %v1996 = vunpack.c.0.s8 %v1995
        %v1997 = vlaneseq
        %v1998 = vshrl.u32 %v1997, 7
        %v1999 = vsub.s32 %v1996, %v1998
        %v2000 = vrot.slane %v1992, %v1999
        %v2002 = vunpack.c.l.s4 1966171168
        %v2003 = vunpack.c.0.s8 %v2002
        %v2004 = vlaneseq
        %v2005 = vshrl.u32 %v2004, 7
        %v2006 = vsub.s32 %v2003, %v2005
        %v2007 = vrot.slane %v1993, %v2006
        %v2008 = vcombine.low %v2000, %v2007
        %v2009 = vcombine.low %v1818, %v1819
        %v2010 = vcombine.low %v1820, %v1821
        %v2011 = vcombine.low %v1822, %v1823
        %v2012 = vcombine.low %v1824, %v1825
        %v2014 = vunpack.c.l.s4 1966171168
        %v2015 = vunpack.c.0.s8 %v2014
        %v2016 = vlaneseq
        %v2017 = vshrl.u32 %v2016, 7
        %v2018 = vsub.s32 %v2015, %v2017
        %v2019 = vrot.slane %v2009, %v2018
        %v2021 = vunpack.c.l.s4 1966171168
        %v2022 = vunpack.c.0.s8 %v2021
        %v2023 = vlaneseq
        %v2024 = vshrl.u32 %v2023, 7
        %v2025 = vsub.s32 %v2022, %v2024
        %v2026 = vrot.slane %v2010, %v2025
        %v2028 = vunpack.c.l.s4 1966171168
        %v2029 = vunpack.c.0.s8 %v2028
        %v2030 = vlaneseq
        %v2031 = vshrl.u32 %v2030, 7
        %v2032 = vsub.s32 %v2029, %v2031
        %v2033 = vrot.slane %v2011, %v2032
        %v2035 = vunpack.c.l.s4 1966171168
        %v2036 = vunpack.c.0.s8 %v2035
        %v2037 = vlaneseq
        %v2038 = vshrl.u32 %v2037, 7
        %v2039 = vsub.s32 %v2036, %v2038
        %v2040 = vrot.slane %v2012, %v2039
        %v2041 = vcombine.low %v2019, %v2026
        %v2042 = vcombine.low %v2033, %v2040
        %v2044 = vunpack.c.l.s4 1966171168
        %v2045 = vunpack.c.0.s8 %v2044
        %v2046 = vlaneseq
        %v2047 = vshrl.u32 %v2046, 7
        %v2048 = vsub.s32 %v2045, %v2047
        %v2049 = vrot.slane %v2041, %v2048
        %v2051 = vunpack.c.l.s4 1966171168
        %v2052 = vunpack.c.0.s8 %v2051
        %v2053 = vlaneseq
        %v2054 = vshrl.u32 %v2053, 7
        %v2055 = vsub.s32 %v2052, %v2054
        %v2056 = vrot.slane %v2042, %v2055
        %v2057 = vcombine.low %v2049, %v2056
        %v2058 = vcombine.low %v1826, %v1827
        %v2060 = vunpack.c.l.s4 1966171168
        %v2061 = vunpack.c.0.s8 %v2060
        %v2062 = vlaneseq
        %v2063 = vshrl.u32 %v2062, 7
        %v2064 = vsub.s32 %v2061, %v2063
        %v2065 = vrot.slane %v2058, %v2064
        %v2067 = vunpack.c.l.s4 1966171168
        %v2068 = vunpack.c.0.s8 %v2067
        %v2069 = vlaneseq
        %v2070 = vshrl.u32 %v2069, 7
        %v2071 = vsub.s32 %v2068, %v2070
        %v2072 = vrot.slane %v2065, %v2071
        %v2078 = vsel %vm1562, %v1910, 0.0
        %2079 = vadd.xlane.f32.xlu0 %v2078
        %v2080 = vpop.xlane.xlu0 %2079
        %v2081 = vsel %vm1562, %v1959, 0.0
        %2082 = vadd.xlane.f32.xlu0 %v2081
        %v2083 = vpop.xlane.xlu0 %2082
        %v2084 = vsel %vm1562, %v2008, 0.0
        %2085 = vadd.xlane.f32.xlu0 %v2084
        %v2086 = vpop.xlane.xlu0 %2085
        %v2087 = vsel %vm1562, %v2057, 0.0
        %2088 = vadd.xlane.f32.xlu0 %v2087
        %v2089 = vpop.xlane.xlu0 %2088
        %v2090 = vsel %vm1575, %v2072, 0.0
        %2091 = vadd.xlane.f32.xlu0 %v2090
        %v2092 = vpop.xlane.xlu0 %2091
        %v2093 = vmul.f32 %v2080, %v1579
        %v2094 = vmul.f32 %v2083, %v1579
        %v2095 = vmul.f32 %v2086, %v1579
        %v2096 = vmul.f32 %v2089, %v1579
        %v2097 = vmul.f32 %v2092, %v1579
        %v2098 = vadd.f32 %v2093, 1e-12
        %v2099 = vadd.f32 %v2094, 1e-12
        %v2100 = vadd.f32 %v2095, 1e-12
        %v2101 = vadd.f32 %v2096, 1e-12
        %v2102 = vadd.f32 %v2097, 1e-12
        %v2103 = vrsqrt.pop %v2098
        %v2104 = vrsqrt.pop %v2099
        %v2105 = vrsqrt.pop %v2100
        %v2106 = vrsqrt.pop %v2101
        %v2107 = vrsqrt.pop %v2102
        %v2113 = vlaneseq
        %v2114 = vshrl.u32 %v2113, 7
        %v2115 = vsub.s32 0, %v2114
        %v2116 = vrot.slane %v2103, %v2115
        %v2117 = vlaneseq
        %v2118 = vshrl.u32 %v2117, 7
        %v2119 = vsub.s32 1, %v2118
        %v2120 = vrot.slane %v2103, %v2119
        %v2121 = vlaneseq
        %v2122 = vshrl.u32 %v2121, 7
        %v2123 = vsub.s32 2, %v2122
        %v2124 = vrot.slane %v2103, %v2123
        %v2125 = vlaneseq
        %v2126 = vshrl.u32 %v2125, 7
        %v2127 = vsub.s32 3, %v2126
        %v2128 = vrot.slane %v2103, %v2127
        %v2129 = vlaneseq
        %v2130 = vshrl.u32 %v2129, 7
        %v2131 = vsub.s32 4, %v2130
        %v2132 = vrot.slane %v2103, %v2131
        %v2133 = vlaneseq
        %v2134 = vshrl.u32 %v2133, 7
        %v2135 = vsub.s32 5, %v2134
        %v2136 = vrot.slane %v2103, %v2135
        %v2137 = vlaneseq
        %v2138 = vshrl.u32 %v2137, 7
        %v2139 = vsub.s32 6, %v2138
        %v2140 = vrot.slane %v2103, %v2139
        %v2141 = vlaneseq
        %v2142 = vshrl.u32 %v2141, 7
        %v2143 = vsub.s32 7, %v2142
        %v2144 = vrot.slane %v2103, %v2143
        %v2145 = vlaneseq
        %v2146 = vshrl.u32 %v2145, 7
        %v2147 = vsub.s32 0, %v2146
        %v2148 = vrot.slane %v2104, %v2147
        %v2149 = vlaneseq
        %v2150 = vshrl.u32 %v2149, 7
        %v2151 = vsub.s32 1, %v2150
        %v2152 = vrot.slane %v2104, %v2151
        %v2153 = vlaneseq
        %v2154 = vshrl.u32 %v2153, 7
        %v2155 = vsub.s32 2, %v2154
        %v2156 = vrot.slane %v2104, %v2155
        %v2157 = vlaneseq
        %v2158 = vshrl.u32 %v2157, 7
        %v2159 = vsub.s32 3, %v2158
        %v2160 = vrot.slane %v2104, %v2159
        %v2161 = vlaneseq
        %v2162 = vshrl.u32 %v2161, 7
        %v2163 = vsub.s32 4, %v2162
        %v2164 = vrot.slane %v2104, %v2163
        %v2165 = vlaneseq
        %v2166 = vshrl.u32 %v2165, 7
        %v2167 = vsub.s32 5, %v2166
        %v2168 = vrot.slane %v2104, %v2167
        %v2169 = vlaneseq
        %v2170 = vshrl.u32 %v2169, 7
        %v2171 = vsub.s32 6, %v2170
        %v2172 = vrot.slane %v2104, %v2171
        %v2173 = vlaneseq
        %v2174 = vshrl.u32 %v2173, 7
        %v2175 = vsub.s32 7, %v2174
        %v2176 = vrot.slane %v2104, %v2175
        %v2177 = vlaneseq
        %v2178 = vshrl.u32 %v2177, 7
        %v2179 = vsub.s32 0, %v2178
        %v2180 = vrot.slane %v2105, %v2179
        %v2181 = vlaneseq
        %v2182 = vshrl.u32 %v2181, 7
        %v2183 = vsub.s32 1, %v2182
        %v2184 = vrot.slane %v2105, %v2183
        %v2185 = vlaneseq
        %v2186 = vshrl.u32 %v2185, 7
        %v2187 = vsub.s32 2, %v2186
        %v2188 = vrot.slane %v2105, %v2187
        %v2189 = vlaneseq
        %v2190 = vshrl.u32 %v2189, 7
        %v2191 = vsub.s32 3, %v2190
        %v2192 = vrot.slane %v2105, %v2191
        %v2193 = vlaneseq
        %v2194 = vshrl.u32 %v2193, 7
        %v2195 = vsub.s32 4, %v2194
        %v2196 = vrot.slane %v2105, %v2195
        %v2197 = vlaneseq
        %v2198 = vshrl.u32 %v2197, 7
        %v2199 = vsub.s32 5, %v2198
        %v2200 = vrot.slane %v2105, %v2199
        %v2201 = vlaneseq
        %v2202 = vshrl.u32 %v2201, 7
        %v2203 = vsub.s32 6, %v2202
        %v2204 = vrot.slane %v2105, %v2203
        %v2205 = vlaneseq
        %v2206 = vshrl.u32 %v2205, 7
        %v2207 = vsub.s32 7, %v2206
        %v2208 = vrot.slane %v2105, %v2207
        %v2209 = vlaneseq
        %v2210 = vshrl.u32 %v2209, 7
        %v2211 = vsub.s32 0, %v2210
        %v2212 = vrot.slane %v2106, %v2211
        %v2213 = vlaneseq
        %v2214 = vshrl.u32 %v2213, 7
        %v2215 = vsub.s32 1, %v2214
        %v2216 = vrot.slane %v2106, %v2215
        %v2217 = vlaneseq
        %v2218 = vshrl.u32 %v2217, 7
        %v2219 = vsub.s32 2, %v2218
        %v2220 = vrot.slane %v2106, %v2219
        %v2221 = vlaneseq
        %v2222 = vshrl.u32 %v2221, 7
        %v2223 = vsub.s32 3, %v2222
        %v2224 = vrot.slane %v2106, %v2223
        %v2225 = vlaneseq
        %v2226 = vshrl.u32 %v2225, 7
        %v2227 = vsub.s32 4, %v2226
        %v2228 = vrot.slane %v2106, %v2227
        %v2229 = vlaneseq
        %v2230 = vshrl.u32 %v2229, 7
        %v2231 = vsub.s32 5, %v2230
        %v2232 = vrot.slane %v2106, %v2231
        %v2233 = vlaneseq
        %v2234 = vshrl.u32 %v2233, 7
        %v2235 = vsub.s32 6, %v2234
        %v2236 = vrot.slane %v2106, %v2235
        %v2237 = vlaneseq
        %v2238 = vshrl.u32 %v2237, 7
        %v2239 = vsub.s32 7, %v2238
        %v2240 = vrot.slane %v2106, %v2239
        %v2241 = vlaneseq
        %v2242 = vshrl.u32 %v2241, 7
        %v2243 = vsub.s32 0, %v2242
        %v2244 = vrot.slane %v2107, %v2243
        %v2245 = vlaneseq
        %v2246 = vshrl.u32 %v2245, 7
        %v2247 = vsub.s32 1, %v2246
        %v2248 = vrot.slane %v2107, %v2247
        %v2283 = vmul.f32 %v1760, %v2116
        %v2284 = vmul.f32 %v1761, %v2120
        %v2285 = vmul.f32 %v1762, %v2124
        %v2286 = vmul.f32 %v1763, %v2128
        %v2287 = vmul.f32 %v1764, %v2132
        %v2288 = vmul.f32 %v1765, %v2136
        %v2289 = vmul.f32 %v1766, %v2140
        %v2290 = vmul.f32 %v1767, %v2144
        %v2291 = vmul.f32 %v1768, %v2148
        %v2292 = vmul.f32 %v1769, %v2152
        %v2293 = vmul.f32 %v1770, %v2156
        %v2294 = vmul.f32 %v1771, %v2160
        %v2295 = vmul.f32 %v1772, %v2164
        %v2296 = vmul.f32 %v1773, %v2168
        %v2297 = vmul.f32 %v1774, %v2172
        %v2298 = vmul.f32 %v1775, %v2176
        %v2299 = vmul.f32 %v1776, %v2180
        %v2300 = vmul.f32 %v1777, %v2184
        %v2301 = vmul.f32 %v1778, %v2188
        %v2302 = vmul.f32 %v1779, %v2192
        %v2303 = vmul.f32 %v1780, %v2196
        %v2304 = vmul.f32 %v1781, %v2200
        %v2305 = vmul.f32 %v1782, %v2204
        %v2306 = vmul.f32 %v1783, %v2208
        %v2307 = vmul.f32 %v1784, %v2212
        %v2308 = vmul.f32 %v1785, %v2216
        %v2309 = vmul.f32 %v1786, %v2220
        %v2310 = vmul.f32 %v1787, %v2224
        %v2311 = vmul.f32 %v1788, %v2228
        %v2312 = vmul.f32 %v1789, %v2232
        %v2313 = vmul.f32 %v1790, %v2236
        %v2314 = vmul.f32 %v1791, %v2240
        %v2315 = vmul.f32 %v1792, %v2244
        %v2316 = vmul.f32 %v1793, %v2248
        %v2318 = vlaneseq
        %v2319 = vshrl.u32 %v2318, 7
        %v2320 = vsub.s32 0, %v2319
        %v2321 = vrot.slane %v1344, %v2320
        %v2322 = vcombine.high %v2321, %v2321
        %v2324 = vunpack.c.l.s4 1966171168
        %v2325 = vunpack.c.0.s8 %v2324
        %v2326 = vlaneseq
        %v2327 = vshrl.u32 %v2326, 7
        %v2328 = vsub.s32 %v2325, %v2327
        %v2329 = vrot.slane %v2321, %v2328
        %v2331 = vunpack.c.l.s4 1966171168
        %v2332 = vunpack.c.0.s8 %v2331
        %v2333 = vlaneseq
        %v2334 = vshrl.u32 %v2333, 7
        %v2335 = vsub.s32 %v2332, %v2334
        %v2336 = vrot.slane %v2322, %v2335
        %v2337 = vcombine.high %v2329, %v2329
        %v2338 = vcombine.high %v2336, %v2336
        %v2340 = vunpack.c.l.s4 1966171168
        %v2341 = vunpack.c.0.s8 %v2340
        %v2342 = vlaneseq
        %v2343 = vshrl.u32 %v2342, 7
        %v2344 = vsub.s32 %v2341, %v2343
        %v2345 = vrot.slane %v2329, %v2344
        %v2347 = vunpack.c.l.s4 1966171168
        %v2348 = vunpack.c.0.s8 %v2347
        %v2349 = vlaneseq
        %v2350 = vshrl.u32 %v2349, 7
        %v2351 = vsub.s32 %v2348, %v2350
        %v2352 = vrot.slane %v2336, %v2351
        %v2354 = vunpack.c.l.s4 1966171168
        %v2355 = vunpack.c.0.s8 %v2354
        %v2356 = vlaneseq
        %v2357 = vshrl.u32 %v2356, 7
        %v2358 = vsub.s32 %v2355, %v2357
        %v2359 = vrot.slane %v2337, %v2358
        %v2361 = vunpack.c.l.s4 1966171168
        %v2362 = vunpack.c.0.s8 %v2361
        %v2363 = vlaneseq
        %v2364 = vshrl.u32 %v2363, 7
        %v2365 = vsub.s32 %v2362, %v2364
        %v2366 = vrot.slane %v2338, %v2365
        %v2367 = vcombine.high %v2345, %v2345
        %v2368 = vcombine.high %v2352, %v2352
        %v2369 = vcombine.high %v2359, %v2359
        %v2370 = vcombine.high %v2366, %v2366
        %v2379 = vmul.f32 %v2283, %v2345
        %v2380 = vmul.f32 %v2284, %v2359
        %v2381 = vmul.f32 %v2285, %v2367
        %v2382 = vmul.f32 %v2286, %v2369
        %v2383 = vmul.f32 %v2287, %v2352
        %v2384 = vmul.f32 %v2288, %v2366
        %v2385 = vmul.f32 %v2289, %v2368
        %v2386 = vmul.f32 %v2290, %v2370
        %v2387 = vmul.f32 %v2291, %v2345
        %v2388 = vmul.f32 %v2292, %v2359
        %v2389 = vmul.f32 %v2293, %v2367
        %v2390 = vmul.f32 %v2294, %v2369
        %v2391 = vmul.f32 %v2295, %v2352
        %v2392 = vmul.f32 %v2296, %v2366
        %v2393 = vmul.f32 %v2297, %v2368
        %v2394 = vmul.f32 %v2298, %v2370
        %v2395 = vmul.f32 %v2299, %v2345
        %v2396 = vmul.f32 %v2300, %v2359
        %v2397 = vmul.f32 %v2301, %v2367
        %v2398 = vmul.f32 %v2302, %v2369
        %v2399 = vmul.f32 %v2303, %v2352
        %v2400 = vmul.f32 %v2304, %v2366
        %v2401 = vmul.f32 %v2305, %v2368
        %v2402 = vmul.f32 %v2306, %v2370
        %v2403 = vmul.f32 %v2307, %v2345
        %v2404 = vmul.f32 %v2308, %v2359
        %v2405 = vmul.f32 %v2309, %v2367
        %v2406 = vmul.f32 %v2310, %v2369
        %v2407 = vmul.f32 %v2311, %v2352
        %v2408 = vmul.f32 %v2312, %v2366
        %v2409 = vmul.f32 %v2313, %v2368
        %v2410 = vmul.f32 %v2314, %v2370
        %v2411 = vmul.f32 %v2315, %v2345
        %v2412 = vmul.f32 %v2316, %v2359
        %v2414 = vlaneseq
        %v2415 = vshrl.u32 %v2414, 7
        %v2416 = vsub.s32 0, %v2415
        %v2417 = vrot.slane %v1345, %v2416
        %v2418 = vcombine.high %v2417, %v2417
        %v2420 = vunpack.c.l.s4 1966171168
        %v2421 = vunpack.c.0.s8 %v2420
        %v2422 = vlaneseq
        %v2423 = vshrl.u32 %v2422, 7
        %v2424 = vsub.s32 %v2421, %v2423
        %v2425 = vrot.slane %v2417, %v2424
        %v2427 = vunpack.c.l.s4 1966171168
        %v2428 = vunpack.c.0.s8 %v2427
        %v2429 = vlaneseq
        %v2430 = vshrl.u32 %v2429, 7
        %v2431 = vsub.s32 %v2428, %v2430
        %v2432 = vrot.slane %v2418, %v2431
        %v2433 = vcombine.high %v2425, %v2425
        %v2434 = vcombine.high %v2432, %v2432
        %v2436 = vunpack.c.l.s4 1966171168
        %v2437 = vunpack.c.0.s8 %v2436
        %v2438 = vlaneseq
        %v2439 = vshrl.u32 %v2438, 7
        %v2440 = vsub.s32 %v2437, %v2439
        %v2441 = vrot.slane %v2425, %v2440
        %v2443 = vunpack.c.l.s4 1966171168
        %v2444 = vunpack.c.0.s8 %v2443
        %v2445 = vlaneseq
        %v2446 = vshrl.u32 %v2445, 7
        %v2447 = vsub.s32 %v2444, %v2446
        %v2448 = vrot.slane %v2432, %v2447
        %v2450 = vunpack.c.l.s4 1966171168
        %v2451 = vunpack.c.0.s8 %v2450
        %v2452 = vlaneseq
        %v2453 = vshrl.u32 %v2452, 7
        %v2454 = vsub.s32 %v2451, %v2453
        %v2455 = vrot.slane %v2433, %v2454
        %v2457 = vunpack.c.l.s4 1966171168
        %v2458 = vunpack.c.0.s8 %v2457
        %v2459 = vlaneseq
        %v2460 = vshrl.u32 %v2459, 7
        %v2461 = vsub.s32 %v2458, %v2460
        %v2462 = vrot.slane %v2434, %v2461
        %v2463 = vcombine.high %v2441, %v2441
        %v2464 = vcombine.high %v2448, %v2448
        %v2465 = vcombine.high %v2455, %v2455
        %v2466 = vcombine.high %v2462, %v2462
        %v2475 = vadd.f32 %v2379, %v2441
        %v2476 = vadd.f32 %v2380, %v2455
        %v2477 = vadd.f32 %v2381, %v2463
        %v2478 = vadd.f32 %v2382, %v2465
        %v2479 = vadd.f32 %v2383, %v2448
        %v2480 = vadd.f32 %v2384, %v2462
        %v2481 = vadd.f32 %v2385, %v2464
        %v2482 = vadd.f32 %v2386, %v2466
        %v2483 = vadd.f32 %v2387, %v2441
        %v2484 = vadd.f32 %v2388, %v2455
        %v2485 = vadd.f32 %v2389, %v2463
        %v2486 = vadd.f32 %v2390, %v2465
        %v2487 = vadd.f32 %v2391, %v2448
        %v2488 = vadd.f32 %v2392, %v2462
        %v2489 = vadd.f32 %v2393, %v2464
        %v2490 = vadd.f32 %v2394, %v2466
        %v2491 = vadd.f32 %v2395, %v2441
        %v2492 = vadd.f32 %v2396, %v2455
        %v2493 = vadd.f32 %v2397, %v2463
        %v2494 = vadd.f32 %v2398, %v2465
        %v2495 = vadd.f32 %v2399, %v2448
        %v2496 = vadd.f32 %v2400, %v2462
        %v2497 = vadd.f32 %v2401, %v2464
        %v2498 = vadd.f32 %v2402, %v2466
        %v2499 = vadd.f32 %v2403, %v2441
        %v2500 = vadd.f32 %v2404, %v2455
        %v2501 = vadd.f32 %v2405, %v2463
        %v2502 = vadd.f32 %v2406, %v2465
        %v2503 = vadd.f32 %v2407, %v2448
        %v2504 = vadd.f32 %v2408, %v2462
        %v2505 = vadd.f32 %v2409, %v2464
        %v2506 = vadd.f32 %v2410, %v2466
        %v2507 = vadd.f32 %v2411, %v2441
        %v2508 = vadd.f32 %v2412, %v2455
        %v2543 = vcombine.low %v2475, %v2476
        %v2544 = vcombine.low %v2477, %v2478
        %v2545 = vcombine.low %v2479, %v2480
        %v2546 = vcombine.low %v2481, %v2482
        %v2548 = vunpack.c.l.s4 1966171168
        %v2549 = vunpack.c.0.s8 %v2548
        %v2550 = vlaneseq
        %v2551 = vshrl.u32 %v2550, 7
        %v2552 = vsub.s32 %v2549, %v2551
        %v2553 = vrot.slane %v2543, %v2552
        %v2555 = vunpack.c.l.s4 1966171168
        %v2556 = vunpack.c.0.s8 %v2555
        %v2557 = vlaneseq
        %v2558 = vshrl.u32 %v2557, 7
        %v2559 = vsub.s32 %v2556, %v2558
        %v2560 = vrot.slane %v2544, %v2559
        %v2562 = vunpack.c.l.s4 1966171168
        %v2563 = vunpack.c.0.s8 %v2562
        %v2564 = vlaneseq
        %v2565 = vshrl.u32 %v2564, 7
        %v2566 = vsub.s32 %v2563, %v2565
        %v2567 = vrot.slane %v2545, %v2566
        %v2569 = vunpack.c.l.s4 1966171168
        %v2570 = vunpack.c.0.s8 %v2569
        %v2571 = vlaneseq
        %v2572 = vshrl.u32 %v2571, 7
        %v2573 = vsub.s32 %v2570, %v2572
        %v2574 = vrot.slane %v2546, %v2573
        %v2575 = vcombine.low %v2553, %v2560
        %v2576 = vcombine.low %v2567, %v2574
        %v2578 = vunpack.c.l.s4 1966171168
        %v2579 = vunpack.c.0.s8 %v2578
        %v2580 = vlaneseq
        %v2581 = vshrl.u32 %v2580, 7
        %v2582 = vsub.s32 %v2579, %v2581
        %v2583 = vrot.slane %v2575, %v2582
        %v2585 = vunpack.c.l.s4 1966171168
        %v2586 = vunpack.c.0.s8 %v2585
        %v2587 = vlaneseq
        %v2588 = vshrl.u32 %v2587, 7
        %v2589 = vsub.s32 %v2586, %v2588
        %v2590 = vrot.slane %v2576, %v2589
        %v2591 = vcombine.low %v2583, %v2590
        %v2592 = vcombine.low %v2483, %v2484
        %v2593 = vcombine.low %v2485, %v2486
        %v2594 = vcombine.low %v2487, %v2488
        %v2595 = vcombine.low %v2489, %v2490
        %v2597 = vunpack.c.l.s4 1966171168
        %v2598 = vunpack.c.0.s8 %v2597
        %v2599 = vlaneseq
        %v2600 = vshrl.u32 %v2599, 7
        %v2601 = vsub.s32 %v2598, %v2600
        %v2602 = vrot.slane %v2592, %v2601
        %v2604 = vunpack.c.l.s4 1966171168
        %v2605 = vunpack.c.0.s8 %v2604
        %v2606 = vlaneseq
        %v2607 = vshrl.u32 %v2606, 7
        %v2608 = vsub.s32 %v2605, %v2607
        %v2609 = vrot.slane %v2593, %v2608
        %v2611 = vunpack.c.l.s4 1966171168
        %v2612 = vunpack.c.0.s8 %v2611
        %v2613 = vlaneseq
        %v2614 = vshrl.u32 %v2613, 7
        %v2615 = vsub.s32 %v2612, %v2614
        %v2616 = vrot.slane %v2594, %v2615
        %v2618 = vunpack.c.l.s4 1966171168
        %v2619 = vunpack.c.0.s8 %v2618
        %v2620 = vlaneseq
        %v2621 = vshrl.u32 %v2620, 7
        %v2622 = vsub.s32 %v2619, %v2621
        %v2623 = vrot.slane %v2595, %v2622
        %v2624 = vcombine.low %v2602, %v2609
        %v2625 = vcombine.low %v2616, %v2623
        %v2627 = vunpack.c.l.s4 1966171168
        %v2628 = vunpack.c.0.s8 %v2627
        %v2629 = vlaneseq
        %v2630 = vshrl.u32 %v2629, 7
        %v2631 = vsub.s32 %v2628, %v2630
        %v2632 = vrot.slane %v2624, %v2631
        %v2634 = vunpack.c.l.s4 1966171168
        %v2635 = vunpack.c.0.s8 %v2634
        %v2636 = vlaneseq
        %v2637 = vshrl.u32 %v2636, 7
        %v2638 = vsub.s32 %v2635, %v2637
        %v2639 = vrot.slane %v2625, %v2638
        %v2640 = vcombine.low %v2632, %v2639
        %v2641 = vcombine.low %v2491, %v2492
        %v2642 = vcombine.low %v2493, %v2494
        %v2643 = vcombine.low %v2495, %v2496
        %v2644 = vcombine.low %v2497, %v2498
        %v2646 = vunpack.c.l.s4 1966171168
        %v2647 = vunpack.c.0.s8 %v2646
        %v2648 = vlaneseq
        %v2649 = vshrl.u32 %v2648, 7
        %v2650 = vsub.s32 %v2647, %v2649
        %v2651 = vrot.slane %v2641, %v2650
        %v2653 = vunpack.c.l.s4 1966171168
        %v2654 = vunpack.c.0.s8 %v2653
        %v2655 = vlaneseq
        %v2656 = vshrl.u32 %v2655, 7
        %v2657 = vsub.s32 %v2654, %v2656
        %v2658 = vrot.slane %v2642, %v2657
        %v2660 = vunpack.c.l.s4 1966171168
        %v2661 = vunpack.c.0.s8 %v2660
        %v2662 = vlaneseq
        %v2663 = vshrl.u32 %v2662, 7
        %v2664 = vsub.s32 %v2661, %v2663
        %v2665 = vrot.slane %v2643, %v2664
        %v2667 = vunpack.c.l.s4 1966171168
        %v2668 = vunpack.c.0.s8 %v2667
        %v2669 = vlaneseq
        %v2670 = vshrl.u32 %v2669, 7
        %v2671 = vsub.s32 %v2668, %v2670
        %v2672 = vrot.slane %v2644, %v2671
        %v2673 = vcombine.low %v2651, %v2658
        %v2674 = vcombine.low %v2665, %v2672
        %v2676 = vunpack.c.l.s4 1966171168
        %v2677 = vunpack.c.0.s8 %v2676
        %v2678 = vlaneseq
        %v2679 = vshrl.u32 %v2678, 7
        %v2680 = vsub.s32 %v2677, %v2679
        %v2681 = vrot.slane %v2673, %v2680
        %v2683 = vunpack.c.l.s4 1966171168
        %v2684 = vunpack.c.0.s8 %v2683
        %v2685 = vlaneseq
        %v2686 = vshrl.u32 %v2685, 7
        %v2687 = vsub.s32 %v2684, %v2686
        %v2688 = vrot.slane %v2674, %v2687
        %v2689 = vcombine.low %v2681, %v2688
        %v2690 = vcombine.low %v2499, %v2500
        %v2691 = vcombine.low %v2501, %v2502
        %v2692 = vcombine.low %v2503, %v2504
        %v2693 = vcombine.low %v2505, %v2506
        %v2695 = vunpack.c.l.s4 1966171168
        %v2696 = vunpack.c.0.s8 %v2695
        %v2697 = vlaneseq
        %v2698 = vshrl.u32 %v2697, 7
        %v2699 = vsub.s32 %v2696, %v2698
        %v2700 = vrot.slane %v2690, %v2699
        %v2702 = vunpack.c.l.s4 1966171168
        %v2703 = vunpack.c.0.s8 %v2702
        %v2704 = vlaneseq
        %v2705 = vshrl.u32 %v2704, 7
        %v2706 = vsub.s32 %v2703, %v2705
        %v2707 = vrot.slane %v2691, %v2706
        %v2709 = vunpack.c.l.s4 1966171168
        %v2710 = vunpack.c.0.s8 %v2709
        %v2711 = vlaneseq
        %v2712 = vshrl.u32 %v2711, 7
        %v2713 = vsub.s32 %v2710, %v2712
        %v2714 = vrot.slane %v2692, %v2713
        %v2716 = vunpack.c.l.s4 1966171168
        %v2717 = vunpack.c.0.s8 %v2716
        %v2718 = vlaneseq
        %v2719 = vshrl.u32 %v2718, 7
        %v2720 = vsub.s32 %v2717, %v2719
        %v2721 = vrot.slane %v2693, %v2720
        %v2722 = vcombine.low %v2700, %v2707
        %v2723 = vcombine.low %v2714, %v2721
        %v2725 = vunpack.c.l.s4 1966171168
        %v2726 = vunpack.c.0.s8 %v2725
        %v2727 = vlaneseq
        %v2728 = vshrl.u32 %v2727, 7
        %v2729 = vsub.s32 %v2726, %v2728
        %v2730 = vrot.slane %v2722, %v2729
        %v2732 = vunpack.c.l.s4 1966171168
        %v2733 = vunpack.c.0.s8 %v2732
        %v2734 = vlaneseq
        %v2735 = vshrl.u32 %v2734, 7
        %v2736 = vsub.s32 %v2733, %v2735
        %v2737 = vrot.slane %v2723, %v2736
        %v2738 = vcombine.low %v2730, %v2737
        %v2739 = vcombine.low %v2507, %v2508
        %v2741 = vunpack.c.l.s4 1966171168
        %v2742 = vunpack.c.0.s8 %v2741
        %v2743 = vlaneseq
        %v2744 = vshrl.u32 %v2743, 7
        %v2745 = vsub.s32 %v2742, %v2744
        %v2746 = vrot.slane %v2739, %v2745
        %v2748 = vunpack.c.l.s4 1966171168
        %v2749 = vunpack.c.0.s8 %v2748
        %v2750 = vlaneseq
        %v2751 = vshrl.u32 %v2750, 7
        %v2752 = vsub.s32 %v2749, %v2751
        %v2753 = vrot.slane %v2746, %v2752
        %v2759 = vpack.c.bf16 %v2640, %v2591
        %v2760 = vpack.c.bf16 %v2738, %v2689
        %v2761 = vpack.c.bf16 %v2753, %v2753
        %v2762 = vld [vmem:[%s848] sm:$0xff]
        %v2763 = vld [vmem:[%s848 + $0x8] sm:$0xff]
        %v2764 = vld [vmem:[%s848 + $0x10] sm:$0xff]
        %v2765 = vld [vmem:[%s848 + $0x18] sm:$0xff]
        %v2766 = vld [vmem:[%s848 + $0x20] sm:$0xff]
        %v2767 = vld [vmem:[%s848 + $0x28] sm:$0xff]
        %v2768 = vld [vmem:[%s848 + $0x30] sm:$0xff]
        %v2769 = vld [vmem:[%s848 + $0x38] sm:$0xff]
        %v2770 = vld [vmem:[%s857] sm:$0x3]
        %v2772 = vlaneseq
        %v2773 = vshrl.u32 %v2772, 7
        %v2774 = vsub.s32 0, %v2773
        %v2775 = vrot.slane %v2770, %v2774
        %v2776 = vlaneseq
        %v2777 = vshrl.u32 %v2776, 7
        %v2778 = vsub.s32 1, %v2777
        %v2779 = vrot.slane %v2770, %v2778
        %v2790 = vunpack.c.l.b16 %v2762
        %v2791 = vunpack.c.h.b16 %v2762
        %v2792 = vunpack.c.l.b16 %v2763
        %v2793 = vunpack.c.h.b16 %v2763
        %v2794 = vunpack.c.l.b16 %v2764
        %v2795 = vunpack.c.h.b16 %v2764
        %v2796 = vunpack.c.l.b16 %v2765
        %v2797 = vunpack.c.h.b16 %v2765
        %v2798 = vunpack.c.l.b16 %v2766
        %v2799 = vunpack.c.h.b16 %v2766
        %v2800 = vunpack.c.l.b16 %v2767
        %v2801 = vunpack.c.h.b16 %v2767
        %v2802 = vunpack.c.l.b16 %v2768
        %v2803 = vunpack.c.h.b16 %v2768
        %v2804 = vunpack.c.l.b16 %v2769
        %v2805 = vunpack.c.h.b16 %v2769
        %v2806 = vpack.c.b16 %v2792, %v2790
        %v2807 = vpack.c.b16 %v2793, %v2791
        %v2808 = vpack.c.b16 %v2796, %v2794
        %v2809 = vpack.c.b16 %v2797, %v2795
        %v2810 = vpack.c.b16 %v2800, %v2798
        %v2811 = vpack.c.b16 %v2801, %v2799
        %v2812 = vpack.c.b16 %v2804, %v2802
        %v2813 = vpack.c.b16 %v2805, %v2803
        %v2823 = vsel %vm1562, %v2759, 0
        %v2826 = vsel %vm1562, %v2760, 0
        %v2829 = vsel %vm1562, %v2761, 0
        %2831 = vmatprep.subr.bf16.mxu0 %v2807
        %2832 = vmatpush1.bf16.msra.mxu0 %v2806
        %2833 = vmatprep.subr.bf16.mxu0 %v2809
        %2834 = vmatpush1.bf16.msra.mxu0 %v2808
        %2835 = vmatprep.subr.bf16.mxu0 %v2811
        %2836 = vmatpush1.bf16.msra.mxu0 %v2810
        %2837 = vmatprep.subr.bf16.mxu0 %v2813
        %2838 = vmatpush1.bf16.msra.mxu0 %v2812
        %2839 = vmatprep.subr.bf16.mxu0 0
        %2840 = vmatpush1.bf16.msra.mxu0 0
        %2841 = vmatprep.subr.bf16.mxu0 0
        %2842 = vmatpush1.bf16.msra.mxu0 0
        %2843 = vmatprep.subr.bf16.mxu0 0
        %2844 = vmatpush1.bf16.msra.mxu0 0
        %2845 = vmatprep.subr.bf16.mxu0 0
        %2846 = vmatpush1.bf16.msra.mxu0 0
        %2847 = vmatprep.subr.bf16.mxu0 0
        %2848 = vmatpush1.bf16.msra.mxu0 0
        %2849 = vmatprep.subr.bf16.mxu0 0
        %2850 = vmatpush1.bf16.msra.mxu0 0
        %2851 = vmatprep.subr.bf16.mxu0 0
        %2852 = vmatpush1.bf16.msra.mxu0 0
        %2853 = vmatprep.subr.bf16.mxu0 0
        %2854 = vmatpush1.bf16.msra.mxu0 0
        %2855 = vmatprep.subr.bf16.mxu0 0
        %2856 = vmatpush1.bf16.msra.mxu0 0
        %2857 = vmatprep.subr.bf16.mxu0 0
        %2858 = vmatpush1.bf16.msra.mxu0 0
        %2859 = vmatprep.subr.bf16.mxu0 0
        %2860 = vmatpush1.bf16.msra.mxu0 0
        %2861 = vmatprep.subr.bf16.mxu0 0
        %2862 = vmatpush1.bf16.msra.mxu0 0
        %2863 = vmatprep.mubr.bf16.mxu0 0
        %2864 = vmatmul.mubr.bf16.gmra.mrb[0].mxu0 %v2823
        %v2865 = vpop.f32.mrb[0].mxu0
        %v2866 = vadd.f32 %v2775, %v2865
        %v2867 = vpop.f32.mrb[0].mxu0
        %v2868 = vadd.f32 %v2779, %v2867
        %v2869 = vpop.f32.mrb[0].mxu0
        %v2870 = vadd.f32 %v2775, %v2869
        %v2871 = vpop.f32.mrb[0].mxu0
        %v2872 = vadd.f32 %v2779, %v2871
        %2873 = vmatprep.mubr.bf16.mxu0 0
        %2874 = vmatmul.mubr.bf16.gmra.mrb[0].mxu0 %v2826
        %v2875 = vpop.f32.mrb[0].mxu0
        %v2876 = vadd.f32 %v2775, %v2875
        %v2877 = vpop.f32.mrb[0].mxu0
        %v2878 = vadd.f32 %v2779, %v2877
        %v2879 = vpop.f32.mrb[0].mxu0
        %v2880 = vadd.f32 %v2775, %v2879
        %v2881 = vpop.f32.mrb[0].mxu0
        %v2882 = vadd.f32 %v2779, %v2881
        %2883 = vmatprep.mubr.bf16.mxu0 0
        %2884 = vmatmul.mubr.bf16.gmra.mrb[0].mxu0 %v2829
        %v2885 = vpop.f32.mrb[0].mxu0
        %v2886 = vadd.f32 %v2775, %v2885
        %v2887 = vpop.f32.mrb[0].mxu0
        %v2888 = vadd.f32 %v2779, %v2887
        %v2889 = vpop.f32.mrb[0].mxu0
        %v2890 = vpop.f32.mrb[0].mxu0
        %2891 = vdwg.mxu0
        %v2897 = vcombine.high %v2866, %v2866
        %v2899 = vunpack.c.l.s4 1966171168
        %v2900 = vunpack.c.0.s8 %v2899
        %v2901 = vlaneseq
        %v2902 = vshrl.u32 %v2901, 7
        %v2903 = vsub.s32 %v2900, %v2902
        %v2904 = vrot.slane %v2866, %v2903
        %v2906 = vunpack.c.l.s4 1966171168
        %v2907 = vunpack.c.0.s8 %v2906
        %v2908 = vlaneseq
        %v2909 = vshrl.u32 %v2908, 7
        %v2910 = vsub.s32 %v2907, %v2909
        %v2911 = vrot.slane %v2897, %v2910
        %v2912 = vcombine.high %v2904, %v2904
        %v2913 = vcombine.high %v2911, %v2911
        %v2915 = vunpack.c.l.s4 1966171168
        %v2916 = vunpack.c.0.s8 %v2915
        %v2917 = vlaneseq
        %v2918 = vshrl.u32 %v2917, 7
        %v2919 = vsub.s32 %v2916, %v2918
        %v2920 = vrot.slane %v2904, %v2919
        %v2922 = vunpack.c.l.s4 1966171168
        %v2923 = vunpack.c.0.s8 %v2922
        %v2924 = vlaneseq
        %v2925 = vshrl.u32 %v2924, 7
        %v2926 = vsub.s32 %v2923, %v2925
        %v2927 = vrot.slane %v2911, %v2926
        %v2929 = vunpack.c.l.s4 1966171168
        %v2930 = vunpack.c.0.s8 %v2929
        %v2931 = vlaneseq
        %v2932 = vshrl.u32 %v2931, 7
        %v2933 = vsub.s32 %v2930, %v2932
        %v2934 = vrot.slane %v2912, %v2933
        %v2936 = vunpack.c.l.s4 1966171168
        %v2937 = vunpack.c.0.s8 %v2936
        %v2938 = vlaneseq
        %v2939 = vshrl.u32 %v2938, 7
        %v2940 = vsub.s32 %v2937, %v2939
        %v2941 = vrot.slane %v2913, %v2940
        %v2942 = vcombine.high %v2920, %v2920
        %v2943 = vcombine.high %v2927, %v2927
        %v2944 = vcombine.high %v2934, %v2934
        %v2945 = vcombine.high %v2941, %v2941
        %v2946 = vcombine.high %v2870, %v2870
        %v2948 = vunpack.c.l.s4 1966171168
        %v2949 = vunpack.c.0.s8 %v2948
        %v2950 = vlaneseq
        %v2951 = vshrl.u32 %v2950, 7
        %v2952 = vsub.s32 %v2949, %v2951
        %v2953 = vrot.slane %v2870, %v2952
        %v2955 = vunpack.c.l.s4 1966171168
        %v2956 = vunpack.c.0.s8 %v2955
        %v2957 = vlaneseq
        %v2958 = vshrl.u32 %v2957, 7
        %v2959 = vsub.s32 %v2956, %v2958
        %v2960 = vrot.slane %v2946, %v2959
        %v2961 = vcombine.high %v2953, %v2953
        %v2962 = vcombine.high %v2960, %v2960
        %v2964 = vunpack.c.l.s4 1966171168
        %v2965 = vunpack.c.0.s8 %v2964
        %v2966 = vlaneseq
        %v2967 = vshrl.u32 %v2966, 7
        %v2968 = vsub.s32 %v2965, %v2967
        %v2969 = vrot.slane %v2953, %v2968
        %v2971 = vunpack.c.l.s4 1966171168
        %v2972 = vunpack.c.0.s8 %v2971
        %v2973 = vlaneseq
        %v2974 = vshrl.u32 %v2973, 7
        %v2975 = vsub.s32 %v2972, %v2974
        %v2976 = vrot.slane %v2960, %v2975
        %v2978 = vunpack.c.l.s4 1966171168
        %v2979 = vunpack.c.0.s8 %v2978
        %v2980 = vlaneseq
        %v2981 = vshrl.u32 %v2980, 7
        %v2982 = vsub.s32 %v2979, %v2981
        %v2983 = vrot.slane %v2961, %v2982
        %v2985 = vunpack.c.l.s4 1966171168
        %v2986 = vunpack.c.0.s8 %v2985
        %v2987 = vlaneseq
        %v2988 = vshrl.u32 %v2987, 7
        %v2989 = vsub.s32 %v2986, %v2988
        %v2990 = vrot.slane %v2962, %v2989
        %v2991 = vcombine.high %v2969, %v2969
        %v2992 = vcombine.high %v2976, %v2976
        %v2993 = vcombine.high %v2983, %v2983
        %v2994 = vcombine.high %v2990, %v2990
        %v2995 = vcombine.high %v2876, %v2876
        %v2997 = vunpack.c.l.s4 1966171168
        %v2998 = vunpack.c.0.s8 %v2997
        %v2999 = vlaneseq
        %v3000 = vshrl.u32 %v2999, 7
        %v3001 = vsub.s32 %v2998, %v3000
        %v3002 = vrot.slane %v2876, %v3001
        %v3004 = vunpack.c.l.s4 1966171168
        %v3005 = vunpack.c.0.s8 %v3004
        %v3006 = vlaneseq
        %v3007 = vshrl.u32 %v3006, 7
        %v3008 = vsub.s32 %v3005, %v3007
        %v3009 = vrot.slane %v2995, %v3008
        %v3010 = vcombine.high %v3002, %v3002
        %v3011 = vcombine.high %v3009, %v3009
        %v3013 = vunpack.c.l.s4 1966171168
        %v3014 = vunpack.c.0.s8 %v3013
        %v3015 = vlaneseq
        %v3016 = vshrl.u32 %v3015, 7
        %v3017 = vsub.s32 %v3014, %v3016
        %v3018 = vrot.slane %v3002, %v3017
        %v3020 = vunpack.c.l.s4 1966171168
        %v3021 = vunpack.c.0.s8 %v3020
        %v3022 = vlaneseq
        %v3023 = vshrl.u32 %v3022, 7
        %v3024 = vsub.s32 %v3021, %v3023
        %v3025 = vrot.slane %v3009, %v3024
        %v3027 = vunpack.c.l.s4 1966171168
        %v3028 = vunpack.c.0.s8 %v3027
        %v3029 = vlaneseq
        %v3030 = vshrl.u32 %v3029, 7
        %v3031 = vsub.s32 %v3028, %v3030
        %v3032 = vrot.slane %v3010, %v3031
        %v3034 = vunpack.c.l.s4 1966171168
        %v3035 = vunpack.c.0.s8 %v3034
        %v3036 = vlaneseq
        %v3037 = vshrl.u32 %v3036, 7
        %v3038 = vsub.s32 %v3035, %v3037
        %v3039 = vrot.slane %v3011, %v3038
        %v3040 = vcombine.high %v3018, %v3018
        %v3041 = vcombine.high %v3025, %v3025
        %v3042 = vcombine.high %v3032, %v3032
        %v3043 = vcombine.high %v3039, %v3039
        %v3044 = vcombine.high %v2880, %v2880
        %v3046 = vunpack.c.l.s4 1966171168
        %v3047 = vunpack.c.0.s8 %v3046
        %v3048 = vlaneseq
        %v3049 = vshrl.u32 %v3048, 7
        %v3050 = vsub.s32 %v3047, %v3049
        %v3051 = vrot.slane %v2880, %v3050
        %v3053 = vunpack.c.l.s4 1966171168
        %v3054 = vunpack.c.0.s8 %v3053
        %v3055 = vlaneseq
        %v3056 = vshrl.u32 %v3055, 7
        %v3057 = vsub.s32 %v3054, %v3056
        %v3058 = vrot.slane %v3044, %v3057
        %v3059 = vcombine.high %v3051, %v3051
        %v3060 = vcombine.high %v3058, %v3058
        %v3062 = vunpack.c.l.s4 1966171168
        %v3063 = vunpack.c.0.s8 %v3062
        %v3064 = vlaneseq
        %v3065 = vshrl.u32 %v3064, 7
        %v3066 = vsub.s32 %v3063, %v3065
        %v3067 = vrot.slane %v3051, %v3066
        %v3069 = vunpack.c.l.s4 1966171168
        %v3070 = vunpack.c.0.s8 %v3069
        %v3071 = vlaneseq
        %v3072 = vshrl.u32 %v3071, 7
        %v3073 = vsub.s32 %v3070, %v3072
        %v3074 = vrot.slane %v3058, %v3073
        %v3076 = vunpack.c.l.s4 1966171168
        %v3077 = vunpack.c.0.s8 %v3076
        %v3078 = vlaneseq
        %v3079 = vshrl.u32 %v3078, 7
        %v3080 = vsub.s32 %v3077, %v3079
        %v3081 = vrot.slane %v3059, %v3080
        %v3083 = vunpack.c.l.s4 1966171168
        %v3084 = vunpack.c.0.s8 %v3083
        %v3085 = vlaneseq
        %v3086 = vshrl.u32 %v3085, 7
        %v3087 = vsub.s32 %v3084, %v3086
        %v3088 = vrot.slane %v3060, %v3087
        %v3089 = vcombine.high %v3067, %v3067
        %v3090 = vcombine.high %v3074, %v3074
        %v3091 = vcombine.high %v3081, %v3081
        %v3092 = vcombine.high %v3088, %v3088
        %v3094 = vunpack.c.l.s4 1966171168
        %v3095 = vunpack.c.0.s8 %v3094
        %v3096 = vlaneseq
        %v3097 = vshrl.u32 %v3096, 7
        %v3098 = vsub.s32 %v3095, %v3097
        %v3099 = vrot.slane %v2886, %v3098
        %v3100 = vcombine.high %v3099, %v3099
        %v3102 = vunpack.c.l.s4 1966171168
        %v3103 = vunpack.c.0.s8 %v3102
        %v3104 = vlaneseq
        %v3105 = vshrl.u32 %v3104, 7
        %v3106 = vsub.s32 %v3103, %v3105
        %v3107 = vrot.slane %v3099, %v3106
        %v3109 = vunpack.c.l.s4 1966171168
        %v3110 = vunpack.c.0.s8 %v3109
        %v3111 = vlaneseq
        %v3112 = vshrl.u32 %v3111, 7
        %v3113 = vsub.s32 %v3110, %v3112
        %v3114 = vrot.slane %v3100, %v3113
        %v3115 = vcombine.low %v2920, %v2934
        %v3116 = vcombine.low %v2942, %v2944
        %v3117 = vcombine.low %v2927, %v2941
        %v3118 = vcombine.low %v2943, %v2945
        %v3120 = vunpack.c.l.s4 1966171168
        %v3121 = vunpack.c.0.s8 %v3120
        %v3122 = vlaneseq
        %v3123 = vshrl.u32 %v3122, 7
        %v3124 = vsub.s32 %v3121, %v3123
        %v3125 = vrot.slane %v3115, %v3124
        %v3127 = vunpack.c.l.s4 1966171168
        %v3128 = vunpack.c.0.s8 %v3127
        %v3129 = vlaneseq
        %v3130 = vshrl.u32 %v3129, 7
        %v3131 = vsub.s32 %v3128, %v3130
        %v3132 = vrot.slane %v3116, %v3131
        %v3134 = vunpack.c.l.s4 1966171168
        %v3135 = vunpack.c.0.s8 %v3134
        %v3136 = vlaneseq
        %v3137 = vshrl.u32 %v3136, 7
        %v3138 = vsub.s32 %v3135, %v3137
        %v3139 = vrot.slane %v3117, %v3138
        %v3141 = vunpack.c.l.s4 1966171168
        %v3142 = vunpack.c.0.s8 %v3141
        %v3143 = vlaneseq
        %v3144 = vshrl.u32 %v3143, 7
        %v3145 = vsub.s32 %v3142, %v3144
        %v3146 = vrot.slane %v3118, %v3145
        %v3147 = vcombine.low %v3125, %v3132
        %v3148 = vcombine.low %v3139, %v3146
        %v3150 = vunpack.c.l.s4 1966171168
        %v3151 = vunpack.c.0.s8 %v3150
        %v3152 = vlaneseq
        %v3153 = vshrl.u32 %v3152, 7
        %v3154 = vsub.s32 %v3151, %v3153
        %v3155 = vrot.slane %v3147, %v3154
        %v3157 = vunpack.c.l.s4 1966171168
        %v3158 = vunpack.c.0.s8 %v3157
        %v3159 = vlaneseq
        %v3160 = vshrl.u32 %v3159, 7
        %v3161 = vsub.s32 %v3158, %v3160
        %v3162 = vrot.slane %v3148, %v3161
        %v3163 = vcombine.low %v3155, %v3162
        %v3164 = vcombine.low %v2969, %v2983
        %v3165 = vcombine.low %v2991, %v2993
        %v3166 = vcombine.low %v2976, %v2990
        %v3167 = vcombine.low %v2992, %v2994
        %v3169 = vunpack.c.l.s4 1966171168
        %v3170 = vunpack.c.0.s8 %v3169
        %v3171 = vlaneseq
        %v3172 = vshrl.u32 %v3171, 7
        %v3173 = vsub.s32 %v3170, %v3172
        %v3174 = vrot.slane %v3164, %v3173
        %v3176 = vunpack.c.l.s4 1966171168
        %v3177 = vunpack.c.0.s8 %v3176
        %v3178 = vlaneseq
        %v3179 = vshrl.u32 %v3178, 7
        %v3180 = vsub.s32 %v3177, %v3179
        %v3181 = vrot.slane %v3165, %v3180
        %v3183 = vunpack.c.l.s4 1966171168
        %v3184 = vunpack.c.0.s8 %v3183
        %v3185 = vlaneseq
        %v3186 = vshrl.u32 %v3185, 7
        %v3187 = vsub.s32 %v3184, %v3186
        %v3188 = vrot.slane %v3166, %v3187
        %v3190 = vunpack.c.l.s4 1966171168
        %v3191 = vunpack.c.0.s8 %v3190
        %v3192 = vlaneseq
        %v3193 = vshrl.u32 %v3192, 7
        %v3194 = vsub.s32 %v3191, %v3193
        %v3195 = vrot.slane %v3167, %v3194
        %v3196 = vcombine.low %v3174, %v3181
        %v3197 = vcombine.low %v3188, %v3195
        %v3199 = vunpack.c.l.s4 1966171168
        %v3200 = vunpack.c.0.s8 %v3199
        %v3201 = vlaneseq
        %v3202 = vshrl.u32 %v3201, 7
        %v3203 = vsub.s32 %v3200, %v3202
        %v3204 = vrot.slane %v3196, %v3203
        %v3206 = vunpack.c.l.s4 1966171168
        %v3207 = vunpack.c.0.s8 %v3206
        %v3208 = vlaneseq
        %v3209 = vshrl.u32 %v3208, 7
        %v3210 = vsub.s32 %v3207, %v3209
        %v3211 = vrot.slane %v3197, %v3210
        %v3212 = vcombine.low %v3204, %v3211
        %v3214 = vunpack.c.l.s4 1966171168
        %v3215 = vunpack.c.0.s8 %v3214
        %v3216 = vlaneseq
        %v3217 = vshrl.u32 %v3216, 7
        %v3218 = vsub.s32 %v3215, %v3217
        %v3219 = vrot.slane %v3018, %v3218
        %v3221 = vunpack.c.l.s4 1966171168
        %v3222 = vunpack.c.0.s8 %v3221
        %v3223 = vlaneseq
        %v3224 = vshrl.u32 %v3223, 7
        %v3225 = vsub.s32 %v3222, %v3224
        %v3226 = vrot.slane %v3219, %v3225
        %v3227 = vcombine.low %v3032, %v3040
        %v3228 = vcombine.low %v3042, %v3025
        %v3229 = vcombine.low %v3039, %v3041
        %v3230 = vcombine.low %v3043, %v3067
        %v3232 = vunpack.c.l.s4 1966171168
        %v3233 = vunpack.c.0.s8 %v3232
        %v3234 = vlaneseq
        %v3235 = vshrl.u32 %v3234, 7
        %v3236 = vsub.s32 %v3233, %v3235
        %v3237 = vrot.slane %v3227, %v3236
        %v3239 = vunpack.c.l.s4 1966171168
        %v3240 = vunpack.c.0.s8 %v3239
        %v3241 = vlaneseq
        %v3242 = vshrl.u32 %v3241, 7
        %v3243 = vsub.s32 %v3240, %v3242
        %v3244 = vrot.slane %v3228, %v3243
        %v3246 = vunpack.c.l.s4 1966171168
        %v3247 = vunpack.c.0.s8 %v3246
        %v3248 = vlaneseq
        %v3249 = vshrl.u32 %v3248, 7
        %v3250 = vsub.s32 %v3247, %v3249
        %v3251 = vrot.slane %v3229, %v3250
        %v3253 = vunpack.c.l.s4 1966171168
        %v3254 = vunpack.c.0.s8 %v3253
        %v3255 = vlaneseq
        %v3256 = vshrl.u32 %v3255, 7
        %v3257 = vsub.s32 %v3254, %v3256
        %v3258 = vrot.slane %v3230, %v3257
        %v3259 = vcombine.low %v3237, %v3244
        %v3260 = vcombine.low %v3251, %v3258
        %v3262 = vunpack.c.l.s4 1966171168
        %v3263 = vunpack.c.0.s8 %v3262
        %v3264 = vlaneseq
        %v3265 = vshrl.u32 %v3264, 7
        %v3266 = vsub.s32 %v3263, %v3265
        %v3267 = vrot.slane %v3259, %v3266
        %v3269 = vunpack.c.l.s4 1966171168
        %v3270 = vunpack.c.0.s8 %v3269
        %v3271 = vlaneseq
        %v3272 = vshrl.u32 %v3271, 7
        %v3273 = vsub.s32 %v3270, %v3272
        %v3274 = vrot.slane %v3260, %v3273
        %v3275 = vcombine.low %v3267, %v3274
        %v3276 = vcombine.low %v3081, %v3089
        %v3277 = vcombine.low %v3091, %v3074
        %v3278 = vcombine.low %v3088, %v3090
        %v3279 = vcombine.low %v3092, %v3107
        %v3281 = vunpack.c.l.s4 1966171168
        %v3282 = vunpack.c.0.s8 %v3281
        %v3283 = vlaneseq
        %v3284 = vshrl.u32 %v3283, 7
        %v3285 = vsub.s32 %v3282, %v3284
        %v3286 = vrot.slane %v3276, %v3285
        %v3288 = vunpack.c.l.s4 1966171168
        %v3289 = vunpack.c.0.s8 %v3288
        %v3290 = vlaneseq
        %v3291 = vshrl.u32 %v3290, 7
        %v3292 = vsub.s32 %v3289, %v3291
        %v3293 = vrot.slane %v3277, %v3292
        %v3295 = vunpack.c.l.s4 1966171168
        %v3296 = vunpack.c.0.s8 %v3295
        %v3297 = vlaneseq
        %v3298 = vshrl.u32 %v3297, 7
        %v3299 = vsub.s32 %v3296, %v3298
        %v3300 = vrot.slane %v3278, %v3299
        %v3302 = vunpack.c.l.s4 1966171168
        %v3303 = vunpack.c.0.s8 %v3302
        %v3304 = vlaneseq
        %v3305 = vshrl.u32 %v3304, 7
        %v3306 = vsub.s32 %v3303, %v3305
        %v3307 = vrot.slane %v3279, %v3306
        %v3308 = vcombine.low %v3286, %v3293
        %v3309 = vcombine.low %v3300, %v3307
        %v3311 = vunpack.c.l.s4 1966171168
        %v3312 = vunpack.c.0.s8 %v3311
        %v3313 = vlaneseq
        %v3314 = vshrl.u32 %v3313, 7
        %v3315 = vsub.s32 %v3312, %v3314
        %v3316 = vrot.slane %v3308, %v3315
        %v3318 = vunpack.c.l.s4 1966171168
        %v3319 = vunpack.c.0.s8 %v3318
        %v3320 = vlaneseq
        %v3321 = vshrl.u32 %v3320, 7
        %v3322 = vsub.s32 %v3319, %v3321
        %v3323 = vrot.slane %v3309, %v3322
        %v3324 = vcombine.low %v3316, %v3323
        %v3326 = vunpack.c.l.s4 1966171168
        %v3327 = vunpack.c.0.s8 %v3326
        %v3328 = vlaneseq
        %v3329 = vshrl.u32 %v3328, 7
        %v3330 = vsub.s32 %v3327, %v3329
        %v3331 = vrot.slane %v3114, %v3330
        %v3333 = vunpack.c.l.s4 1966171168
        %v3334 = vunpack.c.0.s8 %v3333
        %v3335 = vlaneseq
        %v3336 = vshrl.u32 %v3335, 7
        %v3337 = vsub.s32 %v3334, %v3336
        %v3338 = vrot.slane %v3331, %v3337
        %v3345 = vpack.c.bf16 %v3212, %v3163
        %v3346 = vpack.c.bf16 %v3226, %v3226
        %v3347 = vpack.c.bf16 %v3324, %v3275
        %v3348 = vpack.c.bf16 %v3338, %v3338
        %v3354 = vcombine.high %v2868, %v2868
        %v3356 = vunpack.c.l.s4 1966171168
        %v3357 = vunpack.c.0.s8 %v3356
        %v3358 = vlaneseq
        %v3359 = vshrl.u32 %v3358, 7
        %v3360 = vsub.s32 %v3357, %v3359
        %v3361 = vrot.slane %v2868, %v3360
        %v3363 = vunpack.c.l.s4 1966171168
        %v3364 = vunpack.c.0.s8 %v3363
        %v3365 = vlaneseq
        %v3366 = vshrl.u32 %v3365, 7
        %v3367 = vsub.s32 %v3364, %v3366
        %v3368 = vrot.slane %v3354, %v3367
        %v3369 = vcombine.high %v3361, %v3361
        %v3370 = vcombine.high %v3368, %v3368
        %v3372 = vunpack.c.l.s4 1966171168
        %v3373 = vunpack.c.0.s8 %v3372
        %v3374 = vlaneseq
        %v3375 = vshrl.u32 %v3374, 7
        %v3376 = vsub.s32 %v3373, %v3375
        %v3377 = vrot.slane %v3361, %v3376
        %v3379 = vunpack.c.l.s4 1966171168
        %v3380 = vunpack.c.0.s8 %v3379
        %v3381 = vlaneseq
        %v3382 = vshrl.u32 %v3381, 7
        %v3383 = vsub.s32 %v3380, %v3382
        %v3384 = vrot.slane %v3368, %v3383
        %v3386 = vunpack.c.l.s4 1966171168
        %v3387 = vunpack.c.0.s8 %v3386
        %v3388 = vlaneseq
        %v3389 = vshrl.u32 %v3388, 7
        %v3390 = vsub.s32 %v3387, %v3389
        %v3391 = vrot.slane %v3369, %v3390
        %v3393 = vunpack.c.l.s4 1966171168
        %v3394 = vunpack.c.0.s8 %v3393
        %v3395 = vlaneseq
        %v3396 = vshrl.u32 %v3395, 7
        %v3397 = vsub.s32 %v3394, %v3396
        %v3398 = vrot.slane %v3370, %v3397
        %v3399 = vcombine.high %v3377, %v3377
        %v3400 = vcombine.high %v3384, %v3384
        %v3401 = vcombine.high %v3391, %v3391
        %v3402 = vcombine.high %v3398, %v3398
        %v3403 = vcombine.high %v2872, %v2872
        %v3405 = vunpack.c.l.s4 1966171168
        %v3406 = vunpack.c.0.s8 %v3405
        %v3407 = vlaneseq
        %v3408 = vshrl.u32 %v3407, 7
        %v3409 = vsub.s32 %v3406, %v3408
        %v3410 = vrot.slane %v2872, %v3409
        %v3412 = vunpack.c.l.s4 1966171168
        %v3413 = vunpack.c.0.s8 %v3412
        %v3414 = vlaneseq
        %v3415 = vshrl.u32 %v3414, 7
        %v3416 = vsub.s32 %v3413, %v3415
        %v3417 = vrot.slane %v3403, %v3416
        %v3418 = vcombine.high %v3410, %v3410
        %v3419 = vcombine.high %v3417, %v3417
        %v3421 = vunpack.c.l.s4 1966171168
        %v3422 = vunpack.c.0.s8 %v3421
        %v3423 = vlaneseq
        %v3424 = vshrl.u32 %v3423, 7
        %v3425 = vsub.s32 %v3422, %v3424
        %v3426 = vrot.slane %v3410, %v3425
        %v3428 = vunpack.c.l.s4 1966171168
        %v3429 = vunpack.c.0.s8 %v3428
        %v3430 = vlaneseq
        %v3431 = vshrl.u32 %v3430, 7
        %v3432 = vsub.s32 %v3429, %v3431
        %v3433 = vrot.slane %v3417, %v3432
        %v3435 = vunpack.c.l.s4 1966171168
        %v3436 = vunpack.c.0.s8 %v3435
        %v3437 = vlaneseq
        %v3438 = vshrl.u32 %v3437, 7
        %v3439 = vsub.s32 %v3436, %v3438
        %v3440 = vrot.slane %v3418, %v3439
        %v3442 = vunpack.c.l.s4 1966171168
        %v3443 = vunpack.c.0.s8 %v3442
        %v3444 = vlaneseq
        %v3445 = vshrl.u32 %v3444, 7
        %v3446 = vsub.s32 %v3443, %v3445
        %v3447 = vrot.slane %v3419, %v3446
        %v3448 = vcombine.high %v3426, %v3426
        %v3449 = vcombine.high %v3433, %v3433
        %v3450 = vcombine.high %v3440, %v3440
        %v3451 = vcombine.high %v3447, %v3447
        %v3452 = vcombine.high %v2878, %v2878
        %v3454 = vunpack.c.l.s4 1966171168
        %v3455 = vunpack.c.0.s8 %v3454
        %v3456 = vlaneseq
        %v3457 = vshrl.u32 %v3456, 7
        %v3458 = vsub.s32 %v3455, %v3457
        %v3459 = vrot.slane %v2878, %v3458
        %v3461 = vunpack.c.l.s4 1966171168
        %v3462 = vunpack.c.0.s8 %v3461
        %v3463 = vlaneseq
        %v3464 = vshrl.u32 %v3463, 7
        %v3465 = vsub.s32 %v3462, %v3464
        %v3466 = vrot.slane %v3452, %v3465
        %v3467 = vcombine.high %v3459, %v3459
        %v3468 = vcombine.high %v3466, %v3466
        %v3470 = vunpack.c.l.s4 1966171168
        %v3471 = vunpack.c.0.s8 %v3470
        %v3472 = vlaneseq
        %v3473 = vshrl.u32 %v3472, 7
        %v3474 = vsub.s32 %v3471, %v3473
        %v3475 = vrot.slane %v3459, %v3474
        %v3477 = vunpack.c.l.s4 1966171168
        %v3478 = vunpack.c.0.s8 %v3477
        %v3479 = vlaneseq
        %v3480 = vshrl.u32 %v3479, 7
        %v3481 = vsub.s32 %v3478, %v3480
        %v3482 = vrot.slane %v3466, %v3481
        %v3484 = vunpack.c.l.s4 1966171168
        %v3485 = vunpack.c.0.s8 %v3484
        %v3486 = vlaneseq
        %v3487 = vshrl.u32 %v3486, 7
        %v3488 = vsub.s32 %v3485, %v3487
        %v3489 = vrot.slane %v3467, %v3488
        %v3491 = vunpack.c.l.s4 1966171168
        %v3492 = vunpack.c.0.s8 %v3491
        %v3493 = vlaneseq
        %v3494 = vshrl.u32 %v3493, 7
        %v3495 = vsub.s32 %v3492, %v3494
        %v3496 = vrot.slane %v3468, %v3495
        %v3497 = vcombine.high %v3475, %v3475
        %v3498 = vcombine.high %v3482, %v3482
        %v3499 = vcombine.high %v3489, %v3489
        %v3500 = vcombine.high %v3496, %v3496
        %v3501 = vcombine.high %v2882, %v2882
        %v3503 = vunpack.c.l.s4 1966171168
        %v3504 = vunpack.c.0.s8 %v3503
        %v3505 = vlaneseq
        %v3506 = vshrl.u32 %v3505, 7
        %v3507 = vsub.s32 %v3504, %v3506
        %v3508 = vrot.slane %v2882, %v3507
        %v3510 = vunpack.c.l.s4 1966171168
        %v3511 = vunpack.c.0.s8 %v3510
        %v3512 = vlaneseq
        %v3513 = vshrl.u32 %v3512, 7
        %v3514 = vsub.s32 %v3511, %v3513
        %v3515 = vrot.slane %v3501, %v3514
        %v3516 = vcombine.high %v3508, %v3508
        %v3517 = vcombine.high %v3515, %v3515
        %v3519 = vunpack.c.l.s4 1966171168
        %v3520 = vunpack.c.0.s8 %v3519
        %v3521 = vlaneseq
        %v3522 = vshrl.u32 %v3521, 7
        %v3523 = vsub.s32 %v3520, %v3522
        %v3524 = vrot.slane %v3508, %v3523
        %v3526 = vunpack.c.l.s4 1966171168
        %v3527 = vunpack.c.0.s8 %v3526
        %v3528 = vlaneseq
        %v3529 = vshrl.u32 %v3528, 7
        %v3530 = vsub.s32 %v3527, %v3529
        %v3531 = vrot.slane %v3515, %v3530
        %v3533 = vunpack.c.l.s4 1966171168
        %v3534 = vunpack.c.0.s8 %v3533
        %v3535 = vlaneseq
        %v3536 = vshrl.u32 %v3535, 7
        %v3537 = vsub.s32 %v3534, %v3536
        %v3538 = vrot.slane %v3516, %v3537
        %v3540 = vunpack.c.l.s4 1966171168
        %v3541 = vunpack.c.0.s8 %v3540
        %v3542 = vlaneseq
        %v3543 = vshrl.u32 %v3542, 7
        %v3544 = vsub.s32 %v3541, %v3543
        %v3545 = vrot.slane %v3517, %v3544
        %v3546 = vcombine.high %v3524, %v3524
        %v3547 = vcombine.high %v3531, %v3531
        %v3548 = vcombine.high %v3538, %v3538
        %v3549 = vcombine.high %v3545, %v3545
        %v3551 = vunpack.c.l.s4 1966171168
        %v3552 = vunpack.c.0.s8 %v3551
        %v3553 = vlaneseq
        %v3554 = vshrl.u32 %v3553, 7
        %v3555 = vsub.s32 %v3552, %v3554
        %v3556 = vrot.slane %v2888, %v3555
        %v3557 = vcombine.high %v3556, %v3556
        %v3559 = vunpack.c.l.s4 1966171168
        %v3560 = vunpack.c.0.s8 %v3559
        %v3561 = vlaneseq
        %v3562 = vshrl.u32 %v3561, 7
        %v3563 = vsub.s32 %v3560, %v3562
        %v3564 = vrot.slane %v3556, %v3563
        %v3566 = vunpack.c.l.s4 1966171168
        %v3567 = vunpack.c.0.s8 %v3566
        %v3568 = vlaneseq
        %v3569 = vshrl.u32 %v3568, 7
        %v3570 = vsub.s32 %v3567, %v3569
        %v3571 = vrot.slane %v3557, %v3570
        %v3572 = vcombine.low %v3377, %v3391
        %v3573 = vcombine.low %v3399, %v3401
        %v3574 = vcombine.low %v3384, %v3398
        %v3575 = vcombine.low %v3400, %v3402
        %v3577 = vunpack.c.l.s4 1966171168
        %v3578 = vunpack.c.0.s8 %v3577
        %v3579 = vlaneseq
        %v3580 = vshrl.u32 %v3579, 7
        %v3581 = vsub.s32 %v3578, %v3580
        %v3582 = vrot.slane %v3572, %v3581
        %v3584 = vunpack.c.l.s4 1966171168
        %v3585 = vunpack.c.0.s8 %v3584
        %v3586 = vlaneseq
        %v3587 = vshrl.u32 %v3586, 7
        %v3588 = vsub.s32 %v3585, %v3587
        %v3589 = vrot.slane %v3573, %v3588
        %v3591 = vunpack.c.l.s4 1966171168
        %v3592 = vunpack.c.0.s8 %v3591
        %v3593 = vlaneseq
        %v3594 = vshrl.u32 %v3593, 7
        %v3595 = vsub.s32 %v3592, %v3594
        %v3596 = vrot.slane %v3574, %v3595
        %v3598 = vunpack.c.l.s4 1966171168
        %v3599 = vunpack.c.0.s8 %v3598
        %v3600 = vlaneseq
        %v3601 = vshrl.u32 %v3600, 7
        %v3602 = vsub.s32 %v3599, %v3601
        %v3603 = vrot.slane %v3575, %v3602
        %v3604 = vcombine.low %v3582, %v3589
        %v3605 = vcombine.low %v3596, %v3603
        %v3607 = vunpack.c.l.s4 1966171168
        %v3608 = vunpack.c.0.s8 %v3607
        %v3609 = vlaneseq
        %v3610 = vshrl.u32 %v3609, 7
        %v3611 = vsub.s32 %v3608, %v3610
        %v3612 = vrot.slane %v3604, %v3611
        %v3614 = vunpack.c.l.s4 1966171168
        %v3615 = vunpack.c.0.s8 %v3614
        %v3616 = vlaneseq
        %v3617 = vshrl.u32 %v3616, 7
        %v3618 = vsub.s32 %v3615, %v3617
        %v3619 = vrot.slane %v3605, %v3618
        %v3620 = vcombine.low %v3612, %v3619
        %v3621 = vcombine.low %v3426, %v3440
        %v3622 = vcombine.low %v3448, %v3450
        %v3623 = vcombine.low %v3433, %v3447
        %v3624 = vcombine.low %v3449, %v3451
        %v3626 = vunpack.c.l.s4 1966171168
        %v3627 = vunpack.c.0.s8 %v3626
        %v3628 = vlaneseq
        %v3629 = vshrl.u32 %v3628, 7
        %v3630 = vsub.s32 %v3627, %v3629
        %v3631 = vrot.slane %v3621, %v3630
        %v3633 = vunpack.c.l.s4 1966171168
        %v3634 = vunpack.c.0.s8 %v3633
        %v3635 = vlaneseq
        %v3636 = vshrl.u32 %v3635, 7
        %v3637 = vsub.s32 %v3634, %v3636
        %v3638 = vrot.slane %v3622, %v3637
        %v3640 = vunpack.c.l.s4 1966171168
        %v3641 = vunpack.c.0.s8 %v3640
        %v3642 = vlaneseq
        %v3643 = vshrl.u32 %v3642, 7
        %v3644 = vsub.s32 %v3641, %v3643
        %v3645 = vrot.slane %v3623, %v3644
        %v3647 = vunpack.c.l.s4 1966171168
        %v3648 = vunpack.c.0.s8 %v3647
        %v3649 = vlaneseq
        %v3650 = vshrl.u32 %v3649, 7
        %v3651 = vsub.s32 %v3648, %v3650
        %v3652 = vrot.slane %v3624, %v3651
        %v3653 = vcombine.low %v3631, %v3638
        %v3654 = vcombine.low %v3645, %v3652
        %v3656 = vunpack.c.l.s4 1966171168
        %v3657 = vunpack.c.0.s8 %v3656
        %v3658 = vlaneseq
        %v3659 = vshrl.u32 %v3658, 7
        %v3660 = vsub.s32 %v3657, %v3659
        %v3661 = vrot.slane %v3653, %v3660
        %v3663 = vunpack.c.l.s4 1966171168
        %v3664 = vunpack.c.0.s8 %v3663
        %v3665 = vlaneseq
        %v3666 = vshrl.u32 %v3665, 7
        %v3667 = vsub.s32 %v3664, %v3666
        %v3668 = vrot.slane %v3654, %v3667
        %v3669 = vcombine.low %v3661, %v3668
        %v3671 = vunpack.c.l.s4 1966171168
        %v3672 = vunpack.c.0.s8 %v3671
        %v3673 = vlaneseq
        %v3674 = vshrl.u32 %v3673, 7
        %v3675 = vsub.s32 %v3672, %v3674
        %v3676 = vrot.slane %v3475, %v3675
        %v3678 = vunpack.c.l.s4 1966171168
        %v3679 = vunpack.c.0.s8 %v3678
        %v3680 = vlaneseq
        %v3681 = vshrl.u32 %v3680, 7
        %v3682 = vsub.s32 %v3679, %v3681
        %v3683 = vrot.slane %v3676, %v3682
        %v3684 = vcombine.low %v3489, %v3497
        %v3685 = vcombine.low %v3499, %v3482
        %v3686 = vcombine.low %v3496, %v3498
        %v3687 = vcombine.low %v3500, %v3524
        %v3689 = vunpack.c.l.s4 1966171168
        %v3690 = vunpack.c.0.s8 %v3689
        %v3691 = vlaneseq
        %v3692 = vshrl.u32 %v3691, 7
        %v3693 = vsub.s32 %v3690, %v3692
        %v3694 = vrot.slane %v3684, %v3693
        %v3696 = vunpack.c.l.s4 1966171168
        %v3697 = vunpack.c.0.s8 %v3696
        %v3698 = vlaneseq
        %v3699 = vshrl.u32 %v3698, 7
        %v3700 = vsub.s32 %v3697, %v3699
        %v3701 = vrot.slane %v3685, %v3700
        %v3703 = vunpack.c.l.s4 1966171168
        %v3704 = vunpack.c.0.s8 %v3703
        %v3705 = vlaneseq
        %v3706 = vshrl.u32 %v3705, 7
        %v3707 = vsub.s32 %v3704, %v3706
        %v3708 = vrot.slane %v3686, %v3707
        %v3710 = vunpack.c.l.s4 1966171168
        %v3711 = vunpack.c.0.s8 %v3710
        %v3712 = vlaneseq
        %v3713 = vshrl.u32 %v3712, 7
        %v3714 = vsub.s32 %v3711, %v3713
        %v3715 = vrot.slane %v3687, %v3714
        %v3716 = vcombine.low %v3694, %v3701
        %v3717 = vcombine.low %v3708, %v3715
        %v3719 = vunpack.c.l.s4 1966171168
        %v3720 = vunpack.c.0.s8 %v3719
        %v3721 = vlaneseq
        %v3722 = vshrl.u32 %v3721, 7
        %v3723 = vsub.s32 %v3720, %v3722
        %v3724 = vrot.slane %v3716, %v3723
        %v3726 = vunpack.c.l.s4 1966171168
        %v3727 = vunpack.c.0.s8 %v3726
        %v3728 = vlaneseq
        %v3729 = vshrl.u32 %v3728, 7
        %v3730 = vsub.s32 %v3727, %v3729
        %v3731 = vrot.slane %v3717, %v3730
        %v3732 = vcombine.low %v3724, %v3731
        %v3733 = vcombine.low %v3538, %v3546
        %v3734 = vcombine.low %v3548, %v3531
        %v3735 = vcombine.low %v3545, %v3547
        %v3736 = vcombine.low %v3549, %v3564
        %v3738 = vunpack.c.l.s4 1966171168
        %v3739 = vunpack.c.0.s8 %v3738
        %v3740 = vlaneseq
        %v3741 = vshrl.u32 %v3740, 7
        %v3742 = vsub.s32 %v3739, %v3741
        %v3743 = vrot.slane %v3733, %v3742
        %v3745 = vunpack.c.l.s4 1966171168
        %v3746 = vunpack.c.0.s8 %v3745
        %v3747 = vlaneseq
        %v3748 = vshrl.u32 %v3747, 7
        %v3749 = vsub.s32 %v3746, %v3748
        %v3750 = vrot.slane %v3734, %v3749
        %v3752 = vunpack.c.l.s4 1966171168
        %v3753 = vunpack.c.0.s8 %v3752
        %v3754 = vlaneseq
        %v3755 = vshrl.u32 %v3754, 7
        %v3756 = vsub.s32 %v3753, %v3755
        %v3757 = vrot.slane %v3735, %v3756
        %v3759 = vunpack.c.l.s4 1966171168
        %v3760 = vunpack.c.0.s8 %v3759
        %v3761 = vlaneseq
        %v3762 = vshrl.u32 %v3761, 7
        %v3763 = vsub.s32 %v3760, %v3762
        %v3764 = vrot.slane %v3736, %v3763
        %v3765 = vcombine.low %v3743, %v3750
        %v3766 = vcombine.low %v3757, %v3764
        %v3768 = vunpack.c.l.s4 1966171168
        %v3769 = vunpack.c.0.s8 %v3768
        %v3770 = vlaneseq
        %v3771 = vshrl.u32 %v3770, 7
        %v3772 = vsub.s32 %v3769, %v3771
        %v3773 = vrot.slane %v3765, %v3772
        %v3775 = vunpack.c.l.s4 1966171168
        %v3776 = vunpack.c.0.s8 %v3775
        %v3777 = vlaneseq
        %v3778 = vshrl.u32 %v3777, 7
        %v3779 = vsub.s32 %v3776, %v3778
        %v3780 = vrot.slane %v3766, %v3779
        %v3781 = vcombine.low %v3773, %v3780
        %v3783 = vunpack.c.l.s4 1966171168
        %v3784 = vunpack.c.0.s8 %v3783
        %v3785 = vlaneseq
        %v3786 = vshrl.u32 %v3785, 7
        %v3787 = vsub.s32 %v3784, %v3786
        %v3788 = vrot.slane %v3571, %v3787
        %v3790 = vunpack.c.l.s4 1966171168
        %v3791 = vunpack.c.0.s8 %v3790
        %v3792 = vlaneseq
        %v3793 = vshrl.u32 %v3792, 7
        %v3794 = vsub.s32 %v3791, %v3793
        %v3795 = vrot.slane %v3788, %v3794
        %v3802 = vpack.c.bf16 %v3669, %v3620
        %v3803 = vpack.c.bf16 %v3683, %v3683
        %v3804 = vpack.c.bf16 %v3781, %v3732
        %v3805 = vpack.c.bf16 %v3795, %v3795
        %3808 = vrot.lane.b32.xlu0 %v3345, 64
        %v3809 = vpop.permute.xlu0 %3808
        %3810 = vrot.lane.b32.xlu0 %v3346, 64
        %v3811 = vpop.permute.xlu0 %3810
        %vm3812 = vcmask 130048
        %v3814 = vsel %vm3812, %v3345, 0
        %v3817 = vsel %vm3812, %v3346, 0
        %v3820 = vsel %vm3812, %v3809, 0
        %v3823 = vsel %vm3812, %v3811, 0
        %3825 = vmatprep.subr.bf16.mxu0 0
        %3826 = vmatpush1.bf16.xpose.msra.mxu0 %v3820
        %3827 = vmatprep.subr.bf16.mxu0 0
        %3828 = vmatpush1.bf16.xpose.msra.mxu0 %v3823
        %3829 = vmatprep.subr.bf16.mxu0 0
        %3830 = vmatpush1.bf16.xpose.msra.mxu0 0
        %3831 = vmatprep.subr.bf16.mxu0 0
        %3832 = vmatpush1.bf16.xpose.msra.mxu0 0
        %3833 = vmatprep.subr.bf16.mxu0 0
        %3834 = vmatpush1.bf16.xpose.msra.mxu0 0
        %3835 = vmatprep.subr.bf16.mxu0 0
        %3836 = vmatpush1.bf16.xpose.msra.mxu0 0
        %3837 = vmatprep.subr.bf16.mxu0 0
        %3838 = vmatpush1.bf16.xpose.msra.mxu0 0
        %3839 = vmatprep.subr.bf16.mxu0 0
        %3840 = vmatpush1.bf16.xpose.msra.mxu0 0
        %3841 = vmatprep.subr.bf16.mxu0 0
        %3842 = vmatpush1.bf16.xpose.msra.mxu0 0
        %3843 = vmatprep.subr.bf16.mxu0 0
        %3844 = vmatpush1.bf16.xpose.msra.mxu0 0
        %3845 = vmatprep.subr.bf16.mxu0 0
        %3846 = vmatpush1.bf16.xpose.msra.mxu0 0
        %3847 = vmatprep.subr.bf16.mxu0 0
        %3848 = vmatpush1.bf16.xpose.msra.mxu0 0
        %3849 = vmatprep.subr.bf16.mxu0 0
        %3850 = vmatpush1.bf16.xpose.msra.mxu0 0
        %3851 = vmatprep.subr.bf16.mxu0 0
        %3852 = vmatpush1.bf16.xpose.msra.mxu0 0
        %3853 = vmatprep.subr.bf16.mxu0 0
        %3854 = vmatpush1.bf16.xpose.msra.mxu0 0
        %3855 = vmatprep.subr.bf16.mxu0 0
        %3856 = vmatpush1.bf16.xpose.msra.mxu0 0
        %3857 = vmatprep.mubr.bf16.mxu0 0
        %3858 = vmatmul.mubr.bf16.gmra.mrb[0].mxu0 %v3814
        %v3859 = vpop.f32.mrb[0].mxu0
        %v3860 = vadd.f32 0.0, %v3859
        %v3861 = vpop.f32.mrb[0].mxu0
        %v3862 = vpop.f32.mrb[0].mxu0
        %v3863 = vadd.f32 0.0, %v3862
        %v3864 = vpop.f32.mrb[0].mxu0
        %3865 = vmatprep.mubr.bf16.mxu0 0
        %3866 = vmatmul.mubr.bf16.gmra.mrb[0].mxu0 %v3817
        %v3867 = vpop.f32.mrb[0].mxu0
        %v3868 = vadd.f32 0.0, %v3867
        %v3869 = vpop.f32.mrb[0].mxu0
        %v3870 = vpop.f32.mrb[0].mxu0
        %v3871 = vpop.f32.mrb[0].mxu0
        %3872 = vdwg.mxu0
        %3875 = vrot.lane.b32.xlu0 %v3347, 64
        %v3876 = vpop.permute.xlu0 %3875
        %3877 = vrot.lane.b32.xlu0 %v3348, 64
        %v3878 = vpop.permute.xlu0 %3877
        %v3880 = vsel %vm3812, %v3347, 0
        %v3883 = vsel %vm3812, %v3348, 0
        %v3886 = vsel %vm3812, %v3876, 0
        %v3889 = vsel %vm3812, %v3878, 0
        %3891 = vmatprep.subr.bf16.mxu0 0
        %3892 = vmatpush1.bf16.xpose.msra.mxu0 %v3886
        %3893 = vmatprep.subr.bf16.mxu0 0
        %3894 = vmatpush1.bf16.xpose.msra.mxu0 %v3889
        %3895 = vmatprep.subr.bf16.mxu0 0
        %3896 = vmatpush1.bf16.xpose.msra.mxu0 0
        %3897 = vmatprep.subr.bf16.mxu0 0
        %3898 = vmatpush1.bf16.xpose.msra.mxu0 0
        %3899 = vmatprep.subr.bf16.mxu0 0
        %3900 = vmatpush1.bf16.xpose.msra.mxu0 0
        %3901 = vmatprep.subr.bf16.mxu0 0
        %3902 = vmatpush1.bf16.xpose.msra.mxu0 0
        %3903 = vmatprep.subr.bf16.mxu0 0
        %3904 = vmatpush1.bf16.xpose.msra.mxu0 0
        %3905 = vmatprep.subr.bf16.mxu0 0
        %3906 = vmatpush1.bf16.xpose.msra.mxu0 0
        %3907 = vmatprep.subr.bf16.mxu0 0
        %3908 = vmatpush1.bf16.xpose.msra.mxu0 0
        %3909 = vmatprep.subr.bf16.mxu0 0
        %3910 = vmatpush1.bf16.xpose.msra.mxu0 0
        %3911 = vmatprep.subr.bf16.mxu0 0
        %3912 = vmatpush1.bf16.xpose.msra.mxu0 0
        %3913 = vmatprep.subr.bf16.mxu0 0
        %3914 = vmatpush1.bf16.xpose.msra.mxu0 0
        %3915 = vmatprep.subr.bf16.mxu0 0
        %3916 = vmatpush1.bf16.xpose.msra.mxu0 0
        %3917 = vmatprep.subr.bf16.mxu0 0
        %3918 = vmatpush1.bf16.xpose.msra.mxu0 0
        %3919 = vmatprep.subr.bf16.mxu0 0
        %3920 = vmatpush1.bf16.xpose.msra.mxu0 0
        %3921 = vmatprep.subr.bf16.mxu0 0
        %3922 = vmatpush1.bf16.xpose.msra.mxu0 0
        %3923 = vmatprep.mubr.bf16.mxu0 0
        %3924 = vmatmul.mubr.bf16.gmra.mrb[0].mxu0 %v3880
        %v3925 = vpop.f32.mrb[0].mxu0
        %v3926 = vadd.f32 0.0, %v3925
        %v3927 = vpop.f32.mrb[0].mxu0
        %v3928 = vpop.f32.mrb[0].mxu0
        %v3929 = vadd.f32 0.0, %v3928
        %v3930 = vpop.f32.mrb[0].mxu0
        %3931 = vmatprep.mubr.bf16.mxu0 0
        %3932 = vmatmul.mubr.bf16.gmra.mrb[0].mxu0 %v3883
        %v3933 = vpop.f32.mrb[0].mxu0
        %v3934 = vadd.f32 0.0, %v3933
        %v3935 = vpop.f32.mrb[0].mxu0
        %v3936 = vpop.f32.mrb[0].mxu0
        %v3937 = vpop.f32.mrb[0].mxu0
        %3938 = vdwg.mxu0
        %vm3939 = vcmask 138240
        %v3940 = vsel %vm3939, %v3860, -inf
        %3941 = vmax.xlane.f32.xlu0 %v3940
        %v3942 = vpop.xlane.xlu0 %3941
        %v3943 = vsel %vm3939, %v3863, -inf
        %3944 = vmax.xlane.f32.xlu0 %v3943
        %v3945 = vpop.xlane.xlu0 %3944
        %vm3946 = vcmask 131072
        %v3947 = vsel %vm3946, %v3868, -inf
        %3948 = vmax.xlane.f32.xlu0 %v3947
        %v3949 = vpop.xlane.xlu0 %3948
        %v3950 = vsel %vm3939, %v3926, -inf
        %3951 = vmax.xlane.f32.xlu0 %v3950
        %v3952 = vpop.xlane.xlu0 %3951
        %v3953 = vsel %vm3939, %v3929, -inf
        %3954 = vmax.xlane.f32.xlu0 %v3953
        %v3955 = vpop.xlane.xlu0 %3954
        %v3956 = vsel %vm3946, %v3934, -inf
        %3957 = vmax.xlane.f32.xlu0 %v3956
        %v3958 = vpop.xlane.xlu0 %3957
        %v3959 = vsub.f32 %v3860, %v3942
        %v3960 = vsub.f32 %v3863, %v3945
        %v3961 = vsub.f32 %v3868, %v3949
        %v3962 = vsub.f32 %v3926, %v3952
        %v3963 = vsub.f32 %v3929, %v3955
        %v3964 = vsub.f32 %v3934, %v3958
        %v3965 = vmul.f32 %v3959, 1.442695
        %v3966 = vpow.pop %v3965
        %v3967 = vmul.f32 %v3960, 1.442695
        %v3968 = vpow.pop %v3967
        %v3969 = vmul.f32 %v3961, 1.442695
        %v3970 = vpow.pop %v3969
        %v3971 = vmul.f32 %v3962, 1.442695
        %v3972 = vpow.pop %v3971
        %v3973 = vmul.f32 %v3963, 1.442695
        %v3974 = vpow.pop %v3973
        %v3975 = vmul.f32 %v3964, 1.442695
        %v3976 = vpow.pop %v3975
        %v3977 = vsel %vm3939, %v3966, 0.0
        %3978 = vadd.xlane.f32.xlu0 %v3977
        %v3979 = vpop.xlane.xlu0 %3978
        %v3980 = vsel %vm3939, %v3968, 0.0
        %3981 = vadd.xlane.f32.xlu0 %v3980
        %v3982 = vpop.xlane.xlu0 %3981
        %v3983 = vsel %vm3946, %v3970, 0.0
        %3984 = vadd.xlane.f32.xlu0 %v3983
        %v3985 = vpop.xlane.xlu0 %3984
        %v3986 = vsel %vm3939, %v3972, 0.0
        %3987 = vadd.xlane.f32.xlu0 %v3986
        %v3988 = vpop.xlane.xlu0 %3987
        %v3989 = vsel %vm3939, %v3974, 0.0
        %3990 = vadd.xlane.f32.xlu0 %v3989
        %v3991 = vpop.xlane.xlu0 %3990
        %v3992 = vsel %vm3946, %v3976, 0.0
        %3993 = vadd.xlane.f32.xlu0 %v3992
        %v3994 = vpop.xlane.xlu0 %3993
        %v3995 = vrcp.pop %v3979
        %v3996 = vrcp.pop %v3982
        %v3997 = vrcp.pop %v3985
        %v3998 = vrcp.pop %v3988
        %v3999 = vrcp.pop %v3991
        %v4000 = vrcp.pop %v3994
        %v4001 = vmul.f32 %v3966, %v3995
        %v4002 = vmul.f32 %v3968, %v3996
        %v4003 = vmul.f32 %v3970, %v3997
        %v4004 = vmul.f32 %v3972, %v3998
        %v4005 = vmul.f32 %v3974, %v3999
        %v4006 = vmul.f32 %v3976, %v4000
        %v4007 = vpack.c.bf16 %v4002, %v4001
        %v4008 = vpack.c.bf16 %v4003, %v4003
        %v4009 = vpack.c.bf16 %v4005, %v4004
        %v4010 = vpack.c.bf16 %v4006, %v4006
        %v4012 = vsel %vm3939, %v4007, 0
        %v4015 = vsel %vm3939, %v4008, 0
        %vm4017 = vcmask 1040384
        %v4018 = vsel 0, 4294967295, 65535
        %v4019 = vsel %vm4017, %v4018, 0
        %v4021 = vand.u32 %v3803, %v4019
        %4023 = vmatprep.subr.bf16.mxu0 0
        %4024 = vmatpush1.bf16.msra.mxu0 %v3802
        %4025 = vmatprep.subr.bf16.mxu0 0
        %4026 = vmatpush1.bf16.msra.mxu0 %v4021
        %4027 = vmatprep.subr.bf16.mxu0 0
        %4028 = vmatpush1.bf16.msra.mxu0 0
        %4029 = vmatprep.subr.bf16.mxu0 0
        %4030 = vmatpush1.bf16.msra.mxu0 0
        %4031 = vmatprep.subr.bf16.mxu0 0
        %4032 = vmatpush1.bf16.msra.mxu0 0
        %4033 = vmatprep.subr.bf16.mxu0 0
        %4034 = vmatpush1.bf16.msra.mxu0 0
        %4035 = vmatprep.subr.bf16.mxu0 0
        %4036 = vmatpush1.bf16.msra.mxu0 0
        %4037 = vmatprep.subr.bf16.mxu0 0
        %4038 = vmatpush1.bf16.msra.mxu0 0
        %4039 = vmatprep.subr.bf16.mxu0 0
        %4040 = vmatpush1.bf16.msra.mxu0 0
        %4041 = vmatprep.subr.bf16.mxu0 0
        %4042 = vmatpush1.bf16.msra.mxu0 0
        %4043 = vmatprep.subr.bf16.mxu0 0
        %4044 = vmatpush1.bf16.msra.mxu0 0
        %4045 = vmatprep.subr.bf16.mxu0 0
        %4046 = vmatpush1.bf16.msra.mxu0 0
        %4047 = vmatprep.subr.bf16.mxu0 0
        %4048 = vmatpush1.bf16.msra.mxu0 0
        %4049 = vmatprep.subr.bf16.mxu0 0
        %4050 = vmatpush1.bf16.msra.mxu0 0
        %4051 = vmatprep.subr.bf16.mxu0 0
        %4052 = vmatpush1.bf16.msra.mxu0 0
        %4053 = vmatprep.subr.bf16.mxu0 0
        %4054 = vmatpush1.bf16.msra.mxu0 0
        %4055 = vmatprep.mubr.bf16.mxu0 0
        %4056 = vmatmul.mubr.bf16.gmra.mrb[0].mxu0 %v4012
        %v4057 = vpop.f32.mrb[0].mxu0
        %v4058 = vadd.f32 0.0, %v4057
        %v4059 = vpop.f32.mrb[0].mxu0
        %v4060 = vpop.f32.mrb[0].mxu0
        %v4061 = vadd.f32 0.0, %v4060
        %v4062 = vpop.f32.mrb[0].mxu0
        %4063 = vmatprep.mubr.bf16.mxu0 0
        %4064 = vmatmul.mubr.bf16.gmra.mrb[0].mxu0 %v4015
        %v4065 = vpop.f32.mrb[0].mxu0
        %v4066 = vadd.f32 0.0, %v4065
        %v4067 = vpop.f32.mrb[0].mxu0
        %v4068 = vpop.f32.mrb[0].mxu0
        %v4069 = vpop.f32.mrb[0].mxu0
        %4070 = vdwg.mxu0
        %v4072 = vsel %vm3939, %v4009, 0
        %v4075 = vsel %vm3939, %v4010, 0
        %v4078 = vand.u32 %v3805, %v4019
        %4080 = vmatprep.subr.bf16.mxu0 0
        %4081 = vmatpush1.bf16.msra.mxu0 %v3804
        %4082 = vmatprep.subr.bf16.mxu0 0
        %4083 = vmatpush1.bf16.msra.mxu0 %v4078
        %4084 = vmatprep.subr.bf16.mxu0 0
        %4085 = vmatpush1.bf16.msra.mxu0 0
        %4086 = vmatprep.subr.bf16.mxu0 0
        %4087 = vmatpush1.bf16.msra.mxu0 0
        %4088 = vmatprep.subr.bf16.mxu0 0
        %4089 = vmatpush1.bf16.msra.mxu0 0
        %4090 = vmatprep.subr.bf16.mxu0 0
        %4091 = vmatpush1.bf16.msra.mxu0 0
        %4092 = vmatprep.subr.bf16.mxu0 0
        %4093 = vmatpush1.bf16.msra.mxu0 0
        %4094 = vmatprep.subr.bf16.mxu0 0
        %4095 = vmatpush1.bf16.msra.mxu0 0
        %4096 = vmatprep.subr.bf16.mxu0 0
        %4097 = vmatpush1.bf16.msra.mxu0 0
        %4098 = vmatprep.subr.bf16.mxu0 0
        %4099 = vmatpush1.bf16.msra.mxu0 0
        %4100 = vmatprep.subr.bf16.mxu0 0
        %4101 = vmatpush1.bf16.msra.mxu0 0
        %4102 = vmatprep.subr.bf16.mxu0 0
        %4103 = vmatpush1.bf16.msra.mxu0 0
        %4104 = vmatprep.subr.bf16.mxu0 0
        %4105 = vmatpush1.bf16.msra.mxu0 0
        %4106 = vmatprep.subr.bf16.mxu0 0
        %4107 = vmatpush1.bf16.msra.mxu0 0
        %4108 = vmatprep.subr.bf16.mxu0 0
        %4109 = vmatpush1.bf16.msra.mxu0 0
        %4110 = vmatprep.subr.bf16.mxu0 0
        %4111 = vmatpush1.bf16.msra.mxu0 0
        %4112 = vmatprep.mubr.bf16.mxu0 0
        %4113 = vmatmul.mubr.bf16.gmra.mrb[0].mxu0 %v4072
        %v4114 = vpop.f32.mrb[0].mxu0
        %v4115 = vadd.f32 0.0, %v4114
        %v4116 = vpop.f32.mrb[0].mxu0
        %v4117 = vpop.f32.mrb[0].mxu0
        %v4118 = vadd.f32 0.0, %v4117
        %v4119 = vpop.f32.mrb[0].mxu0
        %4120 = vmatprep.mubr.bf16.mxu0 0
        %4121 = vmatmul.mubr.bf16.gmra.mrb[0].mxu0 %v4075
        %v4122 = vpop.f32.mrb[0].mxu0
        %v4123 = vadd.f32 0.0, %v4122
        %v4124 = vpop.f32.mrb[0].mxu0
        %v4125 = vpop.f32.mrb[0].mxu0
        %v4126 = vpop.f32.mrb[0].mxu0
        %4127 = vdwg.mxu0
        %v4134 = vcombine.high %v4058, %v4058
        %v4136 = vunpack.c.l.s4 1966171168
        %v4137 = vunpack.c.0.s8 %v4136
        %v4138 = vlaneseq
        %v4139 = vshrl.u32 %v4138, 7
        %v4140 = vsub.s32 %v4137, %v4139
        %v4141 = vrot.slane %v4058, %v4140
        %v4143 = vunpack.c.l.s4 1966171168
        %v4144 = vunpack.c.0.s8 %v4143
        %v4145 = vlaneseq
        %v4146 = vshrl.u32 %v4145, 7
        %v4147 = vsub.s32 %v4144, %v4146
        %v4148 = vrot.slane %v4134, %v4147
        %v4149 = vcombine.high %v4141, %v4141
        %v4150 = vcombine.high %v4148, %v4148
        %v4152 = vunpack.c.l.s4 1966171168
        %v4153 = vunpack.c.0.s8 %v4152
        %v4154 = vlaneseq
        %v4155 = vshrl.u32 %v4154, 7
        %v4156 = vsub.s32 %v4153, %v4155
        %v4157 = vrot.slane %v4141, %v4156
        %v4159 = vunpack.c.l.s4 1966171168
        %v4160 = vunpack.c.0.s8 %v4159
        %v4161 = vlaneseq
        %v4162 = vshrl.u32 %v4161, 7
        %v4163 = vsub.s32 %v4160, %v4162
        %v4164 = vrot.slane %v4148, %v4163
        %v4166 = vunpack.c.l.s4 1966171168
        %v4167 = vunpack.c.0.s8 %v4166
        %v4168 = vlaneseq
        %v4169 = vshrl.u32 %v4168, 7
        %v4170 = vsub.s32 %v4167, %v4169
        %v4171 = vrot.slane %v4149, %v4170
        %v4173 = vunpack.c.l.s4 1966171168
        %v4174 = vunpack.c.0.s8 %v4173
        %v4175 = vlaneseq
        %v4176 = vshrl.u32 %v4175, 7
        %v4177 = vsub.s32 %v4174, %v4176
        %v4178 = vrot.slane %v4150, %v4177
        %v4179 = vcombine.high %v4157, %v4157
        %v4180 = vcombine.high %v4164, %v4164
        %v4181 = vcombine.high %v4171, %v4171
        %v4182 = vcombine.high %v4178, %v4178
        %v4183 = vcombine.high %v4061, %v4061
        %v4185 = vunpack.c.l.s4 1966171168
        %v4186 = vunpack.c.0.s8 %v4185
        %v4187 = vlaneseq
        %v4188 = vshrl.u32 %v4187, 7
        %v4189 = vsub.s32 %v4186, %v4188
        %v4190 = vrot.slane %v4061, %v4189
        %v4192 = vunpack.c.l.s4 1966171168
        %v4193 = vunpack.c.0.s8 %v4192
        %v4194 = vlaneseq
        %v4195 = vshrl.u32 %v4194, 7
        %v4196 = vsub.s32 %v4193, %v4195
        %v4197 = vrot.slane %v4183, %v4196
        %v4198 = vcombine.high %v4190, %v4190
        %v4199 = vcombine.high %v4197, %v4197
        %v4201 = vunpack.c.l.s4 1966171168
        %v4202 = vunpack.c.0.s8 %v4201
        %v4203 = vlaneseq
        %v4204 = vshrl.u32 %v4203, 7
        %v4205 = vsub.s32 %v4202, %v4204
        %v4206 = vrot.slane %v4190, %v4205
        %v4208 = vunpack.c.l.s4 1966171168
        %v4209 = vunpack.c.0.s8 %v4208
        %v4210 = vlaneseq
        %v4211 = vshrl.u32 %v4210, 7
        %v4212 = vsub.s32 %v4209, %v4211
        %v4213 = vrot.slane %v4197, %v4212
        %v4215 = vunpack.c.l.s4 1966171168
        %v4216 = vunpack.c.0.s8 %v4215
        %v4217 = vlaneseq
        %v4218 = vshrl.u32 %v4217, 7
        %v4219 = vsub.s32 %v4216, %v4218
        %v4220 = vrot.slane %v4198, %v4219
        %v4222 = vunpack.c.l.s4 1966171168
        %v4223 = vunpack.c.0.s8 %v4222
        %v4224 = vlaneseq
        %v4225 = vshrl.u32 %v4224, 7
        %v4226 = vsub.s32 %v4223, %v4225
        %v4227 = vrot.slane %v4199, %v4226
        %v4228 = vcombine.high %v4206, %v4206
        %v4229 = vcombine.high %v4213, %v4213
        %v4230 = vcombine.high %v4220, %v4220
        %v4231 = vcombine.high %v4227, %v4227
        %v4233 = vunpack.c.l.s4 1966171168
        %v4234 = vunpack.c.0.s8 %v4233
        %v4235 = vlaneseq
        %v4236 = vshrl.u32 %v4235, 7
        %v4237 = vsub.s32 %v4234, %v4236
        %v4238 = vrot.slane %v4066, %v4237
        %v4240 = vunpack.c.l.s4 1966171168
        %v4241 = vunpack.c.0.s8 %v4240
        %v4242 = vlaneseq
        %v4243 = vshrl.u32 %v4242, 7
        %v4244 = vsub.s32 %v4241, %v4243
        %v4245 = vrot.slane %v4238, %v4244
        %v4246 = vcombine.high %v4115, %v4115
        %v4248 = vunpack.c.l.s4 1966171168
        %v4249 = vunpack.c.0.s8 %v4248
        %v4250 = vlaneseq
        %v4251 = vshrl.u32 %v4250, 7
        %v4252 = vsub.s32 %v4249, %v4251
        %v4253 = vrot.slane %v4115, %v4252
        %v4255 = vunpack.c.l.s4 1966171168
        %v4256 = vunpack.c.0.s8 %v4255
        %v4257 = vlaneseq
        %v4258 = vshrl.u32 %v4257, 7
        %v4259 = vsub.s32 %v4256, %v4258
        %v4260 = vrot.slane %v4246, %v4259
        %v4261 = vcombine.high %v4253, %v4253
        %v4262 = vcombine.high %v4260, %v4260
        %v4264 = vunpack.c.l.s4 1966171168
        %v4265 = vunpack.c.0.s8 %v4264
        %v4266 = vlaneseq
        %v4267 = vshrl.u32 %v4266, 7
        %v4268 = vsub.s32 %v4265, %v4267
        %v4269 = vrot.slane %v4253, %v4268
        %v4271 = vunpack.c.l.s4 1966171168
        %v4272 = vunpack.c.0.s8 %v4271
        %v4273 = vlaneseq
        %v4274 = vshrl.u32 %v4273, 7
        %v4275 = vsub.s32 %v4272, %v4274
        %v4276 = vrot.slane %v4260, %v4275
        %v4278 = vunpack.c.l.s4 1966171168
        %v4279 = vunpack.c.0.s8 %v4278
        %v4280 = vlaneseq
        %v4281 = vshrl.u32 %v4280, 7
        %v4282 = vsub.s32 %v4279, %v4281
        %v4283 = vrot.slane %v4261, %v4282
        %v4285 = vunpack.c.l.s4 1966171168
        %v4286 = vunpack.c.0.s8 %v4285
        %v4287 = vlaneseq
        %v4288 = vshrl.u32 %v4287, 7
        %v4289 = vsub.s32 %v4286, %v4288
        %v4290 = vrot.slane %v4262, %v4289
        %v4291 = vcombine.high %v4269, %v4269
        %v4292 = vcombine.high %v4276, %v4276
        %v4293 = vcombine.high %v4283, %v4283
        %v4294 = vcombine.high %v4290, %v4290
        %v4295 = vcombine.high %v4118, %v4118
        %v4297 = vunpack.c.l.s4 1966171168
        %v4298 = vunpack.c.0.s8 %v4297
        %v4299 = vlaneseq
        %v4300 = vshrl.u32 %v4299, 7
        %v4301 = vsub.s32 %v4298, %v4300
        %v4302 = vrot.slane %v4118, %v4301
        %v4304 = vunpack.c.l.s4 1966171168
        %v4305 = vunpack.c.0.s8 %v4304
        %v4306 = vlaneseq
        %v4307 = vshrl.u32 %v4306, 7
        %v4308 = vsub.s32 %v4305, %v4307
        %v4309 = vrot.slane %v4295, %v4308
        %v4310 = vcombine.high %v4302, %v4302
        %v4311 = vcombine.high %v4309, %v4309
        %v4313 = vunpack.c.l.s4 1966171168
        %v4314 = vunpack.c.0.s8 %v4313
        %v4315 = vlaneseq
        %v4316 = vshrl.u32 %v4315, 7
        %v4317 = vsub.s32 %v4314, %v4316
        %v4318 = vrot.slane %v4302, %v4317
        %v4320 = vunpack.c.l.s4 1966171168
        %v4321 = vunpack.c.0.s8 %v4320
        %v4322 = vlaneseq
        %v4323 = vshrl.u32 %v4322, 7
        %v4324 = vsub.s32 %v4321, %v4323
        %v4325 = vrot.slane %v4309, %v4324
        %v4327 = vunpack.c.l.s4 1966171168
        %v4328 = vunpack.c.0.s8 %v4327
        %v4329 = vlaneseq
        %v4330 = vshrl.u32 %v4329, 7
        %v4331 = vsub.s32 %v4328, %v4330
        %v4332 = vrot.slane %v4310, %v4331
        %v4334 = vunpack.c.l.s4 1966171168
        %v4335 = vunpack.c.0.s8 %v4334
        %v4336 = vlaneseq
        %v4337 = vshrl.u32 %v4336, 7
        %v4338 = vsub.s32 %v4335, %v4337
        %v4339 = vrot.slane %v4311, %v4338
        %v4340 = vcombine.high %v4318, %v4318
        %v4341 = vcombine.high %v4325, %v4325
        %v4342 = vcombine.high %v4332, %v4332
        %v4343 = vcombine.high %v4339, %v4339
        %v4345 = vunpack.c.l.s4 1966171168
        %v4346 = vunpack.c.0.s8 %v4345
        %v4347 = vlaneseq
        %v4348 = vshrl.u32 %v4347, 7
        %v4349 = vsub.s32 %v4346, %v4348
        %v4350 = vrot.slane %v4123, %v4349
        %v4352 = vunpack.c.l.s4 1966171168
        %v4353 = vunpack.c.0.s8 %v4352
        %v4354 = vlaneseq
        %v4355 = vshrl.u32 %v4354, 7
        %v4356 = vsub.s32 %v4353, %v4355
        %v4357 = vrot.slane %v4350, %v4356
        %v4358 = vcombine.low %v4157, %v4171
        %v4359 = vcombine.low %v4179, %v4181
        %v4360 = vcombine.low %v4164, %v4178
        %v4361 = vcombine.low %v4180, %v4182
        %v4363 = vunpack.c.l.s4 1966171168
        %v4364 = vunpack.c.0.s8 %v4363
        %v4365 = vlaneseq
        %v4366 = vshrl.u32 %v4365, 7
        %v4367 = vsub.s32 %v4364, %v4366
        %v4368 = vrot.slane %v4358, %v4367
        %v4370 = vunpack.c.l.s4 1966171168
        %v4371 = vunpack.c.0.s8 %v4370
        %v4372 = vlaneseq
        %v4373 = vshrl.u32 %v4372, 7
        %v4374 = vsub.s32 %v4371, %v4373
        %v4375 = vrot.slane %v4359, %v4374
        %v4377 = vunpack.c.l.s4 1966171168
        %v4378 = vunpack.c.0.s8 %v4377
        %v4379 = vlaneseq
        %v4380 = vshrl.u32 %v4379, 7
        %v4381 = vsub.s32 %v4378, %v4380
        %v4382 = vrot.slane %v4360, %v4381
        %v4384 = vunpack.c.l.s4 1966171168
        %v4385 = vunpack.c.0.s8 %v4384
        %v4386 = vlaneseq
        %v4387 = vshrl.u32 %v4386, 7
        %v4388 = vsub.s32 %v4385, %v4387
        %v4389 = vrot.slane %v4361, %v4388
        %v4390 = vcombine.low %v4368, %v4375
        %v4391 = vcombine.low %v4382, %v4389
        %v4393 = vunpack.c.l.s4 1966171168
        %v4394 = vunpack.c.0.s8 %v4393
        %v4395 = vlaneseq
        %v4396 = vshrl.u32 %v4395, 7
        %v4397 = vsub.s32 %v4394, %v4396
        %v4398 = vrot.slane %v4390, %v4397
        %v4400 = vunpack.c.l.s4 1966171168
        %v4401 = vunpack.c.0.s8 %v4400
        %v4402 = vlaneseq
        %v4403 = vshrl.u32 %v4402, 7
        %v4404 = vsub.s32 %v4401, %v4403
        %v4405 = vrot.slane %v4391, %v4404
        %v4406 = vcombine.low %v4398, %v4405
        %v4407 = vcombine.low %v4206, %v4220
        %v4408 = vcombine.low %v4228, %v4230
        %v4409 = vcombine.low %v4213, %v4227
        %v4410 = vcombine.low %v4229, %v4231
        %v4412 = vunpack.c.l.s4 1966171168
        %v4413 = vunpack.c.0.s8 %v4412
        %v4414 = vlaneseq
        %v4415 = vshrl.u32 %v4414, 7
        %v4416 = vsub.s32 %v4413, %v4415
        %v4417 = vrot.slane %v4407, %v4416
        %v4419 = vunpack.c.l.s4 1966171168
        %v4420 = vunpack.c.0.s8 %v4419
        %v4421 = vlaneseq
        %v4422 = vshrl.u32 %v4421, 7
        %v4423 = vsub.s32 %v4420, %v4422
        %v4424 = vrot.slane %v4408, %v4423
        %v4426 = vunpack.c.l.s4 1966171168
        %v4427 = vunpack.c.0.s8 %v4426
        %v4428 = vlaneseq
        %v4429 = vshrl.u32 %v4428, 7
        %v4430 = vsub.s32 %v4427, %v4429
        %v4431 = vrot.slane %v4409, %v4430
        %v4433 = vunpack.c.l.s4 1966171168
        %v4434 = vunpack.c.0.s8 %v4433
        %v4435 = vlaneseq
        %v4436 = vshrl.u32 %v4435, 7
        %v4437 = vsub.s32 %v4434, %v4436
        %v4438 = vrot.slane %v4410, %v4437
        %v4439 = vcombine.low %v4417, %v4424
        %v4440 = vcombine.low %v4431, %v4438
        %v4442 = vunpack.c.l.s4 1966171168
        %v4443 = vunpack.c.0.s8 %v4442
        %v4444 = vlaneseq
        %v4445 = vshrl.u32 %v4444, 7
        %v4446 = vsub.s32 %v4443, %v4445
        %v4447 = vrot.slane %v4439, %v4446
        %v4449 = vunpack.c.l.s4 1966171168
        %v4450 = vunpack.c.0.s8 %v4449
        %v4451 = vlaneseq
        %v4452 = vshrl.u32 %v4451, 7
        %v4453 = vsub.s32 %v4450, %v4452
        %v4454 = vrot.slane %v4440, %v4453
        %v4455 = vcombine.low %v4447, %v4454
        %v4456 = vcombine.low %v4245, %v4269
        %v4457 = vcombine.low %v4283, %v4291
        %v4458 = vcombine.low %v4293, %v4276
        %v4459 = vcombine.low %v4290, %v4292
        %v4461 = vunpack.c.l.s4 1966171168
        %v4462 = vunpack.c.0.s8 %v4461
        %v4463 = vlaneseq
        %v4464 = vshrl.u32 %v4463, 7
        %v4465 = vsub.s32 %v4462, %v4464
        %v4466 = vrot.slane %v4456, %v4465
        %v4468 = vunpack.c.l.s4 1966171168
        %v4469 = vunpack.c.0.s8 %v4468
        %v4470 = vlaneseq
        %v4471 = vshrl.u32 %v4470, 7
        %v4472 = vsub.s32 %v4469, %v4471
        %v4473 = vrot.slane %v4457, %v4472
        %v4475 = vunpack.c.l.s4 1966171168
        %v4476 = vunpack.c.0.s8 %v4475
        %v4477 = vlaneseq
        %v4478 = vshrl.u32 %v4477, 7
        %v4479 = vsub.s32 %v4476, %v4478
        %v4480 = vrot.slane %v4458, %v4479
        %v4482 = vunpack.c.l.s4 1966171168
        %v4483 = vunpack.c.0.s8 %v4482
        %v4484 = vlaneseq
        %v4485 = vshrl.u32 %v4484, 7
        %v4486 = vsub.s32 %v4483, %v4485
        %v4487 = vrot.slane %v4459, %v4486
        %v4488 = vcombine.low %v4466, %v4473
        %v4489 = vcombine.low %v4480, %v4487
        %v4491 = vunpack.c.l.s4 1966171168
        %v4492 = vunpack.c.0.s8 %v4491
        %v4493 = vlaneseq
        %v4494 = vshrl.u32 %v4493, 7
        %v4495 = vsub.s32 %v4492, %v4494
        %v4496 = vrot.slane %v4488, %v4495
        %v4498 = vunpack.c.l.s4 1966171168
        %v4499 = vunpack.c.0.s8 %v4498
        %v4500 = vlaneseq
        %v4501 = vshrl.u32 %v4500, 7
        %v4502 = vsub.s32 %v4499, %v4501
        %v4503 = vrot.slane %v4489, %v4502
        %v4504 = vcombine.low %v4496, %v4503
        %v4505 = vcombine.low %v4294, %v4318
        %v4506 = vcombine.low %v4332, %v4340
        %v4507 = vcombine.low %v4342, %v4325
        %v4508 = vcombine.low %v4339, %v4341
        %v4510 = vunpack.c.l.s4 1966171168
        %v4511 = vunpack.c.0.s8 %v4510
        %v4512 = vlaneseq
        %v4513 = vshrl.u32 %v4512, 7
        %v4514 = vsub.s32 %v4511, %v4513
        %v4515 = vrot.slane %v4505, %v4514
        %v4517 = vunpack.c.l.s4 1966171168
        %v4518 = vunpack.c.0.s8 %v4517
        %v4519 = vlaneseq
        %v4520 = vshrl.u32 %v4519, 7
        %v4521 = vsub.s32 %v4518, %v4520
        %v4522 = vrot.slane %v4506, %v4521
        %v4524 = vunpack.c.l.s4 1966171168
        %v4525 = vunpack.c.0.s8 %v4524
        %v4526 = vlaneseq
        %v4527 = vshrl.u32 %v4526, 7
        %v4528 = vsub.s32 %v4525, %v4527
        %v4529 = vrot.slane %v4507, %v4528
        %v4531 = vunpack.c.l.s4 1966171168
        %v4532 = vunpack.c.0.s8 %v4531
        %v4533 = vlaneseq
        %v4534 = vshrl.u32 %v4533, 7
        %v4535 = vsub.s32 %v4532, %v4534
        %v4536 = vrot.slane %v4508, %v4535
        %v4537 = vcombine.low %v4515, %v4522
        %v4538 = vcombine.low %v4529, %v4536
        %v4540 = vunpack.c.l.s4 1966171168
        %v4541 = vunpack.c.0.s8 %v4540
        %v4542 = vlaneseq
        %v4543 = vshrl.u32 %v4542, 7
        %v4544 = vsub.s32 %v4541, %v4543
        %v4545 = vrot.slane %v4537, %v4544
        %v4547 = vunpack.c.l.s4 1966171168
        %v4548 = vunpack.c.0.s8 %v4547
        %v4549 = vlaneseq
        %v4550 = vshrl.u32 %v4549, 7
        %v4551 = vsub.s32 %v4548, %v4550
        %v4552 = vrot.slane %v4538, %v4551
        %v4553 = vcombine.low %v4545, %v4552
        %v4554 = vcombine.low %v4343, %v4357
        %v4556 = vunpack.c.l.s4 1966171168
        %v4557 = vunpack.c.0.s8 %v4556
        %v4558 = vlaneseq
        %v4559 = vshrl.u32 %v4558, 7
        %v4560 = vsub.s32 %v4557, %v4559
        %v4561 = vrot.slane %v4554, %v4560
        %v4563 = vunpack.c.l.s4 1966171168
        %v4564 = vunpack.c.0.s8 %v4563
        %v4565 = vlaneseq
        %v4566 = vshrl.u32 %v4565, 7
        %v4567 = vsub.s32 %v4564, %v4566
        %v4568 = vrot.slane %v4561, %v4567
        %4574 = vst.msk [vmem:[#allocation2] sm:$0xff] %vm3812, %v4406
        %4575 = vst.msk [vmem:[#allocation2 + $0x8] sm:$0xff] %vm3812, %v4455
        %4576 = vst.msk [vmem:[#allocation2 + $0x10] sm:$0xff] %vm3812, %v4504
        %4577 = vst.msk [vmem:[#allocation2 + $0x18] sm:$0xff] %vm3812, %v4553
        %vm4578 = vcmask 123904
        %4579 = vst.msk [vmem:[#allocation2 + $0x20] sm:$0x3] %vm4578, %v4568
        %4580 = vrot.lane.b32.xlu0 %v3345, 112
        %v4581 = vpop.permute.xlu0 %4580
        %4582 = vrot.lane.b32.xlu0 %v3346, 112
        %v4583 = vpop.permute.xlu0 %4582
        %4584 = vrot.lane.b32.xlu0 %v3345, 48
        %v4585 = vpop.permute.xlu0 %4584
        %4586 = vrot.lane.b32.xlu0 %v3346, 48
        %v4587 = vpop.permute.xlu0 %4586
        %v4589 = vsel %vm3812, %v4581, 0
        %v4592 = vsel %vm3812, %v4583, 0
        %v4595 = vsel %vm3812, %v4585, 0
        %v4598 = vsel %vm3812, %v4587, 0
        %4600 = vmatprep.subr.bf16.mxu0 0
        %4601 = vmatpush1.bf16.xpose.msra.mxu0 %v4595
        %4602 = vmatprep.subr.bf16.mxu0 0
        %4603 = vmatpush1.bf16.xpose.msra.mxu0 %v4598
        %4604 = vmatprep.subr.bf16.mxu0 0
        %4605 = vmatpush1.bf16.xpose.msra.mxu0 0
        %4606 = vmatprep.subr.bf16.mxu0 0
        %4607 = vmatpush1.bf16.xpose.msra.mxu0 0
        %4608 = vmatprep.subr.bf16.mxu0 0
        %4609 = vmatpush1.bf16.xpose.msra.mxu0 0
        %4610 = vmatprep.subr.bf16.mxu0 0
        %4611 = vmatpush1.bf16.xpose.msra.mxu0 0
        %4612 = vmatprep.subr.bf16.mxu0 0
        %4613 = vmatpush1.bf16.xpose.msra.mxu0 0
        %4614 = vmatprep.subr.bf16.mxu0 0
        %4615 = vmatpush1.bf16.xpose.msra.mxu0 0
        %4616 = vmatprep.subr.bf16.mxu0 0
        %4617 = vmatpush1.bf16.xpose.msra.mxu0 0
        %4618 = vmatprep.subr.bf16.mxu0 0
        %4619 = vmatpush1.bf16.xpose.msra.mxu0 0
        %4620 = vmatprep.subr.bf16.mxu0 0
        %4621 = vmatpush1.bf16.xpose.msra.mxu0 0
        %4622 = vmatprep.subr.bf16.mxu0 0
        %4623 = vmatpush1.bf16.xpose.msra.mxu0 0
        %4624 = vmatprep.subr.bf16.mxu0 0
        %4625 = vmatpush1.bf16.xpose.msra.mxu0 0
        %4626 = vmatprep.subr.bf16.mxu0 0
        %4627 = vmatpush1.bf16.xpose.msra.mxu0 0
        %4628 = vmatprep.subr.bf16.mxu0 0
        %4629 = vmatpush1.bf16.xpose.msra.mxu0 0
        %4630 = vmatprep.subr.bf16.mxu0 0
        %4631 = vmatpush1.bf16.xpose.msra.mxu0 0
        %4632 = vmatprep.mubr.bf16.mxu0 0
        %4633 = vmatmul.mubr.bf16.gmra.mrb[0].mxu0 %v4589
        %v4634 = vpop.f32.mrb[0].mxu0
        %v4635 = vadd.f32 0.0, %v4634
        %v4636 = vpop.f32.mrb[0].mxu0
        %v4637 = vpop.f32.mrb[0].mxu0
        %v4638 = vadd.f32 0.0, %v4637
        %v4639 = vpop.f32.mrb[0].mxu0
        %4640 = vmatprep.mubr.bf16.mxu0 0
        %4641 = vmatmul.mubr.bf16.gmra.mrb[0].mxu0 %v4592
        %v4642 = vpop.f32.mrb[0].mxu0
        %v4643 = vadd.f32 0.0, %v4642
        %v4644 = vpop.f32.mrb[0].mxu0
        %v4645 = vpop.f32.mrb[0].mxu0
        %v4646 = vpop.f32.mrb[0].mxu0
        %4647 = vdwg.mxu0
        %4648 = vrot.lane.b32.xlu0 %v3347, 112
        %v4649 = vpop.permute.xlu0 %4648
        %4650 = vrot.lane.b32.xlu0 %v3348, 112
        %v4651 = vpop.permute.xlu0 %4650
        %4652 = vrot.lane.b32.xlu0 %v3347, 48
        %v4653 = vpop.permute.xlu0 %4652
        %4654 = vrot.lane.b32.xlu0 %v3348, 48
        %v4655 = vpop.permute.xlu0 %4654
        %v4657 = vsel %vm3812, %v4649, 0
        %v4660 = vsel %vm3812, %v4651, 0
        %v4663 = vsel %vm3812, %v4653, 0
        %v4666 = vsel %vm3812, %v4655, 0
        %4668 = vmatprep.subr.bf16.mxu0 0
        %4669 = vmatpush1.bf16.xpose.msra.mxu0 %v4663
        %4670 = vmatprep.subr.bf16.mxu0 0
        %4671 = vmatpush1.bf16.xpose.msra.mxu0 %v4666
        %4672 = vmatprep.subr.bf16.mxu0 0
        %4673 = vmatpush1.bf16.xpose.msra.mxu0 0
        %4674 = vmatprep.subr.bf16.mxu0 0
        %4675 = vmatpush1.bf16.xpose.msra.mxu0 0
        %4676 = vmatprep.subr.bf16.mxu0 0
        %4677 = vmatpush1.bf16.xpose.msra.mxu0 0
        %4678 = vmatprep.subr.bf16.mxu0 0
        %4679 = vmatpush1.bf16.xpose.msra.mxu0 0
        %4680 = vmatprep.subr.bf16.mxu0 0
        %4681 = vmatpush1.bf16.xpose.msra.mxu0 0
        %4682 = vmatprep.subr.bf16.mxu0 0
        %4683 = vmatpush1.bf16.xpose.msra.mxu0 0
        %4684 = vmatprep.subr.bf16.mxu0 0
        %4685 = vmatpush1.bf16.xpose.msra.mxu0 0
        %4686 = vmatprep.subr.bf16.mxu0 0
        %4687 = vmatpush1.bf16.xpose.msra.mxu0 0
        %4688 = vmatprep.subr.bf16.mxu0 0
        %4689 = vmatpush1.bf16.xpose.msra.mxu0 0
        %4690 = vmatprep.subr.bf16.mxu0 0
        %4691 = vmatpush1.bf16.xpose.msra.mxu0 0
        %4692 = vmatprep.subr.bf16.mxu0 0
        %4693 = vmatpush1.bf16.xpose.msra.mxu0 0
        %4694 = vmatprep.subr.bf16.mxu0 0
        %4695 = vmatpush1.bf16.xpose.msra.mxu0 0
        %4696 = vmatprep.subr.bf16.mxu0 0
        %4697 = vmatpush1.bf16.xpose.msra.mxu0 0
        %4698 = vmatprep.subr.bf16.mxu0 0
        %4699 = vmatpush1.bf16.xpose.msra.mxu0 0
        %4700 = vmatprep.mubr.bf16.mxu0 0
        %4701 = vmatmul.mubr.bf16.gmra.mrb[0].mxu0 %v4657
        %v4702 = vpop.f32.mrb[0].mxu0
        %v4703 = vadd.f32 0.0, %v4702
        %v4704 = vpop.f32.mrb[0].mxu0
        %v4705 = vpop.f32.mrb[0].mxu0
        %v4706 = vadd.f32 0.0, %v4705
        %v4707 = vpop.f32.mrb[0].mxu0
        %4708 = vmatprep.mubr.bf16.mxu0 0
        %4709 = vmatmul.mubr.bf16.gmra.mrb[0].mxu0 %v4660
        %v4710 = vpop.f32.mrb[0].mxu0
        %v4711 = vadd.f32 0.0, %v4710
        %v4712 = vpop.f32.mrb[0].mxu0
        %v4713 = vpop.f32.mrb[0].mxu0
        %v4714 = vpop.f32.mrb[0].mxu0
        %4715 = vdwg.mxu0
        %v4716 = vsel %vm3939, %v4635, -inf
        %4717 = vmax.xlane.f32.xlu0 %v4716
        %v4718 = vpop.xlane.xlu0 %4717
        %v4719 = vsel %vm3939, %v4638, -inf
        %4720 = vmax.xlane.f32.xlu0 %v4719
        %v4721 = vpop.xlane.xlu0 %4720
        %v4722 = vsel %vm3946, %v4643, -inf
        %4723 = vmax.xlane.f32.xlu0 %v4722
        %v4724 = vpop.xlane.xlu0 %4723
        %v4725 = vsel %vm3939, %v4703, -inf
        %4726 = vmax.xlane.f32.xlu0 %v4725
        %v4727 = vpop.xlane.xlu0 %4726
        %v4728 = vsel %vm3939, %v4706, -inf
        %4729 = vmax.xlane.f32.xlu0 %v4728
        %v4730 = vpop.xlane.xlu0 %4729
        %v4731 = vsel %vm3946, %v4711, -inf
        %4732 = vmax.xlane.f32.xlu0 %v4731
        %v4733 = vpop.xlane.xlu0 %4732
        %v4734 = vsub.f32 %v4635, %v4718
        %v4735 = vsub.f32 %v4638, %v4721
        %v4736 = vsub.f32 %v4643, %v4724
        %v4737 = vsub.f32 %v4703, %v4727
        %v4738 = vsub.f32 %v4706, %v4730
        %v4739 = vsub.f32 %v4711, %v4733
        %v4740 = vmul.f32 %v4734, 1.442695
        %v4741 = vpow.pop %v4740
        %v4742 = vmul.f32 %v4735, 1.442695
        %v4743 = vpow.pop %v4742
        %v4744 = vmul.f32 %v4736, 1.442695
        %v4745 = vpow.pop %v4744
        %v4746 = vmul.f32 %v4737, 1.442695
        %v4747 = vpow.pop %v4746
        %v4748 = vmul.f32 %v4738, 1.442695
        %v4749 = vpow.pop %v4748
        %v4750 = vmul.f32 %v4739, 1.442695
        %v4751 = vpow.pop %v4750
        %v4752 = vsel %vm3939, %v4741, 0.0
        %4753 = vadd.xlane.f32.xlu0 %v4752
        %v4754 = vpop.xlane.xlu0 %4753
        %v4755 = vsel %vm3939, %v4743, 0.0
        %4756 = vadd.xlane.f32.xlu0 %v4755
        %v4757 = vpop.xlane.xlu0 %4756
        %v4758 = vsel %vm3946, %v4745, 0.0
        %4759 = vadd.xlane.f32.xlu0 %v4758
        %v4760 = vpop.xlane.xlu0 %4759
        %v4761 = vsel %vm3939, %v4747, 0.0
        %4762 = vadd.xlane.f32.xlu0 %v4761
        %v4763 = vpop.xlane.xlu0 %4762
        %v4764 = vsel %vm3939, %v4749, 0.0
        %4765 = vadd.xlane.f32.xlu0 %v4764
        %v4766 = vpop.xlane.xlu0 %4765
        %v4767 = vsel %vm3946, %v4751, 0.0
        %4768 = vadd.xlane.f32.xlu0 %v4767
        %v4769 = vpop.xlane.xlu0 %4768
        %v4770 = vrcp.pop %v4754
        %v4771 = vrcp.pop %v4757
        %v4772 = vrcp.pop %v4760
        %v4773 = vrcp.pop %v4763
        %v4774 = vrcp.pop %v4766
        %v4775 = vrcp.pop %v4769
        %v4776 = vmul.f32 %v4741, %v4770
        %v4777 = vmul.f32 %v4743, %v4771
        %v4778 = vmul.f32 %v4745, %v4772
        %v4779 = vmul.f32 %v4747, %v4773
        %v4780 = vmul.f32 %v4749, %v4774
        %v4781 = vmul.f32 %v4751, %v4775
        %v4782 = vpack.c.bf16 %v4777, %v4776
        %v4783 = vpack.c.bf16 %v4778, %v4778
        %v4784 = vpack.c.bf16 %v4780, %v4779
        %v4785 = vpack.c.bf16 %v4781, %v4781
        %4788 = vrot.lane.b32.xlu0 %v3802, 112
        %v4789 = vpop.permute.xlu0 %4788
        %4790 = vrot.lane.b32.xlu0 %v3803, 112
        %v4791 = vpop.permute.xlu0 %4790
        %v4794 = vsel %vm3939, %v4782, 0
        %v4797 = vsel %vm3939, %v4783, 0
        %v4800 = vand.u32 %v4791, %v4019
        %4802 = vmatprep.subr.bf16.mxu0 0
        %4803 = vmatpush1.bf16.msra.mxu0 %v4789
        %4804 = vmatprep.subr.bf16.mxu0 0
        %4805 = vmatpush1.bf16.msra.mxu0 %v4800
        %4806 = vmatprep.subr.bf16.mxu0 0
        %4807 = vmatpush1.bf16.msra.mxu0 0
        %4808 = vmatprep.subr.bf16.mxu0 0
        %4809 = vmatpush1.bf16.msra.mxu0 0
        %4810 = vmatprep.subr.bf16.mxu0 0
        %4811 = vmatpush1.bf16.msra.mxu0 0
        %4812 = vmatprep.subr.bf16.mxu0 0
        %4813 = vmatpush1.bf16.msra.mxu0 0
        %4814 = vmatprep.subr.bf16.mxu0 0
        %4815 = vmatpush1.bf16.msra.mxu0 0
        %4816 = vmatprep.subr.bf16.mxu0 0
        %4817 = vmatpush1.bf16.msra.mxu0 0
        %4818 = vmatprep.subr.bf16.mxu0 0
        %4819 = vmatpush1.bf16.msra.mxu0 0
        %4820 = vmatprep.subr.bf16.mxu0 0
        %4821 = vmatpush1.bf16.msra.mxu0 0
        %4822 = vmatprep.subr.bf16.mxu0 0
        %4823 = vmatpush1.bf16.msra.mxu0 0
        %4824 = vmatprep.subr.bf16.mxu0 0
        %4825 = vmatpush1.bf16.msra.mxu0 0
        %4826 = vmatprep.subr.bf16.mxu0 0
        %4827 = vmatpush1.bf16.msra.mxu0 0
        %4828 = vmatprep.subr.bf16.mxu0 0
        %4829 = vmatpush1.bf16.msra.mxu0 0
        %4830 = vmatprep.subr.bf16.mxu0 0
        %4831 = vmatpush1.bf16.msra.mxu0 0
        %4832 = vmatprep.subr.bf16.mxu0 0
        %4833 = vmatpush1.bf16.msra.mxu0 0
        %4834 = vmatprep.mubr.bf16.mxu0 0
        %4835 = vmatmul.mubr.bf16.gmra.mrb[0].mxu0 %v4794
        %v4836 = vpop.f32.mrb[0].mxu0
        %v4837 = vadd.f32 0.0, %v4836
        %v4838 = vpop.f32.mrb[0].mxu0
        %v4839 = vpop.f32.mrb[0].mxu0
        %v4840 = vadd.f32 0.0, %v4839
        %v4841 = vpop.f32.mrb[0].mxu0
        %4842 = vmatprep.mubr.bf16.mxu0 0
        %4843 = vmatmul.mubr.bf16.gmra.mrb[0].mxu0 %v4797
        %v4844 = vpop.f32.mrb[0].mxu0
        %v4845 = vadd.f32 0.0, %v4844
        %v4846 = vpop.f32.mrb[0].mxu0
        %v4847 = vpop.f32.mrb[0].mxu0
        %v4848 = vpop.f32.mrb[0].mxu0
        %4849 = vdwg.mxu0
        %4852 = vrot.lane.b32.xlu0 %v3804, 112
        %v4853 = vpop.permute.xlu0 %4852
        %4854 = vrot.lane.b32.xlu0 %v3805, 112
        %v4855 = vpop.permute.xlu0 %4854
        %v4858 = vsel %vm3939, %v4784, 0
        %v4861 = vsel %vm3939, %v4785, 0
        %v4864 = vand.u32 %v4855, %v4019
        %4866 = vmatprep.subr.bf16.mxu0 0
        %4867 = vmatpush1.bf16.msra.mxu0 %v4853
        %4868 = vmatprep.subr.bf16.mxu0 0
        %4869 = vmatpush1.bf16.msra.mxu0 %v4864
        %4870 = vmatprep.subr.bf16.mxu0 0
        %4871 = vmatpush1.bf16.msra.mxu0 0
        %4872 = vmatprep.subr.bf16.mxu0 0
        %4873 = vmatpush1.bf16.msra.mxu0 0
        %4874 = vmatprep.subr.bf16.mxu0 0
        %4875 = vmatpush1.bf16.msra.mxu0 0
        %4876 = vmatprep.subr.bf16.mxu0 0
        %4877 = vmatpush1.bf16.msra.mxu0 0
        %4878 = vmatprep.subr.bf16.mxu0 0
        %4879 = vmatpush1.bf16.msra.mxu0 0
        %4880 = vmatprep.subr.bf16.mxu0 0
        %4881 = vmatpush1.bf16.msra.mxu0 0
        %4882 = vmatprep.subr.bf16.mxu0 0
        %4883 = vmatpush1.bf16.msra.mxu0 0
        %4884 = vmatprep.subr.bf16.mxu0 0
        %4885 = vmatpush1.bf16.msra.mxu0 0
        %4886 = vmatprep.subr.bf16.mxu0 0
        %4887 = vmatpush1.bf16.msra.mxu0 0
        %4888 = vmatprep.subr.bf16.mxu0 0
        %4889 = vmatpush1.bf16.msra.mxu0 0
        %4890 = vmatprep.subr.bf16.mxu0 0
        %4891 = vmatpush1.bf16.msra.mxu0 0
        %4892 = vmatprep.subr.bf16.mxu0 0
        %4893 = vmatpush1.bf16.msra.mxu0 0
        %4894 = vmatprep.subr.bf16.mxu0 0
        %4895 = vmatpush1.bf16.msra.mxu0 0
        %4896 = vmatprep.subr.bf16.mxu0 0
        %4897 = vmatpush1.bf16.msra.mxu0 0
        %4898 = vmatprep.mubr.bf16.mxu0 0
        %4899 = vmatmul.mubr.bf16.gmra.mrb[0].mxu0 %v4858
        %v4900 = vpop.f32.mrb[0].mxu0
        %v4901 = vadd.f32 0.0, %v4900
        %v4902 = vpop.f32.mrb[0].mxu0
        %v4903 = vpop.f32.mrb[0].mxu0
        %v4904 = vadd.f32 0.0, %v4903
        %v4905 = vpop.f32.mrb[0].mxu0
        %4906 = vmatprep.mubr.bf16.mxu0 0
        %4907 = vmatmul.mubr.bf16.gmra.mrb[0].mxu0 %v4861
        %v4908 = vpop.f32.mrb[0].mxu0
        %v4909 = vadd.f32 0.0, %v4908
        %v4910 = vpop.f32.mrb[0].mxu0
        %v4911 = vpop.f32.mrb[0].mxu0
        %v4912 = vpop.f32.mrb[0].mxu0
        %4913 = vdwg.mxu0
        %v4920 = vcombine.high %v4837, %v4837
        %v4922 = vunpack.c.l.s4 1966171168
        %v4923 = vunpack.c.0.s8 %v4922
        %v4924 = vlaneseq
        %v4925 = vshrl.u32 %v4924, 7
        %v4926 = vsub.s32 %v4923, %v4925
        %v4927 = vrot.slane %v4837, %v4926
        %v4929 = vunpack.c.l.s4 1966171168
        %v4930 = vunpack.c.0.s8 %v4929
        %v4931 = vlaneseq
        %v4932 = vshrl.u32 %v4931, 7
        %v4933 = vsub.s32 %v4930, %v4932
        %v4934 = vrot.slane %v4920, %v4933
        %v4935 = vcombine.high %v4927, %v4927
        %v4936 = vcombine.high %v4934, %v4934
        %v4938 = vunpack.c.l.s4 1966171168
        %v4939 = vunpack.c.0.s8 %v4938
        %v4940 = vlaneseq
        %v4941 = vshrl.u32 %v4940, 7
        %v4942 = vsub.s32 %v4939, %v4941
        %v4943 = vrot.slane %v4927, %v4942
        %v4945 = vunpack.c.l.s4 1966171168
        %v4946 = vunpack.c.0.s8 %v4945
        %v4947 = vlaneseq
        %v4948 = vshrl.u32 %v4947, 7
        %v4949 = vsub.s32 %v4946, %v4948
        %v4950 = vrot.slane %v4934, %v4949
        %v4952 = vunpack.c.l.s4 1966171168
        %v4953 = vunpack.c.0.s8 %v4952
        %v4954 = vlaneseq
        %v4955 = vshrl.u32 %v4954, 7
        %v4956 = vsub.s32 %v4953, %v4955
        %v4957 = vrot.slane %v4935, %v4956
        %v4959 = vunpack.c.l.s4 1966171168
        %v4960 = vunpack.c.0.s8 %v4959
        %v4961 = vlaneseq
        %v4962 = vshrl.u32 %v4961, 7
        %v4963 = vsub.s32 %v4960, %v4962
        %v4964 = vrot.slane %v4936, %v4963
        %v4965 = vcombine.high %v4943, %v4943
        %v4966 = vcombine.high %v4950, %v4950
        %v4967 = vcombine.high %v4957, %v4957
        %v4968 = vcombine.high %v4964, %v4964
        %v4969 = vcombine.high %v4840, %v4840
        %v4971 = vunpack.c.l.s4 1966171168
        %v4972 = vunpack.c.0.s8 %v4971
        %v4973 = vlaneseq
        %v4974 = vshrl.u32 %v4973, 7
        %v4975 = vsub.s32 %v4972, %v4974
        %v4976 = vrot.slane %v4840, %v4975
        %v4978 = vunpack.c.l.s4 1966171168
        %v4979 = vunpack.c.0.s8 %v4978
        %v4980 = vlaneseq
        %v4981 = vshrl.u32 %v4980, 7
        %v4982 = vsub.s32 %v4979, %v4981
        %v4983 = vrot.slane %v4969, %v4982
        %v4984 = vcombine.high %v4976, %v4976
        %v4985 = vcombine.high %v4983, %v4983
        %v4987 = vunpack.c.l.s4 1966171168
        %v4988 = vunpack.c.0.s8 %v4987
        %v4989 = vlaneseq
        %v4990 = vshrl.u32 %v4989, 7
        %v4991 = vsub.s32 %v4988, %v4990
        %v4992 = vrot.slane %v4976, %v4991
        %v4994 = vunpack.c.l.s4 1966171168
        %v4995 = vunpack.c.0.s8 %v4994
        %v4996 = vlaneseq
        %v4997 = vshrl.u32 %v4996, 7
        %v4998 = vsub.s32 %v4995, %v4997
        %v4999 = vrot.slane %v4983, %v4998
        %v5001 = vunpack.c.l.s4 1966171168
        %v5002 = vunpack.c.0.s8 %v5001
        %v5003 = vlaneseq
        %v5004 = vshrl.u32 %v5003, 7
        %v5005 = vsub.s32 %v5002, %v5004
        %v5006 = vrot.slane %v4984, %v5005
        %v5008 = vunpack.c.l.s4 1966171168
        %v5009 = vunpack.c.0.s8 %v5008
        %v5010 = vlaneseq
        %v5011 = vshrl.u32 %v5010, 7
        %v5012 = vsub.s32 %v5009, %v5011
        %v5013 = vrot.slane %v4985, %v5012
        %v5014 = vcombine.high %v4992, %v4992
        %v5015 = vcombine.high %v4999, %v4999
        %v5016 = vcombine.high %v5006, %v5006
        %v5017 = vcombine.high %v5013, %v5013
        %v5019 = vunpack.c.l.s4 1966171168
        %v5020 = vunpack.c.0.s8 %v5019
        %v5021 = vlaneseq
        %v5022 = vshrl.u32 %v5021, 7
        %v5023 = vsub.s32 %v5020, %v5022
        %v5024 = vrot.slane %v4845, %v5023
        %v5026 = vunpack.c.l.s4 1966171168
        %v5027 = vunpack.c.0.s8 %v5026
        %v5028 = vlaneseq
        %v5029 = vshrl.u32 %v5028, 7
        %v5030 = vsub.s32 %v5027, %v5029
        %v5031 = vrot.slane %v5024, %v5030
        %v5032 = vcombine.high %v4901, %v4901
        %v5034 = vunpack.c.l.s4 1966171168
        %v5035 = vunpack.c.0.s8 %v5034
        %v5036 = vlaneseq
        %v5037 = vshrl.u32 %v5036, 7
        %v5038 = vsub.s32 %v5035, %v5037
        %v5039 = vrot.slane %v4901, %v5038
        %v5041 = vunpack.c.l.s4 1966171168
        %v5042 = vunpack.c.0.s8 %v5041
        %v5043 = vlaneseq
        %v5044 = vshrl.u32 %v5043, 7
        %v5045 = vsub.s32 %v5042, %v5044
        %v5046 = vrot.slane %v5032, %v5045
        %v5047 = vcombine.high %v5039, %v5039
        %v5048 = vcombine.high %v5046, %v5046
        %v5050 = vunpack.c.l.s4 1966171168
        %v5051 = vunpack.c.0.s8 %v5050
        %v5052 = vlaneseq
        %v5053 = vshrl.u32 %v5052, 7
        %v5054 = vsub.s32 %v5051, %v5053
        %v5055 = vrot.slane %v5039, %v5054
        %v5057 = vunpack.c.l.s4 1966171168
        %v5058 = vunpack.c.0.s8 %v5057
        %v5059 = vlaneseq
        %v5060 = vshrl.u32 %v5059, 7
        %v5061 = vsub.s32 %v5058, %v5060
        %v5062 = vrot.slane %v5046, %v5061
        %v5064 = vunpack.c.l.s4 1966171168
        %v5065 = vunpack.c.0.s8 %v5064
        %v5066 = vlaneseq
        %v5067 = vshrl.u32 %v5066, 7
        %v5068 = vsub.s32 %v5065, %v5067
        %v5069 = vrot.slane %v5047, %v5068
        %v5071 = vunpack.c.l.s4 1966171168
        %v5072 = vunpack.c.0.s8 %v5071
        %v5073 = vlaneseq
        %v5074 = vshrl.u32 %v5073, 7
        %v5075 = vsub.s32 %v5072, %v5074
        %v5076 = vrot.slane %v5048, %v5075
        %v5077 = vcombine.high %v5055, %v5055
        %v5078 = vcombine.high %v5062, %v5062
        %v5079 = vcombine.high %v5069, %v5069
        %v5080 = vcombine.high %v5076, %v5076
        %v5081 = vcombine.high %v4904, %v4904
        %v5083 = vunpack.c.l.s4 1966171168
        %v5084 = vunpack.c.0.s8 %v5083
        %v5085 = vlaneseq
        %v5086 = vshrl.u32 %v5085, 7
        %v5087 = vsub.s32 %v5084, %v5086
        %v5088 = vrot.slane %v4904, %v5087
        %v5090 = vunpack.c.l.s4 1966171168
        %v5091 = vunpack.c.0.s8 %v5090
        %v5092 = vlaneseq
        %v5093 = vshrl.u32 %v5092, 7
        %v5094 = vsub.s32 %v5091, %v5093
        %v5095 = vrot.slane %v5081, %v5094
        %v5096 = vcombine.high %v5088, %v5088
        %v5097 = vcombine.high %v5095, %v5095
        %v5099 = vunpack.c.l.s4 1966171168
        %v5100 = vunpack.c.0.s8 %v5099
        %v5101 = vlaneseq
        %v5102 = vshrl.u32 %v5101, 7
        %v5103 = vsub.s32 %v5100, %v5102
        %v5104 = vrot.slane %v5088, %v5103
        %v5106 = vunpack.c.l.s4 1966171168
        %v5107 = vunpack.c.0.s8 %v5106
        %v5108 = vlaneseq
        %v5109 = vshrl.u32 %v5108, 7
        %v5110 = vsub.s32 %v5107, %v5109
        %v5111 = vrot.slane %v5095, %v5110
        %v5113 = vunpack.c.l.s4 1966171168
        %v5114 = vunpack.c.0.s8 %v5113
        %v5115 = vlaneseq
        %v5116 = vshrl.u32 %v5115, 7
        %v5117 = vsub.s32 %v5114, %v5116
        %v5118 = vrot.slane %v5096, %v5117
        %v5120 = vunpack.c.l.s4 1966171168
        %v5121 = vunpack.c.0.s8 %v5120
        %v5122 = vlaneseq
        %v5123 = vshrl.u32 %v5122, 7
        %v5124 = vsub.s32 %v5121, %v5123
        %v5125 = vrot.slane %v5097, %v5124
        %v5126 = vcombine.high %v5104, %v5104
        %v5127 = vcombine.high %v5111, %v5111
        %v5128 = vcombine.high %v5118, %v5118
        %v5129 = vcombine.high %v5125, %v5125
        %v5131 = vunpack.c.l.s4 1966171168
        %v5132 = vunpack.c.0.s8 %v5131
        %v5133 = vlaneseq
        %v5134 = vshrl.u32 %v5133, 7
        %v5135 = vsub.s32 %v5132, %v5134
        %v5136 = vrot.slane %v4909, %v5135
        %v5138 = vunpack.c.l.s4 1966171168
        %v5139 = vunpack.c.0.s8 %v5138
        %v5140 = vlaneseq
        %v5141 = vshrl.u32 %v5140, 7
        %v5142 = vsub.s32 %v5139, %v5141
        %v5143 = vrot.slane %v5136, %v5142
        %v5144 = vcombine.low %v4943, %v4957
        %v5145 = vcombine.low %v4965, %v4967
        %v5146 = vcombine.low %v4950, %v4964
        %v5147 = vcombine.low %v4966, %v4968
        %v5149 = vunpack.c.l.s4 1966171168
        %v5150 = vunpack.c.0.s8 %v5149
        %v5151 = vlaneseq
        %v5152 = vshrl.u32 %v5151, 7
        %v5153 = vsub.s32 %v5150, %v5152
        %v5154 = vrot.slane %v5144, %v5153
        %v5156 = vunpack.c.l.s4 1966171168
        %v5157 = vunpack.c.0.s8 %v5156
        %v5158 = vlaneseq
        %v5159 = vshrl.u32 %v5158, 7
        %v5160 = vsub.s32 %v5157, %v5159
        %v5161 = vrot.slane %v5145, %v5160
        %v5163 = vunpack.c.l.s4 1966171168
        %v5164 = vunpack.c.0.s8 %v5163
        %v5165 = vlaneseq
        %v5166 = vshrl.u32 %v5165, 7
        %v5167 = vsub.s32 %v5164, %v5166
        %v5168 = vrot.slane %v5146, %v5167
        %v5170 = vunpack.c.l.s4 1966171168
        %v5171 = vunpack.c.0.s8 %v5170
        %v5172 = vlaneseq
        %v5173 = vshrl.u32 %v5172, 7
        %v5174 = vsub.s32 %v5171, %v5173
        %v5175 = vrot.slane %v5147, %v5174
        %v5176 = vcombine.low %v5154, %v5161
        %v5177 = vcombine.low %v5168, %v5175
        %v5179 = vunpack.c.l.s4 1966171168
        %v5180 = vunpack.c.0.s8 %v5179
        %v5181 = vlaneseq
        %v5182 = vshrl.u32 %v5181, 7
        %v5183 = vsub.s32 %v5180, %v5182
        %v5184 = vrot.slane %v5176, %v5183
        %v5186 = vunpack.c.l.s4 1966171168
        %v5187 = vunpack.c.0.s8 %v5186
        %v5188 = vlaneseq
        %v5189 = vshrl.u32 %v5188, 7
        %v5190 = vsub.s32 %v5187, %v5189
        %v5191 = vrot.slane %v5177, %v5190
        %v5192 = vcombine.low %v5184, %v5191
        %v5193 = vcombine.low %v4992, %v5006
        %v5194 = vcombine.low %v5014, %v5016
        %v5195 = vcombine.low %v4999, %v5013
        %v5196 = vcombine.low %v5015, %v5017
        %v5198 = vunpack.c.l.s4 1966171168
        %v5199 = vunpack.c.0.s8 %v5198
        %v5200 = vlaneseq
        %v5201 = vshrl.u32 %v5200, 7
        %v5202 = vsub.s32 %v5199, %v5201
        %v5203 = vrot.slane %v5193, %v5202
        %v5205 = vunpack.c.l.s4 1966171168
        %v5206 = vunpack.c.0.s8 %v5205
        %v5207 = vlaneseq
        %v5208 = vshrl.u32 %v5207, 7
        %v5209 = vsub.s32 %v5206, %v5208
        %v5210 = vrot.slane %v5194, %v5209
        %v5212 = vunpack.c.l.s4 1966171168
        %v5213 = vunpack.c.0.s8 %v5212
        %v5214 = vlaneseq
        %v5215 = vshrl.u32 %v5214, 7
        %v5216 = vsub.s32 %v5213, %v5215
        %v5217 = vrot.slane %v5195, %v5216
        %v5219 = vunpack.c.l.s4 1966171168
        %v5220 = vunpack.c.0.s8 %v5219
        %v5221 = vlaneseq
        %v5222 = vshrl.u32 %v5221, 7
        %v5223 = vsub.s32 %v5220, %v5222
        %v5224 = vrot.slane %v5196, %v5223
        %v5225 = vcombine.low %v5203, %v5210
        %v5226 = vcombine.low %v5217, %v5224
        %v5228 = vunpack.c.l.s4 1966171168
        %v5229 = vunpack.c.0.s8 %v5228
        %v5230 = vlaneseq
        %v5231 = vshrl.u32 %v5230, 7
        %v5232 = vsub.s32 %v5229, %v5231
        %v5233 = vrot.slane %v5225, %v5232
        %v5235 = vunpack.c.l.s4 1966171168
        %v5236 = vunpack.c.0.s8 %v5235
        %v5237 = vlaneseq
        %v5238 = vshrl.u32 %v5237, 7
        %v5239 = vsub.s32 %v5236, %v5238
        %v5240 = vrot.slane %v5226, %v5239
        %v5241 = vcombine.low %v5233, %v5240
        %v5242 = vcombine.low %v5031, %v5055
        %v5243 = vcombine.low %v5069, %v5077
        %v5244 = vcombine.low %v5079, %v5062
        %v5245 = vcombine.low %v5076, %v5078
        %v5247 = vunpack.c.l.s4 1966171168
        %v5248 = vunpack.c.0.s8 %v5247
        %v5249 = vlaneseq
        %v5250 = vshrl.u32 %v5249, 7
        %v5251 = vsub.s32 %v5248, %v5250
        %v5252 = vrot.slane %v5242, %v5251
        %v5254 = vunpack.c.l.s4 1966171168
        %v5255 = vunpack.c.0.s8 %v5254
        %v5256 = vlaneseq
        %v5257 = vshrl.u32 %v5256, 7
        %v5258 = vsub.s32 %v5255, %v5257
        %v5259 = vrot.slane %v5243, %v5258
        %v5261 = vunpack.c.l.s4 1966171168
        %v5262 = vunpack.c.0.s8 %v5261
        %v5263 = vlaneseq
        %v5264 = vshrl.u32 %v5263, 7
        %v5265 = vsub.s32 %v5262, %v5264
        %v5266 = vrot.slane %v5244, %v5265
        %v5268 = vunpack.c.l.s4 1966171168
        %v5269 = vunpack.c.0.s8 %v5268
        %v5270 = vlaneseq
        %v5271 = vshrl.u32 %v5270, 7
        %v5272 = vsub.s32 %v5269, %v5271
        %v5273 = vrot.slane %v5245, %v5272
        %v5274 = vcombine.low %v5252, %v5259
        %v5275 = vcombine.low %v5266, %v5273
        %v5277 = vunpack.c.l.s4 1966171168
        %v5278 = vunpack.c.0.s8 %v5277
        %v5279 = vlaneseq
        %v5280 = vshrl.u32 %v5279, 7
        %v5281 = vsub.s32 %v5278, %v5280
        %v5282 = vrot.slane %v5274, %v5281
        %v5284 = vunpack.c.l.s4 1966171168
        %v5285 = vunpack.c.0.s8 %v5284
        %v5286 = vlaneseq
        %v5287 = vshrl.u32 %v5286, 7
        %v5288 = vsub.s32 %v5285, %v5287
        %v5289 = vrot.slane %v5275, %v5288
        %v5290 = vcombine.low %v5282, %v5289
        %v5291 = vcombine.low %v5080, %v5104
        %v5292 = vcombine.low %v5118, %v5126
        %v5293 = vcombine.low %v5128, %v5111
        %v5294 = vcombine.low %v5125, %v5127
        %v5296 = vunpack.c.l.s4 1966171168
        %v5297 = vunpack.c.0.s8 %v5296
        %v5298 = vlaneseq
        %v5299 = vshrl.u32 %v5298, 7
        %v5300 = vsub.s32 %v5297, %v5299
        %v5301 = vrot.slane %v5291, %v5300
        %v5303 = vunpack.c.l.s4 1966171168
        %v5304 = vunpack.c.0.s8 %v5303
        %v5305 = vlaneseq
        %v5306 = vshrl.u32 %v5305, 7
        %v5307 = vsub.s32 %v5304, %v5306
        %v5308 = vrot.slane %v5292, %v5307
        %v5310 = vunpack.c.l.s4 1966171168
        %v5311 = vunpack.c.0.s8 %v5310
        %v5312 = vlaneseq
        %v5313 = vshrl.u32 %v5312, 7
        %v5314 = vsub.s32 %v5311, %v5313
        %v5315 = vrot.slane %v5293, %v5314
        %v5317 = vunpack.c.l.s4 1966171168
        %v5318 = vunpack.c.0.s8 %v5317
        %v5319 = vlaneseq
        %v5320 = vshrl.u32 %v5319, 7
        %v5321 = vsub.s32 %v5318, %v5320
        %v5322 = vrot.slane %v5294, %v5321
        %v5323 = vcombine.low %v5301, %v5308
        %v5324 = vcombine.low %v5315, %v5322
        %v5326 = vunpack.c.l.s4 1966171168
        %v5327 = vunpack.c.0.s8 %v5326
        %v5328 = vlaneseq
        %v5329 = vshrl.u32 %v5328, 7
        %v5330 = vsub.s32 %v5327, %v5329
        %v5331 = vrot.slane %v5323, %v5330
        %v5333 = vunpack.c.l.s4 1966171168
        %v5334 = vunpack.c.0.s8 %v5333
        %v5335 = vlaneseq
        %v5336 = vshrl.u32 %v5335, 7
        %v5337 = vsub.s32 %v5334, %v5336
        %v5338 = vrot.slane %v5324, %v5337
        %v5339 = vcombine.low %v5331, %v5338
        %v5340 = vcombine.low %v5129, %v5143
        %v5342 = vunpack.c.l.s4 1966171168
        %v5343 = vunpack.c.0.s8 %v5342
        %v5344 = vlaneseq
        %v5345 = vshrl.u32 %v5344, 7
        %v5346 = vsub.s32 %v5343, %v5345
        %v5347 = vrot.slane %v5340, %v5346
        %v5349 = vunpack.c.l.s4 1966171168
        %v5350 = vunpack.c.0.s8 %v5349
        %v5351 = vlaneseq
        %v5352 = vshrl.u32 %v5351, 7
        %v5353 = vsub.s32 %v5350, %v5352
        %v5354 = vrot.slane %v5347, %v5353
        %5355 = vrot.lane.b32.xlu0 %v5192, 16
        %v5356 = vpop.permute.xlu0 %5355
        %5357 = vrot.lane.b32.xlu0 %v5241, 16
        %v5358 = vpop.permute.xlu0 %5357
        %5359 = vrot.lane.b32.xlu0 %v5290, 16
        %v5360 = vpop.permute.xlu0 %5359
        %5361 = vrot.lane.b32.xlu0 %v5339, 16
        %v5362 = vpop.permute.xlu0 %5361
        %5363 = vrot.lane.b32.xlu0 %v5354, 16
        %v5364 = vpop.permute.xlu0 %5363
        %vm5370 = vcmask 261248
        %5371 = vst.msk [vmem:[#allocation2] sm:$0xff] %vm5370, %v5356
        %5372 = vst.msk [vmem:[#allocation2 + $0x8] sm:$0xff] %vm5370, %v5358
        %5373 = vst.msk [vmem:[#allocation2 + $0x10] sm:$0xff] %vm5370, %v5360
        %5374 = vst.msk [vmem:[#allocation2 + $0x18] sm:$0xff] %vm5370, %v5362
        %vm5375 = vcmask 255104
        %5376 = vst.msk [vmem:[#allocation2 + $0x20] sm:$0x3] %vm5375, %v5364
        %5377 = vrot.lane.b32.xlu0 %v3345, 96
        %v5378 = vpop.permute.xlu0 %5377
        %5379 = vrot.lane.b32.xlu0 %v3346, 96
        %v5380 = vpop.permute.xlu0 %5379
        %5381 = vrot.lane.b32.xlu0 %v3345, 32
        %v5382 = vpop.permute.xlu0 %5381
        %5383 = vrot.lane.b32.xlu0 %v3346, 32
        %v5384 = vpop.permute.xlu0 %5383
        %v5386 = vsel %vm3812, %v5378, 0
        %v5389 = vsel %vm3812, %v5380, 0
        %v5392 = vsel %vm3812, %v5382, 0
        %v5395 = vsel %vm3812, %v5384, 0
        %5397 = vmatprep.subr.bf16.mxu0 0
        %5398 = vmatpush1.bf16.xpose.msra.mxu0 %v5392
        %5399 = vmatprep.subr.bf16.mxu0 0
        %5400 = vmatpush1.bf16.xpose.msra.mxu0 %v5395
        %5401 = vmatprep.subr.bf16.mxu0 0
        %5402 = vmatpush1.bf16.xpose.msra.mxu0 0
        %5403 = vmatprep.subr.bf16.mxu0 0
        %5404 = vmatpush1.bf16.xpose.msra.mxu0 0
        %5405 = vmatprep.subr.bf16.mxu0 0
        %5406 = vmatpush1.bf16.xpose.msra.mxu0 0
        %5407 = vmatprep.subr.bf16.mxu0 0
        %5408 = vmatpush1.bf16.xpose.msra.mxu0 0
        %5409 = vmatprep.subr.bf16.mxu0 0
        %5410 = vmatpush1.bf16.xpose.msra.mxu0 0
        %5411 = vmatprep.subr.bf16.mxu0 0
        %5412 = vmatpush1.bf16.xpose.msra.mxu0 0
        %5413 = vmatprep.subr.bf16.mxu0 0
        %5414 = vmatpush1.bf16.xpose.msra.mxu0 0
        %5415 = vmatprep.subr.bf16.mxu0 0
        %5416 = vmatpush1.bf16.xpose.msra.mxu0 0
        %5417 = vmatprep.subr.bf16.mxu0 0
        %5418 = vmatpush1.bf16.xpose.msra.mxu0 0
        %5419 = vmatprep.subr.bf16.mxu0 0
        %5420 = vmatpush1.bf16.xpose.msra.mxu0 0
        %5421 = vmatprep.subr.bf16.mxu0 0
        %5422 = vmatpush1.bf16.xpose.msra.mxu0 0
        %5423 = vmatprep.subr.bf16.mxu0 0
        %5424 = vmatpush1.bf16.xpose.msra.mxu0 0
        %5425 = vmatprep.subr.bf16.mxu0 0
        %5426 = vmatpush1.bf16.xpose.msra.mxu0 0
        %5427 = vmatprep.subr.bf16.mxu0 0
        %5428 = vmatpush1.bf16.xpose.msra.mxu0 0
        %5429 = vmatprep.mubr.bf16.mxu0 0
        %5430 = vmatmul.mubr.bf16.gmra.mrb[0].mxu0 %v5386
        %v5431 = vpop.f32.mrb[0].mxu0
        %v5432 = vadd.f32 0.0, %v5431
        %v5433 = vpop.f32.mrb[0].mxu0
        %v5434 = vpop.f32.mrb[0].mxu0
        %v5435 = vadd.f32 0.0, %v5434
        %v5436 = vpop.f32.mrb[0].mxu0
        %5437 = vmatprep.mubr.bf16.mxu0 0
        %5438 = vmatmul.mubr.bf16.gmra.mrb[0].mxu0 %v5389
        %v5439 = vpop.f32.mrb[0].mxu0
        %v5440 = vadd.f32 0.0, %v5439
        %v5441 = vpop.f32.mrb[0].mxu0
        %v5442 = vpop.f32.mrb[0].mxu0
        %v5443 = vpop.f32.mrb[0].mxu0
        %5444 = vdwg.mxu0
        %5445 = vrot.lane.b32.xlu0 %v3347, 96
        %v5446 = vpop.permute.xlu0 %5445
        %5447 = vrot.lane.b32.xlu0 %v3348, 96
        %v5448 = vpop.permute.xlu0 %5447
        %5449 = vrot.lane.b32.xlu0 %v3347, 32
        %v5450 = vpop.permute.xlu0 %5449
        %5451 = vrot.lane.b32.xlu0 %v3348, 32
        %v5452 = vpop.permute.xlu0 %5451
        %v5454 = vsel %vm3812, %v5446, 0
        %v5457 = vsel %vm3812, %v5448, 0
        %v5460 = vsel %vm3812, %v5450, 0
        %v5463 = vsel %vm3812, %v5452, 0
        %5465 = vmatprep.subr.bf16.mxu0 0
        %5466 = vmatpush1.bf16.xpose.msra.mxu0 %v5460
        %5467 = vmatprep.subr.bf16.mxu0 0
        %5468 = vmatpush1.bf16.xpose.msra.mxu0 %v5463
        %5469 = vmatprep.subr.bf16.mxu0 0
        %5470 = vmatpush1.bf16.xpose.msra.mxu0 0
        %5471 = vmatprep.subr.bf16.mxu0 0
        %5472 = vmatpush1.bf16.xpose.msra.mxu0 0
        %5473 = vmatprep.subr.bf16.mxu0 0
        %5474 = vmatpush1.bf16.xpose.msra.mxu0 0
        %5475 = vmatprep.subr.bf16.mxu0 0
        %5476 = vmatpush1.bf16.xpose.msra.mxu0 0
        %5477 = vmatprep.subr.bf16.mxu0 0
        %5478 = vmatpush1.bf16.xpose.msra.mxu0 0
        %5479 = vmatprep.subr.bf16.mxu0 0
        %5480 = vmatpush1.bf16.xpose.msra.mxu0 0
        %5481 = vmatprep.subr.bf16.mxu0 0
        %5482 = vmatpush1.bf16.xpose.msra.mxu0 0
        %5483 = vmatprep.subr.bf16.mxu0 0
        %5484 = vmatpush1.bf16.xpose.msra.mxu0 0
        %5485 = vmatprep.subr.bf16.mxu0 0
        %5486 = vmatpush1.bf16.xpose.msra.mxu0 0
        %5487 = vmatprep.subr.bf16.mxu0 0
        %5488 = vmatpush1.bf16.xpose.msra.mxu0 0
        %5489 = vmatprep.subr.bf16.mxu0 0
        %5490 = vmatpush1.bf16.xpose.msra.mxu0 0
        %5491 = vmatprep.subr.bf16.mxu0 0
        %5492 = vmatpush1.bf16.xpose.msra.mxu0 0
        %5493 = vmatprep.subr.bf16.mxu0 0
        %5494 = vmatpush1.bf16.xpose.msra.mxu0 0
        %5495 = vmatprep.subr.bf16.mxu0 0
        %5496 = vmatpush1.bf16.xpose.msra.mxu0 0
        %5497 = vmatprep.mubr.bf16.mxu0 0
        %5498 = vmatmul.mubr.bf16.gmra.mrb[0].mxu0 %v5454
        %v5499 = vpop.f32.mrb[0].mxu0
        %v5500 = vadd.f32 0.0, %v5499
        %v5501 = vpop.f32.mrb[0].mxu0
        %v5502 = vpop.f32.mrb[0].mxu0
        %v5503 = vadd.f32 0.0, %v5502
        %v5504 = vpop.f32.mrb[0].mxu0
        %5505 = vmatprep.mubr.bf16.mxu0 0
        %5506 = vmatmul.mubr.bf16.gmra.mrb[0].mxu0 %v5457
        %v5507 = vpop.f32.mrb[0].mxu0
        %v5508 = vadd.f32 0.0, %v5507
        %v5509 = vpop.f32.mrb[0].mxu0
        %v5510 = vpop.f32.mrb[0].mxu0
        %v5511 = vpop.f32.mrb[0].mxu0
        %5512 = vdwg.mxu0
        %v5513 = vsel %vm3939, %v5432, -inf
        %5514 = vmax.xlane.f32.xlu0 %v5513
        %v5515 = vpop.xlane.xlu0 %5514
        %v5516 = vsel %vm3939, %v5435, -inf
        %5517 = vmax.xlane.f32.xlu0 %v5516
        %v5518 = vpop.xlane.xlu0 %5517
        %v5519 = vsel %vm3946, %v5440, -inf
        %5520 = vmax.xlane.f32.xlu0 %v5519
        %v5521 = vpop.xlane.xlu0 %5520
        %v5522 = vsel %vm3939, %v5500, -inf
        %5523 = vmax.xlane.f32.xlu0 %v5522
        %v5524 = vpop.xlane.xlu0 %5523
        %v5525 = vsel %vm3939, %v5503, -inf
        %5526 = vmax.xlane.f32.xlu0 %v5525
        %v5527 = vpop.xlane.xlu0 %5526
        %v5528 = vsel %vm3946, %v5508, -inf
        %5529 = vmax.xlane.f32.xlu0 %v5528
        %v5530 = vpop.xlane.xlu0 %5529
        %v5531 = vsub.f32 %v5432, %v5515
        %v5532 = vsub.f32 %v5435, %v5518
        %v5533 = vsub.f32 %v5440, %v5521
        %v5534 = vsub.f32 %v5500, %v5524
        %v5535 = vsub.f32 %v5503, %v5527
        %v5536 = vsub.f32 %v5508, %v5530
        %v5537 = vmul.f32 %v5531, 1.442695
        %v5538 = vpow.pop %v5537
        %v5539 = vmul.f32 %v5532, 1.442695
        %v5540 = vpow.pop %v5539
        %v5541 = vmul.f32 %v5533, 1.442695
        %v5542 = vpow.pop %v5541
        %v5543 = vmul.f32 %v5534, 1.442695
        %v5544 = vpow.pop %v5543
        %v5545 = vmul.f32 %v5535, 1.442695
        %v5546 = vpow.pop %v5545
        %v5547 = vmul.f32 %v5536, 1.442695
        %v5548 = vpow.pop %v5547
        %v5549 = vsel %vm3939, %v5538, 0.0
        %5550 = vadd.xlane.f32.xlu0 %v5549
        %v5551 = vpop.xlane.xlu0 %5550
        %v5552 = vsel %vm3939, %v5540, 0.0
        %5553 = vadd.xlane.f32.xlu0 %v5552
        %v5554 = vpop.xlane.xlu0 %5553
        %v5555 = vsel %vm3946, %v5542, 0.0
        %5556 = vadd.xlane.f32.xlu0 %v5555
        %v5557 = vpop.xlane.xlu0 %5556
        %v5558 = vsel %vm3939, %v5544, 0.0
        %5559 = vadd.xlane.f32.xlu0 %v5558
        %v5560 = vpop.xlane.xlu0 %5559
        %v5561 = vsel %vm3939, %v5546, 0.0
        %5562 = vadd.xlane.f32.xlu0 %v5561
        %v5563 = vpop.xlane.xlu0 %5562
        %v5564 = vsel %vm3946, %v5548, 0.0
        %5565 = vadd.xlane.f32.xlu0 %v5564
        %v5566 = vpop.xlane.xlu0 %5565
        %v5567 = vrcp.pop %v5551
        %v5568 = vrcp.pop %v5554
        %v5569 = vrcp.pop %v5557
        %v5570 = vrcp.pop %v5560
        %v5571 = vrcp.pop %v5563
        %v5572 = vrcp.pop %v5566
        %v5573 = vmul.f32 %v5538, %v5567
        %v5574 = vmul.f32 %v5540, %v5568
        %v5575 = vmul.f32 %v5542, %v5569
        %v5576 = vmul.f32 %v5544, %v5570
        %v5577 = vmul.f32 %v5546, %v5571
        %v5578 = vmul.f32 %v5548, %v5572
        %v5579 = vpack.c.bf16 %v5574, %v5573
        %v5580 = vpack.c.bf16 %v5575, %v5575
        %v5581 = vpack.c.bf16 %v5577, %v5576
        %v5582 = vpack.c.bf16 %v5578, %v5578
        %5583 = vrot.lane.b32.xlu0 %v3802, 96
        %v5584 = vpop.permute.xlu0 %5583
        %5585 = vrot.lane.b32.xlu0 %v3803, 96
        %v5586 = vpop.permute.xlu0 %5585
        %v5589 = vsel %vm3939, %v5579, 0
        %v5592 = vsel %vm3939, %v5580, 0
        %v5595 = vand.u32 %v5586, %v4019
        %5597 = vmatprep.subr.bf16.mxu0 0
        %5598 = vmatpush1.bf16.msra.mxu0 %v5584
        %5599 = vmatprep.subr.bf16.mxu0 0
        %5600 = vmatpush1.bf16.msra.mxu0 %v5595
        %5601 = vmatprep.subr.bf16.mxu0 0
        %5602 = vmatpush1.bf16.msra.mxu0 0
        %5603 = vmatprep.subr.bf16.mxu0 0
        %5604 = vmatpush1.bf16.msra.mxu0 0
        %5605 = vmatprep.subr.bf16.mxu0 0
        %5606 = vmatpush1.bf16.msra.mxu0 0
        %5607 = vmatprep.subr.bf16.mxu0 0
        %5608 = vmatpush1.bf16.msra.mxu0 0
        %5609 = vmatprep.subr.bf16.mxu0 0
        %5610 = vmatpush1.bf16.msra.mxu0 0
        %5611 = vmatprep.subr.bf16.mxu0 0
        %5612 = vmatpush1.bf16.msra.mxu0 0
        %5613 = vmatprep.subr.bf16.mxu0 0
        %5614 = vmatpush1.bf16.msra.mxu0 0
        %5615 = vmatprep.subr.bf16.mxu0 0
        %5616 = vmatpush1.bf16.msra.mxu0 0
        %5617 = vmatprep.subr.bf16.mxu0 0
        %5618 = vmatpush1.bf16.msra.mxu0 0
        %5619 = vmatprep.subr.bf16.mxu0 0
        %5620 = vmatpush1.bf16.msra.mxu0 0
        %5621 = vmatprep.subr.bf16.mxu0 0
        %5622 = vmatpush1.bf16.msra.mxu0 0
        %5623 = vmatprep.subr.bf16.mxu0 0
        %5624 = vmatpush1.bf16.msra.mxu0 0
        %5625 = vmatprep.subr.bf16.mxu0 0
        %5626 = vmatpush1.bf16.msra.mxu0 0
        %5627 = vmatprep.subr.bf16.mxu0 0
        %5628 = vmatpush1.bf16.msra.mxu0 0
        %5629 = vmatprep.mubr.bf16.mxu0 0
        %5630 = vmatmul.mubr.bf16.gmra.mrb[0].mxu0 %v5589
        %v5631 = vpop.f32.mrb[0].mxu0
        %v5632 = vadd.f32 0.0, %v5631
        %v5633 = vpop.f32.mrb[0].mxu0
        %v5634 = vpop.f32.mrb[0].mxu0
        %v5635 = vadd.f32 0.0, %v5634
        %v5636 = vpop.f32.mrb[0].mxu0
        %5637 = vmatprep.mubr.bf16.mxu0 0
        %5638 = vmatmul.mubr.bf16.gmra.mrb[0].mxu0 %v5592
        %v5639 = vpop.f32.mrb[0].mxu0
        %v5640 = vadd.f32 0.0, %v5639
        %v5641 = vpop.f32.mrb[0].mxu0
        %v5642 = vpop.f32.mrb[0].mxu0
        %v5643 = vpop.f32.mrb[0].mxu0
        %5644 = vdwg.mxu0
        %5645 = vrot.lane.b32.xlu0 %v3804, 96
        %v5646 = vpop.permute.xlu0 %5645
        %5647 = vrot.lane.b32.xlu0 %v3805, 96
        %v5648 = vpop.permute.xlu0 %5647
        %v5651 = vsel %vm3939, %v5581, 0
        %v5654 = vsel %vm3939, %v5582, 0
        %v5657 = vand.u32 %v5648, %v4019
        %5659 = vmatprep.subr.bf16.mxu0 0
        %5660 = vmatpush1.bf16.msra.mxu0 %v5646
        %5661 = vmatprep.subr.bf16.mxu0 0
        %5662 = vmatpush1.bf16.msra.mxu0 %v5657
        %5663 = vmatprep.subr.bf16.mxu0 0
        %5664 = vmatpush1.bf16.msra.mxu0 0
        %5665 = vmatprep.subr.bf16.mxu0 0
        %5666 = vmatpush1.bf16.msra.mxu0 0
        %5667 = vmatprep.subr.bf16.mxu0 0
        %5668 = vmatpush1.bf16.msra.mxu0 0
        %5669 = vmatprep.subr.bf16.mxu0 0
        %5670 = vmatpush1.bf16.msra.mxu0 0
        %5671 = vmatprep.subr.bf16.mxu0 0
        %5672 = vmatpush1.bf16.msra.mxu0 0
        %5673 = vmatprep.subr.bf16.mxu0 0
        %5674 = vmatpush1.bf16.msra.mxu0 0
        %5675 = vmatprep.subr.bf16.mxu0 0
        %5676 = vmatpush1.bf16.msra.mxu0 0
        %5677 = vmatprep.subr.bf16.mxu0 0
        %5678 = vmatpush1.bf16.msra.mxu0 0
        %5679 = vmatprep.subr.bf16.mxu0 0
        %5680 = vmatpush1.bf16.msra.mxu0 0
        %5681 = vmatprep.subr.bf16.mxu0 0
        %5682 = vmatpush1.bf16.msra.mxu0 0
        %5683 = vmatprep.subr.bf16.mxu0 0
        %5684 = vmatpush1.bf16.msra.mxu0 0
        %5685 = vmatprep.subr.bf16.mxu0 0
        %5686 = vmatpush1.bf16.msra.mxu0 0
        %5687 = vmatprep.subr.bf16.mxu0 0
        %5688 = vmatpush1.bf16.msra.mxu0 0
        %5689 = vmatprep.subr.bf16.mxu0 0
        %5690 = vmatpush1.bf16.msra.mxu0 0
        %5691 = vmatprep.mubr.bf16.mxu0 0
        %5692 = vmatmul.mubr.bf16.gmra.mrb[0].mxu0 %v5651
        %v5693 = vpop.f32.mrb[0].mxu0
        %v5694 = vadd.f32 0.0, %v5693
        %v5695 = vpop.f32.mrb[0].mxu0
        %v5696 = vpop.f32.mrb[0].mxu0
        %v5697 = vadd.f32 0.0, %v5696
        %v5698 = vpop.f32.mrb[0].mxu0
        %5699 = vmatprep.mubr.bf16.mxu0 0
        %5700 = vmatmul.mubr.bf16.gmra.mrb[0].mxu0 %v5654
        %v5701 = vpop.f32.mrb[0].mxu0
        %v5702 = vadd.f32 0.0, %v5701
        %v5703 = vpop.f32.mrb[0].mxu0
        %v5704 = vpop.f32.mrb[0].mxu0
        %v5705 = vpop.f32.mrb[0].mxu0
        %5706 = vdwg.mxu0
        %v5713 = vcombine.high %v5632, %v5632
        %v5715 = vunpack.c.l.s4 1966171168
        %v5716 = vunpack.c.0.s8 %v5715
        %v5717 = vlaneseq
        %v5718 = vshrl.u32 %v5717, 7
        %v5719 = vsub.s32 %v5716, %v5718
        %v5720 = vrot.slane %v5632, %v5719
        %v5722 = vunpack.c.l.s4 1966171168
        %v5723 = vunpack.c.0.s8 %v5722
        %v5724 = vlaneseq
        %v5725 = vshrl.u32 %v5724, 7
        %v5726 = vsub.s32 %v5723, %v5725
        %v5727 = vrot.slane %v5713, %v5726
        %v5728 = vcombine.high %v5720, %v5720
        %v5729 = vcombine.high %v5727, %v5727
        %v5731 = vunpack.c.l.s4 1966171168
        %v5732 = vunpack.c.0.s8 %v5731
        %v5733 = vlaneseq
        %v5734 = vshrl.u32 %v5733, 7
        %v5735 = vsub.s32 %v5732, %v5734
        %v5736 = vrot.slane %v5720, %v5735
        %v5738 = vunpack.c.l.s4 1966171168
        %v5739 = vunpack.c.0.s8 %v5738
        %v5740 = vlaneseq
        %v5741 = vshrl.u32 %v5740, 7
        %v5742 = vsub.s32 %v5739, %v5741
        %v5743 = vrot.slane %v5727, %v5742
        %v5745 = vunpack.c.l.s4 1966171168
        %v5746 = vunpack.c.0.s8 %v5745
        %v5747 = vlaneseq
        %v5748 = vshrl.u32 %v5747, 7
        %v5749 = vsub.s32 %v5746, %v5748
        %v5750 = vrot.slane %v5728, %v5749
        %v5752 = vunpack.c.l.s4 1966171168
        %v5753 = vunpack.c.0.s8 %v5752
        %v5754 = vlaneseq
        %v5755 = vshrl.u32 %v5754, 7
        %v5756 = vsub.s32 %v5753, %v5755
        %v5757 = vrot.slane %v5729, %v5756
        %v5758 = vcombine.high %v5736, %v5736
        %v5759 = vcombine.high %v5743, %v5743
        %v5760 = vcombine.high %v5750, %v5750
        %v5761 = vcombine.high %v5757, %v5757
        %v5762 = vcombine.high %v5635, %v5635
        %v5764 = vunpack.c.l.s4 1966171168
        %v5765 = vunpack.c.0.s8 %v5764
        %v5766 = vlaneseq
        %v5767 = vshrl.u32 %v5766, 7
        %v5768 = vsub.s32 %v5765, %v5767
        %v5769 = vrot.slane %v5635, %v5768
        %v5771 = vunpack.c.l.s4 1966171168
        %v5772 = vunpack.c.0.s8 %v5771
        %v5773 = vlaneseq
        %v5774 = vshrl.u32 %v5773, 7
        %v5775 = vsub.s32 %v5772, %v5774
        %v5776 = vrot.slane %v5762, %v5775
        %v5777 = vcombine.high %v5769, %v5769
        %v5778 = vcombine.high %v5776, %v5776
        %v5780 = vunpack.c.l.s4 1966171168
        %v5781 = vunpack.c.0.s8 %v5780
        %v5782 = vlaneseq
        %v5783 = vshrl.u32 %v5782, 7
        %v5784 = vsub.s32 %v5781, %v5783
        %v5785 = vrot.slane %v5769, %v5784
        %v5787 = vunpack.c.l.s4 1966171168
        %v5788 = vunpack.c.0.s8 %v5787
        %v5789 = vlaneseq
        %v5790 = vshrl.u32 %v5789, 7
        %v5791 = vsub.s32 %v5788, %v5790
        %v5792 = vrot.slane %v5776, %v5791
        %v5794 = vunpack.c.l.s4 1966171168
        %v5795 = vunpack.c.0.s8 %v5794
        %v5796 = vlaneseq
        %v5797 = vshrl.u32 %v5796, 7
        %v5798 = vsub.s32 %v5795, %v5797
        %v5799 = vrot.slane %v5777, %v5798
        %v5801 = vunpack.c.l.s4 1966171168
        %v5802 = vunpack.c.0.s8 %v5801
        %v5803 = vlaneseq
        %v5804 = vshrl.u32 %v5803, 7
        %v5805 = vsub.s32 %v5802, %v5804
        %v5806 = vrot.slane %v5778, %v5805
        %v5807 = vcombine.high %v5785, %v5785
        %v5808 = vcombine.high %v5792, %v5792
        %v5809 = vcombine.high %v5799, %v5799
        %v5810 = vcombine.high %v5806, %v5806
        %v5812 = vunpack.c.l.s4 1966171168
        %v5813 = vunpack.c.0.s8 %v5812
        %v5814 = vlaneseq
        %v5815 = vshrl.u32 %v5814, 7
        %v5816 = vsub.s32 %v5813, %v5815
        %v5817 = vrot.slane %v5640, %v5816
        %v5819 = vunpack.c.l.s4 1966171168
        %v5820 = vunpack.c.0.s8 %v5819
        %v5821 = vlaneseq
        %v5822 = vshrl.u32 %v5821, 7
        %v5823 = vsub.s32 %v5820, %v5822
        %v5824 = vrot.slane %v5817, %v5823
        %v5825 = vcombine.high %v5694, %v5694
        %v5827 = vunpack.c.l.s4 1966171168
        %v5828 = vunpack.c.0.s8 %v5827
        %v5829 = vlaneseq
        %v5830 = vshrl.u32 %v5829, 7
        %v5831 = vsub.s32 %v5828, %v5830
        %v5832 = vrot.slane %v5694, %v5831
        %v5834 = vunpack.c.l.s4 1966171168
        %v5835 = vunpack.c.0.s8 %v5834
        %v5836 = vlaneseq
        %v5837 = vshrl.u32 %v5836, 7
        %v5838 = vsub.s32 %v5835, %v5837
        %v5839 = vrot.slane %v5825, %v5838
        %v5840 = vcombine.high %v5832, %v5832
        %v5841 = vcombine.high %v5839, %v5839
        %v5843 = vunpack.c.l.s4 1966171168
        %v5844 = vunpack.c.0.s8 %v5843
        %v5845 = vlaneseq
        %v5846 = vshrl.u32 %v5845, 7
        %v5847 = vsub.s32 %v5844, %v5846
        %v5848 = vrot.slane %v5832, %v5847
        %v5850 = vunpack.c.l.s4 1966171168
        %v5851 = vunpack.c.0.s8 %v5850
        %v5852 = vlaneseq
        %v5853 = vshrl.u32 %v5852, 7
        %v5854 = vsub.s32 %v5851, %v5853
        %v5855 = vrot.slane %v5839, %v5854
        %v5857 = vunpack.c.l.s4 1966171168
        %v5858 = vunpack.c.0.s8 %v5857
        %v5859 = vlaneseq
        %v5860 = vshrl.u32 %v5859, 7
        %v5861 = vsub.s32 %v5858, %v5860
        %v5862 = vrot.slane %v5840, %v5861
        %v5864 = vunpack.c.l.s4 1966171168
        %v5865 = vunpack.c.0.s8 %v5864
        %v5866 = vlaneseq
        %v5867 = vshrl.u32 %v5866, 7
        %v5868 = vsub.s32 %v5865, %v5867
        %v5869 = vrot.slane %v5841, %v5868
        %v5870 = vcombine.high %v5848, %v5848
        %v5871 = vcombine.high %v5855, %v5855
        %v5872 = vcombine.high %v5862, %v5862
        %v5873 = vcombine.high %v5869, %v5869
        %v5874 = vcombine.high %v5697, %v5697
        %v5876 = vunpack.c.l.s4 1966171168
        %v5877 = vunpack.c.0.s8 %v5876
        %v5878 = vlaneseq
        %v5879 = vshrl.u32 %v5878, 7
        %v5880 = vsub.s32 %v5877, %v5879
        %v5881 = vrot.slane %v5697, %v5880
        %v5883 = vunpack.c.l.s4 1966171168
        %v5884 = vunpack.c.0.s8 %v5883
        %v5885 = vlaneseq
        %v5886 = vshrl.u32 %v5885, 7
        %v5887 = vsub.s32 %v5884, %v5886
        %v5888 = vrot.slane %v5874, %v5887
        %v5889 = vcombine.high %v5881, %v5881
        %v5890 = vcombine.high %v5888, %v5888
        %v5892 = vunpack.c.l.s4 1966171168
        %v5893 = vunpack.c.0.s8 %v5892
        %v5894 = vlaneseq
        %v5895 = vshrl.u32 %v5894, 7
        %v5896 = vsub.s32 %v5893, %v5895
        %v5897 = vrot.slane %v5881, %v5896
        %v5899 = vunpack.c.l.s4 1966171168
        %v5900 = vunpack.c.0.s8 %v5899
        %v5901 = vlaneseq
        %v5902 = vshrl.u32 %v5901, 7
        %v5903 = vsub.s32 %v5900, %v5902
        %v5904 = vrot.slane %v5888, %v5903
        %v5906 = vunpack.c.l.s4 1966171168
        %v5907 = vunpack.c.0.s8 %v5906
        %v5908 = vlaneseq
        %v5909 = vshrl.u32 %v5908, 7
        %v5910 = vsub.s32 %v5907, %v5909
        %v5911 = vrot.slane %v5889, %v5910
        %v5913 = vunpack.c.l.s4 1966171168
        %v5914 = vunpack.c.0.s8 %v5913
        %v5915 = vlaneseq
        %v5916 = vshrl.u32 %v5915, 7
        %v5917 = vsub.s32 %v5914, %v5916
        %v5918 = vrot.slane %v5890, %v5917
        %v5919 = vcombine.high %v5897, %v5897
        %v5920 = vcombine.high %v5904, %v5904
        %v5921 = vcombine.high %v5911, %v5911
        %v5922 = vcombine.high %v5918, %v5918
        %v5924 = vunpack.c.l.s4 1966171168
        %v5925 = vunpack.c.0.s8 %v5924
        %v5926 = vlaneseq
        %v5927 = vshrl.u32 %v5926, 7
        %v5928 = vsub.s32 %v5925, %v5927
        %v5929 = vrot.slane %v5702, %v5928
        %v5931 = vunpack.c.l.s4 1966171168
        %v5932 = vunpack.c.0.s8 %v5931
        %v5933 = vlaneseq
        %v5934 = vshrl.u32 %v5933, 7
        %v5935 = vsub.s32 %v5932, %v5934
        %v5936 = vrot.slane %v5929, %v5935
        %v5937 = vcombine.low %v5736, %v5750
        %v5938 = vcombine.low %v5758, %v5760
        %v5939 = vcombine.low %v5743, %v5757
        %v5940 = vcombine.low %v5759, %v5761
        %v5942 = vunpack.c.l.s4 1966171168
        %v5943 = vunpack.c.0.s8 %v5942
        %v5944 = vlaneseq
        %v5945 = vshrl.u32 %v5944, 7
        %v5946 = vsub.s32 %v5943, %v5945
        %v5947 = vrot.slane %v5937, %v5946
        %v5949 = vunpack.c.l.s4 1966171168
        %v5950 = vunpack.c.0.s8 %v5949
        %v5951 = vlaneseq
        %v5952 = vshrl.u32 %v5951, 7
        %v5953 = vsub.s32 %v5950, %v5952
        %v5954 = vrot.slane %v5938, %v5953
        %v5956 = vunpack.c.l.s4 1966171168
        %v5957 = vunpack.c.0.s8 %v5956
        %v5958 = vlaneseq
        %v5959 = vshrl.u32 %v5958, 7
        %v5960 = vsub.s32 %v5957, %v5959
        %v5961 = vrot.slane %v5939, %v5960
        %v5963 = vunpack.c.l.s4 1966171168
        %v5964 = vunpack.c.0.s8 %v5963
        %v5965 = vlaneseq
        %v5966 = vshrl.u32 %v5965, 7
        %v5967 = vsub.s32 %v5964, %v5966
        %v5968 = vrot.slane %v5940, %v5967
        %v5969 = vcombine.low %v5947, %v5954
        %v5970 = vcombine.low %v5961, %v5968
        %v5972 = vunpack.c.l.s4 1966171168
        %v5973 = vunpack.c.0.s8 %v5972
        %v5974 = vlaneseq
        %v5975 = vshrl.u32 %v5974, 7
        %v5976 = vsub.s32 %v5973, %v5975
        %v5977 = vrot.slane %v5969, %v5976
        %v5979 = vunpack.c.l.s4 1966171168
        %v5980 = vunpack.c.0.s8 %v5979
        %v5981 = vlaneseq
        %v5982 = vshrl.u32 %v5981, 7
        %v5983 = vsub.s32 %v5980, %v5982
        %v5984 = vrot.slane %v5970, %v5983
        %v5985 = vcombine.low %v5977, %v5984
        %v5986 = vcombine.low %v5785, %v5799
        %v5987 = vcombine.low %v5807, %v5809
        %v5988 = vcombine.low %v5792, %v5806
        %v5989 = vcombine.low %v5808, %v5810
        %v5991 = vunpack.c.l.s4 1966171168
        %v5992 = vunpack.c.0.s8 %v5991
        %v5993 = vlaneseq
        %v5994 = vshrl.u32 %v5993, 7
        %v5995 = vsub.s32 %v5992, %v5994
        %v5996 = vrot.slane %v5986, %v5995
        %v5998 = vunpack.c.l.s4 1966171168
        %v5999 = vunpack.c.0.s8 %v5998
        %v6000 = vlaneseq
        %v6001 = vshrl.u32 %v6000, 7
        %v6002 = vsub.s32 %v5999, %v6001
        %v6003 = vrot.slane %v5987, %v6002
        %v6005 = vunpack.c.l.s4 1966171168
        %v6006 = vunpack.c.0.s8 %v6005
        %v6007 = vlaneseq
        %v6008 = vshrl.u32 %v6007, 7
        %v6009 = vsub.s32 %v6006, %v6008
        %v6010 = vrot.slane %v5988, %v6009
        %v6012 = vunpack.c.l.s4 1966171168
        %v6013 = vunpack.c.0.s8 %v6012
        %v6014 = vlaneseq
        %v6015 = vshrl.u32 %v6014, 7
        %v6016 = vsub.s32 %v6013, %v6015
        %v6017 = vrot.slane %v5989, %v6016
        %v6018 = vcombine.low %v5996, %v6003
        %v6019 = vcombine.low %v6010, %v6017
        %v6021 = vunpack.c.l.s4 1966171168
        %v6022 = vunpack.c.0.s8 %v6021
        %v6023 = vlaneseq
        %v6024 = vshrl.u32 %v6023, 7
        %v6025 = vsub.s32 %v6022, %v6024
        %v6026 = vrot.slane %v6018, %v6025
        %v6028 = vunpack.c.l.s4 1966171168
        %v6029 = vunpack.c.0.s8 %v6028
        %v6030 = vlaneseq
        %v6031 = vshrl.u32 %v6030, 7
        %v6032 = vsub.s32 %v6029, %v6031
        %v6033 = vrot.slane %v6019, %v6032
        %v6034 = vcombine.low %v6026, %v6033
        %v6035 = vcombine.low %v5824, %v5848
        %v6036 = vcombine.low %v5862, %v5870
        %v6037 = vcombine.low %v5872, %v5855
        %v6038 = vcombine.low %v5869, %v5871
        %v6040 = vunpack.c.l.s4 1966171168
        %v6041 = vunpack.c.0.s8 %v6040
        %v6042 = vlaneseq
        %v6043 = vshrl.u32 %v6042, 7
        %v6044 = vsub.s32 %v6041, %v6043
        %v6045 = vrot.slane %v6035, %v6044
        %v6047 = vunpack.c.l.s4 1966171168
        %v6048 = vunpack.c.0.s8 %v6047
        %v6049 = vlaneseq
        %v6050 = vshrl.u32 %v6049, 7
        %v6051 = vsub.s32 %v6048, %v6050
        %v6052 = vrot.slane %v6036, %v6051
        %v6054 = vunpack.c.l.s4 1966171168
        %v6055 = vunpack.c.0.s8 %v6054
        %v6056 = vlaneseq
        %v6057 = vshrl.u32 %v6056, 7
        %v6058 = vsub.s32 %v6055, %v6057
        %v6059 = vrot.slane %v6037, %v6058
        %v6061 = vunpack.c.l.s4 1966171168
        %v6062 = vunpack.c.0.s8 %v6061
        %v6063 = vlaneseq
        %v6064 = vshrl.u32 %v6063, 7
        %v6065 = vsub.s32 %v6062, %v6064
        %v6066 = vrot.slane %v6038, %v6065
        %v6067 = vcombine.low %v6045, %v6052
        %v6068 = vcombine.low %v6059, %v6066
        %v6070 = vunpack.c.l.s4 1966171168
        %v6071 = vunpack.c.0.s8 %v6070
        %v6072 = vlaneseq
        %v6073 = vshrl.u32 %v6072, 7
        %v6074 = vsub.s32 %v6071, %v6073
        %v6075 = vrot.slane %v6067, %v6074
        %v6077 = vunpack.c.l.s4 1966171168
        %v6078 = vunpack.c.0.s8 %v6077
        %v6079 = vlaneseq
        %v6080 = vshrl.u32 %v6079, 7
        %v6081 = vsub.s32 %v6078, %v6080
        %v6082 = vrot.slane %v6068, %v6081
        %v6083 = vcombine.low %v6075, %v6082
        %v6084 = vcombine.low %v5873, %v5897
        %v6085 = vcombine.low %v5911, %v5919
        %v6086 = vcombine.low %v5921, %v5904
        %v6087 = vcombine.low %v5918, %v5920
        %v6089 = vunpack.c.l.s4 1966171168
        %v6090 = vunpack.c.0.s8 %v6089
        %v6091 = vlaneseq
        %v6092 = vshrl.u32 %v6091, 7
        %v6093 = vsub.s32 %v6090, %v6092
        %v6094 = vrot.slane %v6084, %v6093
        %v6096 = vunpack.c.l.s4 1966171168
        %v6097 = vunpack.c.0.s8 %v6096
        %v6098 = vlaneseq
        %v6099 = vshrl.u32 %v6098, 7
        %v6100 = vsub.s32 %v6097, %v6099
        %v6101 = vrot.slane %v6085, %v6100
        %v6103 = vunpack.c.l.s4 1966171168
        %v6104 = vunpack.c.0.s8 %v6103
        %v6105 = vlaneseq
        %v6106 = vshrl.u32 %v6105, 7
        %v6107 = vsub.s32 %v6104, %v6106
        %v6108 = vrot.slane %v6086, %v6107
        %v6110 = vunpack.c.l.s4 1966171168
        %v6111 = vunpack.c.0.s8 %v6110
        %v6112 = vlaneseq
        %v6113 = vshrl.u32 %v6112, 7
        %v6114 = vsub.s32 %v6111, %v6113
        %v6115 = vrot.slane %v6087, %v6114
        %v6116 = vcombine.low %v6094, %v6101
        %v6117 = vcombine.low %v6108, %v6115
        %v6119 = vunpack.c.l.s4 1966171168
        %v6120 = vunpack.c.0.s8 %v6119
        %v6121 = vlaneseq
        %v6122 = vshrl.u32 %v6121, 7
        %v6123 = vsub.s32 %v6120, %v6122
        %v6124 = vrot.slane %v6116, %v6123
        %v6126 = vunpack.c.l.s4 1966171168
        %v6127 = vunpack.c.0.s8 %v6126
        %v6128 = vlaneseq
        %v6129 = vshrl.u32 %v6128, 7
        %v6130 = vsub.s32 %v6127, %v6129
        %v6131 = vrot.slane %v6117, %v6130
        %v6132 = vcombine.low %v6124, %v6131
        %v6133 = vcombine.low %v5922, %v5936
        %v6135 = vunpack.c.l.s4 1966171168
        %v6136 = vunpack.c.0.s8 %v6135
        %v6137 = vlaneseq
        %v6138 = vshrl.u32 %v6137, 7
        %v6139 = vsub.s32 %v6136, %v6138
        %v6140 = vrot.slane %v6133, %v6139
        %v6142 = vunpack.c.l.s4 1966171168
        %v6143 = vunpack.c.0.s8 %v6142
        %v6144 = vlaneseq
        %v6145 = vshrl.u32 %v6144, 7
        %v6146 = vsub.s32 %v6143, %v6145
        %v6147 = vrot.slane %v6140, %v6146
        %6148 = vrot.lane.b32.xlu0 %v5985, 32
        %v6149 = vpop.permute.xlu0 %6148
        %6150 = vrot.lane.b32.xlu0 %v6034, 32
        %v6151 = vpop.permute.xlu0 %6150
        %6152 = vrot.lane.b32.xlu0 %v6083, 32
        %v6153 = vpop.permute.xlu0 %6152
        %6154 = vrot.lane.b32.xlu0 %v6132, 32
        %v6155 = vpop.permute.xlu0 %6154
        %6156 = vrot.lane.b32.xlu0 %v6147, 32
        %v6157 = vpop.permute.xlu0 %6156
        %vm6163 = vcmask 392448
        %6164 = vst.msk [vmem:[#allocation2] sm:$0xff] %vm6163, %v6149
        %6165 = vst.msk [vmem:[#allocation2 + $0x8] sm:$0xff] %vm6163, %v6151
        %6166 = vst.msk [vmem:[#allocation2 + $0x10] sm:$0xff] %vm6163, %v6153
        %6167 = vst.msk [vmem:[#allocation2 + $0x18] sm:$0xff] %vm6163, %v6155
        %vm6168 = vcmask 386304
        %6169 = vst.msk [vmem:[#allocation2 + $0x20] sm:$0x3] %vm6168, %v6157
        %6170 = vrot.lane.b32.xlu0 %v3345, 80
        %v6171 = vpop.permute.xlu0 %6170
        %6172 = vrot.lane.b32.xlu0 %v3346, 80
        %v6173 = vpop.permute.xlu0 %6172
        %6174 = vrot.lane.b32.xlu0 %v3345, 16
        %v6175 = vpop.permute.xlu0 %6174
        %6176 = vrot.lane.b32.xlu0 %v3346, 16
        %v6177 = vpop.permute.xlu0 %6176
        %v6179 = vsel %vm3812, %v6171, 0
        %v6182 = vsel %vm3812, %v6173, 0
        %v6185 = vsel %vm3812, %v6175, 0
        %v6188 = vsel %vm3812, %v6177, 0
        %6190 = vmatprep.subr.bf16.mxu0 0
        %6191 = vmatpush1.bf16.xpose.msra.mxu0 %v6185
        %6192 = vmatprep.subr.bf16.mxu0 0
        %6193 = vmatpush1.bf16.xpose.msra.mxu0 %v6188
        %6194 = vmatprep.subr.bf16.mxu0 0
        %6195 = vmatpush1.bf16.xpose.msra.mxu0 0
        %6196 = vmatprep.subr.bf16.mxu0 0
        %6197 = vmatpush1.bf16.xpose.msra.mxu0 0
        %6198 = vmatprep.subr.bf16.mxu0 0
        %6199 = vmatpush1.bf16.xpose.msra.mxu0 0
        %6200 = vmatprep.subr.bf16.mxu0 0
        %6201 = vmatpush1.bf16.xpose.msra.mxu0 0
        %6202 = vmatprep.subr.bf16.mxu0 0
        %6203 = vmatpush1.bf16.xpose.msra.mxu0 0
        %6204 = vmatprep.subr.bf16.mxu0 0
        %6205 = vmatpush1.bf16.xpose.msra.mxu0 0
        %6206 = vmatprep.subr.bf16.mxu0 0
        %6207 = vmatpush1.bf16.xpose.msra.mxu0 0
        %6208 = vmatprep.subr.bf16.mxu0 0
        %6209 = vmatpush1.bf16.xpose.msra.mxu0 0
        %6210 = vmatprep.subr.bf16.mxu0 0
        %6211 = vmatpush1.bf16.xpose.msra.mxu0 0
        %6212 = vmatprep.subr.bf16.mxu0 0
        %6213 = vmatpush1.bf16.xpose.msra.mxu0 0
        %6214 = vmatprep.subr.bf16.mxu0 0
        %6215 = vmatpush1.bf16.xpose.msra.mxu0 0
        %6216 = vmatprep.subr.bf16.mxu0 0
        %6217 = vmatpush1.bf16.xpose.msra.mxu0 0
        %6218 = vmatprep.subr.bf16.mxu0 0
        %6219 = vmatpush1.bf16.xpose.msra.mxu0 0
        %6220 = vmatprep.subr.bf16.mxu0 0
        %6221 = vmatpush1.bf16.xpose.msra.mxu0 0
        %6222 = vmatprep.mubr.bf16.mxu0 0
        %6223 = vmatmul.mubr.bf16.gmra.mrb[0].mxu0 %v6179
        %v6224 = vpop.f32.mrb[0].mxu0
        %v6225 = vadd.f32 0.0, %v6224
        %v6226 = vpop.f32.mrb[0].mxu0
        %v6227 = vpop.f32.mrb[0].mxu0
        %v6228 = vadd.f32 0.0, %v6227
        %v6229 = vpop.f32.mrb[0].mxu0
        %6230 = vmatprep.mubr.bf16.mxu0 0
        %6231 = vmatmul.mubr.bf16.gmra.mrb[0].mxu0 %v6182
        %v6232 = vpop.f32.mrb[0].mxu0
        %v6233 = vadd.f32 0.0, %v6232
        %v6234 = vpop.f32.mrb[0].mxu0
        %v6235 = vpop.f32.mrb[0].mxu0
        %v6236 = vpop.f32.mrb[0].mxu0
        %6237 = vdwg.mxu0
        %6238 = vrot.lane.b32.xlu0 %v3347, 80
        %v6239 = vpop.permute.xlu0 %6238
        %6240 = vrot.lane.b32.xlu0 %v3348, 80
        %v6241 = vpop.permute.xlu0 %6240
        %6242 = vrot.lane.b32.xlu0 %v3347, 16
        %v6243 = vpop.permute.xlu0 %6242
        %6244 = vrot.lane.b32.xlu0 %v3348, 16
        %v6245 = vpop.permute.xlu0 %6244
        %v6247 = vsel %vm3812, %v6239, 0
        %v6250 = vsel %vm3812, %v6241, 0
        %v6253 = vsel %vm3812, %v6243, 0
        %v6256 = vsel %vm3812, %v6245, 0
        %6258 = vmatprep.subr.bf16.mxu0 0
        %6259 = vmatpush1.bf16.xpose.msra.mxu0 %v6253
        %6260 = vmatprep.subr.bf16.mxu0 0
        %6261 = vmatpush1.bf16.xpose.msra.mxu0 %v6256
        %6262 = vmatprep.subr.bf16.mxu0 0
        %6263 = vmatpush1.bf16.xpose.msra.mxu0 0
        %6264 = vmatprep.subr.bf16.mxu0 0
        %6265 = vmatpush1.bf16.xpose.msra.mxu0 0
        %6266 = vmatprep.subr.bf16.mxu0 0
        %6267 = vmatpush1.bf16.xpose.msra.mxu0 0
        %6268 = vmatprep.subr.bf16.mxu0 0
        %6269 = vmatpush1.bf16.xpose.msra.mxu0 0
        %6270 = vmatprep.subr.bf16.mxu0 0
        %6271 = vmatpush1.bf16.xpose.msra.mxu0 0
        %6272 = vmatprep.subr.bf16.mxu0 0
        %6273 = vmatpush1.bf16.xpose.msra.mxu0 0
        %6274 = vmatprep.subr.bf16.mxu0 0
        %6275 = vmatpush1.bf16.xpose.msra.mxu0 0
        %6276 = vmatprep.subr.bf16.mxu0 0
        %6277 = vmatpush1.bf16.xpose.msra.mxu0 0
        %6278 = vmatprep.subr.bf16.mxu0 0
        %6279 = vmatpush1.bf16.xpose.msra.mxu0 0
        %6280 = vmatprep.subr.bf16.mxu0 0
        %6281 = vmatpush1.bf16.xpose.msra.mxu0 0
        %6282 = vmatprep.subr.bf16.mxu0 0
        %6283 = vmatpush1.bf16.xpose.msra.mxu0 0
        %6284 = vmatprep.subr.bf16.mxu0 0
        %6285 = vmatpush1.bf16.xpose.msra.mxu0 0
        %6286 = vmatprep.subr.bf16.mxu0 0
        %6287 = vmatpush1.bf16.xpose.msra.mxu0 0
        %6288 = vmatprep.subr.bf16.mxu0 0
        %6289 = vmatpush1.bf16.xpose.msra.mxu0 0
        %6290 = vmatprep.mubr.bf16.mxu0 0
        %6291 = vmatmul.mubr.bf16.gmra.mrb[0].mxu0 %v6247
        %v6292 = vpop.f32.mrb[0].mxu0
        %v6293 = vadd.f32 0.0, %v6292
        %v6294 = vpop.f32.mrb[0].mxu0
        %v6295 = vpop.f32.mrb[0].mxu0
        %v6296 = vadd.f32 0.0, %v6295
        %v6297 = vpop.f32.mrb[0].mxu0
        %6298 = vmatprep.mubr.bf16.mxu0 0
        %6299 = vmatmul.mubr.bf16.gmra.mrb[0].mxu0 %v6250
        %v6300 = vpop.f32.mrb[0].mxu0
        %v6301 = vadd.f32 0.0, %v6300
        %v6302 = vpop.f32.mrb[0].mxu0
        %v6303 = vpop.f32.mrb[0].mxu0
        %v6304 = vpop.f32.mrb[0].mxu0
        %6305 = vdwg.mxu0
        %v6306 = vsel %vm3939, %v6225, -inf
        %6307 = vmax.xlane.f32.xlu0 %v6306
        %v6308 = vpop.xlane.xlu0 %6307
        %v6309 = vsel %vm3939, %v6228, -inf
        %6310 = vmax.xlane.f32.xlu0 %v6309
        %v6311 = vpop.xlane.xlu0 %6310
        %v6312 = vsel %vm3946, %v6233, -inf
        %6313 = vmax.xlane.f32.xlu0 %v6312
        %v6314 = vpop.xlane.xlu0 %6313
        %v6315 = vsel %vm3939, %v6293, -inf
        %6316 = vmax.xlane.f32.xlu0 %v6315
        %v6317 = vpop.xlane.xlu0 %6316
        %v6318 = vsel %vm3939, %v6296, -inf
        %6319 = vmax.xlane.f32.xlu0 %v6318
        %v6320 = vpop.xlane.xlu0 %6319
        %v6321 = vsel %vm3946, %v6301, -inf
        %6322 = vmax.xlane.f32.xlu0 %v6321
        %v6323 = vpop.xlane.xlu0 %6322
        %v6324 = vsub.f32 %v6225, %v6308
        %v6325 = vsub.f32 %v6228, %v6311
        %v6326 = vsub.f32 %v6233, %v6314
        %v6327 = vsub.f32 %v6293, %v6317
        %v6328 = vsub.f32 %v6296, %v6320
        %v6329 = vsub.f32 %v6301, %v6323
        %v6330 = vmul.f32 %v6324, 1.442695
        %v6331 = vpow.pop %v6330
        %v6332 = vmul.f32 %v6325, 1.442695
        %v6333 = vpow.pop %v6332
        %v6334 = vmul.f32 %v6326, 1.442695
        %v6335 = vpow.pop %v6334
        %v6336 = vmul.f32 %v6327, 1.442695
        %v6337 = vpow.pop %v6336
        %v6338 = vmul.f32 %v6328, 1.442695
        %v6339 = vpow.pop %v6338
        %v6340 = vmul.f32 %v6329, 1.442695
        %v6341 = vpow.pop %v6340
        %v6342 = vsel %vm3939, %v6331, 0.0
        %6343 = vadd.xlane.f32.xlu0 %v6342
        %v6344 = vpop.xlane.xlu0 %6343
        %v6345 = vsel %vm3939, %v6333, 0.0
        %6346 = vadd.xlane.f32.xlu0 %v6345
        %v6347 = vpop.xlane.xlu0 %6346
        %v6348 = vsel %vm3946, %v6335, 0.0
        %6349 = vadd.xlane.f32.xlu0 %v6348
        %v6350 = vpop.xlane.xlu0 %6349
        %v6351 = vsel %vm3939, %v6337, 0.0
        %6352 = vadd.xlane.f32.xlu0 %v6351
        %v6353 = vpop.xlane.xlu0 %6352
        %v6354 = vsel %vm3939, %v6339, 0.0
        %6355 = vadd.xlane.f32.xlu0 %v6354
        %v6356 = vpop.xlane.xlu0 %6355
        %v6357 = vsel %vm3946, %v6341, 0.0
        %6358 = vadd.xlane.f32.xlu0 %v6357
        %v6359 = vpop.xlane.xlu0 %6358
        %v6360 = vrcp.pop %v6344
        %v6361 = vrcp.pop %v6347
        %v6362 = vrcp.pop %v6350
        %v6363 = vrcp.pop %v6353
        %v6364 = vrcp.pop %v6356
        %v6365 = vrcp.pop %v6359
        %v6366 = vmul.f32 %v6331, %v6360
        %v6367 = vmul.f32 %v6333, %v6361
        %v6368 = vmul.f32 %v6335, %v6362
        %v6369 = vmul.f32 %v6337, %v6363
        %v6370 = vmul.f32 %v6339, %v6364
        %v6371 = vmul.f32 %v6341, %v6365
        %v6372 = vpack.c.bf16 %v6367, %v6366
        %v6373 = vpack.c.bf16 %v6368, %v6368
        %v6374 = vpack.c.bf16 %v6370, %v6369
        %v6375 = vpack.c.bf16 %v6371, %v6371
        %6376 = vrot.lane.b32.xlu0 %v3802, 80
        %v6377 = vpop.permute.xlu0 %6376
        %6378 = vrot.lane.b32.xlu0 %v3803, 80
        %v6379 = vpop.permute.xlu0 %6378
        %v6382 = vsel %vm3939, %v6372, 0
        %v6385 = vsel %vm3939, %v6373, 0
        %v6388 = vand.u32 %v6379, %v4019
        %6390 = vmatprep.subr.bf16.mxu0 0
        %6391 = vmatpush1.bf16.msra.mxu0 %v6377
        %6392 = vmatprep.subr.bf16.mxu0 0
        %6393 = vmatpush1.bf16.msra.mxu0 %v6388
        %6394 = vmatprep.subr.bf16.mxu0 0
        %6395 = vmatpush1.bf16.msra.mxu0 0
        %6396 = vmatprep.subr.bf16.mxu0 0
        %6397 = vmatpush1.bf16.msra.mxu0 0
        %6398 = vmatprep.subr.bf16.mxu0 0
        %6399 = vmatpush1.bf16.msra.mxu0 0
        %6400 = vmatprep.subr.bf16.mxu0 0
        %6401 = vmatpush1.bf16.msra.mxu0 0
        %6402 = vmatprep.subr.bf16.mxu0 0
        %6403 = vmatpush1.bf16.msra.mxu0 0
        %6404 = vmatprep.subr.bf16.mxu0 0
        %6405 = vmatpush1.bf16.msra.mxu0 0
        %6406 = vmatprep.subr.bf16.mxu0 0
        %6407 = vmatpush1.bf16.msra.mxu0 0
        %6408 = vmatprep.subr.bf16.mxu0 0
        %6409 = vmatpush1.bf16.msra.mxu0 0
        %6410 = vmatprep.subr.bf16.mxu0 0
        %6411 = vmatpush1.bf16.msra.mxu0 0
        %6412 = vmatprep.subr.bf16.mxu0 0
        %6413 = vmatpush1.bf16.msra.mxu0 0
        %6414 = vmatprep.subr.bf16.mxu0 0
        %6415 = vmatpush1.bf16.msra.mxu0 0
        %6416 = vmatprep.subr.bf16.mxu0 0
        %6417 = vmatpush1.bf16.msra.mxu0 0
        %6418 = vmatprep.subr.bf16.mxu0 0
        %6419 = vmatpush1.bf16.msra.mxu0 0
        %6420 = vmatprep.subr.bf16.mxu0 0
        %6421 = vmatpush1.bf16.msra.mxu0 0
        %6422 = vmatprep.mubr.bf16.mxu0 0
        %6423 = vmatmul.mubr.bf16.gmra.mrb[0].mxu0 %v6382
        %v6424 = vpop.f32.mrb[0].mxu0
        %v6425 = vadd.f32 0.0, %v6424
        %v6426 = vpop.f32.mrb[0].mxu0
        %v6427 = vpop.f32.mrb[0].mxu0
        %v6428 = vadd.f32 0.0, %v6427
        %v6429 = vpop.f32.mrb[0].mxu0
        %6430 = vmatprep.mubr.bf16.mxu0 0
        %6431 = vmatmul.mubr.bf16.gmra.mrb[0].mxu0 %v6385
        %v6432 = vpop.f32.mrb[0].mxu0
        %v6433 = vadd.f32 0.0, %v6432
        %v6434 = vpop.f32.mrb[0].mxu0
        %v6435 = vpop.f32.mrb[0].mxu0
        %v6436 = vpop.f32.mrb[0].mxu0
        %6437 = vdwg.mxu0
        %6438 = vrot.lane.b32.xlu0 %v3804, 80
        %v6439 = vpop.permute.xlu0 %6438
        %6440 = vrot.lane.b32.xlu0 %v3805, 80
        %v6441 = vpop.permute.xlu0 %6440
        %v6444 = vsel %vm3939, %v6374, 0
        %v6447 = vsel %vm3939, %v6375, 0
        %v6450 = vand.u32 %v6441, %v4019
        %6452 = vmatprep.subr.bf16.mxu0 0
        %6453 = vmatpush1.bf16.msra.mxu0 %v6439
        %6454 = vmatprep.subr.bf16.mxu0 0
        %6455 = vmatpush1.bf16.msra.mxu0 %v6450
        %6456 = vmatprep.subr.bf16.mxu0 0
        %6457 = vmatpush1.bf16.msra.mxu0 0
        %6458 = vmatprep.subr.bf16.mxu0 0
        %6459 = vmatpush1.bf16.msra.mxu0 0
        %6460 = vmatprep.subr.bf16.mxu0 0
        %6461 = vmatpush1.bf16.msra.mxu0 0
        %6462 = vmatprep.subr.bf16.mxu0 0
        %6463 = vmatpush1.bf16.msra.mxu0 0
        %6464 = vmatprep.subr.bf16.mxu0 0
        %6465 = vmatpush1.bf16.msra.mxu0 0
        %6466 = vmatprep.subr.bf16.mxu0 0
        %6467 = vmatpush1.bf16.msra.mxu0 0
        %6468 = vmatprep.subr.bf16.mxu0 0
        %6469 = vmatpush1.bf16.msra.mxu0 0
        %6470 = vmatprep.subr.bf16.mxu0 0
        %6471 = vmatpush1.bf16.msra.mxu0 0
        %6472 = vmatprep.subr.bf16.mxu0 0
        %6473 = vmatpush1.bf16.msra.mxu0 0
        %6474 = vmatprep.subr.bf16.mxu0 0
        %6475 = vmatpush1.bf16.msra.mxu0 0
        %6476 = vmatprep.subr.bf16.mxu0 0
        %6477 = vmatpush1.bf16.msra.mxu0 0
        %6478 = vmatprep.subr.bf16.mxu0 0
        %6479 = vmatpush1.bf16.msra.mxu0 0
        %6480 = vmatprep.subr.bf16.mxu0 0
        %6481 = vmatpush1.bf16.msra.mxu0 0
        %6482 = vmatprep.subr.bf16.mxu0 0
        %6483 = vmatpush1.bf16.msra.mxu0 0
        %6484 = vmatprep.mubr.bf16.mxu0 0
        %6485 = vmatmul.mubr.bf16.gmra.mrb[0].mxu0 %v6444
        %v6486 = vpop.f32.mrb[0].mxu0
        %v6487 = vadd.f32 0.0, %v6486
        %v6488 = vpop.f32.mrb[0].mxu0
        %v6489 = vpop.f32.mrb[0].mxu0
        %v6490 = vadd.f32 0.0, %v6489
        %v6491 = vpop.f32.mrb[0].mxu0
        %6492 = vmatprep.mubr.bf16.mxu0 0
        %6493 = vmatmul.mubr.bf16.gmra.mrb[0].mxu0 %v6447
        %v6494 = vpop.f32.mrb[0].mxu0
        %v6495 = vadd.f32 0.0, %v6494
        %v6496 = vpop.f32.mrb[0].mxu0
        %v6497 = vpop.f32.mrb[0].mxu0
        %v6498 = vpop.f32.mrb[0].mxu0
        %6499 = vdwg.mxu0
        %v6506 = vcombine.high %v6425, %v6425
        %v6508 = vunpack.c.l.s4 1966171168
        %v6509 = vunpack.c.0.s8 %v6508
        %v6510 = vlaneseq
        %v6511 = vshrl.u32 %v6510, 7
        %v6512 = vsub.s32 %v6509, %v6511
        %v6513 = vrot.slane %v6425, %v6512
        %v6515 = vunpack.c.l.s4 1966171168
        %v6516 = vunpack.c.0.s8 %v6515
        %v6517 = vlaneseq
        %v6518 = vshrl.u32 %v6517, 7
        %v6519 = vsub.s32 %v6516, %v6518
        %v6520 = vrot.slane %v6506, %v6519
        %v6521 = vcombine.high %v6513, %v6513
        %v6522 = vcombine.high %v6520, %v6520
        %v6524 = vunpack.c.l.s4 1966171168
        %v6525 = vunpack.c.0.s8 %v6524
        %v6526 = vlaneseq
        %v6527 = vshrl.u32 %v6526, 7
        %v6528 = vsub.s32 %v6525, %v6527
        %v6529 = vrot.slane %v6513, %v6528
        %v6531 = vunpack.c.l.s4 1966171168
        %v6532 = vunpack.c.0.s8 %v6531
        %v6533 = vlaneseq
        %v6534 = vshrl.u32 %v6533, 7
        %v6535 = vsub.s32 %v6532, %v6534
        %v6536 = vrot.slane %v6520, %v6535
        %v6538 = vunpack.c.l.s4 1966171168
        %v6539 = vunpack.c.0.s8 %v6538
        %v6540 = vlaneseq
        %v6541 = vshrl.u32 %v6540, 7
        %v6542 = vsub.s32 %v6539, %v6541
        %v6543 = vrot.slane %v6521, %v6542
        %v6545 = vunpack.c.l.s4 1966171168
        %v6546 = vunpack.c.0.s8 %v6545
        %v6547 = vlaneseq
        %v6548 = vshrl.u32 %v6547, 7
        %v6549 = vsub.s32 %v6546, %v6548
        %v6550 = vrot.slane %v6522, %v6549
        %v6551 = vcombine.high %v6529, %v6529
        %v6552 = vcombine.high %v6536, %v6536
        %v6553 = vcombine.high %v6543, %v6543
        %v6554 = vcombine.high %v6550, %v6550
        %v6555 = vcombine.high %v6428, %v6428
        %v6557 = vunpack.c.l.s4 1966171168
        %v6558 = vunpack.c.0.s8 %v6557
        %v6559 = vlaneseq
        %v6560 = vshrl.u32 %v6559, 7
        %v6561 = vsub.s32 %v6558, %v6560
        %v6562 = vrot.slane %v6428, %v6561
        %v6564 = vunpack.c.l.s4 1966171168
        %v6565 = vunpack.c.0.s8 %v6564
        %v6566 = vlaneseq
        %v6567 = vshrl.u32 %v6566, 7
        %v6568 = vsub.s32 %v6565, %v6567
        %v6569 = vrot.slane %v6555, %v6568
        %v6570 = vcombine.high %v6562, %v6562
        %v6571 = vcombine.high %v6569, %v6569
        %v6573 = vunpack.c.l.s4 1966171168
        %v6574 = vunpack.c.0.s8 %v6573
        %v6575 = vlaneseq
        %v6576 = vshrl.u32 %v6575, 7
        %v6577 = vsub.s32 %v6574, %v6576
        %v6578 = vrot.slane %v6562, %v6577
        %v6580 = vunpack.c.l.s4 1966171168
        %v6581 = vunpack.c.0.s8 %v6580
        %v6582 = vlaneseq
        %v6583 = vshrl.u32 %v6582, 7
        %v6584 = vsub.s32 %v6581, %v6583
        %v6585 = vrot.slane %v6569, %v6584
        %v6587 = vunpack.c.l.s4 1966171168
        %v6588 = vunpack.c.0.s8 %v6587
        %v6589 = vlaneseq
        %v6590 = vshrl.u32 %v6589, 7
        %v6591 = vsub.s32 %v6588, %v6590
        %v6592 = vrot.slane %v6570, %v6591
        %v6594 = vunpack.c.l.s4 1966171168
        %v6595 = vunpack.c.0.s8 %v6594
        %v6596 = vlaneseq
        %v6597 = vshrl.u32 %v6596, 7
        %v6598 = vsub.s32 %v6595, %v6597
        %v6599 = vrot.slane %v6571, %v6598
        %v6600 = vcombine.high %v6578, %v6578
        %v6601 = vcombine.high %v6585, %v6585
        %v6602 = vcombine.high %v6592, %v6592
        %v6603 = vcombine.high %v6599, %v6599
        %v6605 = vunpack.c.l.s4 1966171168
        %v6606 = vunpack.c.0.s8 %v6605
        %v6607 = vlaneseq
        %v6608 = vshrl.u32 %v6607, 7
        %v6609 = vsub.s32 %v6606, %v6608
        %v6610 = vrot.slane %v6433, %v6609
        %v6612 = vunpack.c.l.s4 1966171168
        %v6613 = vunpack.c.0.s8 %v6612
        %v6614 = vlaneseq
        %v6615 = vshrl.u32 %v6614, 7
        %v6616 = vsub.s32 %v6613, %v6615
        %v6617 = vrot.slane %v6610, %v6616
        %v6618 = vcombine.high %v6487, %v6487
        %v6620 = vunpack.c.l.s4 1966171168
        %v6621 = vunpack.c.0.s8 %v6620
        %v6622 = vlaneseq
        %v6623 = vshrl.u32 %v6622, 7
        %v6624 = vsub.s32 %v6621, %v6623
        %v6625 = vrot.slane %v6487, %v6624
        %v6627 = vunpack.c.l.s4 1966171168
        %v6628 = vunpack.c.0.s8 %v6627
        %v6629 = vlaneseq
        %v6630 = vshrl.u32 %v6629, 7
        %v6631 = vsub.s32 %v6628, %v6630
        %v6632 = vrot.slane %v6618, %v6631
        %v6633 = vcombine.high %v6625, %v6625
        %v6634 = vcombine.high %v6632, %v6632
        %v6636 = vunpack.c.l.s4 1966171168
        %v6637 = vunpack.c.0.s8 %v6636
        %v6638 = vlaneseq
        %v6639 = vshrl.u32 %v6638, 7
        %v6640 = vsub.s32 %v6637, %v6639
        %v6641 = vrot.slane %v6625, %v6640
        %v6643 = vunpack.c.l.s4 1966171168
        %v6644 = vunpack.c.0.s8 %v6643
        %v6645 = vlaneseq
        %v6646 = vshrl.u32 %v6645, 7
        %v6647 = vsub.s32 %v6644, %v6646
        %v6648 = vrot.slane %v6632, %v6647
        %v6650 = vunpack.c.l.s4 1966171168
        %v6651 = vunpack.c.0.s8 %v6650
        %v6652 = vlaneseq
        %v6653 = vshrl.u32 %v6652, 7
        %v6654 = vsub.s32 %v6651, %v6653
        %v6655 = vrot.slane %v6633, %v6654
        %v6657 = vunpack.c.l.s4 1966171168
        %v6658 = vunpack.c.0.s8 %v6657
        %v6659 = vlaneseq
        %v6660 = vshrl.u32 %v6659, 7
        %v6661 = vsub.s32 %v6658, %v6660
        %v6662 = vrot.slane %v6634, %v6661
        %v6663 = vcombine.high %v6641, %v6641
        %v6664 = vcombine.high %v6648, %v6648
        %v6665 = vcombine.high %v6655, %v6655
        %v6666 = vcombine.high %v6662, %v6662
        %v6667 = vcombine.high %v6490, %v6490
        %v6669 = vunpack.c.l.s4 1966171168
        %v6670 = vunpack.c.0.s8 %v6669
        %v6671 = vlaneseq
        %v6672 = vshrl.u32 %v6671, 7
        %v6673 = vsub.s32 %v6670, %v6672
        %v6674 = vrot.slane %v6490, %v6673
        %v6676 = vunpack.c.l.s4 1966171168
        %v6677 = vunpack.c.0.s8 %v6676
        %v6678 = vlaneseq
        %v6679 = vshrl.u32 %v6678, 7
        %v6680 = vsub.s32 %v6677, %v6679
        %v6681 = vrot.slane %v6667, %v6680
        %v6682 = vcombine.high %v6674, %v6674
        %v6683 = vcombine.high %v6681, %v6681
        %v6685 = vunpack.c.l.s4 1966171168
        %v6686 = vunpack.c.0.s8 %v6685
        %v6687 = vlaneseq
        %v6688 = vshrl.u32 %v6687, 7
        %v6689 = vsub.s32 %v6686, %v6688
        %v6690 = vrot.slane %v6674, %v6689
        %v6692 = vunpack.c.l.s4 1966171168
        %v6693 = vunpack.c.0.s8 %v6692
        %v6694 = vlaneseq
        %v6695 = vshrl.u32 %v6694, 7
        %v6696 = vsub.s32 %v6693, %v6695
        %v6697 = vrot.slane %v6681, %v6696
        %v6699 = vunpack.c.l.s4 1966171168
        %v6700 = vunpack.c.0.s8 %v6699
        %v6701 = vlaneseq
        %v6702 = vshrl.u32 %v6701, 7
        %v6703 = vsub.s32 %v6700, %v6702
        %v6704 = vrot.slane %v6682, %v6703
        %v6706 = vunpack.c.l.s4 1966171168
        %v6707 = vunpack.c.0.s8 %v6706
        %v6708 = vlaneseq
        %v6709 = vshrl.u32 %v6708, 7
        %v6710 = vsub.s32 %v6707, %v6709
        %v6711 = vrot.slane %v6683, %v6710
        %v6712 = vcombine.high %v6690, %v6690
        %v6713 = vcombine.high %v6697, %v6697
        %v6714 = vcombine.high %v6704, %v6704
        %v6715 = vcombine.high %v6711, %v6711
        %v6717 = vunpack.c.l.s4 1966171168
        %v6718 = vunpack.c.0.s8 %v6717
        %v6719 = vlaneseq
        %v6720 = vshrl.u32 %v6719, 7
        %v6721 = vsub.s32 %v6718, %v6720
        %v6722 = vrot.slane %v6495, %v6721
        %v6724 = vunpack.c.l.s4 1966171168
        %v6725 = vunpack.c.0.s8 %v6724
        %v6726 = vlaneseq
        %v6727 = vshrl.u32 %v6726, 7
        %v6728 = vsub.s32 %v6725, %v6727
        %v6729 = vrot.slane %v6722, %v6728
        %v6730 = vcombine.low %v6529, %v6543
        %v6731 = vcombine.low %v6551, %v6553
        %v6732 = vcombine.low %v6536, %v6550
        %v6733 = vcombine.low %v6552, %v6554
        %v6735 = vunpack.c.l.s4 1966171168
        %v6736 = vunpack.c.0.s8 %v6735
        %v6737 = vlaneseq
        %v6738 = vshrl.u32 %v6737, 7
        %v6739 = vsub.s32 %v6736, %v6738
        %v6740 = vrot.slane %v6730, %v6739
        %v6742 = vunpack.c.l.s4 1966171168
        %v6743 = vunpack.c.0.s8 %v6742
        %v6744 = vlaneseq
        %v6745 = vshrl.u32 %v6744, 7
        %v6746 = vsub.s32 %v6743, %v6745
        %v6747 = vrot.slane %v6731, %v6746
        %v6749 = vunpack.c.l.s4 1966171168
        %v6750 = vunpack.c.0.s8 %v6749
        %v6751 = vlaneseq
        %v6752 = vshrl.u32 %v6751, 7
        %v6753 = vsub.s32 %v6750, %v6752
        %v6754 = vrot.slane %v6732, %v6753
        %v6756 = vunpack.c.l.s4 1966171168
        %v6757 = vunpack.c.0.s8 %v6756
        %v6758 = vlaneseq
        %v6759 = vshrl.u32 %v6758, 7
        %v6760 = vsub.s32 %v6757, %v6759
        %v6761 = vrot.slane %v6733, %v6760
        %v6762 = vcombine.low %v6740, %v6747
        %v6763 = vcombine.low %v6754, %v6761
        %v6765 = vunpack.c.l.s4 1966171168
        %v6766 = vunpack.c.0.s8 %v6765
        %v6767 = vlaneseq
        %v6768 = vshrl.u32 %v6767, 7
        %v6769 = vsub.s32 %v6766, %v6768
        %v6770 = vrot.slane %v6762, %v6769
        %v6772 = vunpack.c.l.s4 1966171168
        %v6773 = vunpack.c.0.s8 %v6772
        %v6774 = vlaneseq
        %v6775 = vshrl.u32 %v6774, 7
        %v6776 = vsub.s32 %v6773, %v6775
        %v6777 = vrot.slane %v6763, %v6776
        %v6778 = vcombine.low %v6770, %v6777
        %v6779 = vcombine.low %v6578, %v6592
        %v6780 = vcombine.low %v6600, %v6602
        %v6781 = vcombine.low %v6585, %v6599
        %v6782 = vcombine.low %v6601, %v6603
        %v6784 = vunpack.c.l.s4 1966171168
        %v6785 = vunpack.c.0.s8 %v6784
        %v6786 = vlaneseq
        %v6787 = vshrl.u32 %v6786, 7
        %v6788 = vsub.s32 %v6785, %v6787
        %v6789 = vrot.slane %v6779, %v6788
        %v6791 = vunpack.c.l.s4 1966171168
        %v6792 = vunpack.c.0.s8 %v6791
        %v6793 = vlaneseq
        %v6794 = vshrl.u32 %v6793, 7
        %v6795 = vsub.s32 %v6792, %v6794
        %v6796 = vrot.slane %v6780, %v6795
        %v6798 = vunpack.c.l.s4 1966171168
        %v6799 = vunpack.c.0.s8 %v6798
        %v6800 = vlaneseq
        %v6801 = vshrl.u32 %v6800, 7
        %v6802 = vsub.s32 %v6799, %v6801
        %v6803 = vrot.slane %v6781, %v6802
        %v6805 = vunpack.c.l.s4 1966171168
        %v6806 = vunpack.c.0.s8 %v6805
        %v6807 = vlaneseq
        %v6808 = vshrl.u32 %v6807, 7
        %v6809 = vsub.s32 %v6806, %v6808
        %v6810 = vrot.slane %v6782, %v6809
        %v6811 = vcombine.low %v6789, %v6796
        %v6812 = vcombine.low %v6803, %v6810
        %v6814 = vunpack.c.l.s4 1966171168
        %v6815 = vunpack.c.0.s8 %v6814
        %v6816 = vlaneseq
        %v6817 = vshrl.u32 %v6816, 7
        %v6818 = vsub.s32 %v6815, %v6817
        %v6819 = vrot.slane %v6811, %v6818
        %v6821 = vunpack.c.l.s4 1966171168
        %v6822 = vunpack.c.0.s8 %v6821
        %v6823 = vlaneseq
        %v6824 = vshrl.u32 %v6823, 7
        %v6825 = vsub.s32 %v6822, %v6824
        %v6826 = vrot.slane %v6812, %v6825
        %v6827 = vcombine.low %v6819, %v6826
        %v6828 = vcombine.low %v6617, %v6641
        %v6829 = vcombine.low %v6655, %v6663
        %v6830 = vcombine.low %v6665, %v6648
        %v6831 = vcombine.low %v6662, %v6664
        %v6833 = vunpack.c.l.s4 1966171168
        %v6834 = vunpack.c.0.s8 %v6833
        %v6835 = vlaneseq
        %v6836 = vshrl.u32 %v6835, 7
        %v6837 = vsub.s32 %v6834, %v6836
        %v6838 = vrot.slane %v6828, %v6837
        %v6840 = vunpack.c.l.s4 1966171168
        %v6841 = vunpack.c.0.s8 %v6840
        %v6842 = vlaneseq
        %v6843 = vshrl.u32 %v6842, 7
        %v6844 = vsub.s32 %v6841, %v6843
        %v6845 = vrot.slane %v6829, %v6844
        %v6847 = vunpack.c.l.s4 1966171168
        %v6848 = vunpack.c.0.s8 %v6847
        %v6849 = vlaneseq
        %v6850 = vshrl.u32 %v6849, 7
        %v6851 = vsub.s32 %v6848, %v6850
        %v6852 = vrot.slane %v6830, %v6851
        %v6854 = vunpack.c.l.s4 1966171168
        %v6855 = vunpack.c.0.s8 %v6854
        %v6856 = vlaneseq
        %v6857 = vshrl.u32 %v6856, 7
        %v6858 = vsub.s32 %v6855, %v6857
        %v6859 = vrot.slane %v6831, %v6858
        %v6860 = vcombine.low %v6838, %v6845
        %v6861 = vcombine.low %v6852, %v6859
        %v6863 = vunpack.c.l.s4 1966171168
        %v6864 = vunpack.c.0.s8 %v6863
        %v6865 = vlaneseq
        %v6866 = vshrl.u32 %v6865, 7
        %v6867 = vsub.s32 %v6864, %v6866
        %v6868 = vrot.slane %v6860, %v6867
        %v6870 = vunpack.c.l.s4 1966171168
        %v6871 = vunpack.c.0.s8 %v6870
        %v6872 = vlaneseq
        %v6873 = vshrl.u32 %v6872, 7
        %v6874 = vsub.s32 %v6871, %v6873
        %v6875 = vrot.slane %v6861, %v6874
        %v6876 = vcombine.low %v6868, %v6875
        %v6877 = vcombine.low %v6666, %v6690
        %v6878 = vcombine.low %v6704, %v6712
        %v6879 = vcombine.low %v6714, %v6697
        %v6880 = vcombine.low %v6711, %v6713
        %v6882 = vunpack.c.l.s4 1966171168
        %v6883 = vunpack.c.0.s8 %v6882
        %v6884 = vlaneseq
        %v6885 = vshrl.u32 %v6884, 7
        %v6886 = vsub.s32 %v6883, %v6885
        %v6887 = vrot.slane %v6877, %v6886
        %v6889 = vunpack.c.l.s4 1966171168
        %v6890 = vunpack.c.0.s8 %v6889
        %v6891 = vlaneseq
        %v6892 = vshrl.u32 %v6891, 7
        %v6893 = vsub.s32 %v6890, %v6892
        %v6894 = vrot.slane %v6878, %v6893
        %v6896 = vunpack.c.l.s4 1966171168
        %v6897 = vunpack.c.0.s8 %v6896
        %v6898 = vlaneseq
        %v6899 = vshrl.u32 %v6898, 7
        %v6900 = vsub.s32 %v6897, %v6899
        %v6901 = vrot.slane %v6879, %v6900
        %v6903 = vunpack.c.l.s4 1966171168
        %v6904 = vunpack.c.0.s8 %v6903
        %v6905 = vlaneseq
        %v6906 = vshrl.u32 %v6905, 7
        %v6907 = vsub.s32 %v6904, %v6906
        %v6908 = vrot.slane %v6880, %v6907
        %v6909 = vcombine.low %v6887, %v6894
        %v6910 = vcombine.low %v6901, %v6908
        %v6912 = vunpack.c.l.s4 1966171168
        %v6913 = vunpack.c.0.s8 %v6912
        %v6914 = vlaneseq
        %v6915 = vshrl.u32 %v6914, 7
        %v6916 = vsub.s32 %v6913, %v6915
        %v6917 = vrot.slane %v6909, %v6916
        %v6919 = vunpack.c.l.s4 1966171168
        %v6920 = vunpack.c.0.s8 %v6919
        %v6921 = vlaneseq
        %v6922 = vshrl.u32 %v6921, 7
        %v6923 = vsub.s32 %v6920, %v6922
        %v6924 = vrot.slane %v6910, %v6923
        %v6925 = vcombine.low %v6917, %v6924
        %v6926 = vcombine.low %v6715, %v6729
        %v6928 = vunpack.c.l.s4 1966171168
        %v6929 = vunpack.c.0.s8 %v6928
        %v6930 = vlaneseq
        %v6931 = vshrl.u32 %v6930, 7
        %v6932 = vsub.s32 %v6929, %v6931
        %v6933 = vrot.slane %v6926, %v6932
        %v6935 = vunpack.c.l.s4 1966171168
        %v6936 = vunpack.c.0.s8 %v6935
        %v6937 = vlaneseq
        %v6938 = vshrl.u32 %v6937, 7
        %v6939 = vsub.s32 %v6936, %v6938
        %v6940 = vrot.slane %v6933, %v6939
        %6941 = vrot.lane.b32.xlu0 %v6778, 48
        %v6942 = vpop.permute.xlu0 %6941
        %6943 = vrot.lane.b32.xlu0 %v6827, 48
        %v6944 = vpop.permute.xlu0 %6943
        %6945 = vrot.lane.b32.xlu0 %v6876, 48
        %v6946 = vpop.permute.xlu0 %6945
        %6947 = vrot.lane.b32.xlu0 %v6925, 48
        %v6948 = vpop.permute.xlu0 %6947
        %6949 = vrot.lane.b32.xlu0 %v6940, 48
        %v6950 = vpop.permute.xlu0 %6949
        %vm6956 = vcmask 523648
        %6957 = vst.msk [vmem:[#allocation2] sm:$0xff] %vm6956, %v6942
        %6958 = vst.msk [vmem:[#allocation2 + $0x8] sm:$0xff] %vm6956, %v6944
        %6959 = vst.msk [vmem:[#allocation2 + $0x10] sm:$0xff] %vm6956, %v6946
        %6960 = vst.msk [vmem:[#allocation2 + $0x18] sm:$0xff] %vm6956, %v6948
        %vm6961 = vcmask 517504
        %6962 = vst.msk [vmem:[#allocation2 + $0x20] sm:$0x3] %vm6961, %v6950
        %v6963 = vld [vmem:[#allocation2] sm:$0xff]
        %v6964 = vld [vmem:[#allocation2 + $0x8] sm:$0xff]
        %v6965 = vld [vmem:[#allocation2 + $0x10] sm:$0xff]
        %v6966 = vld [vmem:[#allocation2 + $0x18] sm:$0xff]
        %v6967 = vld [vmem:[#allocation2 + $0x20] sm:$0x3]
        %v6968 = vpack.c.bf16 %v6964, %v6963
        %v6969 = vpack.c.bf16 %v6966, %v6965
        %v6970 = vpack.c.bf16 %v6967, %v6967
        %v6971 = vld [vmem:[%s866] sm:$0xf]
        %v6972 = vld [vmem:[%s866 + $0x4] sm:$0xf]
        %v6973 = vld [vmem:[%s866 + $0x8] sm:$0xf]
        %v6974 = vld [vmem:[%s866 + $0xc] sm:$0xf]
        %v6975 = vld [vmem:[%s866 + $0x10] sm:$0xf]
        %v6976 = vld [vmem:[%s866 + $0x14] sm:$0xf]
        %v6977 = vld [vmem:[%s866 + $0x18] sm:$0xf]
        %v6978 = vld [vmem:[%s866 + $0x1c] sm:$0xf]
        %v6979 = vld [vmem:[%s874] sm:$0x1]
        %v6981 = vlaneseq
        %v6982 = vshrl.u32 %v6981, 7
        %v6983 = vsub.s32 0, %v6982
        %v6984 = vrot.slane %v6979, %v6983
        %v6994 = vunpack.c.l.b16 %v6971
        %v6995 = vunpack.c.l.b16 %v6972
        %v6996 = vunpack.c.l.b16 %v6973
        %v6997 = vunpack.c.l.b16 %v6974
        %v6998 = vunpack.c.l.b16 %v6975
        %v6999 = vunpack.c.l.b16 %v6976
        %v7000 = vunpack.c.l.b16 %v6977
        %v7001 = vunpack.c.l.b16 %v6978
        %v7002 = vpack.c.b16 %v6995, %v6994
        %v7003 = vpack.c.b16 %v6997, %v6996
        %v7004 = vpack.c.b16 %v6999, %v6998
        %v7005 = vpack.c.b16 %v7001, %v7000
        %v7011 = vsel %vm1562, %v6968, 0
        %v7014 = vsel %vm1562, %v6969, 0
        %v7017 = vsel %vm1562, %v6970, 0
        %7019 = vmatprep.subr.bf16.mxu0 0
        %7020 = vmatpush1.bf16.msra.mxu0 %v7002
        %7021 = vmatprep.subr.bf16.mxu0 0
        %7022 = vmatpush1.bf16.msra.mxu0 %v7003
        %7023 = vmatprep.subr.bf16.mxu0 0
        %7024 = vmatpush1.bf16.msra.mxu0 %v7004
        %7025 = vmatprep.subr.bf16.mxu0 0
        %7026 = vmatpush1.bf16.msra.mxu0 %v7005
        %7027 = vmatprep.subr.bf16.mxu0 0
        %7028 = vmatpush1.bf16.msra.mxu0 0
        %7029 = vmatprep.subr.bf16.mxu0 0
        %7030 = vmatpush1.bf16.msra.mxu0 0
        %7031 = vmatprep.subr.bf16.mxu0 0
        %7032 = vmatpush1.bf16.msra.mxu0 0
        %7033 = vmatprep.subr.bf16.mxu0 0
        %7034 = vmatpush1.bf16.msra.mxu0 0
        %7035 = vmatprep.subr.bf16.mxu0 0
        %7036 = vmatpush1.bf16.msra.mxu0 0
        %7037 = vmatprep.subr.bf16.mxu0 0
        %7038 = vmatpush1.bf16.msra.mxu0 0
        %7039 = vmatprep.subr.bf16.mxu0 0
        %7040 = vmatpush1.bf16.msra.mxu0 0
        %7041 = vmatprep.subr.bf16.mxu0 0
        %7042 = vmatpush1.bf16.msra.mxu0 0
        %7043 = vmatprep.subr.bf16.mxu0 0
        %7044 = vmatpush1.bf16.msra.mxu0 0
        %7045 = vmatprep.subr.bf16.mxu0 0
        %7046 = vmatpush1.bf16.msra.mxu0 0
        %7047 = vmatprep.subr.bf16.mxu0 0
        %7048 = vmatpush1.bf16.msra.mxu0 0
        %7049 = vmatprep.subr.bf16.mxu0 0
        %7050 = vmatpush1.bf16.msra.mxu0 0
        %7051 = vmatprep.mubr.bf16.mxu0 0
        %7052 = vmatmul.mubr.bf16.gmra.mrb[0].mxu0 %v7011
        %v7053 = vpop.f32.mrb[0].mxu0
        %v7054 = vadd.f32 %v6984, %v7053
        %v7055 = vpop.f32.mrb[0].mxu0
        %v7056 = vpop.f32.mrb[0].mxu0
        %v7057 = vadd.f32 %v6984, %v7056
        %v7058 = vpop.f32.mrb[0].mxu0
        %7059 = vmatprep.mubr.bf16.mxu0 0
        %7060 = vmatmul.mubr.bf16.gmra.mrb[0].mxu0 %v7014
        %v7061 = vpop.f32.mrb[0].mxu0
        %v7062 = vadd.f32 %v6984, %v7061
        %v7063 = vpop.f32.mrb[0].mxu0
        %v7064 = vpop.f32.mrb[0].mxu0
        %v7065 = vadd.f32 %v6984, %v7064
        %v7066 = vpop.f32.mrb[0].mxu0
        %7067 = vmatprep.mubr.bf16.mxu0 0
        %7068 = vmatmul.mubr.bf16.gmra.mrb[0].mxu0 %v7017
        %v7069 = vpop.f32.mrb[0].mxu0
        %v7070 = vadd.f32 %v6984, %v7069
        %v7071 = vpop.f32.mrb[0].mxu0
        %v7072 = vpop.f32.mrb[0].mxu0
        %v7073 = vpop.f32.mrb[0].mxu0
        %7074 = vdwg.mxu0
        %v7080 = vcombine.high %v7054, %v7054
        %v7082 = vunpack.c.l.s4 1966171168
        %v7083 = vunpack.c.0.s8 %v7082
        %v7084 = vlaneseq
        %v7085 = vshrl.u32 %v7084, 7
        %v7086 = vsub.s32 %v7083, %v7085
        %v7087 = vrot.slane %v7054, %v7086
        %v7089 = vunpack.c.l.s4 1966171168
        %v7090 = vunpack.c.0.s8 %v7089
        %v7091 = vlaneseq
        %v7092 = vshrl.u32 %v7091, 7
        %v7093 = vsub.s32 %v7090, %v7092
        %v7094 = vrot.slane %v7080, %v7093
        %v7095 = vcombine.high %v7087, %v7087
        %v7096 = vcombine.high %v7094, %v7094
        %v7098 = vunpack.c.l.s4 1966171168
        %v7099 = vunpack.c.0.s8 %v7098
        %v7100 = vlaneseq
        %v7101 = vshrl.u32 %v7100, 7
        %v7102 = vsub.s32 %v7099, %v7101
        %v7103 = vrot.slane %v7087, %v7102
        %v7105 = vunpack.c.l.s4 1966171168
        %v7106 = vunpack.c.0.s8 %v7105
        %v7107 = vlaneseq
        %v7108 = vshrl.u32 %v7107, 7
        %v7109 = vsub.s32 %v7106, %v7108
        %v7110 = vrot.slane %v7094, %v7109
        %v7112 = vunpack.c.l.s4 1966171168
        %v7113 = vunpack.c.0.s8 %v7112
        %v7114 = vlaneseq
        %v7115 = vshrl.u32 %v7114, 7
        %v7116 = vsub.s32 %v7113, %v7115
        %v7117 = vrot.slane %v7095, %v7116
        %v7119 = vunpack.c.l.s4 1966171168
        %v7120 = vunpack.c.0.s8 %v7119
        %v7121 = vlaneseq
        %v7122 = vshrl.u32 %v7121, 7
        %v7123 = vsub.s32 %v7120, %v7122
        %v7124 = vrot.slane %v7096, %v7123
        %v7125 = vcombine.high %v7103, %v7103
        %v7126 = vcombine.high %v7110, %v7110
        %v7127 = vcombine.high %v7117, %v7117
        %v7128 = vcombine.high %v7124, %v7124
        %v7129 = vcombine.high %v7057, %v7057
        %v7131 = vunpack.c.l.s4 1966171168
        %v7132 = vunpack.c.0.s8 %v7131
        %v7133 = vlaneseq
        %v7134 = vshrl.u32 %v7133, 7
        %v7135 = vsub.s32 %v7132, %v7134
        %v7136 = vrot.slane %v7057, %v7135
        %v7138 = vunpack.c.l.s4 1966171168
        %v7139 = vunpack.c.0.s8 %v7138
        %v7140 = vlaneseq
        %v7141 = vshrl.u32 %v7140, 7
        %v7142 = vsub.s32 %v7139, %v7141
        %v7143 = vrot.slane %v7129, %v7142
        %v7144 = vcombine.high %v7136, %v7136
        %v7145 = vcombine.high %v7143, %v7143
        %v7147 = vunpack.c.l.s4 1966171168
        %v7148 = vunpack.c.0.s8 %v7147
        %v7149 = vlaneseq
        %v7150 = vshrl.u32 %v7149, 7
        %v7151 = vsub.s32 %v7148, %v7150
        %v7152 = vrot.slane %v7136, %v7151
        %v7154 = vunpack.c.l.s4 1966171168
        %v7155 = vunpack.c.0.s8 %v7154
        %v7156 = vlaneseq
        %v7157 = vshrl.u32 %v7156, 7
        %v7158 = vsub.s32 %v7155, %v7157
        %v7159 = vrot.slane %v7143, %v7158
        %v7161 = vunpack.c.l.s4 1966171168
        %v7162 = vunpack.c.0.s8 %v7161
        %v7163 = vlaneseq
        %v7164 = vshrl.u32 %v7163, 7
        %v7165 = vsub.s32 %v7162, %v7164
        %v7166 = vrot.slane %v7144, %v7165
        %v7168 = vunpack.c.l.s4 1966171168
        %v7169 = vunpack.c.0.s8 %v7168
        %v7170 = vlaneseq
        %v7171 = vshrl.u32 %v7170, 7
        %v7172 = vsub.s32 %v7169, %v7171
        %v7173 = vrot.slane %v7145, %v7172
        %v7174 = vcombine.high %v7152, %v7152
        %v7175 = vcombine.high %v7159, %v7159
        %v7176 = vcombine.high %v7166, %v7166
        %v7177 = vcombine.high %v7173, %v7173
        %v7178 = vcombine.high %v7062, %v7062
        %v7180 = vunpack.c.l.s4 1966171168
        %v7181 = vunpack.c.0.s8 %v7180
        %v7182 = vlaneseq
        %v7183 = vshrl.u32 %v7182, 7
        %v7184 = vsub.s32 %v7181, %v7183
        %v7185 = vrot.slane %v7062, %v7184
        %v7187 = vunpack.c.l.s4 1966171168
        %v7188 = vunpack.c.0.s8 %v7187
        %v7189 = vlaneseq
        %v7190 = vshrl.u32 %v7189, 7
        %v7191 = vsub.s32 %v7188, %v7190
        %v7192 = vrot.slane %v7178, %v7191
        %v7193 = vcombine.high %v7185, %v7185
        %v7194 = vcombine.high %v7192, %v7192
        %v7196 = vunpack.c.l.s4 1966171168
        %v7197 = vunpack.c.0.s8 %v7196
        %v7198 = vlaneseq
        %v7199 = vshrl.u32 %v7198, 7
        %v7200 = vsub.s32 %v7197, %v7199
        %v7201 = vrot.slane %v7185, %v7200
        %v7203 = vunpack.c.l.s4 1966171168
        %v7204 = vunpack.c.0.s8 %v7203
        %v7205 = vlaneseq
        %v7206 = vshrl.u32 %v7205, 7
        %v7207 = vsub.s32 %v7204, %v7206
        %v7208 = vrot.slane %v7192, %v7207
        %v7210 = vunpack.c.l.s4 1966171168
        %v7211 = vunpack.c.0.s8 %v7210
        %v7212 = vlaneseq
        %v7213 = vshrl.u32 %v7212, 7
        %v7214 = vsub.s32 %v7211, %v7213
        %v7215 = vrot.slane %v7193, %v7214
        %v7217 = vunpack.c.l.s4 1966171168
        %v7218 = vunpack.c.0.s8 %v7217
        %v7219 = vlaneseq
        %v7220 = vshrl.u32 %v7219, 7
        %v7221 = vsub.s32 %v7218, %v7220
        %v7222 = vrot.slane %v7194, %v7221
        %v7223 = vcombine.high %v7201, %v7201
        %v7224 = vcombine.high %v7208, %v7208
        %v7225 = vcombine.high %v7215, %v7215
        %v7226 = vcombine.high %v7222, %v7222
        %v7227 = vcombine.high %v7065, %v7065
        %v7229 = vunpack.c.l.s4 1966171168
        %v7230 = vunpack.c.0.s8 %v7229
        %v7231 = vlaneseq
        %v7232 = vshrl.u32 %v7231, 7
        %v7233 = vsub.s32 %v7230, %v7232
        %v7234 = vrot.slane %v7065, %v7233
        %v7236 = vunpack.c.l.s4 1966171168
        %v7237 = vunpack.c.0.s8 %v7236
        %v7238 = vlaneseq
        %v7239 = vshrl.u32 %v7238, 7
        %v7240 = vsub.s32 %v7237, %v7239
        %v7241 = vrot.slane %v7227, %v7240
        %v7242 = vcombine.high %v7234, %v7234
        %v7243 = vcombine.high %v7241, %v7241
        %v7245 = vunpack.c.l.s4 1966171168
        %v7246 = vunpack.c.0.s8 %v7245
        %v7247 = vlaneseq
        %v7248 = vshrl.u32 %v7247, 7
        %v7249 = vsub.s32 %v7246, %v7248
        %v7250 = vrot.slane %v7234, %v7249
        %v7252 = vunpack.c.l.s4 1966171168
        %v7253 = vunpack.c.0.s8 %v7252
        %v7254 = vlaneseq
        %v7255 = vshrl.u32 %v7254, 7
        %v7256 = vsub.s32 %v7253, %v7255
        %v7257 = vrot.slane %v7241, %v7256
        %v7259 = vunpack.c.l.s4 1966171168
        %v7260 = vunpack.c.0.s8 %v7259
        %v7261 = vlaneseq
        %v7262 = vshrl.u32 %v7261, 7
        %v7263 = vsub.s32 %v7260, %v7262
        %v7264 = vrot.slane %v7242, %v7263
        %v7266 = vunpack.c.l.s4 1966171168
        %v7267 = vunpack.c.0.s8 %v7266
        %v7268 = vlaneseq
        %v7269 = vshrl.u32 %v7268, 7
        %v7270 = vsub.s32 %v7267, %v7269
        %v7271 = vrot.slane %v7243, %v7270
        %v7272 = vcombine.high %v7250, %v7250
        %v7273 = vcombine.high %v7257, %v7257
        %v7274 = vcombine.high %v7264, %v7264
        %v7275 = vcombine.high %v7271, %v7271
        %v7277 = vunpack.c.l.s4 1966171168
        %v7278 = vunpack.c.0.s8 %v7277
        %v7279 = vlaneseq
        %v7280 = vshrl.u32 %v7279, 7
        %v7281 = vsub.s32 %v7278, %v7280
        %v7282 = vrot.slane %v7070, %v7281
        %v7283 = vcombine.high %v7282, %v7282
        %v7285 = vunpack.c.l.s4 1966171168
        %v7286 = vunpack.c.0.s8 %v7285
        %v7287 = vlaneseq
        %v7288 = vshrl.u32 %v7287, 7
        %v7289 = vsub.s32 %v7286, %v7288
        %v7290 = vrot.slane %v7282, %v7289
        %v7292 = vunpack.c.l.s4 1966171168
        %v7293 = vunpack.c.0.s8 %v7292
        %v7294 = vlaneseq
        %v7295 = vshrl.u32 %v7294, 7
        %v7296 = vsub.s32 %v7293, %v7295
        %v7297 = vrot.slane %v7283, %v7296
        %v7332 = vadd.f32 %v1109, %v7103
        %v7333 = vadd.f32 %v1123, %v7117
        %v7334 = vadd.f32 %v1131, %v7125
        %v7335 = vadd.f32 %v1133, %v7127
        %v7336 = vadd.f32 %v1116, %v7110
        %v7337 = vadd.f32 %v1130, %v7124
        %v7338 = vadd.f32 %v1132, %v7126
        %v7339 = vadd.f32 %v1134, %v7128
        %v7340 = vadd.f32 %v1158, %v7152
        %v7341 = vadd.f32 %v1172, %v7166
        %v7342 = vadd.f32 %v1180, %v7174
        %v7343 = vadd.f32 %v1182, %v7176
        %v7344 = vadd.f32 %v1165, %v7159
        %v7345 = vadd.f32 %v1179, %v7173
        %v7346 = vadd.f32 %v1181, %v7175
        %v7347 = vadd.f32 %v1183, %v7177
        %v7348 = vadd.f32 %v1197, %v7201
        %v7349 = vadd.f32 %v1221, %v7215
        %v7350 = vadd.f32 %v1235, %v7223
        %v7351 = vadd.f32 %v1243, %v7225
        %v7352 = vadd.f32 %v1245, %v7208
        %v7353 = vadd.f32 %v1228, %v7222
        %v7354 = vadd.f32 %v1242, %v7224
        %v7355 = vadd.f32 %v1244, %v7226
        %v7356 = vadd.f32 %v1246, %v7250
        %v7357 = vadd.f32 %v1270, %v7264
        %v7358 = vadd.f32 %v1284, %v7272
        %v7359 = vadd.f32 %v1292, %v7274
        %v7360 = vadd.f32 %v1294, %v7257
        %v7361 = vadd.f32 %v1277, %v7271
        %v7362 = vadd.f32 %v1291, %v7273
        %v7363 = vadd.f32 %v1293, %v7275
        %v7364 = vadd.f32 %v1295, %v7290
        %v7365 = vadd.f32 %v1309, %v7297
        %v7366 = vld [vmem:[%s882] sm:$0x1]
        %v7367 = vld [vmem:[%s890] sm:$0x1]
        %v7402 = vcombine.low %v7332, %v7333
        %v7403 = vcombine.low %v7334, %v7335
        %v7404 = vcombine.low %v7336, %v7337
        %v7405 = vcombine.low %v7338, %v7339
        %v7407 = vunpack.c.l.s4 1966171168
        %v7408 = vunpack.c.0.s8 %v7407
        %v7409 = vlaneseq
        %v7410 = vshrl.u32 %v7409, 7
        %v7411 = vsub.s32 %v7408, %v7410
        %v7412 = vrot.slane %v7402, %v7411
        %v7414 = vunpack.c.l.s4 1966171168
        %v7415 = vunpack.c.0.s8 %v7414
        %v7416 = vlaneseq
        %v7417 = vshrl.u32 %v7416, 7
        %v7418 = vsub.s32 %v7415, %v7417
        %v7419 = vrot.slane %v7403, %v7418
        %v7421 = vunpack.c.l.s4 1966171168
        %v7422 = vunpack.c.0.s8 %v7421
        %v7423 = vlaneseq
        %v7424 = vshrl.u32 %v7423, 7
        %v7425 = vsub.s32 %v7422, %v7424
        %v7426 = vrot.slane %v7404, %v7425
        %v7428 = vunpack.c.l.s4 1966171168
        %v7429 = vunpack.c.0.s8 %v7428
        %v7430 = vlaneseq
        %v7431 = vshrl.u32 %v7430, 7
        %v7432 = vsub.s32 %v7429, %v7431
        %v7433 = vrot.slane %v7405, %v7432
        %v7434 = vcombine.low %v7412, %v7419
        %v7435 = vcombine.low %v7426, %v7433
        %v7437 = vunpack.c.l.s4 1966171168
        %v7438 = vunpack.c.0.s8 %v7437
        %v7439 = vlaneseq
        %v7440 = vshrl.u32 %v7439, 7
        %v7441 = vsub.s32 %v7438, %v7440
        %v7442 = vrot.slane %v7434, %v7441
        %v7444 = vunpack.c.l.s4 1966171168
        %v7445 = vunpack.c.0.s8 %v7444
        %v7446 = vlaneseq
        %v7447 = vshrl.u32 %v7446, 7
        %v7448 = vsub.s32 %v7445, %v7447
        %v7449 = vrot.slane %v7435, %v7448
        %v7450 = vcombine.low %v7442, %v7449
        %v7451 = vcombine.low %v7340, %v7341
        %v7452 = vcombine.low %v7342, %v7343
        %v7453 = vcombine.low %v7344, %v7345
        %v7454 = vcombine.low %v7346, %v7347
        %v7456 = vunpack.c.l.s4 1966171168
        %v7457 = vunpack.c.0.s8 %v7456
        %v7458 = vlaneseq
        %v7459 = vshrl.u32 %v7458, 7
        %v7460 = vsub.s32 %v7457, %v7459
        %v7461 = vrot.slane %v7451, %v7460
        %v7463 = vunpack.c.l.s4 1966171168
        %v7464 = vunpack.c.0.s8 %v7463
        %v7465 = vlaneseq
        %v7466 = vshrl.u32 %v7465, 7
        %v7467 = vsub.s32 %v7464, %v7466
        %v7468 = vrot.slane %v7452, %v7467
        %v7470 = vunpack.c.l.s4 1966171168
        %v7471 = vunpack.c.0.s8 %v7470
        %v7472 = vlaneseq
        %v7473 = vshrl.u32 %v7472, 7
        %v7474 = vsub.s32 %v7471, %v7473
        %v7475 = vrot.slane %v7453, %v7474
        %v7477 = vunpack.c.l.s4 1966171168
        %v7478 = vunpack.c.0.s8 %v7477
        %v7479 = vlaneseq
        %v7480 = vshrl.u32 %v7479, 7
        %v7481 = vsub.s32 %v7478, %v7480
        %v7482 = vrot.slane %v7454, %v7481
        %v7483 = vcombine.low %v7461, %v7468
        %v7484 = vcombine.low %v7475, %v7482
        %v7486 = vunpack.c.l.s4 1966171168
        %v7487 = vunpack.c.0.s8 %v7486
        %v7488 = vlaneseq
        %v7489 = vshrl.u32 %v7488, 7
        %v7490 = vsub.s32 %v7487, %v7489
        %v7491 = vrot.slane %v7483, %v7490
        %v7493 = vunpack.c.l.s4 1966171168
        %v7494 = vunpack.c.0.s8 %v7493
        %v7495 = vlaneseq
        %v7496 = vshrl.u32 %v7495, 7
        %v7497 = vsub.s32 %v7494, %v7496
        %v7498 = vrot.slane %v7484, %v7497
        %v7499 = vcombine.low %v7491, %v7498
        %v7500 = vcombine.low %v7348, %v7349
        %v7501 = vcombine.low %v7350, %v7351
        %v7502 = vcombine.low %v7352, %v7353
        %v7503 = vcombine.low %v7354, %v7355
        %v7505 = vunpack.c.l.s4 1966171168
        %v7506 = vunpack.c.0.s8 %v7505
        %v7507 = vlaneseq
        %v7508 = vshrl.u32 %v7507, 7
        %v7509 = vsub.s32 %v7506, %v7508
        %v7510 = vrot.slane %v7500, %v7509
        %v7512 = vunpack.c.l.s4 1966171168
        %v7513 = vunpack.c.0.s8 %v7512
        %v7514 = vlaneseq
        %v7515 = vshrl.u32 %v7514, 7
        %v7516 = vsub.s32 %v7513, %v7515
        %v7517 = vrot.slane %v7501, %v7516
        %v7519 = vunpack.c.l.s4 1966171168
        %v7520 = vunpack.c.0.s8 %v7519
        %v7521 = vlaneseq
        %v7522 = vshrl.u32 %v7521, 7
        %v7523 = vsub.s32 %v7520, %v7522
        %v7524 = vrot.slane %v7502, %v7523
        %v7526 = vunpack.c.l.s4 1966171168
        %v7527 = vunpack.c.0.s8 %v7526
        %v7528 = vlaneseq
        %v7529 = vshrl.u32 %v7528, 7
        %v7530 = vsub.s32 %v7527, %v7529
        %v7531 = vrot.slane %v7503, %v7530
        %v7532 = vcombine.low %v7510, %v7517
        %v7533 = vcombine.low %v7524, %v7531
        %v7535 = vunpack.c.l.s4 1966171168
        %v7536 = vunpack.c.0.s8 %v7535
        %v7537 = vlaneseq
        %v7538 = vshrl.u32 %v7537, 7
        %v7539 = vsub.s32 %v7536, %v7538
        %v7540 = vrot.slane %v7532, %v7539
        %v7542 = vunpack.c.l.s4 1966171168
        %v7543 = vunpack.c.0.s8 %v7542
        %v7544 = vlaneseq
        %v7545 = vshrl.u32 %v7544, 7
        %v7546 = vsub.s32 %v7543, %v7545
        %v7547 = vrot.slane %v7533, %v7546
        %v7548 = vcombine.low %v7540, %v7547
        %v7549 = vcombine.low %v7356, %v7357
        %v7550 = vcombine.low %v7358, %v7359
        %v7551 = vcombine.low %v7360, %v7361
        %v7552 = vcombine.low %v7362, %v7363
        %v7554 = vunpack.c.l.s4 1966171168
        %v7555 = vunpack.c.0.s8 %v7554
        %v7556 = vlaneseq
        %v7557 = vshrl.u32 %v7556, 7
        %v7558 = vsub.s32 %v7555, %v7557
        %v7559 = vrot.slane %v7549, %v7558
        %v7561 = vunpack.c.l.s4 1966171168
        %v7562 = vunpack.c.0.s8 %v7561
        %v7563 = vlaneseq
        %v7564 = vshrl.u32 %v7563, 7
        %v7565 = vsub.s32 %v7562, %v7564
        %v7566 = vrot.slane %v7550, %v7565
        %v7568 = vunpack.c.l.s4 1966171168
        %v7569 = vunpack.c.0.s8 %v7568
        %v7570 = vlaneseq
        %v7571 = vshrl.u32 %v7570, 7
        %v7572 = vsub.s32 %v7569, %v7571
        %v7573 = vrot.slane %v7551, %v7572
        %v7575 = vunpack.c.l.s4 1966171168
        %v7576 = vunpack.c.0.s8 %v7575
        %v7577 = vlaneseq
        %v7578 = vshrl.u32 %v7577, 7
        %v7579 = vsub.s32 %v7576, %v7578
        %v7580 = vrot.slane %v7552, %v7579
        %v7581 = vcombine.low %v7559, %v7566
        %v7582 = vcombine.low %v7573, %v7580
        %v7584 = vunpack.c.l.s4 1966171168
        %v7585 = vunpack.c.0.s8 %v7584
        %v7586 = vlaneseq
        %v7587 = vshrl.u32 %v7586, 7
        %v7588 = vsub.s32 %v7585, %v7587
        %v7589 = vrot.slane %v7581, %v7588
        %v7591 = vunpack.c.l.s4 1966171168
        %v7592 = vunpack.c.0.s8 %v7591
        %v7593 = vlaneseq
        %v7594 = vshrl.u32 %v7593, 7
        %v7595 = vsub.s32 %v7592, %v7594
        %v7596 = vrot.slane %v7582, %v7595
        %v7597 = vcombine.low %v7589, %v7596
        %v7598 = vcombine.low %v7364, %v7365
        %v7600 = vunpack.c.l.s4 1966171168
        %v7601 = vunpack.c.0.s8 %v7600
        %v7602 = vlaneseq
        %v7603 = vshrl.u32 %v7602, 7
        %v7604 = vsub.s32 %v7601, %v7603
        %v7605 = vrot.slane %v7598, %v7604
        %v7607 = vunpack.c.l.s4 1966171168
        %v7608 = vunpack.c.0.s8 %v7607
        %v7609 = vlaneseq
        %v7610 = vshrl.u32 %v7609, 7
        %v7611 = vsub.s32 %v7608, %v7610
        %v7612 = vrot.slane %v7605, %v7611
        %v7618 = vsel %vm1562, %v7450, 0.0
        %7619 = vadd.xlane.f32.xlu0 %v7618
        %v7620 = vpop.xlane.xlu0 %7619
        %v7621 = vsel %vm1562, %v7499, 0.0
        %7622 = vadd.xlane.f32.xlu0 %v7621
        %v7623 = vpop.xlane.xlu0 %7622
        %v7624 = vsel %vm1562, %v7548, 0.0
        %7625 = vadd.xlane.f32.xlu0 %v7624
        %v7626 = vpop.xlane.xlu0 %7625
        %v7627 = vsel %vm1562, %v7597, 0.0
        %7628 = vadd.xlane.f32.xlu0 %v7627
        %v7629 = vpop.xlane.xlu0 %7628
        %v7630 = vsel %vm1575, %v7612, 0.0
        %7631 = vadd.xlane.f32.xlu0 %v7630
        %v7632 = vpop.xlane.xlu0 %7631
        %v7633 = vmul.f32 %v7620, %v1579
        %v7634 = vmul.f32 %v7623, %v1579
        %v7635 = vmul.f32 %v7626, %v1579
        %v7636 = vmul.f32 %v7629, %v1579
        %v7637 = vmul.f32 %v7632, %v1579
        %v7643 = vlaneseq
        %v7644 = vshrl.u32 %v7643, 7
        %v7645 = vsub.s32 0, %v7644
        %v7646 = vrot.slane %v7633, %v7645
        %v7647 = vlaneseq
        %v7648 = vshrl.u32 %v7647, 7
        %v7649 = vsub.s32 1, %v7648
        %v7650 = vrot.slane %v7633, %v7649
        %v7651 = vlaneseq
        %v7652 = vshrl.u32 %v7651, 7
        %v7653 = vsub.s32 2, %v7652
        %v7654 = vrot.slane %v7633, %v7653
        %v7655 = vlaneseq
        %v7656 = vshrl.u32 %v7655, 7
        %v7657 = vsub.s32 3, %v7656
        %v7658 = vrot.slane %v7633, %v7657
        %v7659 = vlaneseq
        %v7660 = vshrl.u32 %v7659, 7
        %v7661 = vsub.s32 4, %v7660
        %v7662 = vrot.slane %v7633, %v7661
        %v7663 = vlaneseq
        %v7664 = vshrl.u32 %v7663, 7
        %v7665 = vsub.s32 5, %v7664
        %v7666 = vrot.slane %v7633, %v7665
        %v7667 = vlaneseq
        %v7668 = vshrl.u32 %v7667, 7
        %v7669 = vsub.s32 6, %v7668
        %v7670 = vrot.slane %v7633, %v7669
        %v7671 = vlaneseq
        %v7672 = vshrl.u32 %v7671, 7
        %v7673 = vsub.s32 7, %v7672
        %v7674 = vrot.slane %v7633, %v7673
        %v7675 = vlaneseq
        %v7676 = vshrl.u32 %v7675, 7
        %v7677 = vsub.s32 0, %v7676
        %v7678 = vrot.slane %v7634, %v7677
        %v7679 = vlaneseq
        %v7680 = vshrl.u32 %v7679, 7
        %v7681 = vsub.s32 1, %v7680
        %v7682 = vrot.slane %v7634, %v7681
        %v7683 = vlaneseq
        %v7684 = vshrl.u32 %v7683, 7
        %v7685 = vsub.s32 2, %v7684
        %v7686 = vrot.slane %v7634, %v7685
        %v7687 = vlaneseq
        %v7688 = vshrl.u32 %v7687, 7
        %v7689 = vsub.s32 3, %v7688
        %v7690 = vrot.slane %v7634, %v7689
        %v7691 = vlaneseq
        %v7692 = vshrl.u32 %v7691, 7
        %v7693 = vsub.s32 4, %v7692
        %v7694 = vrot.slane %v7634, %v7693
        %v7695 = vlaneseq
        %v7696 = vshrl.u32 %v7695, 7
        %v7697 = vsub.s32 5, %v7696
        %v7698 = vrot.slane %v7634, %v7697
        %v7699 = vlaneseq
        %v7700 = vshrl.u32 %v7699, 7
        %v7701 = vsub.s32 6, %v7700
        %v7702 = vrot.slane %v7634, %v7701
        %v7703 = vlaneseq
        %v7704 = vshrl.u32 %v7703, 7
        %v7705 = vsub.s32 7, %v7704
        %v7706 = vrot.slane %v7634, %v7705
        %v7707 = vlaneseq
        %v7708 = vshrl.u32 %v7707, 7
        %v7709 = vsub.s32 0, %v7708
        %v7710 = vrot.slane %v7635, %v7709
        %v7711 = vlaneseq
        %v7712 = vshrl.u32 %v7711, 7
        %v7713 = vsub.s32 1, %v7712
        %v7714 = vrot.slane %v7635, %v7713
        %v7715 = vlaneseq
        %v7716 = vshrl.u32 %v7715, 7
        %v7717 = vsub.s32 2, %v7716
        %v7718 = vrot.slane %v7635, %v7717
        %v7719 = vlaneseq
        %v7720 = vshrl.u32 %v7719, 7
        %v7721 = vsub.s32 3, %v7720
        %v7722 = vrot.slane %v7635, %v7721
        %v7723 = vlaneseq
        %v7724 = vshrl.u32 %v7723, 7
        %v7725 = vsub.s32 4, %v7724
        %v7726 = vrot.slane %v7635, %v7725
        %v7727 = vlaneseq
        %v7728 = vshrl.u32 %v7727, 7
        %v7729 = vsub.s32 5, %v7728
        %v7730 = vrot.slane %v7635, %v7729
        %v7731 = vlaneseq
        %v7732 = vshrl.u32 %v7731, 7
        %v7733 = vsub.s32 6, %v7732
        %v7734 = vrot.slane %v7635, %v7733
        %v7735 = vlaneseq
        %v7736 = vshrl.u32 %v7735, 7
        %v7737 = vsub.s32 7, %v7736
        %v7738 = vrot.slane %v7635, %v7737
        %v7739 = vlaneseq
        %v7740 = vshrl.u32 %v7739, 7
        %v7741 = vsub.s32 0, %v7740
        %v7742 = vrot.slane %v7636, %v7741
        %v7743 = vlaneseq
        %v7744 = vshrl.u32 %v7743, 7
        %v7745 = vsub.s32 1, %v7744
        %v7746 = vrot.slane %v7636, %v7745
        %v7747 = vlaneseq
        %v7748 = vshrl.u32 %v7747, 7
        %v7749 = vsub.s32 2, %v7748
        %v7750 = vrot.slane %v7636, %v7749
        %v7751 = vlaneseq
        %v7752 = vshrl.u32 %v7751, 7
        %v7753 = vsub.s32 3, %v7752
        %v7754 = vrot.slane %v7636, %v7753
        %v7755 = vlaneseq
        %v7756 = vshrl.u32 %v7755, 7
        %v7757 = vsub.s32 4, %v7756
        %v7758 = vrot.slane %v7636, %v7757
        %v7759 = vlaneseq
        %v7760 = vshrl.u32 %v7759, 7
        %v7761 = vsub.s32 5, %v7760
        %v7762 = vrot.slane %v7636, %v7761
        %v7763 = vlaneseq
        %v7764 = vshrl.u32 %v7763, 7
        %v7765 = vsub.s32 6, %v7764
        %v7766 = vrot.slane %v7636, %v7765
        %v7767 = vlaneseq
        %v7768 = vshrl.u32 %v7767, 7
        %v7769 = vsub.s32 7, %v7768
        %v7770 = vrot.slane %v7636, %v7769
        %v7771 = vlaneseq
        %v7772 = vshrl.u32 %v7771, 7
        %v7773 = vsub.s32 0, %v7772
        %v7774 = vrot.slane %v7637, %v7773
        %v7775 = vlaneseq
        %v7776 = vshrl.u32 %v7775, 7
        %v7777 = vsub.s32 1, %v7776
        %v7778 = vrot.slane %v7637, %v7777
        %v7813 = vsub.f32 %v7332, %v7646
        %v7814 = vsub.f32 %v7333, %v7650
        %v7815 = vsub.f32 %v7334, %v7654
        %v7816 = vsub.f32 %v7335, %v7658
        %v7817 = vsub.f32 %v7336, %v7662
        %v7818 = vsub.f32 %v7337, %v7666
        %v7819 = vsub.f32 %v7338, %v7670
        %v7820 = vsub.f32 %v7339, %v7674
        %v7821 = vsub.f32 %v7340, %v7678
        %v7822 = vsub.f32 %v7341, %v7682
        %v7823 = vsub.f32 %v7342, %v7686
        %v7824 = vsub.f32 %v7343, %v7690
        %v7825 = vsub.f32 %v7344, %v7694
        %v7826 = vsub.f32 %v7345, %v7698
        %v7827 = vsub.f32 %v7346, %v7702
        %v7828 = vsub.f32 %v7347, %v7706
        %v7829 = vsub.f32 %v7348, %v7710
        %v7830 = vsub.f32 %v7349, %v7714
        %v7831 = vsub.f32 %v7350, %v7718
        %v7832 = vsub.f32 %v7351, %v7722
        %v7833 = vsub.f32 %v7352, %v7726
        %v7834 = vsub.f32 %v7353, %v7730
        %v7835 = vsub.f32 %v7354, %v7734
        %v7836 = vsub.f32 %v7355, %v7738
        %v7837 = vsub.f32 %v7356, %v7742
        %v7838 = vsub.f32 %v7357, %v7746
        %v7839 = vsub.f32 %v7358, %v7750
        %v7840 = vsub.f32 %v7359, %v7754
        %v7841 = vsub.f32 %v7360, %v7758
        %v7842 = vsub.f32 %v7361, %v7762
        %v7843 = vsub.f32 %v7362, %v7766
        %v7844 = vsub.f32 %v7363, %v7770
        %v7845 = vsub.f32 %v7364, %v7774
        %v7846 = vsub.f32 %v7365, %v7778
        %v7847 = vmul.f32 %v7813, %v7813
        %v7848 = vmul.f32 %v7814, %v7814
        %v7849 = vmul.f32 %v7815, %v7815
        %v7850 = vmul.f32 %v7816, %v7816
        %v7851 = vmul.f32 %v7817, %v7817
        %v7852 = vmul.f32 %v7818, %v7818
        %v7853 = vmul.f32 %v7819, %v7819
        %v7854 = vmul.f32 %v7820, %v7820
        %v7855 = vmul.f32 %v7821, %v7821
        %v7856 = vmul.f32 %v7822, %v7822
        %v7857 = vmul.f32 %v7823, %v7823
        %v7858 = vmul.f32 %v7824, %v7824
        %v7859 = vmul.f32 %v7825, %v7825
        %v7860 = vmul.f32 %v7826, %v7826
        %v7861 = vmul.f32 %v7827, %v7827
        %v7862 = vmul.f32 %v7828, %v7828
        %v7863 = vmul.f32 %v7829, %v7829
        %v7864 = vmul.f32 %v7830, %v7830
        %v7865 = vmul.f32 %v7831, %v7831
        %v7866 = vmul.f32 %v7832, %v7832
        %v7867 = vmul.f32 %v7833, %v7833
        %v7868 = vmul.f32 %v7834, %v7834
        %v7869 = vmul.f32 %v7835, %v7835
        %v7870 = vmul.f32 %v7836, %v7836
        %v7871 = vmul.f32 %v7837, %v7837
        %v7872 = vmul.f32 %v7838, %v7838
        %v7873 = vmul.f32 %v7839, %v7839
        %v7874 = vmul.f32 %v7840, %v7840
        %v7875 = vmul.f32 %v7841, %v7841
        %v7876 = vmul.f32 %v7842, %v7842
        %v7877 = vmul.f32 %v7843, %v7843
        %v7878 = vmul.f32 %v7844, %v7844
        %v7879 = vmul.f32 %v7845, %v7845
        %v7880 = vmul.f32 %v7846, %v7846
        %v7915 = vcombine.low %v7847, %v7848
        %v7916 = vcombine.low %v7849, %v7850
        %v7917 = vcombine.low %v7851, %v7852
        %v7918 = vcombine.low %v7853, %v7854
        %v7920 = vunpack.c.l.s4 1966171168
        %v7921 = vunpack.c.0.s8 %v7920
        %v7922 = vlaneseq
        %v7923 = vshrl.u32 %v7922, 7
        %v7924 = vsub.s32 %v7921, %v7923
        %v7925 = vrot.slane %v7915, %v7924
        %v7927 = vunpack.c.l.s4 1966171168
        %v7928 = vunpack.c.0.s8 %v7927
        %v7929 = vlaneseq
        %v7930 = vshrl.u32 %v7929, 7
        %v7931 = vsub.s32 %v7928, %v7930
        %v7932 = vrot.slane %v7916, %v7931
        %v7934 = vunpack.c.l.s4 1966171168
        %v7935 = vunpack.c.0.s8 %v7934
        %v7936 = vlaneseq
        %v7937 = vshrl.u32 %v7936, 7
        %v7938 = vsub.s32 %v7935, %v7937
        %v7939 = vrot.slane %v7917, %v7938
        %v7941 = vunpack.c.l.s4 1966171168
        %v7942 = vunpack.c.0.s8 %v7941
        %v7943 = vlaneseq
        %v7944 = vshrl.u32 %v7943, 7
        %v7945 = vsub.s32 %v7942, %v7944
        %v7946 = vrot.slane %v7918, %v7945
        %v7947 = vcombine.low %v7925, %v7932
        %v7948 = vcombine.low %v7939, %v7946
        %v7950 = vunpack.c.l.s4 1966171168
        %v7951 = vunpack.c.0.s8 %v7950
        %v7952 = vlaneseq
        %v7953 = vshrl.u32 %v7952, 7
        %v7954 = vsub.s32 %v7951, %v7953
        %v7955 = vrot.slane %v7947, %v7954
        %v7957 = vunpack.c.l.s4 1966171168
        %v7958 = vunpack.c.0.s8 %v7957
        %v7959 = vlaneseq
        %v7960 = vshrl.u32 %v7959, 7
        %v7961 = vsub.s32 %v7958, %v7960
        %v7962 = vrot.slane %v7948, %v7961
        %v7963 = vcombine.low %v7955, %v7962
        %v7964 = vcombine.low %v7855, %v7856
        %v7965 = vcombine.low %v7857, %v7858
        %v7966 = vcombine.low %v7859, %v7860
        %v7967 = vcombine.low %v7861, %v7862
        %v7969 = vunpack.c.l.s4 1966171168
        %v7970 = vunpack.c.0.s8 %v7969
        %v7971 = vlaneseq
        %v7972 = vshrl.u32 %v7971, 7
        %v7973 = vsub.s32 %v7970, %v7972
        %v7974 = vrot.slane %v7964, %v7973
        %v7976 = vunpack.c.l.s4 1966171168
        %v7977 = vunpack.c.0.s8 %v7976
        %v7978 = vlaneseq
        %v7979 = vshrl.u32 %v7978, 7
        %v7980 = vsub.s32 %v7977, %v7979
        %v7981 = vrot.slane %v7965, %v7980
        %v7983 = vunpack.c.l.s4 1966171168
        %v7984 = vunpack.c.0.s8 %v7983
        %v7985 = vlaneseq
        %v7986 = vshrl.u32 %v7985, 7
        %v7987 = vsub.s32 %v7984, %v7986
        %v7988 = vrot.slane %v7966, %v7987
        %v7990 = vunpack.c.l.s4 1966171168
        %v7991 = vunpack.c.0.s8 %v7990
        %v7992 = vlaneseq
        %v7993 = vshrl.u32 %v7992, 7
        %v7994 = vsub.s32 %v7991, %v7993
        %v7995 = vrot.slane %v7967, %v7994
        %v7996 = vcombine.low %v7974, %v7981
        %v7997 = vcombine.low %v7988, %v7995
        %v7999 = vunpack.c.l.s4 1966171168
        %v8000 = vunpack.c.0.s8 %v7999
        %v8001 = vlaneseq
        %v8002 = vshrl.u32 %v8001, 7
        %v8003 = vsub.s32 %v8000, %v8002
        %v8004 = vrot.slane %v7996, %v8003
        %v8006 = vunpack.c.l.s4 1966171168
        %v8007 = vunpack.c.0.s8 %v8006
        %v8008 = vlaneseq
        %v8009 = vshrl.u32 %v8008, 7
        %v8010 = vsub.s32 %v8007, %v8009
        %v8011 = vrot.slane %v7997, %v8010
        %v8012 = vcombine.low %v8004, %v8011
        %v8013 = vcombine.low %v7863, %v7864
        %v8014 = vcombine.low %v7865, %v7866
        %v8015 = vcombine.low %v7867, %v7868
        %v8016 = vcombine.low %v7869, %v7870
        %v8018 = vunpack.c.l.s4 1966171168
        %v8019 = vunpack.c.0.s8 %v8018
        %v8020 = vlaneseq
        %v8021 = vshrl.u32 %v8020, 7
        %v8022 = vsub.s32 %v8019, %v8021
        %v8023 = vrot.slane %v8013, %v8022
        %v8025 = vunpack.c.l.s4 1966171168
        %v8026 = vunpack.c.0.s8 %v8025
        %v8027 = vlaneseq
        %v8028 = vshrl.u32 %v8027, 7
        %v8029 = vsub.s32 %v8026, %v8028
        %v8030 = vrot.slane %v8014, %v8029
        %v8032 = vunpack.c.l.s4 1966171168
        %v8033 = vunpack.c.0.s8 %v8032
        %v8034 = vlaneseq
        %v8035 = vshrl.u32 %v8034, 7
        %v8036 = vsub.s32 %v8033, %v8035
        %v8037 = vrot.slane %v8015, %v8036
        %v8039 = vunpack.c.l.s4 1966171168
        %v8040 = vunpack.c.0.s8 %v8039
        %v8041 = vlaneseq
        %v8042 = vshrl.u32 %v8041, 7
        %v8043 = vsub.s32 %v8040, %v8042
        %v8044 = vrot.slane %v8016, %v8043
        %v8045 = vcombine.low %v8023, %v8030
        %v8046 = vcombine.low %v8037, %v8044
        %v8048 = vunpack.c.l.s4 1966171168
        %v8049 = vunpack.c.0.s8 %v8048
        %v8050 = vlaneseq
        %v8051 = vshrl.u32 %v8050, 7
        %v8052 = vsub.s32 %v8049, %v8051
        %v8053 = vrot.slane %v8045, %v8052
        %v8055 = vunpack.c.l.s4 1966171168
        %v8056 = vunpack.c.0.s8 %v8055
        %v8057 = vlaneseq
        %v8058 = vshrl.u32 %v8057, 7
        %v8059 = vsub.s32 %v8056, %v8058
        %v8060 = vrot.slane %v8046, %v8059
        %v8061 = vcombine.low %v8053, %v8060
        %v8062 = vcombine.low %v7871, %v7872
        %v8063 = vcombine.low %v7873, %v7874
        %v8064 = vcombine.low %v7875, %v7876
        %v8065 = vcombine.low %v7877, %v7878
        %v8067 = vunpack.c.l.s4 1966171168
        %v8068 = vunpack.c.0.s8 %v8067
        %v8069 = vlaneseq
        %v8070 = vshrl.u32 %v8069, 7
        %v8071 = vsub.s32 %v8068, %v8070
        %v8072 = vrot.slane %v8062, %v8071
        %v8074 = vunpack.c.l.s4 1966171168
        %v8075 = vunpack.c.0.s8 %v8074
        %v8076 = vlaneseq
        %v8077 = vshrl.u32 %v8076, 7
        %v8078 = vsub.s32 %v8075, %v8077
        %v8079 = vrot.slane %v8063, %v8078
        %v8081 = vunpack.c.l.s4 1966171168
        %v8082 = vunpack.c.0.s8 %v8081
        %v8083 = vlaneseq
        %v8084 = vshrl.u32 %v8083, 7
        %v8085 = vsub.s32 %v8082, %v8084
        %v8086 = vrot.slane %v8064, %v8085
        %v8088 = vunpack.c.l.s4 1966171168
        %v8089 = vunpack.c.0.s8 %v8088
        %v8090 = vlaneseq
        %v8091 = vshrl.u32 %v8090, 7
        %v8092 = vsub.s32 %v8089, %v8091
        %v8093 = vrot.slane %v8065, %v8092
        %v8094 = vcombine.low %v8072, %v8079
        %v8095 = vcombine.low %v8086, %v8093
        %v8097 = vunpack.c.l.s4 1966171168
        %v8098 = vunpack.c.0.s8 %v8097
        %v8099 = vlaneseq
        %v8100 = vshrl.u32 %v8099, 7
        %v8101 = vsub.s32 %v8098, %v8100
        %v8102 = vrot.slane %v8094, %v8101
        %v8104 = vunpack.c.l.s4 1966171168
        %v8105 = vunpack.c.0.s8 %v8104
        %v8106 = vlaneseq
        %v8107 = vshrl.u32 %v8106, 7
        %v8108 = vsub.s32 %v8105, %v8107
        %v8109 = vrot.slane %v8095, %v8108
        %v8110 = vcombine.low %v8102, %v8109
        %v8111 = vcombine.low %v7879, %v7880
        %v8113 = vunpack.c.l.s4 1966171168
        %v8114 = vunpack.c.0.s8 %v8113
        %v8115 = vlaneseq
        %v8116 = vshrl.u32 %v8115, 7
        %v8117 = vsub.s32 %v8114, %v8116
        %v8118 = vrot.slane %v8111, %v8117
        %v8120 = vunpack.c.l.s4 1966171168
        %v8121 = vunpack.c.0.s8 %v8120
        %v8122 = vlaneseq
        %v8123 = vshrl.u32 %v8122, 7
        %v8124 = vsub.s32 %v8121, %v8123
        %v8125 = vrot.slane %v8118, %v8124
        %v8131 = vsel %vm1562, %v7963, 0.0
        %8132 = vadd.xlane.f32.xlu0 %v8131
        %v8133 = vpop.xlane.xlu0 %8132
        %v8134 = vsel %vm1562, %v8012, 0.0
        %8135 = vadd.xlane.f32.xlu0 %v8134
        %v8136 = vpop.xlane.xlu0 %8135
        %v8137 = vsel %vm1562, %v8061, 0.0
        %8138 = vadd.xlane.f32.xlu0 %v8137
        %v8139 = vpop.xlane.xlu0 %8138
        %v8140 = vsel %vm1562, %v8110, 0.0
        %8141 = vadd.xlane.f32.xlu0 %v8140
        %v8142 = vpop.xlane.xlu0 %8141
        %v8143 = vsel %vm1575, %v8125, 0.0
        %8144 = vadd.xlane.f32.xlu0 %v8143
        %v8145 = vpop.xlane.xlu0 %8144
        %v8146 = vmul.f32 %v8133, %v1579
        %v8147 = vmul.f32 %v8136, %v1579
        %v8148 = vmul.f32 %v8139, %v1579
        %v8149 = vmul.f32 %v8142, %v1579
        %v8150 = vmul.f32 %v8145, %v1579
        %v8151 = vadd.f32 %v8146, 1e-12
        %v8152 = vadd.f32 %v8147, 1e-12
        %v8153 = vadd.f32 %v8148, 1e-12
        %v8154 = vadd.f32 %v8149, 1e-12
        %v8155 = vadd.f32 %v8150, 1e-12
        %v8156 = vrsqrt.pop %v8151
        %v8157 = vrsqrt.pop %v8152
        %v8158 = vrsqrt.pop %v8153
        %v8159 = vrsqrt.pop %v8154
        %v8160 = vrsqrt.pop %v8155
        %v8166 = vlaneseq
        %v8167 = vshrl.u32 %v8166, 7
        %v8168 = vsub.s32 0, %v8167
        %v8169 = vrot.slane %v8156, %v8168
        %v8170 = vlaneseq
        %v8171 = vshrl.u32 %v8170, 7
        %v8172 = vsub.s32 1, %v8171
        %v8173 = vrot.slane %v8156, %v8172
        %v8174 = vlaneseq
        %v8175 = vshrl.u32 %v8174, 7
        %v8176 = vsub.s32 2, %v8175
        %v8177 = vrot.slane %v8156, %v8176
        %v8178 = vlaneseq
        %v8179 = vshrl.u32 %v8178, 7
        %v8180 = vsub.s32 3, %v8179
        %v8181 = vrot.slane %v8156, %v8180
        %v8182 = vlaneseq
        %v8183 = vshrl.u32 %v8182, 7
        %v8184 = vsub.s32 4, %v8183
        %v8185 = vrot.slane %v8156, %v8184
        %v8186 = vlaneseq
        %v8187 = vshrl.u32 %v8186, 7
        %v8188 = vsub.s32 5, %v8187
        %v8189 = vrot.slane %v8156, %v8188
        %v8190 = vlaneseq
        %v8191 = vshrl.u32 %v8190, 7
        %v8192 = vsub.s32 6, %v8191
        %v8193 = vrot.slane %v8156, %v8192
        %v8194 = vlaneseq
        %v8195 = vshrl.u32 %v8194, 7
        %v8196 = vsub.s32 7, %v8195
        %v8197 = vrot.slane %v8156, %v8196
        %v8198 = vlaneseq
        %v8199 = vshrl.u32 %v8198, 7
        %v8200 = vsub.s32 0, %v8199
        %v8201 = vrot.slane %v8157, %v8200
        %v8202 = vlaneseq
        %v8203 = vshrl.u32 %v8202, 7
        %v8204 = vsub.s32 1, %v8203
        %v8205 = vrot.slane %v8157, %v8204
        %v8206 = vlaneseq
        %v8207 = vshrl.u32 %v8206, 7
        %v8208 = vsub.s32 2, %v8207
        %v8209 = vrot.slane %v8157, %v8208
        %v8210 = vlaneseq
        %v8211 = vshrl.u32 %v8210, 7
        %v8212 = vsub.s32 3, %v8211
        %v8213 = vrot.slane %v8157, %v8212
        %v8214 = vlaneseq
        %v8215 = vshrl.u32 %v8214, 7
        %v8216 = vsub.s32 4, %v8215
        %v8217 = vrot.slane %v8157, %v8216
        %v8218 = vlaneseq
        %v8219 = vshrl.u32 %v8218, 7
        %v8220 = vsub.s32 5, %v8219
        %v8221 = vrot.slane %v8157, %v8220
        %v8222 = vlaneseq
        %v8223 = vshrl.u32 %v8222, 7
        %v8224 = vsub.s32 6, %v8223
        %v8225 = vrot.slane %v8157, %v8224
        %v8226 = vlaneseq
        %v8227 = vshrl.u32 %v8226, 7
        %v8228 = vsub.s32 7, %v8227
        %v8229 = vrot.slane %v8157, %v8228
        %v8230 = vlaneseq
        %v8231 = vshrl.u32 %v8230, 7
        %v8232 = vsub.s32 0, %v8231
        %v8233 = vrot.slane %v8158, %v8232
        %v8234 = vlaneseq
        %v8235 = vshrl.u32 %v8234, 7
        %v8236 = vsub.s32 1, %v8235
        %v8237 = vrot.slane %v8158, %v8236
        %v8238 = vlaneseq
        %v8239 = vshrl.u32 %v8238, 7
        %v8240 = vsub.s32 2, %v8239
        %v8241 = vrot.slane %v8158, %v8240
        %v8242 = vlaneseq
        %v8243 = vshrl.u32 %v8242, 7
        %v8244 = vsub.s32 3, %v8243
        %v8245 = vrot.slane %v8158, %v8244
        %v8246 = vlaneseq
        %v8247 = vshrl.u32 %v8246, 7
        %v8248 = vsub.s32 4, %v8247
        %v8249 = vrot.slane %v8158, %v8248
        %v8250 = vlaneseq
        %v8251 = vshrl.u32 %v8250, 7
        %v8252 = vsub.s32 5, %v8251
        %v8253 = vrot.slane %v8158, %v8252
        %v8254 = vlaneseq
        %v8255 = vshrl.u32 %v8254, 7
        %v8256 = vsub.s32 6, %v8255
        %v8257 = vrot.slane %v8158, %v8256
        %v8258 = vlaneseq
        %v8259 = vshrl.u32 %v8258, 7
        %v8260 = vsub.s32 7, %v8259
        %v8261 = vrot.slane %v8158, %v8260
        %v8262 = vlaneseq
        %v8263 = vshrl.u32 %v8262, 7
        %v8264 = vsub.s32 0, %v8263
        %v8265 = vrot.slane %v8159, %v8264
        %v8266 = vlaneseq
        %v8267 = vshrl.u32 %v8266, 7
        %v8268 = vsub.s32 1, %v8267
        %v8269 = vrot.slane %v8159, %v8268
        %v8270 = vlaneseq
        %v8271 = vshrl.u32 %v8270, 7
        %v8272 = vsub.s32 2, %v8271
        %v8273 = vrot.slane %v8159, %v8272
        %v8274 = vlaneseq
        %v8275 = vshrl.u32 %v8274, 7
        %v8276 = vsub.s32 3, %v8275
        %v8277 = vrot.slane %v8159, %v8276
        %v8278 = vlaneseq
        %v8279 = vshrl.u32 %v8278, 7
        %v8280 = vsub.s32 4, %v8279
        %v8281 = vrot.slane %v8159, %v8280
        %v8282 = vlaneseq
        %v8283 = vshrl.u32 %v8282, 7
        %v8284 = vsub.s32 5, %v8283
        %v8285 = vrot.slane %v8159, %v8284
        %v8286 = vlaneseq
        %v8287 = vshrl.u32 %v8286, 7
        %v8288 = vsub.s32 6, %v8287
        %v8289 = vrot.slane %v8159, %v8288
        %v8290 = vlaneseq
        %v8291 = vshrl.u32 %v8290, 7
        %v8292 = vsub.s32 7, %v8291
        %v8293 = vrot.slane %v8159, %v8292
        %v8294 = vlaneseq
        %v8295 = vshrl.u32 %v8294, 7
        %v8296 = vsub.s32 0, %v8295
        %v8297 = vrot.slane %v8160, %v8296
        %v8298 = vlaneseq
        %v8299 = vshrl.u32 %v8298, 7
        %v8300 = vsub.s32 1, %v8299
        %v8301 = vrot.slane %v8160, %v8300
        %v8336 = vmul.f32 %v7813, %v8169
        %v8337 = vmul.f32 %v7814, %v8173
        %v8338 = vmul.f32 %v7815, %v8177
        %v8339 = vmul.f32 %v7816, %v8181
        %v8340 = vmul.f32 %v7817, %v8185
        %v8341 = vmul.f32 %v7818, %v8189
        %v8342 = vmul.f32 %v7819, %v8193
        %v8343 = vmul.f32 %v7820, %v8197
        %v8344 = vmul.f32 %v7821, %v8201
        %v8345 = vmul.f32 %v7822, %v8205
        %v8346 = vmul.f32 %v7823, %v8209
        %v8347 = vmul.f32 %v7824, %v8213
        %v8348 = vmul.f32 %v7825, %v8217
        %v8349 = vmul.f32 %v7826, %v8221
        %v8350 = vmul.f32 %v7827, %v8225
        %v8351 = vmul.f32 %v7828, %v8229
        %v8352 = vmul.f32 %v7829, %v8233
        %v8353 = vmul.f32 %v7830, %v8237
        %v8354 = vmul.f32 %v7831, %v8241
        %v8355 = vmul.f32 %v7832, %v8245
        %v8356 = vmul.f32 %v7833, %v8249
        %v8357 = vmul.f32 %v7834, %v8253
        %v8358 = vmul.f32 %v7835, %v8257
        %v8359 = vmul.f32 %v7836, %v8261
        %v8360 = vmul.f32 %v7837, %v8265
        %v8361 = vmul.f32 %v7838, %v8269
        %v8362 = vmul.f32 %v7839, %v8273
        %v8363 = vmul.f32 %v7840, %v8277
        %v8364 = vmul.f32 %v7841, %v8281
        %v8365 = vmul.f32 %v7842, %v8285
        %v8366 = vmul.f32 %v7843, %v8289
        %v8367 = vmul.f32 %v7844, %v8293
        %v8368 = vmul.f32 %v7845, %v8297
        %v8369 = vmul.f32 %v7846, %v8301
        %v8371 = vlaneseq
        %v8372 = vshrl.u32 %v8371, 7
        %v8373 = vsub.s32 0, %v8372
        %v8374 = vrot.slane %v7366, %v8373
        %v8375 = vcombine.high %v8374, %v8374
        %v8377 = vunpack.c.l.s4 1966171168
        %v8378 = vunpack.c.0.s8 %v8377
        %v8379 = vlaneseq
        %v8380 = vshrl.u32 %v8379, 7
        %v8381 = vsub.s32 %v8378, %v8380
        %v8382 = vrot.slane %v8374, %v8381
        %v8384 = vunpack.c.l.s4 1966171168
        %v8385 = vunpack.c.0.s8 %v8384
        %v8386 = vlaneseq
        %v8387 = vshrl.u32 %v8386, 7
        %v8388 = vsub.s32 %v8385, %v8387
        %v8389 = vrot.slane %v8375, %v8388
        %v8390 = vcombine.high %v8382, %v8382
        %v8391 = vcombine.high %v8389, %v8389
        %v8393 = vunpack.c.l.s4 1966171168
        %v8394 = vunpack.c.0.s8 %v8393
        %v8395 = vlaneseq
        %v8396 = vshrl.u32 %v8395, 7
        %v8397 = vsub.s32 %v8394, %v8396
        %v8398 = vrot.slane %v8382, %v8397
        %v8400 = vunpack.c.l.s4 1966171168
        %v8401 = vunpack.c.0.s8 %v8400
        %v8402 = vlaneseq
        %v8403 = vshrl.u32 %v8402, 7
        %v8404 = vsub.s32 %v8401, %v8403
        %v8405 = vrot.slane %v8389, %v8404
        %v8407 = vunpack.c.l.s4 1966171168
        %v8408 = vunpack.c.0.s8 %v8407
        %v8409 = vlaneseq
        %v8410 = vshrl.u32 %v8409, 7
        %v8411 = vsub.s32 %v8408, %v8410
        %v8412 = vrot.slane %v8390, %v8411
        %v8414 = vunpack.c.l.s4 1966171168
        %v8415 = vunpack.c.0.s8 %v8414
        %v8416 = vlaneseq
        %v8417 = vshrl.u32 %v8416, 7
        %v8418 = vsub.s32 %v8415, %v8417
        %v8419 = vrot.slane %v8391, %v8418
        %v8420 = vcombine.high %v8398, %v8398
        %v8421 = vcombine.high %v8405, %v8405
        %v8422 = vcombine.high %v8412, %v8412
        %v8423 = vcombine.high %v8419, %v8419
        %v8432 = vmul.f32 %v8336, %v8398
        %v8433 = vmul.f32 %v8337, %v8412
        %v8434 = vmul.f32 %v8338, %v8420
        %v8435 = vmul.f32 %v8339, %v8422
        %v8436 = vmul.f32 %v8340, %v8405
        %v8437 = vmul.f32 %v8341, %v8419
        %v8438 = vmul.f32 %v8342, %v8421
        %v8439 = vmul.f32 %v8343, %v8423
        %v8440 = vmul.f32 %v8344, %v8398
        %v8441 = vmul.f32 %v8345, %v8412
        %v8442 = vmul.f32 %v8346, %v8420
        %v8443 = vmul.f32 %v8347, %v8422
        %v8444 = vmul.f32 %v8348, %v8405
        %v8445 = vmul.f32 %v8349, %v8419
        %v8446 = vmul.f32 %v8350, %v8421
        %v8447 = vmul.f32 %v8351, %v8423
        %v8448 = vmul.f32 %v8352, %v8398
        %v8449 = vmul.f32 %v8353, %v8412
        %v8450 = vmul.f32 %v8354, %v8420
        %v8451 = vmul.f32 %v8355, %v8422
        %v8452 = vmul.f32 %v8356, %v8405
        %v8453 = vmul.f32 %v8357, %v8419
        %v8454 = vmul.f32 %v8358, %v8421
        %v8455 = vmul.f32 %v8359, %v8423
        %v8456 = vmul.f32 %v8360, %v8398
        %v8457 = vmul.f32 %v8361, %v8412
        %v8458 = vmul.f32 %v8362, %v8420
        %v8459 = vmul.f32 %v8363, %v8422
        %v8460 = vmul.f32 %v8364, %v8405
        %v8461 = vmul.f32 %v8365, %v8419
        %v8462 = vmul.f32 %v8366, %v8421
        %v8463 = vmul.f32 %v8367, %v8423
        %v8464 = vmul.f32 %v8368, %v8398
        %v8465 = vmul.f32 %v8369, %v8412
        %v8467 = vlaneseq
        %v8468 = vshrl.u32 %v8467, 7
        %v8469 = vsub.s32 0, %v8468
        %v8470 = vrot.slane %v7367, %v8469
        %v8471 = vcombine.high %v8470, %v8470
        %v8473 = vunpack.c.l.s4 1966171168
        %v8474 = vunpack.c.0.s8 %v8473
        %v8475 = vlaneseq
        %v8476 = vshrl.u32 %v8475, 7
        %v8477 = vsub.s32 %v8474, %v8476
        %v8478 = vrot.slane %v8470, %v8477
        %v8480 = vunpack.c.l.s4 1966171168
        %v8481 = vunpack.c.0.s8 %v8480
        %v8482 = vlaneseq
        %v8483 = vshrl.u32 %v8482, 7
        %v8484 = vsub.s32 %v8481, %v8483
        %v8485 = vrot.slane %v8471, %v8484
        %v8486 = vcombine.high %v8478, %v8478
        %v8487 = vcombine.high %v8485, %v8485
        %v8489 = vunpack.c.l.s4 1966171168
        %v8490 = vunpack.c.0.s8 %v8489
        %v8491 = vlaneseq
        %v8492 = vshrl.u32 %v8491, 7
        %v8493 = vsub.s32 %v8490, %v8492
        %v8494 = vrot.slane %v8478, %v8493
        %v8496 = vunpack.c.l.s4 1966171168
        %v8497 = vunpack.c.0.s8 %v8496
        %v8498 = vlaneseq
        %v8499 = vshrl.u32 %v8498, 7
        %v8500 = vsub.s32 %v8497, %v8499
        %v8501 = vrot.slane %v8485, %v8500
        %v8503 = vunpack.c.l.s4 1966171168
        %v8504 = vunpack.c.0.s8 %v8503
        %v8505 = vlaneseq
        %v8506 = vshrl.u32 %v8505, 7
        %v8507 = vsub.s32 %v8504, %v8506
        %v8508 = vrot.slane %v8486, %v8507
        %v8510 = vunpack.c.l.s4 1966171168
        %v8511 = vunpack.c.0.s8 %v8510
        %v8512 = vlaneseq
        %v8513 = vshrl.u32 %v8512, 7
        %v8514 = vsub.s32 %v8511, %v8513
        %v8515 = vrot.slane %v8487, %v8514
        %v8516 = vcombine.high %v8494, %v8494
        %v8517 = vcombine.high %v8501, %v8501
        %v8518 = vcombine.high %v8508, %v8508
        %v8519 = vcombine.high %v8515, %v8515
        %v8528 = vadd.f32 %v8432, %v8494
        %v8529 = vadd.f32 %v8433, %v8508
        %v8530 = vadd.f32 %v8434, %v8516
        %v8531 = vadd.f32 %v8435, %v8518
        %v8532 = vadd.f32 %v8436, %v8501
        %v8533 = vadd.f32 %v8437, %v8515
        %v8534 = vadd.f32 %v8438, %v8517
        %v8535 = vadd.f32 %v8439, %v8519
        %v8536 = vadd.f32 %v8440, %v8494
        %v8537 = vadd.f32 %v8441, %v8508
        %v8538 = vadd.f32 %v8442, %v8516
        %v8539 = vadd.f32 %v8443, %v8518
        %v8540 = vadd.f32 %v8444, %v8501
        %v8541 = vadd.f32 %v8445, %v8515
        %v8542 = vadd.f32 %v8446, %v8517
        %v8543 = vadd.f32 %v8447, %v8519
        %v8544 = vadd.f32 %v8448, %v8494
        %v8545 = vadd.f32 %v8449, %v8508
        %v8546 = vadd.f32 %v8450, %v8516
        %v8547 = vadd.f32 %v8451, %v8518
        %v8548 = vadd.f32 %v8452, %v8501
        %v8549 = vadd.f32 %v8453, %v8515
        %v8550 = vadd.f32 %v8454, %v8517
        %v8551 = vadd.f32 %v8455, %v8519
        %v8552 = vadd.f32 %v8456, %v8494
        %v8553 = vadd.f32 %v8457, %v8508
        %v8554 = vadd.f32 %v8458, %v8516
        %v8555 = vadd.f32 %v8459, %v8518
        %v8556 = vadd.f32 %v8460, %v8501
        %v8557 = vadd.f32 %v8461, %v8515
        %v8558 = vadd.f32 %v8462, %v8517
        %v8559 = vadd.f32 %v8463, %v8519
        %v8560 = vadd.f32 %v8464, %v8494
        %v8561 = vadd.f32 %v8465, %v8508
        %v8596 = vcombine.low %v8528, %v8529
        %v8597 = vcombine.low %v8530, %v8531
        %v8598 = vcombine.low %v8532, %v8533
        %v8599 = vcombine.low %v8534, %v8535
        %v8601 = vunpack.c.l.s4 1966171168
        %v8602 = vunpack.c.0.s8 %v8601
        %v8603 = vlaneseq
        %v8604 = vshrl.u32 %v8603, 7
        %v8605 = vsub.s32 %v8602, %v8604
        %v8606 = vrot.slane %v8596, %v8605
        %v8608 = vunpack.c.l.s4 1966171168
        %v8609 = vunpack.c.0.s8 %v8608
        %v8610 = vlaneseq
        %v8611 = vshrl.u32 %v8610, 7
        %v8612 = vsub.s32 %v8609, %v8611
        %v8613 = vrot.slane %v8597, %v8612
        %v8615 = vunpack.c.l.s4 1966171168
        %v8616 = vunpack.c.0.s8 %v8615
        %v8617 = vlaneseq
        %v8618 = vshrl.u32 %v8617, 7
        %v8619 = vsub.s32 %v8616, %v8618
        %v8620 = vrot.slane %v8598, %v8619
        %v8622 = vunpack.c.l.s4 1966171168
        %v8623 = vunpack.c.0.s8 %v8622
        %v8624 = vlaneseq
        %v8625 = vshrl.u32 %v8624, 7
        %v8626 = vsub.s32 %v8623, %v8625
        %v8627 = vrot.slane %v8599, %v8626
        %v8628 = vcombine.low %v8606, %v8613
        %v8629 = vcombine.low %v8620, %v8627
        %v8631 = vunpack.c.l.s4 1966171168
        %v8632 = vunpack.c.0.s8 %v8631
        %v8633 = vlaneseq
        %v8634 = vshrl.u32 %v8633, 7
        %v8635 = vsub.s32 %v8632, %v8634
        %v8636 = vrot.slane %v8628, %v8635
        %v8638 = vunpack.c.l.s4 1966171168
        %v8639 = vunpack.c.0.s8 %v8638
        %v8640 = vlaneseq
        %v8641 = vshrl.u32 %v8640, 7
        %v8642 = vsub.s32 %v8639, %v8641
        %v8643 = vrot.slane %v8629, %v8642
        %v8644 = vcombine.low %v8636, %v8643
        %v8645 = vcombine.low %v8536, %v8537
        %v8646 = vcombine.low %v8538, %v8539
        %v8647 = vcombine.low %v8540, %v8541
        %v8648 = vcombine.low %v8542, %v8543
        %v8650 = vunpack.c.l.s4 1966171168
        %v8651 = vunpack.c.0.s8 %v8650
        %v8652 = vlaneseq
        %v8653 = vshrl.u32 %v8652, 7
        %v8654 = vsub.s32 %v8651, %v8653
        %v8655 = vrot.slane %v8645, %v8654
        %v8657 = vunpack.c.l.s4 1966171168
        %v8658 = vunpack.c.0.s8 %v8657
        %v8659 = vlaneseq
        %v8660 = vshrl.u32 %v8659, 7
        %v8661 = vsub.s32 %v8658, %v8660
        %v8662 = vrot.slane %v8646, %v8661
        %v8664 = vunpack.c.l.s4 1966171168
        %v8665 = vunpack.c.0.s8 %v8664
        %v8666 = vlaneseq
        %v8667 = vshrl.u32 %v8666, 7
        %v8668 = vsub.s32 %v8665, %v8667
        %v8669 = vrot.slane %v8647, %v8668
        %v8671 = vunpack.c.l.s4 1966171168
        %v8672 = vunpack.c.0.s8 %v8671
        %v8673 = vlaneseq
        %v8674 = vshrl.u32 %v8673, 7
        %v8675 = vsub.s32 %v8672, %v8674
        %v8676 = vrot.slane %v8648, %v8675
        %v8677 = vcombine.low %v8655, %v8662
        %v8678 = vcombine.low %v8669, %v8676
        %v8680 = vunpack.c.l.s4 1966171168
        %v8681 = vunpack.c.0.s8 %v8680
        %v8682 = vlaneseq
        %v8683 = vshrl.u32 %v8682, 7
        %v8684 = vsub.s32 %v8681, %v8683
        %v8685 = vrot.slane %v8677, %v8684
        %v8687 = vunpack.c.l.s4 1966171168
        %v8688 = vunpack.c.0.s8 %v8687
        %v8689 = vlaneseq
        %v8690 = vshrl.u32 %v8689, 7
        %v8691 = vsub.s32 %v8688, %v8690
        %v8692 = vrot.slane %v8678, %v8691
        %v8693 = vcombine.low %v8685, %v8692
        %v8694 = vcombine.low %v8544, %v8545
        %v8695 = vcombine.low %v8546, %v8547
        %v8696 = vcombine.low %v8548, %v8549
        %v8697 = vcombine.low %v8550, %v8551
        %v8699 = vunpack.c.l.s4 1966171168
        %v8700 = vunpack.c.0.s8 %v8699
        %v8701 = vlaneseq
        %v8702 = vshrl.u32 %v8701, 7
        %v8703 = vsub.s32 %v8700, %v8702
        %v8704 = vrot.slane %v8694, %v8703
        %v8706 = vunpack.c.l.s4 1966171168
        %v8707 = vunpack.c.0.s8 %v8706
        %v8708 = vlaneseq
        %v8709 = vshrl.u32 %v8708, 7
        %v8710 = vsub.s32 %v8707, %v8709
        %v8711 = vrot.slane %v8695, %v8710
        %v8713 = vunpack.c.l.s4 1966171168
        %v8714 = vunpack.c.0.s8 %v8713
        %v8715 = vlaneseq
        %v8716 = vshrl.u32 %v8715, 7
        %v8717 = vsub.s32 %v8714, %v8716
        %v8718 = vrot.slane %v8696, %v8717
        %v8720 = vunpack.c.l.s4 1966171168
        %v8721 = vunpack.c.0.s8 %v8720
        %v8722 = vlaneseq
        %v8723 = vshrl.u32 %v8722, 7
        %v8724 = vsub.s32 %v8721, %v8723
        %v8725 = vrot.slane %v8697, %v8724
        %v8726 = vcombine.low %v8704, %v8711
        %v8727 = vcombine.low %v8718, %v8725
        %v8729 = vunpack.c.l.s4 1966171168
        %v8730 = vunpack.c.0.s8 %v8729
        %v8731 = vlaneseq
        %v8732 = vshrl.u32 %v8731, 7
        %v8733 = vsub.s32 %v8730, %v8732
        %v8734 = vrot.slane %v8726, %v8733
        %v8736 = vunpack.c.l.s4 1966171168
        %v8737 = vunpack.c.0.s8 %v8736
        %v8738 = vlaneseq
        %v8739 = vshrl.u32 %v8738, 7
        %v8740 = vsub.s32 %v8737, %v8739
        %v8741 = vrot.slane %v8727, %v8740
        %v8742 = vcombine.low %v8734, %v8741
        %v8743 = vcombine.low %v8552, %v8553
        %v8744 = vcombine.low %v8554, %v8555
        %v8745 = vcombine.low %v8556, %v8557
        %v8746 = vcombine.low %v8558, %v8559
        %v8748 = vunpack.c.l.s4 1966171168
        %v8749 = vunpack.c.0.s8 %v8748
        %v8750 = vlaneseq
        %v8751 = vshrl.u32 %v8750, 7
        %v8752 = vsub.s32 %v8749, %v8751
        %v8753 = vrot.slane %v8743, %v8752
        %v8755 = vunpack.c.l.s4 1966171168
        %v8756 = vunpack.c.0.s8 %v8755
        %v8757 = vlaneseq
        %v8758 = vshrl.u32 %v8757, 7
        %v8759 = vsub.s32 %v8756, %v8758
        %v8760 = vrot.slane %v8744, %v8759
        %v8762 = vunpack.c.l.s4 1966171168
        %v8763 = vunpack.c.0.s8 %v8762
        %v8764 = vlaneseq
        %v8765 = vshrl.u32 %v8764, 7
        %v8766 = vsub.s32 %v8763, %v8765
        %v8767 = vrot.slane %v8745, %v8766
        %v8769 = vunpack.c.l.s4 1966171168
        %v8770 = vunpack.c.0.s8 %v8769
        %v8771 = vlaneseq
        %v8772 = vshrl.u32 %v8771, 7
        %v8773 = vsub.s32 %v8770, %v8772
        %v8774 = vrot.slane %v8746, %v8773
        %v8775 = vcombine.low %v8753, %v8760
        %v8776 = vcombine.low %v8767, %v8774
        %v8778 = vunpack.c.l.s4 1966171168
        %v8779 = vunpack.c.0.s8 %v8778
        %v8780 = vlaneseq
        %v8781 = vshrl.u32 %v8780, 7
        %v8782 = vsub.s32 %v8779, %v8781
        %v8783 = vrot.slane %v8775, %v8782
        %v8785 = vunpack.c.l.s4 1966171168
        %v8786 = vunpack.c.0.s8 %v8785
        %v8787 = vlaneseq
        %v8788 = vshrl.u32 %v8787, 7
        %v8789 = vsub.s32 %v8786, %v8788
        %v8790 = vrot.slane %v8776, %v8789
        %v8791 = vcombine.low %v8783, %v8790
        %v8792 = vcombine.low %v8560, %v8561
        %v8794 = vunpack.c.l.s4 1966171168
        %v8795 = vunpack.c.0.s8 %v8794
        %v8796 = vlaneseq
        %v8797 = vshrl.u32 %v8796, 7
        %v8798 = vsub.s32 %v8795, %v8797
        %v8799 = vrot.slane %v8792, %v8798
        %v8801 = vunpack.c.l.s4 1966171168
        %v8802 = vunpack.c.0.s8 %v8801
        %v8803 = vlaneseq
        %v8804 = vshrl.u32 %v8803, 7
        %v8805 = vsub.s32 %v8802, %v8804
        %v8806 = vrot.slane %v8799, %v8805
        %v8812 = vpack.c.bf16 %v8693, %v8644
        %v8813 = vpack.c.bf16 %v8791, %v8742
        %v8814 = vpack.c.bf16 %v8806, %v8806
        %v8815 = vld [vmem:[%s899] sm:$0xf]
        %v8816 = vld [vmem:[%s899 + $0x4] sm:$0xf]
        %v8817 = vld [vmem:[%s899 + $0x8] sm:$0xf]
        %v8818 = vld [vmem:[%s899 + $0xc] sm:$0xf]
        %v8819 = vld [vmem:[%s899 + $0x10] sm:$0xf]
        %v8820 = vld [vmem:[%s899 + $0x14] sm:$0xf]
        %v8821 = vld [vmem:[%s899 + $0x18] sm:$0xf]
        %v8822 = vld [vmem:[%s899 + $0x1c] sm:$0xf]
        %v8823 = vld [vmem:[%s907] sm:$0x1]
        %v8825 = vlaneseq
        %v8826 = vshrl.u32 %v8825, 7
        %v8827 = vsub.s32 0, %v8826
        %v8828 = vrot.slane %v8823, %v8827
        %v8838 = vunpack.c.l.b16 %v8815
        %v8839 = vunpack.c.l.b16 %v8816
        %v8840 = vunpack.c.l.b16 %v8817
        %v8841 = vunpack.c.l.b16 %v8818
        %v8842 = vunpack.c.l.b16 %v8819
        %v8843 = vunpack.c.l.b16 %v8820
        %v8844 = vunpack.c.l.b16 %v8821
        %v8845 = vunpack.c.l.b16 %v8822
        %v8846 = vpack.c.b16 %v8839, %v8838
        %v8847 = vpack.c.b16 %v8841, %v8840
        %v8848 = vpack.c.b16 %v8843, %v8842
        %v8849 = vpack.c.b16 %v8845, %v8844
        %v8855 = vsel %vm1562, %v8812, 0
        %v8858 = vsel %vm1562, %v8813, 0
        %v8861 = vsel %vm1562, %v8814, 0
        %8863 = vmatprep.subr.bf16.mxu0 0
        %8864 = vmatpush1.bf16.msra.mxu0 %v8846
        %8865 = vmatprep.subr.bf16.mxu0 0
        %8866 = vmatpush1.bf16.msra.mxu0 %v8847
        %8867 = vmatprep.subr.bf16.mxu0 0
        %8868 = vmatpush1.bf16.msra.mxu0 %v8848
        %8869 = vmatprep.subr.bf16.mxu0 0
        %8870 = vmatpush1.bf16.msra.mxu0 %v8849
        %8871 = vmatprep.subr.bf16.mxu0 0
        %8872 = vmatpush1.bf16.msra.mxu0 0
        %8873 = vmatprep.subr.bf16.mxu0 0
        %8874 = vmatpush1.bf16.msra.mxu0 0
        %8875 = vmatprep.subr.bf16.mxu0 0
        %8876 = vmatpush1.bf16.msra.mxu0 0
        %8877 = vmatprep.subr.bf16.mxu0 0
        %8878 = vmatpush1.bf16.msra.mxu0 0
        %8879 = vmatprep.subr.bf16.mxu0 0
        %8880 = vmatpush1.bf16.msra.mxu0 0
        %8881 = vmatprep.subr.bf16.mxu0 0
        %8882 = vmatpush1.bf16.msra.mxu0 0
        %8883 = vmatprep.subr.bf16.mxu0 0
        %8884 = vmatpush1.bf16.msra.mxu0 0
        %8885 = vmatprep.subr.bf16.mxu0 0
        %8886 = vmatpush1.bf16.msra.mxu0 0
        %8887 = vmatprep.subr.bf16.mxu0 0
        %8888 = vmatpush1.bf16.msra.mxu0 0
        %8889 = vmatprep.subr.bf16.mxu0 0
        %8890 = vmatpush1.bf16.msra.mxu0 0
        %8891 = vmatprep.subr.bf16.mxu0 0
        %8892 = vmatpush1.bf16.msra.mxu0 0
        %8893 = vmatprep.subr.bf16.mxu0 0
        %8894 = vmatpush1.bf16.msra.mxu0 0
        %8895 = vmatprep.mubr.bf16.mxu0 0
        %8896 = vmatmul.mubr.bf16.gmra.mrb[0].mxu0 %v8855
        %v8897 = vpop.f32.mrb[0].mxu0
        %v8898 = vadd.f32 %v8828, %v8897
        %v8899 = vpop.f32.mrb[0].mxu0
        %v8900 = vpop.f32.mrb[0].mxu0
        %v8901 = vadd.f32 %v8828, %v8900
        %v8902 = vpop.f32.mrb[0].mxu0
        %8903 = vmatprep.mubr.bf16.mxu0 0
        %8904 = vmatmul.mubr.bf16.gmra.mrb[0].mxu0 %v8858
        %v8905 = vpop.f32.mrb[0].mxu0
        %v8906 = vadd.f32 %v8828, %v8905
        %v8907 = vpop.f32.mrb[0].mxu0
        %v8908 = vpop.f32.mrb[0].mxu0
        %v8909 = vadd.f32 %v8828, %v8908
        %v8910 = vpop.f32.mrb[0].mxu0
        %8911 = vmatprep.mubr.bf16.mxu0 0
        %8912 = vmatmul.mubr.bf16.gmra.mrb[0].mxu0 %v8861
        %v8913 = vpop.f32.mrb[0].mxu0
        %v8914 = vadd.f32 %v8828, %v8913
        %v8915 = vpop.f32.mrb[0].mxu0
        %v8916 = vpop.f32.mrb[0].mxu0
        %v8917 = vpop.f32.mrb[0].mxu0
        %8918 = vdwg.mxu0
        %v8919 = vmul.f32 %v8898, 0.5
        %v8920 = vmul.f32 %v8901, 0.5
        %v8921 = vmul.f32 %v8906, 0.5
        %v8922 = vmul.f32 %v8909, 0.5
        %v8923 = vmul.f32 %v8914, 0.5
        %v8924 = vmul.f32 %v8898, 0.70710677
        %v8925 = vmul.f32 %v8901, 0.70710677
        %v8926 = vmul.f32 %v8906, 0.70710677
        %v8927 = vmul.f32 %v8909, 0.70710677
        %v8928 = vmul.f32 %v8914, 0.70710677
        %v8929 = verf.f32.pop %v8924
        %v8930 = verf.f32.pop %v8925
        %v8931 = verf.f32.pop %v8926
        %v8932 = verf.f32.pop %v8927
        %v8933 = verf.f32.pop %v8928
        %v8934 = vadd.f32 %v8929, 1.0
        %v8935 = vadd.f32 %v8930, 1.0
        %v8936 = vadd.f32 %v8931, 1.0
        %v8937 = vadd.f32 %v8932, 1.0
        %v8938 = vadd.f32 %v8933, 1.0
        %v8939 = vmul.f32 %v8919, %v8934
        %v8940 = vmul.f32 %v8920, %v8935
        %v8941 = vmul.f32 %v8921, %v8936
        %v8942 = vmul.f32 %v8922, %v8937
        %v8943 = vmul.f32 %v8923, %v8938
        %v8944 = vpack.c.bf16 %v8940, %v8939
        %v8945 = vpack.c.bf16 %v8942, %v8941
        %v8946 = vpack.c.bf16 %v8943, %v8943
        %v8947 = vld [vmem:[%s916] sm:$0xf]
        %v8948 = vld [vmem:[%s916 + $0x4] sm:$0xf]
        %v8949 = vld [vmem:[%s916 + $0x8] sm:$0xf]
        %v8950 = vld [vmem:[%s916 + $0xc] sm:$0xf]
        %v8951 = vld [vmem:[%s916 + $0x10] sm:$0xf]
        %v8952 = vld [vmem:[%s916 + $0x14] sm:$0xf]
        %v8953 = vld [vmem:[%s916 + $0x18] sm:$0xf]
        %v8954 = vld [vmem:[%s916 + $0x1c] sm:$0xf]
        %v8955 = vld [vmem:[%s916 + $0x20] sm:$0xf]
        %v8956 = vld [vmem:[%s916 + $0x24] sm:$0xf]
        %v8957 = vld [vmem:[%s916 + $0x28] sm:$0xf]
        %v8958 = vld [vmem:[%s916 + $0x2c] sm:$0xf]
        %v8959 = vld [vmem:[%s916 + $0x30] sm:$0xf]
        %v8960 = vld [vmem:[%s916 + $0x34] sm:$0xf]
        %v8961 = vld [vmem:[%s916 + $0x38] sm:$0xf]
        %v8962 = vld [vmem:[%s916 + $0x3c] sm:$0xf]
        %v8963 = vld [vmem:[%s924] sm:$0x1]
        %v8965 = vlaneseq
        %v8966 = vshrl.u32 %v8965, 7
        %v8967 = vsub.s32 0, %v8966
        %v8968 = vrot.slane %v8963, %v8967
        %v8986 = vunpack.c.l.b16 %v8947
        %v8987 = vunpack.c.l.b16 %v8948
        %v8988 = vunpack.c.l.b16 %v8949
        %v8989 = vunpack.c.l.b16 %v8950
        %v8990 = vunpack.c.l.b16 %v8951
        %v8991 = vunpack.c.l.b16 %v8952
        %v8992 = vunpack.c.l.b16 %v8953
        %v8993 = vunpack.c.l.b16 %v8954
        %v8994 = vunpack.c.l.b16 %v8955
        %v8995 = vunpack.c.l.b16 %v8956
        %v8996 = vunpack.c.l.b16 %v8957
        %v8997 = vunpack.c.l.b16 %v8958
        %v8998 = vunpack.c.l.b16 %v8959
        %v8999 = vunpack.c.l.b16 %v8960
        %v9000 = vunpack.c.l.b16 %v8961
        %v9001 = vunpack.c.l.b16 %v8962
        %v9002 = vpack.c.b16 %v8987, %v8986
        %v9003 = vpack.c.b16 %v8989, %v8988
        %v9004 = vpack.c.b16 %v8991, %v8990
        %v9005 = vpack.c.b16 %v8993, %v8992
        %v9006 = vpack.c.b16 %v8995, %v8994
        %v9007 = vpack.c.b16 %v8997, %v8996
        %v9008 = vpack.c.b16 %v8999, %v8998
        %v9009 = vpack.c.b16 %v9001, %v9000
        %9018 = vmatprep.subr.bf16.mxu0 0
        %9019 = vmatpush1.bf16.msra.mxu0 %v9002
        %9020 = vmatprep.subr.bf16.mxu0 0
        %9021 = vmatpush1.bf16.msra.mxu0 %v9003
        %9022 = vmatprep.subr.bf16.mxu0 0
        %9023 = vmatpush1.bf16.msra.mxu0 %v9004
        %9024 = vmatprep.subr.bf16.mxu0 0
        %9025 = vmatpush1.bf16.msra.mxu0 %v9005
        %9026 = vmatprep.subr.bf16.mxu0 0
        %9027 = vmatpush1.bf16.msra.mxu0 %v9006
        %9028 = vmatprep.subr.bf16.mxu0 0
        %9029 = vmatpush1.bf16.msra.mxu0 %v9007
        %9030 = vmatprep.subr.bf16.mxu0 0
        %9031 = vmatpush1.bf16.msra.mxu0 %v9008
        %9032 = vmatprep.subr.bf16.mxu0 0
        %9033 = vmatpush1.bf16.msra.mxu0 %v9009
        %9034 = vmatprep.subr.bf16.mxu0 0
        %9035 = vmatpush1.bf16.msra.mxu0 0
        %9036 = vmatprep.subr.bf16.mxu0 0
        %9037 = vmatpush1.bf16.msra.mxu0 0
        %9038 = vmatprep.subr.bf16.mxu0 0
        %9039 = vmatpush1.bf16.msra.mxu0 0
        %9040 = vmatprep.subr.bf16.mxu0 0
        %9041 = vmatpush1.bf16.msra.mxu0 0
        %9042 = vmatprep.subr.bf16.mxu0 0
        %9043 = vmatpush1.bf16.msra.mxu0 0
        %9044 = vmatprep.subr.bf16.mxu0 0
        %9045 = vmatpush1.bf16.msra.mxu0 0
        %9046 = vmatprep.subr.bf16.mxu0 0
        %9047 = vmatpush1.bf16.msra.mxu0 0
        %9048 = vmatprep.subr.bf16.mxu0 0
        %9049 = vmatpush1.bf16.msra.mxu0 0
        %9050 = vmatprep.mubr.bf16.mxu0 0
        %9051 = vmatmul.mubr.bf16.gmra.mrb[0].mxu0 %v8944
        %v9052 = vpop.f32.mrb[0].mxu0
        %v9053 = vadd.f32 %v8968, %v9052
        %v9054 = vpop.f32.mrb[0].mxu0
        %v9055 = vpop.f32.mrb[0].mxu0
        %v9056 = vadd.f32 %v8968, %v9055
        %v9057 = vpop.f32.mrb[0].mxu0
        %9058 = vmatprep.mubr.bf16.mxu0 0
        %9059 = vmatmul.mubr.bf16.gmra.mrb[0].mxu0 %v8945
        %v9060 = vpop.f32.mrb[0].mxu0
        %v9061 = vadd.f32 %v8968, %v9060
        %v9062 = vpop.f32.mrb[0].mxu0
        %v9063 = vpop.f32.mrb[0].mxu0
        %v9064 = vadd.f32 %v8968, %v9063
        %v9065 = vpop.f32.mrb[0].mxu0
        %9066 = vmatprep.mubr.bf16.mxu0 0
        %9067 = vmatmul.mubr.bf16.gmra.mrb[0].mxu0 %v8946
        %v9068 = vpop.f32.mrb[0].mxu0
        %v9069 = vadd.f32 %v8968, %v9068
        %v9070 = vpop.f32.mrb[0].mxu0
        %v9071 = vpop.f32.mrb[0].mxu0
        %v9072 = vpop.f32.mrb[0].mxu0
        %9073 = vdwg.mxu0
        %v9079 = vcombine.high %v9053, %v9053
        %v9081 = vunpack.c.l.s4 1966171168
        %v9082 = vunpack.c.0.s8 %v9081
        %v9083 = vlaneseq
        %v9084 = vshrl.u32 %v9083, 7
        %v9085 = vsub.s32 %v9082, %v9084
        %v9086 = vrot.slane %v9053, %v9085
        %v9088 = vunpack.c.l.s4 1966171168
        %v9089 = vunpack.c.0.s8 %v9088
        %v9090 = vlaneseq
        %v9091 = vshrl.u32 %v9090, 7
        %v9092 = vsub.s32 %v9089, %v9091
        %v9093 = vrot.slane %v9079, %v9092
        %v9094 = vcombine.high %v9086, %v9086
        %v9095 = vcombine.high %v9093, %v9093
        %v9097 = vunpack.c.l.s4 1966171168
        %v9098 = vunpack.c.0.s8 %v9097
        %v9099 = vlaneseq
        %v9100 = vshrl.u32 %v9099, 7
        %v9101 = vsub.s32 %v9098, %v9100
        %v9102 = vrot.slane %v9086, %v9101
        %v9104 = vunpack.c.l.s4 1966171168
        %v9105 = vunpack.c.0.s8 %v9104
        %v9106 = vlaneseq
        %v9107 = vshrl.u32 %v9106, 7
        %v9108 = vsub.s32 %v9105, %v9107
        %v9109 = vrot.slane %v9093, %v9108
        %v9111 = vunpack.c.l.s4 1966171168
        %v9112 = vunpack.c.0.s8 %v9111
        %v9113 = vlaneseq
        %v9114 = vshrl.u32 %v9113, 7
        %v9115 = vsub.s32 %v9112, %v9114
        %v9116 = vrot.slane %v9094, %v9115
        %v9118 = vunpack.c.l.s4 1966171168
        %v9119 = vunpack.c.0.s8 %v9118
        %v9120 = vlaneseq
        %v9121 = vshrl.u32 %v9120, 7
        %v9122 = vsub.s32 %v9119, %v9121
        %v9123 = vrot.slane %v9095, %v9122
        %v9124 = vcombine.high %v9102, %v9102
        %v9125 = vcombine.high %v9109, %v9109
        %v9126 = vcombine.high %v9116, %v9116
        %v9127 = vcombine.high %v9123, %v9123
        %v9128 = vcombine.high %v9056, %v9056
        %v9130 = vunpack.c.l.s4 1966171168
        %v9131 = vunpack.c.0.s8 %v9130
        %v9132 = vlaneseq
        %v9133 = vshrl.u32 %v9132, 7
        %v9134 = vsub.s32 %v9131, %v9133
        %v9135 = vrot.slane %v9056, %v9134
        %v9137 = vunpack.c.l.s4 1966171168
        %v9138 = vunpack.c.0.s8 %v9137
        %v9139 = vlaneseq
        %v9140 = vshrl.u32 %v9139, 7
        %v9141 = vsub.s32 %v9138, %v9140
        %v9142 = vrot.slane %v9128, %v9141
        %v9143 = vcombine.high %v9135, %v9135
        %v9144 = vcombine.high %v9142, %v9142
        %v9146 = vunpack.c.l.s4 1966171168
        %v9147 = vunpack.c.0.s8 %v9146
        %v9148 = vlaneseq
        %v9149 = vshrl.u32 %v9148, 7
        %v9150 = vsub.s32 %v9147, %v9149
        %v9151 = vrot.slane %v9135, %v9150
        %v9153 = vunpack.c.l.s4 1966171168
        %v9154 = vunpack.c.0.s8 %v9153
        %v9155 = vlaneseq
        %v9156 = vshrl.u32 %v9155, 7
        %v9157 = vsub.s32 %v9154, %v9156
        %v9158 = vrot.slane %v9142, %v9157
        %v9160 = vunpack.c.l.s4 1966171168
        %v9161 = vunpack.c.0.s8 %v9160
        %v9162 = vlaneseq
        %v9163 = vshrl.u32 %v9162, 7
        %v9164 = vsub.s32 %v9161, %v9163
        %v9165 = vrot.slane %v9143, %v9164
        %v9167 = vunpack.c.l.s4 1966171168
        %v9168 = vunpack.c.0.s8 %v9167
        %v9169 = vlaneseq
        %v9170 = vshrl.u32 %v9169, 7
        %v9171 = vsub.s32 %v9168, %v9170
        %v9172 = vrot.slane %v9144, %v9171
        %v9173 = vcombine.high %v9151, %v9151
        %v9174 = vcombine.high %v9158, %v9158
        %v9175 = vcombine.high %v9165, %v9165
        %v9176 = vcombine.high %v9172, %v9172
        %v9177 = vcombine.high %v9061, %v9061
        %v9179 = vunpack.c.l.s4 1966171168
        %v9180 = vunpack.c.0.s8 %v9179
        %v9181 = vlaneseq
        %v9182 = vshrl.u32 %v9181, 7
        %v9183 = vsub.s32 %v9180, %v9182
        %v9184 = vrot.slane %v9061, %v9183
        %v9186 = vunpack.c.l.s4 1966171168
        %v9187 = vunpack.c.0.s8 %v9186
        %v9188 = vlaneseq
        %v9189 = vshrl.u32 %v9188, 7
        %v9190 = vsub.s32 %v9187, %v9189
        %v9191 = vrot.slane %v9177, %v9190
        %v9192 = vcombine.high %v9184, %v9184
        %v9193 = vcombine.high %v9191, %v9191
        %v9195 = vunpack.c.l.s4 1966171168
        %v9196 = vunpack.c.0.s8 %v9195
        %v9197 = vlaneseq
        %v9198 = vshrl.u32 %v9197, 7
        %v9199 = vsub.s32 %v9196, %v9198
        %v9200 = vrot.slane %v9184, %v9199
        %v9202 = vunpack.c.l.s4 1966171168
        %v9203 = vunpack.c.0.s8 %v9202
        %v9204 = vlaneseq
        %v9205 = vshrl.u32 %v9204, 7
        %v9206 = vsub.s32 %v9203, %v9205
        %v9207 = vrot.slane %v9191, %v9206
        %v9209 = vunpack.c.l.s4 1966171168
        %v9210 = vunpack.c.0.s8 %v9209
        %v9211 = vlaneseq
        %v9212 = vshrl.u32 %v9211, 7
        %v9213 = vsub.s32 %v9210, %v9212
        %v9214 = vrot.slane %v9192, %v9213
        %v9216 = vunpack.c.l.s4 1966171168
        %v9217 = vunpack.c.0.s8 %v9216
        %v9218 = vlaneseq
        %v9219 = vshrl.u32 %v9218, 7
        %v9220 = vsub.s32 %v9217, %v9219
        %v9221 = vrot.slane %v9193, %v9220
        %v9222 = vcombine.high %v9200, %v9200
        %v9223 = vcombine.high %v9207, %v9207
        %v9224 = vcombine.high %v9214, %v9214
        %v9225 = vcombine.high %v9221, %v9221
        %v9226 = vcombine.high %v9064, %v9064
        %v9228 = vunpack.c.l.s4 1966171168
        %v9229 = vunpack.c.0.s8 %v9228
        %v9230 = vlaneseq
        %v9231 = vshrl.u32 %v9230, 7
        %v9232 = vsub.s32 %v9229, %v9231
        %v9233 = vrot.slane %v9064, %v9232
        %v9235 = vunpack.c.l.s4 1966171168
        %v9236 = vunpack.c.0.s8 %v9235
        %v9237 = vlaneseq
        %v9238 = vshrl.u32 %v9237, 7
        %v9239 = vsub.s32 %v9236, %v9238
        %v9240 = vrot.slane %v9226, %v9239
        %v9241 = vcombine.high %v9233, %v9233
        %v9242 = vcombine.high %v9240, %v9240
        %v9244 = vunpack.c.l.s4 1966171168
        %v9245 = vunpack.c.0.s8 %v9244
        %v9246 = vlaneseq
        %v9247 = vshrl.u32 %v9246, 7
        %v9248 = vsub.s32 %v9245, %v9247
        %v9249 = vrot.slane %v9233, %v9248
        %v9251 = vunpack.c.l.s4 1966171168
        %v9252 = vunpack.c.0.s8 %v9251
        %v9253 = vlaneseq
        %v9254 = vshrl.u32 %v9253, 7
        %v9255 = vsub.s32 %v9252, %v9254
        %v9256 = vrot.slane %v9240, %v9255
        %v9258 = vunpack.c.l.s4 1966171168
        %v9259 = vunpack.c.0.s8 %v9258
        %v9260 = vlaneseq
        %v9261 = vshrl.u32 %v9260, 7
        %v9262 = vsub.s32 %v9259, %v9261
        %v9263 = vrot.slane %v9241, %v9262
        %v9265 = vunpack.c.l.s4 1966171168
        %v9266 = vunpack.c.0.s8 %v9265
        %v9267 = vlaneseq
        %v9268 = vshrl.u32 %v9267, 7
        %v9269 = vsub.s32 %v9266, %v9268
        %v9270 = vrot.slane %v9242, %v9269
        %v9271 = vcombine.high %v9249, %v9249
        %v9272 = vcombine.high %v9256, %v9256
        %v9273 = vcombine.high %v9263, %v9263
        %v9274 = vcombine.high %v9270, %v9270
        %v9276 = vunpack.c.l.s4 1966171168
        %v9277 = vunpack.c.0.s8 %v9276
        %v9278 = vlaneseq
        %v9279 = vshrl.u32 %v9278, 7
        %v9280 = vsub.s32 %v9277, %v9279
        %v9281 = vrot.slane %v9069, %v9280
        %v9282 = vcombine.high %v9281, %v9281
        %v9284 = vunpack.c.l.s4 1966171168
        %v9285 = vunpack.c.0.s8 %v9284
        %v9286 = vlaneseq
        %v9287 = vshrl.u32 %v9286, 7
        %v9288 = vsub.s32 %v9285, %v9287
        %v9289 = vrot.slane %v9281, %v9288
        %v9291 = vunpack.c.l.s4 1966171168
        %v9292 = vunpack.c.0.s8 %v9291
        %v9293 = vlaneseq
        %v9294 = vshrl.u32 %v9293, 7
        %v9295 = vsub.s32 %v9292, %v9294
        %v9296 = vrot.slane %v9282, %v9295
        %v9331 = vadd.f32 %v7332, %v9102
        %v9332 = vadd.f32 %v7333, %v9116
        %v9333 = vadd.f32 %v7334, %v9124
        %v9334 = vadd.f32 %v7335, %v9126
        %v9335 = vadd.f32 %v7336, %v9109
        %v9336 = vadd.f32 %v7337, %v9123
        %v9337 = vadd.f32 %v7338, %v9125
        %v9338 = vadd.f32 %v7339, %v9127
        %v9339 = vadd.f32 %v7340, %v9151
        %v9340 = vadd.f32 %v7341, %v9165
        %v9341 = vadd.f32 %v7342, %v9173
        %v9342 = vadd.f32 %v7343, %v9175
        %v9343 = vadd.f32 %v7344, %v9158
        %v9344 = vadd.f32 %v7345, %v9172
        %v9345 = vadd.f32 %v7346, %v9174
        %v9346 = vadd.f32 %v7347, %v9176
        %v9347 = vadd.f32 %v7348, %v9200
        %v9348 = vadd.f32 %v7349, %v9214
        %v9349 = vadd.f32 %v7350, %v9222
        %v9350 = vadd.f32 %v7351, %v9224
        %v9351 = vadd.f32 %v7352, %v9207
        %v9352 = vadd.f32 %v7353, %v9221
        %v9353 = vadd.f32 %v7354, %v9223
        %v9354 = vadd.f32 %v7355, %v9225
        %v9355 = vadd.f32 %v7356, %v9249
        %v9356 = vadd.f32 %v7357, %v9263
        %v9357 = vadd.f32 %v7358, %v9271
        %v9358 = vadd.f32 %v7359, %v9273
        %v9359 = vadd.f32 %v7360, %v9256
        %v9360 = vadd.f32 %v7361, %v9270
        %v9361 = vadd.f32 %v7362, %v9272
        %v9362 = vadd.f32 %v7363, %v9274
        %v9363 = vadd.f32 %v7364, %v9289
        %v9364 = vadd.f32 %v7365, %v9296
        %p9365 = scmp.lt.s32.totalorder %s55, 2
        // Predicated region
        $region161: #{dino_forward.3} parent=87 // pred_check
          %p9366 = pneg %p9365
        $region162: #{dino_forward.3} parent=87 // pred_check_branch
          %9368 = sbr.rel (%p9366) target = $region164
        $region163: #{dino_forward.3} parent=87 // pred_region
          %v9403 = vcombine.low %v9331, %v9332
          %v9404 = vcombine.low %v9333, %v9334
          %v9405 = vcombine.low %v9335, %v9336
          %v9406 = vcombine.low %v9337, %v9338
          %v9408 = vunpack.c.l.s4 1966171168
          %v9409 = vunpack.c.0.s8 %v9408
          %v9410 = vlaneseq
          %v9411 = vshrl.u32 %v9410, 7
          %v9412 = vsub.s32 %v9409, %v9411
          %v9413 = vrot.slane %v9403, %v9412
          %v9415 = vunpack.c.l.s4 1966171168
          %v9416 = vunpack.c.0.s8 %v9415
          %v9417 = vlaneseq
          %v9418 = vshrl.u32 %v9417, 7
          %v9419 = vsub.s32 %v9416, %v9418
          %v9420 = vrot.slane %v9404, %v9419
          %v9422 = vunpack.c.l.s4 1966171168
          %v9423 = vunpack.c.0.s8 %v9422
          %v9424 = vlaneseq
          %v9425 = vshrl.u32 %v9424, 7
          %v9426 = vsub.s32 %v9423, %v9425
          %v9427 = vrot.slane %v9405, %v9426
          %v9429 = vunpack.c.l.s4 1966171168
          %v9430 = vunpack.c.0.s8 %v9429
          %v9431 = vlaneseq
          %v9432 = vshrl.u32 %v9431, 7
          %v9433 = vsub.s32 %v9430, %v9432
          %v9434 = vrot.slane %v9406, %v9433
          %v9435 = vcombine.low %v9413, %v9420
          %v9436 = vcombine.low %v9427, %v9434
          %v9438 = vunpack.c.l.s4 1966171168
          %v9439 = vunpack.c.0.s8 %v9438
          %v9440 = vlaneseq
          %v9441 = vshrl.u32 %v9440, 7
          %v9442 = vsub.s32 %v9439, %v9441
          %v9443 = vrot.slane %v9435, %v9442
          %v9445 = vunpack.c.l.s4 1966171168
          %v9446 = vunpack.c.0.s8 %v9445
          %v9447 = vlaneseq
          %v9448 = vshrl.u32 %v9447, 7
          %v9449 = vsub.s32 %v9446, %v9448
          %v9450 = vrot.slane %v9436, %v9449
          %v9451 = vcombine.low %v9443, %v9450
          %v9452 = vcombine.low %v9339, %v9340
          %v9453 = vcombine.low %v9341, %v9342
          %v9454 = vcombine.low %v9343, %v9344
          %v9455 = vcombine.low %v9345, %v9346
          %v9457 = vunpack.c.l.s4 1966171168
          %v9458 = vunpack.c.0.s8 %v9457
          %v9459 = vlaneseq
          %v9460 = vshrl.u32 %v9459, 7
          %v9461 = vsub.s32 %v9458, %v9460
          %v9462 = vrot.slane %v9452, %v9461
          %v9464 = vunpack.c.l.s4 1966171168
          %v9465 = vunpack.c.0.s8 %v9464
          %v9466 = vlaneseq
          %v9467 = vshrl.u32 %v9466, 7
          %v9468 = vsub.s32 %v9465, %v9467
          %v9469 = vrot.slane %v9453, %v9468
          %v9471 = vunpack.c.l.s4 1966171168
          %v9472 = vunpack.c.0.s8 %v9471
          %v9473 = vlaneseq
          %v9474 = vshrl.u32 %v9473, 7
          %v9475 = vsub.s32 %v9472, %v9474
          %v9476 = vrot.slane %v9454, %v9475
          %v9478 = vunpack.c.l.s4 1966171168
          %v9479 = vunpack.c.0.s8 %v9478
          %v9480 = vlaneseq
          %v9481 = vshrl.u32 %v9480, 7
          %v9482 = vsub.s32 %v9479, %v9481
          %v9483 = vrot.slane %v9455, %v9482
          %v9484 = vcombine.low %v9462, %v9469
          %v9485 = vcombine.low %v9476, %v9483
          %v9487 = vunpack.c.l.s4 1966171168
          %v9488 = vunpack.c.0.s8 %v9487
          %v9489 = vlaneseq
          %v9490 = vshrl.u32 %v9489, 7
          %v9491 = vsub.s32 %v9488, %v9490
          %v9492 = vrot.slane %v9484, %v9491
          %v9494 = vunpack.c.l.s4 1966171168
          %v9495 = vunpack.c.0.s8 %v9494
          %v9496 = vlaneseq
          %v9497 = vshrl.u32 %v9496, 7
          %v9498 = vsub.s32 %v9495, %v9497
          %v9499 = vrot.slane %v9485, %v9498
          %v9500 = vcombine.low %v9492, %v9499
          %v9502 = vunpack.c.l.s4 1966171168
          %v9503 = vunpack.c.0.s8 %v9502
          %v9504 = vlaneseq
          %v9505 = vshrl.u32 %v9504, 7
          %v9506 = vsub.s32 %v9503, %v9505
          %v9507 = vrot.slane %v9347, %v9506
          %v9509 = vunpack.c.l.s4 1966171168
          %v9510 = vunpack.c.0.s8 %v9509
          %v9511 = vlaneseq
          %v9512 = vshrl.u32 %v9511, 7
          %v9513 = vsub.s32 %v9510, %v9512
          %v9514 = vrot.slane %v9507, %v9513
          %v9515 = vcombine.low %v9348, %v9349
          %v9516 = vcombine.low %v9350, %v9351
          %v9517 = vcombine.low %v9352, %v9353
          %v9518 = vcombine.low %v9354, %v9355
          %v9520 = vunpack.c.l.s4 1966171168
          %v9521 = vunpack.c.0.s8 %v9520
          %v9522 = vlaneseq
          %v9523 = vshrl.u32 %v9522, 7
          %v9524 = vsub.s32 %v9521, %v9523
          %v9525 = vrot.slane %v9515, %v9524
          %v9527 = vunpack.c.l.s4 1966171168
          %v9528 = vunpack.c.0.s8 %v9527
          %v9529 = vlaneseq
          %v9530 = vshrl.u32 %v9529, 7
          %v9531 = vsub.s32 %v9528, %v9530
          %v9532 = vrot.slane %v9516, %v9531
          %v9534 = vunpack.c.l.s4 1966171168
          %v9535 = vunpack.c.0.s8 %v9534
          %v9536 = vlaneseq
          %v9537 = vshrl.u32 %v9536, 7
          %v9538 = vsub.s32 %v9535, %v9537
          %v9539 = vrot.slane %v9517, %v9538
          %v9541 = vunpack.c.l.s4 1966171168
          %v9542 = vunpack.c.0.s8 %v9541
          %v9543 = vlaneseq
          %v9544 = vshrl.u32 %v9543, 7
          %v9545 = vsub.s32 %v9542, %v9544
          %v9546 = vrot.slane %v9518, %v9545
          %v9547 = vcombine.low %v9525, %v9532
          %v9548 = vcombine.low %v9539, %v9546
          %v9550 = vunpack.c.l.s4 1966171168
          %v9551 = vunpack.c.0.s8 %v9550
          %v9552 = vlaneseq
          %v9553 = vshrl.u32 %v9552, 7
          %v9554 = vsub.s32 %v9551, %v9553
          %v9555 = vrot.slane %v9547, %v9554
          %v9557 = vunpack.c.l.s4 1966171168
          %v9558 = vunpack.c.0.s8 %v9557
          %v9559 = vlaneseq
          %v9560 = vshrl.u32 %v9559, 7
          %v9561 = vsub.s32 %v9558, %v9560
          %v9562 = vrot.slane %v9548, %v9561
          %v9563 = vcombine.low %v9555, %v9562
          %v9564 = vcombine.low %v9356, %v9357
          %v9565 = vcombine.low %v9358, %v9359
          %v9566 = vcombine.low %v9360, %v9361
          %v9567 = vcombine.low %v9362, %v9363
          %v9569 = vunpack.c.l.s4 1966171168
          %v9570 = vunpack.c.0.s8 %v9569
          %v9571 = vlaneseq
          %v9572 = vshrl.u32 %v9571, 7
          %v9573 = vsub.s32 %v9570, %v9572
          %v9574 = vrot.slane %v9564, %v9573
          %v9576 = vunpack.c.l.s4 1966171168
          %v9577 = vunpack.c.0.s8 %v9576
          %v9578 = vlaneseq
          %v9579 = vshrl.u32 %v9578, 7
          %v9580 = vsub.s32 %v9577, %v9579
          %v9581 = vrot.slane %v9565, %v9580
          %v9583 = vunpack.c.l.s4 1966171168
          %v9584 = vunpack.c.0.s8 %v9583
          %v9585 = vlaneseq
          %v9586 = vshrl.u32 %v9585, 7
          %v9587 = vsub.s32 %v9584, %v9586
          %v9588 = vrot.slane %v9566, %v9587
          %v9590 = vunpack.c.l.s4 1966171168
          %v9591 = vunpack.c.0.s8 %v9590
          %v9592 = vlaneseq
          %v9593 = vshrl.u32 %v9592, 7
          %v9594 = vsub.s32 %v9591, %v9593
          %v9595 = vrot.slane %v9567, %v9594
          %v9596 = vcombine.low %v9574, %v9581
          %v9597 = vcombine.low %v9588, %v9595
          %v9599 = vunpack.c.l.s4 1966171168
          %v9600 = vunpack.c.0.s8 %v9599
          %v9601 = vlaneseq
          %v9602 = vshrl.u32 %v9601, 7
          %v9603 = vsub.s32 %v9600, %v9602
          %v9604 = vrot.slane %v9596, %v9603
          %v9606 = vunpack.c.l.s4 1966171168
          %v9607 = vunpack.c.0.s8 %v9606
          %v9608 = vlaneseq
          %v9609 = vshrl.u32 %v9608, 7
          %v9610 = vsub.s32 %v9607, %v9609
          %v9611 = vrot.slane %v9597, %v9610
          %v9612 = vcombine.low %v9604, %v9611
          %v9614 = vunpack.c.l.s4 1966171168
          %v9615 = vunpack.c.0.s8 %v9614
          %v9616 = vlaneseq
          %v9617 = vshrl.u32 %v9616, 7
          %v9618 = vsub.s32 %v9615, %v9617
          %v9619 = vrot.slane %v9364, %v9618
          %v9621 = vunpack.c.l.s4 1966171168
          %v9622 = vunpack.c.0.s8 %v9621
          %v9623 = vlaneseq
          %v9624 = vshrl.u32 %v9623, 7
          %v9625 = vsub.s32 %v9622, %v9624
          %v9626 = vrot.slane %v9619, %v9625
          %9633 = vst.msk [vmem:[#allocation30] sm:$0xff] %vm1562, %v9451
          %9634 = vst.msk [vmem:[#allocation30 + $0x8] sm:$0xff] %vm1562, %v9500
          %vm9635 = vcmask 516096
          %9636 = vst.msk [vmem:[#allocation30 + $0x10] sm:$0x1] %vm9635, %v9514
          %9637 = vst.msk [vmem:[#allocation30 + $0x18] sm:$0xff] %vm1562, %v9563
          %9638 = vst.msk [vmem:[#allocation30 + $0x20] sm:$0xff] %vm1562, %v9612
          %9639 = vst.msk [vmem:[#allocation30 + $0x28] sm:$0x1] %vm9635, %v9626
        $region164: #{dino_forward.3} parent=87 // pred_fallthru
          _
        %p9640 = scmp.eq.s32.totalorder %s55, 2
        // Predicated region
        $region165: #{dino_forward.3} parent=87 // pred_check
          %p9641 = pneg %p9640
        $region166: #{dino_forward.3} parent=87 // pred_check_branch
          %9643 = sbr.rel (%p9641) target = $region168
        $region167: #{dino_forward.3} parent=87 // pred_region
          %v9644 = vld [vmem:[#allocation27] sm:$0x1]
          %v9645 = vld [vmem:[#allocation29] sm:$0x1]
          %v9680 = vcombine.low %v9331, %v9332
          %v9681 = vcombine.low %v9333, %v9334
          %v9682 = vcombine.low %v9335, %v9336
          %v9683 = vcombine.low %v9337, %v9338
          %v9685 = vunpack.c.l.s4 1966171168
          %v9686 = vunpack.c.0.s8 %v9685
          %v9687 = vlaneseq
          %v9688 = vshrl.u32 %v9687, 7
          %v9689 = vsub.s32 %v9686, %v9688
          %v9690 = vrot.slane %v9680, %v9689
          %v9692 = vunpack.c.l.s4 1966171168
          %v9693 = vunpack.c.0.s8 %v9692
          %v9694 = vlaneseq
          %v9695 = vshrl.u32 %v9694, 7
          %v9696 = vsub.s32 %v9693, %v9695
          %v9697 = vrot.slane %v9681, %v9696
          %v9699 = vunpack.c.l.s4 1966171168
          %v9700 = vunpack.c.0.s8 %v9699
          %v9701 = vlaneseq
          %v9702 = vshrl.u32 %v9701, 7
          %v9703 = vsub.s32 %v9700, %v9702
          %v9704 = vrot.slane %v9682, %v9703
          %v9706 = vunpack.c.l.s4 1966171168
          %v9707 = vunpack.c.0.s8 %v9706
          %v9708 = vlaneseq
          %v9709 = vshrl.u32 %v9708, 7
          %v9710 = vsub.s32 %v9707, %v9709
          %v9711 = vrot.slane %v9683, %v9710
          %v9712 = vcombine.low %v9690, %v9697
          %v9713 = vcombine.low %v9704, %v9711
          %v9715 = vunpack.c.l.s4 1966171168
          %v9716 = vunpack.c.0.s8 %v9715
          %v9717 = vlaneseq
          %v9718 = vshrl.u32 %v9717, 7
          %v9719 = vsub.s32 %v9716, %v9718
          %v9720 = vrot.slane %v9712, %v9719
          %v9722 = vunpack.c.l.s4 1966171168
          %v9723 = vunpack.c.0.s8 %v9722
          %v9724 = vlaneseq
          %v9725 = vshrl.u32 %v9724, 7
          %v9726 = vsub.s32 %v9723, %v9725
          %v9727 = vrot.slane %v9713, %v9726
          %v9728 = vcombine.low %v9720, %v9727
          %v9729 = vcombine.low %v9339, %v9340
          %v9730 = vcombine.low %v9341, %v9342
          %v9731 = vcombine.low %v9343, %v9344
          %v9732 = vcombine.low %v9345, %v9346
          %v9734 = vunpack.c.l.s4 1966171168
          %v9735 = vunpack.c.0.s8 %v9734
          %v9736 = vlaneseq
          %v9737 = vshrl.u32 %v9736, 7
          %v9738 = vsub.s32 %v9735, %v9737
          %v9739 = vrot.slane %v9729, %v9738
          %v9741 = vunpack.c.l.s4 1966171168
          %v9742 = vunpack.c.0.s8 %v9741
          %v9743 = vlaneseq
          %v9744 = vshrl.u32 %v9743, 7
          %v9745 = vsub.s32 %v9742, %v9744
          %v9746 = vrot.slane %v9730, %v9745
          %v9748 = vunpack.c.l.s4 1966171168
          %v9749 = vunpack.c.0.s8 %v9748
          %v9750 = vlaneseq
          %v9751 = vshrl.u32 %v9750, 7
          %v9752 = vsub.s32 %v9749, %v9751
          %v9753 = vrot.slane %v9731, %v9752
          %v9755 = vunpack.c.l.s4 1966171168
          %v9756 = vunpack.c.0.s8 %v9755
          %v9757 = vlaneseq
          %v9758 = vshrl.u32 %v9757, 7
          %v9759 = vsub.s32 %v9756, %v9758
          %v9760 = vrot.slane %v9732, %v9759
          %v9761 = vcombine.low %v9739, %v9746
          %v9762 = vcombine.low %v9753, %v9760
          %v9764 = vunpack.c.l.s4 1966171168
          %v9765 = vunpack.c.0.s8 %v9764
          %v9766 = vlaneseq
          %v9767 = vshrl.u32 %v9766, 7
          %v9768 = vsub.s32 %v9765, %v9767
          %v9769 = vrot.slane %v9761, %v9768
          %v9771 = vunpack.c.l.s4 1966171168
          %v9772 = vunpack.c.0.s8 %v9771
          %v9773 = vlaneseq
          %v9774 = vshrl.u32 %v9773, 7
          %v9775 = vsub.s32 %v9772, %v9774
          %v9776 = vrot.slane %v9762, %v9775
          %v9777 = vcombine.low %v9769, %v9776
          %v9778 = vcombine.low %v9347, %v9348
          %v9779 = vcombine.low %v9349, %v9350
          %v9780 = vcombine.low %v9351, %v9352
          %v9781 = vcombine.low %v9353, %v9354
          %v9783 = vunpack.c.l.s4 1966171168
          %v9784 = vunpack.c.0.s8 %v9783
          %v9785 = vlaneseq
          %v9786 = vshrl.u32 %v9785, 7
          %v9787 = vsub.s32 %v9784, %v9786
          %v9788 = vrot.slane %v9778, %v9787
          %v9790 = vunpack.c.l.s4 1966171168
          %v9791 = vunpack.c.0.s8 %v9790
          %v9792 = vlaneseq
          %v9793 = vshrl.u32 %v9792, 7
          %v9794 = vsub.s32 %v9791, %v9793
          %v9795 = vrot.slane %v9779, %v9794
          %v9797 = vunpack.c.l.s4 1966171168
          %v9798 = vunpack.c.0.s8 %v9797
          %v9799 = vlaneseq
          %v9800 = vshrl.u32 %v9799, 7
          %v9801 = vsub.s32 %v9798, %v9800
          %v9802 = vrot.slane %v9780, %v9801
          %v9804 = vunpack.c.l.s4 1966171168
          %v9805 = vunpack.c.0.s8 %v9804
          %v9806 = vlaneseq
          %v9807 = vshrl.u32 %v9806, 7
          %v9808 = vsub.s32 %v9805, %v9807
          %v9809 = vrot.slane %v9781, %v9808
          %v9810 = vcombine.low %v9788, %v9795
          %v9811 = vcombine.low %v9802, %v9809
          %v9813 = vunpack.c.l.s4 1966171168
          %v9814 = vunpack.c.0.s8 %v9813
          %v9815 = vlaneseq
          %v9816 = vshrl.u32 %v9815, 7
          %v9817 = vsub.s32 %v9814, %v9816
          %v9818 = vrot.slane %v9810, %v9817
          %v9820 = vunpack.c.l.s4 1966171168
          %v9821 = vunpack.c.0.s8 %v9820
          %v9822 = vlaneseq
          %v9823 = vshrl.u32 %v9822, 7
          %v9824 = vsub.s32 %v9821, %v9823
          %v9825 = vrot.slane %v9811, %v9824
          %v9826 = vcombine.low %v9818, %v9825
          %v9827 = vcombine.low %v9355, %v9356
          %v9828 = vcombine.low %v9357, %v9358
          %v9829 = vcombine.low %v9359, %v9360
          %v9830 = vcombine.low %v9361, %v9362
          %v9832 = vunpack.c.l.s4 1966171168
          %v9833 = vunpack.c.0.s8 %v9832
          %v9834 = vlaneseq
          %v9835 = vshrl.u32 %v9834, 7
          %v9836 = vsub.s32 %v9833, %v9835
          %v9837 = vrot.slane %v9827, %v9836
          %v9839 = vunpack.c.l.s4 1966171168
          %v9840 = vunpack.c.0.s8 %v9839
          %v9841 = vlaneseq
          %v9842 = vshrl.u32 %v9841, 7
          %v9843 = vsub.s32 %v9840, %v9842
          %v9844 = vrot.slane %v9828, %v9843
          %v9846 = vunpack.c.l.s4 1966171168
          %v9847 = vunpack.c.0.s8 %v9846
          %v9848 = vlaneseq
          %v9849 = vshrl.u32 %v9848, 7
          %v9850 = vsub.s32 %v9847, %v9849
          %v9851 = vrot.slane %v9829, %v9850
          %v9853 = vunpack.c.l.s4 1966171168
          %v9854 = vunpack.c.0.s8 %v9853
          %v9855 = vlaneseq
          %v9856 = vshrl.u32 %v9855, 7
          %v9857 = vsub.s32 %v9854, %v9856
          %v9858 = vrot.slane %v9830, %v9857
          %v9859 = vcombine.low %v9837, %v9844
          %v9860 = vcombine.low %v9851, %v9858
          %v9862 = vunpack.c.l.s4 1966171168
          %v9863 = vunpack.c.0.s8 %v9862
          %v9864 = vlaneseq
          %v9865 = vshrl.u32 %v9864, 7
          %v9866 = vsub.s32 %v9863, %v9865
          %v9867 = vrot.slane %v9859, %v9866
          %v9869 = vunpack.c.l.s4 1966171168
          %v9870 = vunpack.c.0.s8 %v9869
          %v9871 = vlaneseq
          %v9872 = vshrl.u32 %v9871, 7
          %v9873 = vsub.s32 %v9870, %v9872
          %v9874 = vrot.slane %v9860, %v9873
          %v9875 = vcombine.low %v9867, %v9874
          %v9876 = vcombine.low %v9363, %v9364
          %v9878 = vunpack.c.l.s4 1966171168
          %v9879 = vunpack.c.0.s8 %v9878
          %v9880 = vlaneseq
          %v9881 = vshrl.u32 %v9880, 7
          %v9882 = vsub.s32 %v9879, %v9881
          %v9883 = vrot.slane %v9876, %v9882
          %v9885 = vunpack.c.l.s4 1966171168
          %v9886 = vunpack.c.0.s8 %v9885
          %v9887 = vlaneseq
          %v9888 = vshrl.u32 %v9887, 7
          %v9889 = vsub.s32 %v9886, %v9888
          %v9890 = vrot.slane %v9883, %v9889
          %v9896 = vsel %vm1562, %v9728, 0.0
          %9897 = vadd.xlane.f32.xlu0 %v9896
          %v9898 = vpop.xlane.xlu0 %9897
          %v9899 = vsel %vm1562, %v9777, 0.0
          %9900 = vadd.xlane.f32.xlu0 %v9899
          %v9901 = vpop.xlane.xlu0 %9900
          %v9902 = vsel %vm1562, %v9826, 0.0
          %9903 = vadd.xlane.f32.xlu0 %v9902
          %v9904 = vpop.xlane.xlu0 %9903
          %v9905 = vsel %vm1562, %v9875, 0.0
          %9906 = vadd.xlane.f32.xlu0 %v9905
          %v9907 = vpop.xlane.xlu0 %9906
          %v9908 = vsel %vm1575, %v9890, 0.0
          %9909 = vadd.xlane.f32.xlu0 %v9908
          %v9910 = vpop.xlane.xlu0 %9909
          %v9911 = vmul.f32 %v9898, %v1579
          %v9912 = vmul.f32 %v9901, %v1579
          %v9913 = vmul.f32 %v9904, %v1579
          %v9914 = vmul.f32 %v9907, %v1579
          %v9915 = vmul.f32 %v9910, %v1579
          %v9921 = vlaneseq
          %v9922 = vshrl.u32 %v9921, 7
          %v9923 = vsub.s32 0, %v9922
          %v9924 = vrot.slane %v9911, %v9923
          %v9925 = vlaneseq
          %v9926 = vshrl.u32 %v9925, 7
          %v9927 = vsub.s32 1, %v9926
          %v9928 = vrot.slane %v9911, %v9927
          %v9929 = vlaneseq
          %v9930 = vshrl.u32 %v9929, 7
          %v9931 = vsub.s32 2, %v9930
          %v9932 = vrot.slane %v9911, %v9931
          %v9933 = vlaneseq
          %v9934 = vshrl.u32 %v9933, 7
          %v9935 = vsub.s32 3, %v9934
          %v9936 = vrot.slane %v9911, %v9935
          %v9937 = vlaneseq
          %v9938 = vshrl.u32 %v9937, 7
          %v9939 = vsub.s32 4, %v9938
          %v9940 = vrot.slane %v9911, %v9939
          %v9941 = vlaneseq
          %v9942 = vshrl.u32 %v9941, 7
          %v9943 = vsub.s32 5, %v9942
          %v9944 = vrot.slane %v9911, %v9943
          %v9945 = vlaneseq
          %v9946 = vshrl.u32 %v9945, 7
          %v9947 = vsub.s32 6, %v9946
          %v9948 = vrot.slane %v9911, %v9947
          %v9949 = vlaneseq
          %v9950 = vshrl.u32 %v9949, 7
          %v9951 = vsub.s32 7, %v9950
          %v9952 = vrot.slane %v9911, %v9951
          %v9953 = vlaneseq
          %v9954 = vshrl.u32 %v9953, 7
          %v9955 = vsub.s32 0, %v9954
          %v9956 = vrot.slane %v9912, %v9955
          %v9957 = vlaneseq
          %v9958 = vshrl.u32 %v9957, 7
          %v9959 = vsub.s32 1, %v9958
          %v9960 = vrot.slane %v9912, %v9959
          %v9961 = vlaneseq
          %v9962 = vshrl.u32 %v9961, 7
          %v9963 = vsub.s32 2, %v9962
          %v9964 = vrot.slane %v9912, %v9963
          %v9965 = vlaneseq
          %v9966 = vshrl.u32 %v9965, 7
          %v9967 = vsub.s32 3, %v9966
          %v9968 = vrot.slane %v9912, %v9967
          %v9969 = vlaneseq
          %v9970 = vshrl.u32 %v9969, 7
          %v9971 = vsub.s32 4, %v9970
          %v9972 = vrot.slane %v9912, %v9971
          %v9973 = vlaneseq
          %v9974 = vshrl.u32 %v9973, 7
          %v9975 = vsub.s32 5, %v9974
          %v9976 = vrot.slane %v9912, %v9975
          %v9977 = vlaneseq
          %v9978 = vshrl.u32 %v9977, 7
          %v9979 = vsub.s32 6, %v9978
          %v9980 = vrot.slane %v9912, %v9979
          %v9981 = vlaneseq
          %v9982 = vshrl.u32 %v9981, 7
          %v9983 = vsub.s32 7, %v9982
          %v9984 = vrot.slane %v9912, %v9983
          %v9985 = vlaneseq
          %v9986 = vshrl.u32 %v9985, 7
          %v9987 = vsub.s32 0, %v9986
          %v9988 = vrot.slane %v9913, %v9987
          %v9989 = vlaneseq
          %v9990 = vshrl.u32 %v9989, 7
          %v9991 = vsub.s32 1, %v9990
          %v9992 = vrot.slane %v9913, %v9991
          %v9993 = vlaneseq
          %v9994 = vshrl.u32 %v9993, 7
          %v9995 = vsub.s32 2, %v9994
          %v9996 = vrot.slane %v9913, %v9995
          %v9997 = vlaneseq
          %v9998 = vshrl.u32 %v9997, 7
          %v9999 = vsub.s32 3, %v9998
          %v10000 = vrot.slane %v9913, %v9999
          %v10001 = vlaneseq
          %v10002 = vshrl.u32 %v10001, 7
          %v10003 = vsub.s32 4, %v10002
          %v10004 = vrot.slane %v9913, %v10003
          %v10005 = vlaneseq
          %v10006 = vshrl.u32 %v10005, 7
          %v10007 = vsub.s32 5, %v10006
          %v10008 = vrot.slane %v9913, %v10007
          %v10009 = vlaneseq
          %v10010 = vshrl.u32 %v10009, 7
          %v10011 = vsub.s32 6, %v10010
          %v10012 = vrot.slane %v9913, %v10011
          %v10013 = vlaneseq
          %v10014 = vshrl.u32 %v10013, 7
          %v10015 = vsub.s32 7, %v10014
          %v10016 = vrot.slane %v9913, %v10015
          %v10017 = vlaneseq
          %v10018 = vshrl.u32 %v10017, 7
          %v10019 = vsub.s32 0, %v10018
          %v10020 = vrot.slane %v9914, %v10019
          %v10021 = vlaneseq
          %v10022 = vshrl.u32 %v10021, 7
          %v10023 = vsub.s32 1, %v10022
          %v10024 = vrot.slane %v9914, %v10023
          %v10025 = vlaneseq
          %v10026 = vshrl.u32 %v10025, 7
          %v10027 = vsub.s32 2, %v10026
          %v10028 = vrot.slane %v9914, %v10027
          %v10029 = vlaneseq
          %v10030 = vshrl.u32 %v10029, 7
          %v10031 = vsub.s32 3, %v10030
          %v10032 = vrot.slane %v9914, %v10031
          %v10033 = vlaneseq
          %v10034 = vshrl.u32 %v10033, 7
          %v10035 = vsub.s32 4, %v10034
          %v10036 = vrot.slane %v9914, %v10035
          %v10037 = vlaneseq
          %v10038 = vshrl.u32 %v10037, 7
          %v10039 = vsub.s32 5, %v10038
          %v10040 = vrot.slane %v9914, %v10039
          %v10041 = vlaneseq
          %v10042 = vshrl.u32 %v10041, 7
          %v10043 = vsub.s32 6, %v10042
          %v10044 = vrot.slane %v9914, %v10043
          %v10045 = vlaneseq
          %v10046 = vshrl.u32 %v10045, 7
          %v10047 = vsub.s32 7, %v10046
          %v10048 = vrot.slane %v9914, %v10047
          %v10049 = vlaneseq
          %v10050 = vshrl.u32 %v10049, 7
          %v10051 = vsub.s32 0, %v10050
          %v10052 = vrot.slane %v9915, %v10051
          %v10053 = vlaneseq
          %v10054 = vshrl.u32 %v10053, 7
          %v10055 = vsub.s32 1, %v10054
          %v10056 = vrot.slane %v9915, %v10055
          %v10091 = vsub.f32 %v9331, %v9924
          %v10092 = vsub.f32 %v9332, %v9928
          %v10093 = vsub.f32 %v9333, %v9932
          %v10094 = vsub.f32 %v9334, %v9936
          %v10095 = vsub.f32 %v9335, %v9940
          %v10096 = vsub.f32 %v9336, %v9944
          %v10097 = vsub.f32 %v9337, %v9948
          %v10098 = vsub.f32 %v9338, %v9952
          %v10099 = vsub.f32 %v9339, %v9956
          %v10100 = vsub.f32 %v9340, %v9960
          %v10101 = vsub.f32 %v9341, %v9964
          %v10102 = vsub.f32 %v9342, %v9968
          %v10103 = vsub.f32 %v9343, %v9972
          %v10104 = vsub.f32 %v9344, %v9976
          %v10105 = vsub.f32 %v9345, %v9980
          %v10106 = vsub.f32 %v9346, %v9984
          %v10107 = vsub.f32 %v9347, %v9988
          %v10108 = vsub.f32 %v9348, %v9992
          %v10109 = vsub.f32 %v9349, %v9996
          %v10110 = vsub.f32 %v9350, %v10000
          %v10111 = vsub.f32 %v9351, %v10004
          %v10112 = vsub.f32 %v9352, %v10008
          %v10113 = vsub.f32 %v9353, %v10012
          %v10114 = vsub.f32 %v9354, %v10016
          %v10115 = vsub.f32 %v9355, %v10020
          %v10116 = vsub.f32 %v9356, %v10024
          %v10117 = vsub.f32 %v9357, %v10028
          %v10118 = vsub.f32 %v9358, %v10032
          %v10119 = vsub.f32 %v9359, %v10036
          %v10120 = vsub.f32 %v9360, %v10040
          %v10121 = vsub.f32 %v9361, %v10044
          %v10122 = vsub.f32 %v9362, %v10048
          %v10123 = vsub.f32 %v9363, %v10052
          %v10124 = vsub.f32 %v9364, %v10056
          %v10125 = vmul.f32 %v10091, %v10091
          %v10126 = vmul.f32 %v10092, %v10092
          %v10127 = vmul.f32 %v10093, %v10093
          %v10128 = vmul.f32 %v10094, %v10094
          %v10129 = vmul.f32 %v10095, %v10095
          %v10130 = vmul.f32 %v10096, %v10096
          %v10131 = vmul.f32 %v10097, %v10097
          %v10132 = vmul.f32 %v10098, %v10098
          %v10133 = vmul.f32 %v10099, %v10099
          %v10134 = vmul.f32 %v10100, %v10100
          %v10135 = vmul.f32 %v10101, %v10101
          %v10136 = vmul.f32 %v10102, %v10102
          %v10137 = vmul.f32 %v10103, %v10103
          %v10138 = vmul.f32 %v10104, %v10104
          %v10139 = vmul.f32 %v10105, %v10105
          %v10140 = vmul.f32 %v10106, %v10106
          %v10141 = vmul.f32 %v10107, %v10107
          %v10142 = vmul.f32 %v10108, %v10108
          %v10143 = vmul.f32 %v10109, %v10109
          %v10144 = vmul.f32 %v10110, %v10110
          %v10145 = vmul.f32 %v10111, %v10111
          %v10146 = vmul.f32 %v10112, %v10112
          %v10147 = vmul.f32 %v10113, %v10113
          %v10148 = vmul.f32 %v10114, %v10114
          %v10149 = vmul.f32 %v10115, %v10115
          %v10150 = vmul.f32 %v10116, %v10116
          %v10151 = vmul.f32 %v10117, %v10117
          %v10152 = vmul.f32 %v10118, %v10118
          %v10153 = vmul.f32 %v10119, %v10119
          %v10154 = vmul.f32 %v10120, %v10120
          %v10155 = vmul.f32 %v10121, %v10121
          %v10156 = vmul.f32 %v10122, %v10122
          %v10157 = vmul.f32 %v10123, %v10123
          %v10158 = vmul.f32 %v10124, %v10124
          %v10193 = vcombine.low %v10125, %v10126
          %v10194 = vcombine.low %v10127, %v10128
          %v10195 = vcombine.low %v10129, %v10130
          %v10196 = vcombine.low %v10131, %v10132
          %v10198 = vunpack.c.l.s4 1966171168
          %v10199 = vunpack.c.0.s8 %v10198
          %v10200 = vlaneseq
          %v10201 = vshrl.u32 %v10200, 7
          %v10202 = vsub.s32 %v10199, %v10201
          %v10203 = vrot.slane %v10193, %v10202
          %v10205 = vunpack.c.l.s4 1966171168
          %v10206 = vunpack.c.0.s8 %v10205
          %v10207 = vlaneseq
          %v10208 = vshrl.u32 %v10207, 7
          %v10209 = vsub.s32 %v10206, %v10208
          %v10210 = vrot.slane %v10194, %v10209
          %v10212 = vunpack.c.l.s4 1966171168
          %v10213 = vunpack.c.0.s8 %v10212
          %v10214 = vlaneseq
          %v10215 = vshrl.u32 %v10214, 7
          %v10216 = vsub.s32 %v10213, %v10215
          %v10217 = vrot.slane %v10195, %v10216
          %v10219 = vunpack.c.l.s4 1966171168
          %v10220 = vunpack.c.0.s8 %v10219
          %v10221 = vlaneseq
          %v10222 = vshrl.u32 %v10221, 7
          %v10223 = vsub.s32 %v10220, %v10222
          %v10224 = vrot.slane %v10196, %v10223
          %v10225 = vcombine.low %v10203, %v10210
          %v10226 = vcombine.low %v10217, %v10224
          %v10228 = vunpack.c.l.s4 1966171168
          %v10229 = vunpack.c.0.s8 %v10228
          %v10230 = vlaneseq
          %v10231 = vshrl.u32 %v10230, 7
          %v10232 = vsub.s32 %v10229, %v10231
          %v10233 = vrot.slane %v10225, %v10232
          %v10235 = vunpack.c.l.s4 1966171168
          %v10236 = vunpack.c.0.s8 %v10235
          %v10237 = vlaneseq
          %v10238 = vshrl.u32 %v10237, 7
          %v10239 = vsub.s32 %v10236, %v10238
          %v10240 = vrot.slane %v10226, %v10239
          %v10241 = vcombine.low %v10233, %v10240
          %v10242 = vcombine.low %v10133, %v10134
          %v10243 = vcombine.low %v10135, %v10136
          %v10244 = vcombine.low %v10137, %v10138
          %v10245 = vcombine.low %v10139, %v10140
          %v10247 = vunpack.c.l.s4 1966171168
          %v10248 = vunpack.c.0.s8 %v10247
          %v10249 = vlaneseq
          %v10250 = vshrl.u32 %v10249, 7
          %v10251 = vsub.s32 %v10248, %v10250
          %v10252 = vrot.slane %v10242, %v10251
          %v10254 = vunpack.c.l.s4 1966171168
          %v10255 = vunpack.c.0.s8 %v10254
          %v10256 = vlaneseq
          %v10257 = vshrl.u32 %v10256, 7
          %v10258 = vsub.s32 %v10255, %v10257
          %v10259 = vrot.slane %v10243, %v10258
          %v10261 = vunpack.c.l.s4 1966171168
          %v10262 = vunpack.c.0.s8 %v10261
          %v10263 = vlaneseq
          %v10264 = vshrl.u32 %v10263, 7
          %v10265 = vsub.s32 %v10262, %v10264
          %v10266 = vrot.slane %v10244, %v10265
          %v10268 = vunpack.c.l.s4 1966171168
          %v10269 = vunpack.c.0.s8 %v10268
          %v10270 = vlaneseq
          %v10271 = vshrl.u32 %v10270, 7
          %v10272 = vsub.s32 %v10269, %v10271
          %v10273 = vrot.slane %v10245, %v10272
          %v10274 = vcombine.low %v10252, %v10259
          %v10275 = vcombine.low %v10266, %v10273
          %v10277 = vunpack.c.l.s4 1966171168
          %v10278 = vunpack.c.0.s8 %v10277
          %v10279 = vlaneseq
          %v10280 = vshrl.u32 %v10279, 7
          %v10281 = vsub.s32 %v10278, %v10280
          %v10282 = vrot.slane %v10274, %v10281
          %v10284 = vunpack.c.l.s4 1966171168
          %v10285 = vunpack.c.0.s8 %v10284
          %v10286 = vlaneseq
          %v10287 = vshrl.u32 %v10286, 7
          %v10288 = vsub.s32 %v10285, %v10287
          %v10289 = vrot.slane %v10275, %v10288
          %v10290 = vcombine.low %v10282, %v10289
          %v10291 = vcombine.low %v10141, %v10142
          %v10292 = vcombine.low %v10143, %v10144
          %v10293 = vcombine.low %v10145, %v10146
          %v10294 = vcombine.low %v10147, %v10148
          %v10296 = vunpack.c.l.s4 1966171168
          %v10297 = vunpack.c.0.s8 %v10296
          %v10298 = vlaneseq
          %v10299 = vshrl.u32 %v10298, 7
          %v10300 = vsub.s32 %v10297, %v10299
          %v10301 = vrot.slane %v10291, %v10300
          %v10303 = vunpack.c.l.s4 1966171168
          %v10304 = vunpack.c.0.s8 %v10303
          %v10305 = vlaneseq
          %v10306 = vshrl.u32 %v10305, 7
          %v10307 = vsub.s32 %v10304, %v10306
          %v10308 = vrot.slane %v10292, %v10307
          %v10310 = vunpack.c.l.s4 1966171168
          %v10311 = vunpack.c.0.s8 %v10310
          %v10312 = vlaneseq
          %v10313 = vshrl.u32 %v10312, 7
          %v10314 = vsub.s32 %v10311, %v10313
          %v10315 = vrot.slane %v10293, %v10314
          %v10317 = vunpack.c.l.s4 1966171168
          %v10318 = vunpack.c.0.s8 %v10317
          %v10319 = vlaneseq
          %v10320 = vshrl.u32 %v10319, 7
          %v10321 = vsub.s32 %v10318, %v10320
          %v10322 = vrot.slane %v10294, %v10321
          %v10323 = vcombine.low %v10301, %v10308
          %v10324 = vcombine.low %v10315, %v10322
          %v10326 = vunpack.c.l.s4 1966171168
          %v10327 = vunpack.c.0.s8 %v10326
          %v10328 = vlaneseq
          %v10329 = vshrl.u32 %v10328, 7
          %v10330 = vsub.s32 %v10327, %v10329
          %v10331 = vrot.slane %v10323, %v10330
          %v10333 = vunpack.c.l.s4 1966171168
          %v10334 = vunpack.c.0.s8 %v10333
          %v10335 = vlaneseq
          %v10336 = vshrl.u32 %v10335, 7
          %v10337 = vsub.s32 %v10334, %v10336
          %v10338 = vrot.slane %v10324, %v10337
          %v10339 = vcombine.low %v10331, %v10338
          %v10340 = vcombine.low %v10149, %v10150
          %v10341 = vcombine.low %v10151, %v10152
          %v10342 = vcombine.low %v10153, %v10154
          %v10343 = vcombine.low %v10155, %v10156
          %v10345 = vunpack.c.l.s4 1966171168
          %v10346 = vunpack.c.0.s8 %v10345
          %v10347 = vlaneseq
          %v10348 = vshrl.u32 %v10347, 7
          %v10349 = vsub.s32 %v10346, %v10348
          %v10350 = vrot.slane %v10340, %v10349
          %v10352 = vunpack.c.l.s4 1966171168
          %v10353 = vunpack.c.0.s8 %v10352
          %v10354 = vlaneseq
          %v10355 = vshrl.u32 %v10354, 7
          %v10356 = vsub.s32 %v10353, %v10355
          %v10357 = vrot.slane %v10341, %v10356
          %v10359 = vunpack.c.l.s4 1966171168
          %v10360 = vunpack.c.0.s8 %v10359
          %v10361 = vlaneseq
          %v10362 = vshrl.u32 %v10361, 7
          %v10363 = vsub.s32 %v10360, %v10362
          %v10364 = vrot.slane %v10342, %v10363
          %v10366 = vunpack.c.l.s4 1966171168
          %v10367 = vunpack.c.0.s8 %v10366
          %v10368 = vlaneseq
          %v10369 = vshrl.u32 %v10368, 7
          %v10370 = vsub.s32 %v10367, %v10369
          %v10371 = vrot.slane %v10343, %v10370
          %v10372 = vcombine.low %v10350, %v10357
          %v10373 = vcombine.low %v10364, %v10371
          %v10375 = vunpack.c.l.s4 1966171168
          %v10376 = vunpack.c.0.s8 %v10375
          %v10377 = vlaneseq
          %v10378 = vshrl.u32 %v10377, 7
          %v10379 = vsub.s32 %v10376, %v10378
          %v10380 = vrot.slane %v10372, %v10379
          %v10382 = vunpack.c.l.s4 1966171168
          %v10383 = vunpack.c.0.s8 %v10382
          %v10384 = vlaneseq
          %v10385 = vshrl.u32 %v10384, 7
          %v10386 = vsub.s32 %v10383, %v10385
          %v10387 = vrot.slane %v10373, %v10386
          %v10388 = vcombine.low %v10380, %v10387
          %v10389 = vcombine.low %v10157, %v10158
          %v10391 = vunpack.c.l.s4 1966171168
          %v10392 = vunpack.c.0.s8 %v10391
          %v10393 = vlaneseq
          %v10394 = vshrl.u32 %v10393, 7
          %v10395 = vsub.s32 %v10392, %v10394
          %v10396 = vrot.slane %v10389, %v10395
          %v10398 = vunpack.c.l.s4 1966171168
          %v10399 = vunpack.c.0.s8 %v10398
          %v10400 = vlaneseq
          %v10401 = vshrl.u32 %v10400, 7
          %v10402 = vsub.s32 %v10399, %v10401
          %v10403 = vrot.slane %v10396, %v10402
          %v10409 = vsel %vm1562, %v10241, 0.0
          %10410 = vadd.xlane.f32.xlu0 %v10409
          %v10411 = vpop.xlane.xlu0 %10410
          %v10412 = vsel %vm1562, %v10290, 0.0
          %10413 = vadd.xlane.f32.xlu0 %v10412
          %v10414 = vpop.xlane.xlu0 %10413
          %v10415 = vsel %vm1562, %v10339, 0.0
          %10416 = vadd.xlane.f32.xlu0 %v10415
          %v10417 = vpop.xlane.xlu0 %10416
          %v10418 = vsel %vm1562, %v10388, 0.0
          %10419 = vadd.xlane.f32.xlu0 %v10418
          %v10420 = vpop.xlane.xlu0 %10419
          %v10421 = vsel %vm1575, %v10403, 0.0
          %10422 = vadd.xlane.f32.xlu0 %v10421
          %v10423 = vpop.xlane.xlu0 %10422
          %v10424 = vmul.f32 %v10411, %v1579
          %v10425 = vmul.f32 %v10414, %v1579
          %v10426 = vmul.f32 %v10417, %v1579
          %v10427 = vmul.f32 %v10420, %v1579
          %v10428 = vmul.f32 %v10423, %v1579
          %v10429 = vadd.f32 %v10424, 1e-12
          %v10430 = vadd.f32 %v10425, 1e-12
          %v10431 = vadd.f32 %v10426, 1e-12
          %v10432 = vadd.f32 %v10427, 1e-12
          %v10433 = vadd.f32 %v10428, 1e-12
          %v10434 = vrsqrt.pop %v10429
          %v10435 = vrsqrt.pop %v10430
          %v10436 = vrsqrt.pop %v10431
          %v10437 = vrsqrt.pop %v10432
          %v10438 = vrsqrt.pop %v10433
          %v10444 = vlaneseq
          %v10445 = vshrl.u32 %v10444, 7
          %v10446 = vsub.s32 0, %v10445
          %v10447 = vrot.slane %v10434, %v10446
          %v10448 = vlaneseq
          %v10449 = vshrl.u32 %v10448, 7
          %v10450 = vsub.s32 1, %v10449
          %v10451 = vrot.slane %v10434, %v10450
          %v10452 = vlaneseq
          %v10453 = vshrl.u32 %v10452, 7
          %v10454 = vsub.s32 2, %v10453
          %v10455 = vrot.slane %v10434, %v10454
          %v10456 = vlaneseq
          %v10457 = vshrl.u32 %v10456, 7
          %v10458 = vsub.s32 3, %v10457
          %v10459 = vrot.slane %v10434, %v10458
          %v10460 = vlaneseq
          %v10461 = vshrl.u32 %v10460, 7
          %v10462 = vsub.s32 4, %v10461
          %v10463 = vrot.slane %v10434, %v10462
          %v10464 = vlaneseq
          %v10465 = vshrl.u32 %v10464, 7
          %v10466 = vsub.s32 5, %v10465
          %v10467 = vrot.slane %v10434, %v10466
          %v10468 = vlaneseq
          %v10469 = vshrl.u32 %v10468, 7
          %v10470 = vsub.s32 6, %v10469
          %v10471 = vrot.slane %v10434, %v10470
          %v10472 = vlaneseq
          %v10473 = vshrl.u32 %v10472, 7
          %v10474 = vsub.s32 7, %v10473
          %v10475 = vrot.slane %v10434, %v10474
          %v10476 = vlaneseq
          %v10477 = vshrl.u32 %v10476, 7
          %v10478 = vsub.s32 0, %v10477
          %v10479 = vrot.slane %v10435, %v10478
          %v10480 = vlaneseq
          %v10481 = vshrl.u32 %v10480, 7
          %v10482 = vsub.s32 1, %v10481
          %v10483 = vrot.slane %v10435, %v10482
          %v10484 = vlaneseq
          %v10485 = vshrl.u32 %v10484, 7
          %v10486 = vsub.s32 2, %v10485
          %v10487 = vrot.slane %v10435, %v10486
          %v10488 = vlaneseq
          %v10489 = vshrl.u32 %v10488, 7
          %v10490 = vsub.s32 3, %v10489
          %v10491 = vrot.slane %v10435, %v10490
          %v10492 = vlaneseq
          %v10493 = vshrl.u32 %v10492, 7
          %v10494 = vsub.s32 4, %v10493
          %v10495 = vrot.slane %v10435, %v10494
          %v10496 = vlaneseq
          %v10497 = vshrl.u32 %v10496, 7
          %v10498 = vsub.s32 5, %v10497
          %v10499 = vrot.slane %v10435, %v10498
          %v10500 = vlaneseq
          %v10501 = vshrl.u32 %v10500, 7
          %v10502 = vsub.s32 6, %v10501
          %v10503 = vrot.slane %v10435, %v10502
          %v10504 = vlaneseq
          %v10505 = vshrl.u32 %v10504, 7
          %v10506 = vsub.s32 7, %v10505
          %v10507 = vrot.slane %v10435, %v10506
          %v10508 = vlaneseq
          %v10509 = vshrl.u32 %v10508, 7
          %v10510 = vsub.s32 0, %v10509
          %v10511 = vrot.slane %v10436, %v10510
          %v10512 = vlaneseq
          %v10513 = vshrl.u32 %v10512, 7
          %v10514 = vsub.s32 1, %v10513
          %v10515 = vrot.slane %v10436, %v10514
          %v10516 = vlaneseq
          %v10517 = vshrl.u32 %v10516, 7
          %v10518 = vsub.s32 2, %v10517
          %v10519 = vrot.slane %v10436, %v10518
          %v10520 = vlaneseq
          %v10521 = vshrl.u32 %v10520, 7
          %v10522 = vsub.s32 3, %v10521
          %v10523 = vrot.slane %v10436, %v10522
          %v10524 = vlaneseq
          %v10525 = vshrl.u32 %v10524, 7
          %v10526 = vsub.s32 4, %v10525
          %v10527 = vrot.slane %v10436, %v10526
          %v10528 = vlaneseq
          %v10529 = vshrl.u32 %v10528, 7
          %v10530 = vsub.s32 5, %v10529
          %v10531 = vrot.slane %v10436, %v10530
          %v10532 = vlaneseq
          %v10533 = vshrl.u32 %v10532, 7
          %v10534 = vsub.s32 6, %v10533
          %v10535 = vrot.slane %v10436, %v10534
          %v10536 = vlaneseq
          %v10537 = vshrl.u32 %v10536, 7
          %v10538 = vsub.s32 7, %v10537
          %v10539 = vrot.slane %v10436, %v10538
          %v10540 = vlaneseq
          %v10541 = vshrl.u32 %v10540, 7
          %v10542 = vsub.s32 0, %v10541
          %v10543 = vrot.slane %v10437, %v10542
          %v10544 = vlaneseq
          %v10545 = vshrl.u32 %v10544, 7
          %v10546 = vsub.s32 1, %v10545
          %v10547 = vrot.slane %v10437, %v10546
          %v10548 = vlaneseq
          %v10549 = vshrl.u32 %v10548, 7
          %v10550 = vsub.s32 2, %v10549
          %v10551 = vrot.slane %v10437, %v10550
          %v10552 = vlaneseq
          %v10553 = vshrl.u32 %v10552, 7
          %v10554 = vsub.s32 3, %v10553
          %v10555 = vrot.slane %v10437, %v10554
          %v10556 = vlaneseq
          %v10557 = vshrl.u32 %v10556, 7
          %v10558 = vsub.s32 4, %v10557
          %v10559 = vrot.slane %v10437, %v10558
          %v10560 = vlaneseq
          %v10561 = vshrl.u32 %v10560, 7
          %v10562 = vsub.s32 5, %v10561
          %v10563 = vrot.slane %v10437, %v10562
          %v10564 = vlaneseq
          %v10565 = vshrl.u32 %v10564, 7
          %v10566 = vsub.s32 6, %v10565
          %v10567 = vrot.slane %v10437, %v10566
          %v10568 = vlaneseq
          %v10569 = vshrl.u32 %v10568, 7
          %v10570 = vsub.s32 7, %v10569
          %v10571 = vrot.slane %v10437, %v10570
          %v10572 = vlaneseq
          %v10573 = vshrl.u32 %v10572, 7
          %v10574 = vsub.s32 0, %v10573
          %v10575 = vrot.slane %v10438, %v10574
          %v10576 = vlaneseq
          %v10577 = vshrl.u32 %v10576, 7
          %v10578 = vsub.s32 1, %v10577
          %v10579 = vrot.slane %v10438, %v10578
          %v10614 = vmul.f32 %v10091, %v10447
          %v10615 = vmul.f32 %v10092, %v10451
          %v10616 = vmul.f32 %v10093, %v10455
          %v10617 = vmul.f32 %v10094, %v10459
          %v10618 = vmul.f32 %v10095, %v10463
          %v10619 = vmul.f32 %v10096, %v10467
          %v10620 = vmul.f32 %v10097, %v10471
          %v10621 = vmul.f32 %v10098, %v10475
          %v10622 = vmul.f32 %v10099, %v10479
          %v10623 = vmul.f32 %v10100, %v10483
          %v10624 = vmul.f32 %v10101, %v10487
          %v10625 = vmul.f32 %v10102, %v10491
          %v10626 = vmul.f32 %v10103, %v10495
          %v10627 = vmul.f32 %v10104, %v10499
          %v10628 = vmul.f32 %v10105, %v10503
          %v10629 = vmul.f32 %v10106, %v10507
          %v10630 = vmul.f32 %v10107, %v10511
          %v10631 = vmul.f32 %v10108, %v10515
          %v10632 = vmul.f32 %v10109, %v10519
          %v10633 = vmul.f32 %v10110, %v10523
          %v10634 = vmul.f32 %v10111, %v10527
          %v10635 = vmul.f32 %v10112, %v10531
          %v10636 = vmul.f32 %v10113, %v10535
          %v10637 = vmul.f32 %v10114, %v10539
          %v10638 = vmul.f32 %v10115, %v10543
          %v10639 = vmul.f32 %v10116, %v10547
          %v10640 = vmul.f32 %v10117, %v10551
          %v10641 = vmul.f32 %v10118, %v10555
          %v10642 = vmul.f32 %v10119, %v10559
          %v10643 = vmul.f32 %v10120, %v10563
          %v10644 = vmul.f32 %v10121, %v10567
          %v10645 = vmul.f32 %v10122, %v10571
          %v10646 = vmul.f32 %v10123, %v10575
          %v10647 = vmul.f32 %v10124, %v10579
          %v10649 = vlaneseq
          %v10650 = vshrl.u32 %v10649, 7
          %v10651 = vsub.s32 0, %v10650
          %v10652 = vrot.slane %v9644, %v10651
          %v10653 = vcombine.high %v10652, %v10652
          %v10655 = vunpack.c.l.s4 1966171168
          %v10656 = vunpack.c.0.s8 %v10655
          %v10657 = vlaneseq
          %v10658 = vshrl.u32 %v10657, 7
          %v10659 = vsub.s32 %v10656, %v10658
          %v10660 = vrot.slane %v10652, %v10659
          %v10662 = vunpack.c.l.s4 1966171168
          %v10663 = vunpack.c.0.s8 %v10662
          %v10664 = vlaneseq
          %v10665 = vshrl.u32 %v10664, 7
          %v10666 = vsub.s32 %v10663, %v10665
          %v10667 = vrot.slane %v10653, %v10666
          %v10668 = vcombine.high %v10660, %v10660
          %v10669 = vcombine.high %v10667, %v10667
          %v10671 = vunpack.c.l.s4 1966171168
          %v10672 = vunpack.c.0.s8 %v10671
          %v10673 = vlaneseq
          %v10674 = vshrl.u32 %v10673, 7
          %v10675 = vsub.s32 %v10672, %v10674
          %v10676 = vrot.slane %v10660, %v10675
          %v10678 = vunpack.c.l.s4 1966171168
          %v10679 = vunpack.c.0.s8 %v10678
          %v10680 = vlaneseq
          %v10681 = vshrl.u32 %v10680, 7
          %v10682 = vsub.s32 %v10679, %v10681
          %v10683 = vrot.slane %v10667, %v10682
          %v10685 = vunpack.c.l.s4 1966171168
          %v10686 = vunpack.c.0.s8 %v10685
          %v10687 = vlaneseq
          %v10688 = vshrl.u32 %v10687, 7
          %v10689 = vsub.s32 %v10686, %v10688
          %v10690 = vrot.slane %v10668, %v10689
          %v10692 = vunpack.c.l.s4 1966171168
          %v10693 = vunpack.c.0.s8 %v10692
          %v10694 = vlaneseq
          %v10695 = vshrl.u32 %v10694, 7
          %v10696 = vsub.s32 %v10693, %v10695
          %v10697 = vrot.slane %v10669, %v10696
          %v10698 = vcombine.high %v10676, %v10676
          %v10699 = vcombine.high %v10683, %v10683
          %v10700 = vcombine.high %v10690, %v10690
          %v10701 = vcombine.high %v10697, %v10697
          %v10710 = vmul.f32 %v10614, %v10676
          %v10711 = vmul.f32 %v10615, %v10690
          %v10712 = vmul.f32 %v10616, %v10698
          %v10713 = vmul.f32 %v10617, %v10700
          %v10714 = vmul.f32 %v10618, %v10683
          %v10715 = vmul.f32 %v10619, %v10697
          %v10716 = vmul.f32 %v10620, %v10699
          %v10717 = vmul.f32 %v10621, %v10701
          %v10718 = vmul.f32 %v10622, %v10676
          %v10719 = vmul.f32 %v10623, %v10690
          %v10720 = vmul.f32 %v10624, %v10698
          %v10721 = vmul.f32 %v10625, %v10700
          %v10722 = vmul.f32 %v10626, %v10683
          %v10723 = vmul.f32 %v10627, %v10697
          %v10724 = vmul.f32 %v10628, %v10699
          %v10725 = vmul.f32 %v10629, %v10701
          %v10726 = vmul.f32 %v10630, %v10676
          %v10727 = vmul.f32 %v10631, %v10690
          %v10728 = vmul.f32 %v10632, %v10698
          %v10729 = vmul.f32 %v10633, %v10700
          %v10730 = vmul.f32 %v10634, %v10683
          %v10731 = vmul.f32 %v10635, %v10697
          %v10732 = vmul.f32 %v10636, %v10699
          %v10733 = vmul.f32 %v10637, %v10701
          %v10734 = vmul.f32 %v10638, %v10676
          %v10735 = vmul.f32 %v10639, %v10690
          %v10736 = vmul.f32 %v10640, %v10698
          %v10737 = vmul.f32 %v10641, %v10700
          %v10738 = vmul.f32 %v10642, %v10683
          %v10739 = vmul.f32 %v10643, %v10697
          %v10740 = vmul.f32 %v10644, %v10699
          %v10741 = vmul.f32 %v10645, %v10701
          %v10742 = vmul.f32 %v10646, %v10676
          %v10743 = vmul.f32 %v10647, %v10690
          %v10745 = vlaneseq
          %v10746 = vshrl.u32 %v10745, 7
          %v10747 = vsub.s32 0, %v10746
          %v10748 = vrot.slane %v9645, %v10747
          %v10749 = vcombine.high %v10748, %v10748
          %v10751 = vunpack.c.l.s4 1966171168
          %v10752 = vunpack.c.0.s8 %v10751
          %v10753 = vlaneseq
          %v10754 = vshrl.u32 %v10753, 7
          %v10755 = vsub.s32 %v10752, %v10754
          %v10756 = vrot.slane %v10748, %v10755
          %v10758 = vunpack.c.l.s4 1966171168
          %v10759 = vunpack.c.0.s8 %v10758
          %v10760 = vlaneseq
          %v10761 = vshrl.u32 %v10760, 7
          %v10762 = vsub.s32 %v10759, %v10761
          %v10763 = vrot.slane %v10749, %v10762
          %v10764 = vcombine.high %v10756, %v10756
          %v10765 = vcombine.high %v10763, %v10763
          %v10767 = vunpack.c.l.s4 1966171168
          %v10768 = vunpack.c.0.s8 %v10767
          %v10769 = vlaneseq
          %v10770 = vshrl.u32 %v10769, 7
          %v10771 = vsub.s32 %v10768, %v10770
          %v10772 = vrot.slane %v10756, %v10771
          %v10774 = vunpack.c.l.s4 1966171168
          %v10775 = vunpack.c.0.s8 %v10774
          %v10776 = vlaneseq
          %v10777 = vshrl.u32 %v10776, 7
          %v10778 = vsub.s32 %v10775, %v10777
          %v10779 = vrot.slane %v10763, %v10778
          %v10781 = vunpack.c.l.s4 1966171168
          %v10782 = vunpack.c.0.s8 %v10781
          %v10783 = vlaneseq
          %v10784 = vshrl.u32 %v10783, 7
          %v10785 = vsub.s32 %v10782, %v10784
          %v10786 = vrot.slane %v10764, %v10785
          %v10788 = vunpack.c.l.s4 1966171168
          %v10789 = vunpack.c.0.s8 %v10788
          %v10790 = vlaneseq
          %v10791 = vshrl.u32 %v10790, 7
          %v10792 = vsub.s32 %v10789, %v10791
          %v10793 = vrot.slane %v10765, %v10792
          %v10794 = vcombine.high %v10772, %v10772
          %v10795 = vcombine.high %v10779, %v10779
          %v10796 = vcombine.high %v10786, %v10786
          %v10797 = vcombine.high %v10793, %v10793
          %v10806 = vadd.f32 %v10710, %v10772
          %v10807 = vadd.f32 %v10711, %v10786
          %v10808 = vadd.f32 %v10712, %v10794
          %v10809 = vadd.f32 %v10713, %v10796
          %v10810 = vadd.f32 %v10714, %v10779
          %v10811 = vadd.f32 %v10715, %v10793
          %v10812 = vadd.f32 %v10716, %v10795
          %v10813 = vadd.f32 %v10717, %v10797
          %v10814 = vadd.f32 %v10718, %v10772
          %v10815 = vadd.f32 %v10719, %v10786
          %v10816 = vadd.f32 %v10720, %v10794
          %v10817 = vadd.f32 %v10721, %v10796
          %v10818 = vadd.f32 %v10722, %v10779
          %v10819 = vadd.f32 %v10723, %v10793
          %v10820 = vadd.f32 %v10724, %v10795
          %v10821 = vadd.f32 %v10725, %v10797
          %v10822 = vadd.f32 %v10726, %v10772
          %v10823 = vadd.f32 %v10727, %v10786
          %v10824 = vadd.f32 %v10728, %v10794
          %v10825 = vadd.f32 %v10729, %v10796
          %v10826 = vadd.f32 %v10730, %v10779
          %v10827 = vadd.f32 %v10731, %v10793
          %v10828 = vadd.f32 %v10732, %v10795
          %v10829 = vadd.f32 %v10733, %v10797
          %v10830 = vadd.f32 %v10734, %v10772
          %v10831 = vadd.f32 %v10735, %v10786
          %v10832 = vadd.f32 %v10736, %v10794
          %v10833 = vadd.f32 %v10737, %v10796
          %v10834 = vadd.f32 %v10738, %v10779
          %v10835 = vadd.f32 %v10739, %v10793
          %v10836 = vadd.f32 %v10740, %v10795
          %v10837 = vadd.f32 %v10741, %v10797
          %v10838 = vadd.f32 %v10742, %v10772
          %v10839 = vadd.f32 %v10743, %v10786
          %v10874 = vcombine.low %v10806, %v10807
          %v10875 = vcombine.low %v10808, %v10809
          %v10876 = vcombine.low %v10810, %v10811
          %v10877 = vcombine.low %v10812, %v10813
          %v10879 = vunpack.c.l.s4 1966171168
          %v10880 = vunpack.c.0.s8 %v10879
          %v10881 = vlaneseq
          %v10882 = vshrl.u32 %v10881, 7
          %v10883 = vsub.s32 %v10880, %v10882
          %v10884 = vrot.slane %v10874, %v10883
          %v10886 = vunpack.c.l.s4 1966171168
          %v10887 = vunpack.c.0.s8 %v10886
          %v10888 = vlaneseq
          %v10889 = vshrl.u32 %v10888, 7
          %v10890 = vsub.s32 %v10887, %v10889
          %v10891 = vrot.slane %v10875, %v10890
          %v10893 = vunpack.c.l.s4 1966171168
          %v10894 = vunpack.c.0.s8 %v10893
          %v10895 = vlaneseq
          %v10896 = vshrl.u32 %v10895, 7
          %v10897 = vsub.s32 %v10894, %v10896
          %v10898 = vrot.slane %v10876, %v10897
          %v10900 = vunpack.c.l.s4 1966171168
          %v10901 = vunpack.c.0.s8 %v10900
          %v10902 = vlaneseq
          %v10903 = vshrl.u32 %v10902, 7
          %v10904 = vsub.s32 %v10901, %v10903
          %v10905 = vrot.slane %v10877, %v10904
          %v10906 = vcombine.low %v10884, %v10891
          %v10907 = vcombine.low %v10898, %v10905
          %v10909 = vunpack.c.l.s4 1966171168
          %v10910 = vunpack.c.0.s8 %v10909
          %v10911 = vlaneseq
          %v10912 = vshrl.u32 %v10911, 7
          %v10913 = vsub.s32 %v10910, %v10912
          %v10914 = vrot.slane %v10906, %v10913
          %v10916 = vunpack.c.l.s4 1966171168
          %v10917 = vunpack.c.0.s8 %v10916
          %v10918 = vlaneseq
          %v10919 = vshrl.u32 %v10918, 7
          %v10920 = vsub.s32 %v10917, %v10919
          %v10921 = vrot.slane %v10907, %v10920
          %v10922 = vcombine.low %v10914, %v10921
          %v10923 = vcombine.low %v10814, %v10815
          %v10924 = vcombine.low %v10816, %v10817
          %v10925 = vcombine.low %v10818, %v10819
          %v10926 = vcombine.low %v10820, %v10821
          %v10928 = vunpack.c.l.s4 1966171168
          %v10929 = vunpack.c.0.s8 %v10928
          %v10930 = vlaneseq
          %v10931 = vshrl.u32 %v10930, 7
          %v10932 = vsub.s32 %v10929, %v10931
          %v10933 = vrot.slane %v10923, %v10932
          %v10935 = vunpack.c.l.s4 1966171168
          %v10936 = vunpack.c.0.s8 %v10935
          %v10937 = vlaneseq
          %v10938 = vshrl.u32 %v10937, 7
          %v10939 = vsub.s32 %v10936, %v10938
          %v10940 = vrot.slane %v10924, %v10939
          %v10942 = vunpack.c.l.s4 1966171168
          %v10943 = vunpack.c.0.s8 %v10942
          %v10944 = vlaneseq
          %v10945 = vshrl.u32 %v10944, 7
          %v10946 = vsub.s32 %v10943, %v10945
          %v10947 = vrot.slane %v10925, %v10946
          %v10949 = vunpack.c.l.s4 1966171168
          %v10950 = vunpack.c.0.s8 %v10949
          %v10951 = vlaneseq
          %v10952 = vshrl.u32 %v10951, 7
          %v10953 = vsub.s32 %v10950, %v10952
          %v10954 = vrot.slane %v10926, %v10953
          %v10955 = vcombine.low %v10933, %v10940
          %v10956 = vcombine.low %v10947, %v10954
          %v10958 = vunpack.c.l.s4 1966171168
          %v10959 = vunpack.c.0.s8 %v10958
          %v10960 = vlaneseq
          %v10961 = vshrl.u32 %v10960, 7
          %v10962 = vsub.s32 %v10959, %v10961
          %v10963 = vrot.slane %v10955, %v10962
          %v10965 = vunpack.c.l.s4 1966171168
          %v10966 = vunpack.c.0.s8 %v10965
          %v10967 = vlaneseq
          %v10968 = vshrl.u32 %v10967, 7
          %v10969 = vsub.s32 %v10966, %v10968
          %v10970 = vrot.slane %v10956, %v10969
          %v10971 = vcombine.low %v10963, %v10970
          %v10973 = vunpack.c.l.s4 1966171168
          %v10974 = vunpack.c.0.s8 %v10973
          %v10975 = vlaneseq
          %v10976 = vshrl.u32 %v10975, 7
          %v10977 = vsub.s32 %v10974, %v10976
          %v10978 = vrot.slane %v10822, %v10977
          %v10980 = vunpack.c.l.s4 1966171168
          %v10981 = vunpack.c.0.s8 %v10980
          %v10982 = vlaneseq
          %v10983 = vshrl.u32 %v10982, 7
          %v10984 = vsub.s32 %v10981, %v10983
          %v10985 = vrot.slane %v10978, %v10984
          %v10986 = vcombine.low %v10823, %v10824
          %v10987 = vcombine.low %v10825, %v10826
          %v10988 = vcombine.low %v10827, %v10828
          %v10989 = vcombine.low %v10829, %v10830
          %v10991 = vunpack.c.l.s4 1966171168
          %v10992 = vunpack.c.0.s8 %v10991
          %v10993 = vlaneseq
          %v10994 = vshrl.u32 %v10993, 7
          %v10995 = vsub.s32 %v10992, %v10994
          %v10996 = vrot.slane %v10986, %v10995
          %v10998 = vunpack.c.l.s4 1966171168
          %v10999 = vunpack.c.0.s8 %v10998
          %v11000 = vlaneseq
          %v11001 = vshrl.u32 %v11000, 7
          %v11002 = vsub.s32 %v10999, %v11001
          %v11003 = vrot.slane %v10987, %v11002
          %v11005 = vunpack.c.l.s4 1966171168
          %v11006 = vunpack.c.0.s8 %v11005
          %v11007 = vlaneseq
          %v11008 = vshrl.u32 %v11007, 7
          %v11009 = vsub.s32 %v11006, %v11008
          %v11010 = vrot.slane %v10988, %v11009
          %v11012 = vunpack.c.l.s4 1966171168
          %v11013 = vunpack.c.0.s8 %v11012
          %v11014 = vlaneseq
          %v11015 = vshrl.u32 %v11014, 7
          %v11016 = vsub.s32 %v11013, %v11015
          %v11017 = vrot.slane %v10989, %v11016
          %v11018 = vcombine.low %v10996, %v11003
          %v11019 = vcombine.low %v11010, %v11017
          %v11021 = vunpack.c.l.s4 1966171168
          %v11022 = vunpack.c.0.s8 %v11021
          %v11023 = vlaneseq
          %v11024 = vshrl.u32 %v11023, 7
          %v11025 = vsub.s32 %v11022, %v11024
          %v11026 = vrot.slane %v11018, %v11025
          %v11028 = vunpack.c.l.s4 1966171168
          %v11029 = vunpack.c.0.s8 %v11028
          %v11030 = vlaneseq
          %v11031 = vshrl.u32 %v11030, 7
          %v11032 = vsub.s32 %v11029, %v11031
          %v11033 = vrot.slane %v11019, %v11032
          %v11034 = vcombine.low %v11026, %v11033
          %v11035 = vcombine.low %v10831, %v10832
          %v11036 = vcombine.low %v10833, %v10834
          %v11037 = vcombine.low %v10835, %v10836
          %v11038 = vcombine.low %v10837, %v10838
          %v11040 = vunpack.c.l.s4 1966171168
          %v11041 = vunpack.c.0.s8 %v11040
          %v11042 = vlaneseq
          %v11043 = vshrl.u32 %v11042, 7
          %v11044 = vsub.s32 %v11041, %v11043
          %v11045 = vrot.slane %v11035, %v11044
          %v11047 = vunpack.c.l.s4 1966171168
          %v11048 = vunpack.c.0.s8 %v11047
          %v11049 = vlaneseq
          %v11050 = vshrl.u32 %v11049, 7
          %v11051 = vsub.s32 %v11048, %v11050
          %v11052 = vrot.slane %v11036, %v11051
          %v11054 = vunpack.c.l.s4 1966171168
          %v11055 = vunpack.c.0.s8 %v11054
          %v11056 = vlaneseq
          %v11057 = vshrl.u32 %v11056, 7
          %v11058 = vsub.s32 %v11055, %v11057
          %v11059 = vrot.slane %v11037, %v11058
          %v11061 = vunpack.c.l.s4 1966171168
          %v11062 = vunpack.c.0.s8 %v11061
          %v11063 = vlaneseq
          %v11064 = vshrl.u32 %v11063, 7
          %v11065 = vsub.s32 %v11062, %v11064
          %v11066 = vrot.slane %v11038, %v11065
          %v11067 = vcombine.low %v11045, %v11052
          %v11068 = vcombine.low %v11059, %v11066
          %v11070 = vunpack.c.l.s4 1966171168
          %v11071 = vunpack.c.0.s8 %v11070
          %v11072 = vlaneseq
          %v11073 = vshrl.u32 %v11072, 7
          %v11074 = vsub.s32 %v11071, %v11073
          %v11075 = vrot.slane %v11067, %v11074
          %v11077 = vunpack.c.l.s4 1966171168
          %v11078 = vunpack.c.0.s8 %v11077
          %v11079 = vlaneseq
          %v11080 = vshrl.u32 %v11079, 7
          %v11081 = vsub.s32 %v11078, %v11080
          %v11082 = vrot.slane %v11068, %v11081
          %v11083 = vcombine.low %v11075, %v11082
          %v11085 = vunpack.c.l.s4 1966171168
          %v11086 = vunpack.c.0.s8 %v11085
          %v11087 = vlaneseq
          %v11088 = vshrl.u32 %v11087, 7
          %v11089 = vsub.s32 %v11086, %v11088
          %v11090 = vrot.slane %v10839, %v11089
          %v11092 = vunpack.c.l.s4 1966171168
          %v11093 = vunpack.c.0.s8 %v11092
          %v11094 = vlaneseq
          %v11095 = vshrl.u32 %v11094, 7
          %v11096 = vsub.s32 %v11093, %v11095
          %v11097 = vrot.slane %v11090, %v11096
          %11104 = vst.msk [vmem:[#allocation30] sm:$0xff] %vm1562, %v10922
          %11105 = vst.msk [vmem:[#allocation30 + $0x8] sm:$0xff] %vm1562, %v10971
          %vm11106 = vcmask 516096
          %11107 = vst.msk [vmem:[#allocation30 + $0x10] sm:$0x1] %vm11106, %v10985
          %11108 = vst.msk [vmem:[#allocation30 + $0x18] sm:$0xff] %vm1562, %v11034
          %11109 = vst.msk [vmem:[#allocation30 + $0x20] sm:$0xff] %vm1562, %v11083
          %11110 = vst.msk [vmem:[#allocation30 + $0x28] sm:$0x1] %vm11106, %v11097
        $region168: #{dino_forward.3} parent=87 // pred_fallthru
          _
        // Predicated region
        $region169: #{dino_forward.3} parent=87 // pred_check
          %p11111 = pneg %p502
        $region170: #{dino_forward.3} parent=87 // pred_check_branch
          %11113 = sbr.rel (%p11111) target = $region172
        $region171: #{dino_forward.3} parent=87 // pred_region
          %s11114 = smul.u32 2, %s54
          %s11116 = ssub.s32 768, 768
          %11117 = vsyncadd [#allocation5], %s11116
          %s11118 = smul.addr %s11114, 3
          %s11119 = smul.addr %s11118, 128
          %s11120 = scalar_lea.hbm %s17, %s11119
          %s11121 = sshll.u32 [#allocation30], 4
          %s11122 = int_to_ptr.vmem [resolvable:$true] %s11121
          %11127 = dma.vmem_to_hbm [thread:$0]  %s11122, 768, %s11120, [#allocation5], 128, 128, 8
        $region172: #{dino_forward.3} parent=87 // pred_fallthru
          _
        // Predicated region
        $region173: #{dino_forward.3} parent=87 // pred_check
          %p11128 = pneg %p502
        $region174: #{dino_forward.3} parent=87 // pred_check_branch
          %11130 = sbr.rel (%p11128) target = $region176
        $region175: #{dino_forward.3} parent=87 // pred_region
          %11131 = dma.done [#allocation5], 768
        $region176: #{dino_forward.3} parent=87 // pred_fallthru
          _
      $region88: #{dino_forward.3} parent=5 // pred_fallthru
        _
      %p11132 = scmp.le.s32.totalorder 2, %s45
      // Predicated region
      $region177: #{dino_forward.3} parent=5 // pred_check
        %p11133 = pneg %p11132
      $region178: #{dino_forward.3} parent=5 // pred_check_branch
        %11135 = sbr.rel (%p11133) target = $region180
      $region179: #{dino_forward.3} parent=5 // pred_region
        %s11136 = ssub.s32 %s45, 2
      $region180: #{dino_forward.3} parent=5 // pred_fallthru
        _
    $region6: #{dino_forward.3} parent=1 // loop_footer
      %s49 = sadd.s32 1, %s45
    $region7: #{dino_forward.3} parent=1 // loop_footer_branch
      %44 = sbr.rel target = $region3
    $region8: #{dino_forward.3} parent=1 // loop_exit
      _
    %11137 = vsyncpa [#allocation4], 1
    %s11138 = scalar_lea.sflag [#allocation4], 1
    %11139 = vsyncpa %s11138, 1
    %11140 = vsyncpa [#allocation7], 1
    %11141 = vsyncpa [#allocation10], 1
    %s11142 = scalar_lea.sflag [#allocation10], 1
    %11143 = vsyncpa %s11142, 1
    %11144 = vsyncpa [#allocation13], 1
    %s11145 = scalar_lea.sflag [#allocation13], 1
    %11146 = vsyncpa %s11145, 1
    %11147 = vsyncpa [#allocation16], 1
    %s11148 = scalar_lea.sflag [#allocation16], 1
    %11149 = vsyncpa %s11148, 1
    %11150 = vsyncpa [#allocation19], 1
    %s11151 = scalar_lea.sflag [#allocation19], 1
    %11152 = vsyncpa %s11151, 1
    %11153 = vsyncpa [#allocation22], 1
    %s11154 = scalar_lea.sflag [#allocation22], 1
    %11155 = vsyncpa %s11154, 1
    %11156 = vsyncpa [#allocation25], 1
    %s11157 = scalar_lea.sflag [#allocation25], 1
    %11158 = vsyncpa %s11157, 1
    %11159 = vsyncpa [#allocation28], 1
    %11160 = vsyncpa [#allocation5], 1
    %s11161 = scalar_lea.sflag [#allocation5], 1
    %11162 = vsyncpa %s11161, 1

</llo_original>
